<compile_context>
chip_gen: v7x
topology: tpu7x:2x2x1
jax: 0.10.0
libtpu: 0.0.40
codegen_flags: <defaults>
</compile_context>

<pallas_src>
import functools

import jax
import jax.numpy as jnp
from jax import lax
from jax.experimental import pallas as pl
from jax.experimental.pallas import tpu as pltpu

FILTER_SIZE = 256
NUM_X_FREQ = 6
NUM_D_FREQ = 3
X_DIM = 2 * NUM_X_FREQ * 3 + 3   # 39
D_DIM = 2 * NUM_D_FREQ * 3 + 3   # 21
HALF = FILTER_SIZE // 2          # 128
PAD_IN = 128                     # lane-dense padded feature width for x and d
LANES = 128                      # output slab width; lanes 0:3 rgb, lane 3 sigma
SIGMA_LANE = 3


def nerf_kernel(x_ref, d_ref,
                w_in5b, b_in,
                w1, b1, w2, b2, w3, b3, w4, b4,
                w5a, b5,
                w6, b6, w7, b7,
                w8s, b8s,
                w9a, w9b, b9,
                w_out, b_out,
                out_ref):
    F = FILTER_SIZE
    x = x_ref[...]      # (tm, 128) bf16, zero-padded beyond X_DIM
    d = d_ref[...]      # (tm, 128) bf16, zero-padded beyond D_DIM

    def mm(h, w):
        # bf16 MXU operands, f32 accumulation.
        return jnp.dot(h, w[...], preferred_element_type=jnp.float32)

    def act(pre):
        # bias-add already done; relu in f32 (portable), single bf16 carry cast.
        return jnp.maximum(pre, 0.0).astype(jnp.bfloat16)

    # Fused first pass: x @ [W_in | W5_xskip]  ->  (tm, 512) f32.
    xf = mm(x, w_in5b)
    h = act(xf[:, :F] + b_in[...])          # input_fc
    x_skip = xf[:, F:]                      # (tm, 256) f32, consumed at fc5

    h = act(mm(h, w1) + b1[...])
    h = act(mm(h, w2) + b2[...])
    h = act(mm(h, w3) + b3[...])
    h4 = act(mm(h, w4) + b4[...])

    # hidden_fc_5 on cat([h4, x]) == h4 @ W5a + (x @ W5b) + b5
    h5 = act(mm(h4, w5a) + x_skip + b5[...])
    h6 = act(mm(h5, w6) + b6[...])
    h7 = act(mm(h6, w7) + b7[...])

    # hidden_fc_8 and sigma_out fused into one MXU pass (no activation):
    # fused = h7 @ [W8 | W_sig placed at lane SIGMA_LANE of a 128-wide block]
    fused8 = mm(h7, w8s) + b8s[...]                    # (tm, 384) f32
    h8 = fused8[:, :F].astype(jnp.bfloat16)            # bf16 immediately
    sigma_slab = fused8[:, F:]                         # (tm, 128) f32; lane 3 = sigma

    # hidden_fc_9 on cat([h8, d]) == h8 @ W9a + d @ W9b + b9
    h9 = act(mm(h8, w9a) + mm(d, w9b) + b9[...])
    rgb_slab = jax.nn.sigmoid(mm(h9, w_out) + b_out[...])   # (tm, 128) f32

    # Merge sigma into lane 3 of the rgb slab -> single lane-dense (tm,128) store.
    lane = lax.broadcasted_iota(jnp.int32, rgb_slab.shape, 1)
    out_ref[...] = jnp.where(lane == SIGMA_LANE, sigma_slab,
                             rgb_slab).astype(out_ref.dtype)


def init_params(key):
    """Deterministic synthetic parameters, shapes match the torch module."""
    def linear(key, fan_in, fan_out):
        kw, kb = jax.random.split(key)
        # weight stored already transposed: (fan_in, fan_out)
        w = jax.random.normal(kw, (fan_in, fan_out), jnp.float32) * (1.0 / jnp.sqrt(fan_in))
        b = jax.random.normal(kb, (1, fan_out), jnp.float32) * 0.01
        return w, b

    keys = jax.random.split(key, 12)
    F = FILTER_SIZE
    p = {}
    p["input_fc"] = linear(keys[0], X_DIM, F)
    p["hidden_fc_1"] = linear(keys[1], F, F)
    p["hidden_fc_2"] = linear(keys[2], F, F)
    p["hidden_fc_3"] = linear(keys[3], F, F)
    p["hidden_fc_4"] = linear(keys[4], F, F)
    p["hidden_fc_5"] = linear(keys[5], F + X_DIM, F)
    p["hidden_fc_6"] = linear(keys[6], F, F)
    p["hidden_fc_7"] = linear(keys[7], F, F)
    p["sigma_out"] = linear(keys[8], F, 1)
    p["hidden_fc_8"] = linear(keys[9], F, F)
    p["hidden_fc_9"] = linear(keys[10], F + D_DIM, HALF)
    p["output_fc"] = linear(keys[11], HALF, 3)
    return p


def pack_params(p):
    """Pad / split / fuse the parameters into the kernel's flat argument list.

    Weights -> bf16 (MXU operands).  Biases stay f32 (added on the VPU).
    Zero rows/cols are mathematically inert because the matching input lanes
    are zero-padded (or the extra output lanes are sliced off in the wrapper).
    """
    F = FILTER_SIZE
    wcast = lambda w: w.astype(jnp.bfloat16)

    w_in, b_in = p["input_fc"]
    w_in = jnp.pad(w_in, ((0, PAD_IN - X_DIM), (0, 0)))          # (128, 256)

    w5, b5 = p["hidden_fc_5"]                                    # (F+39, F)
    w5a = w5[:F]                                                 # (256, 256)
    w5b = jnp.pad(w5[F:], ((0, PAD_IN - X_DIM), (0, 0)))         # (128, 256)

    # Fused first-pass weights: x @ [W_in | W5b] -> (128, 512)
    w_in5b = jnp.concatenate([w_in, w5b], axis=1)

    w8, b8 = p["hidden_fc_8"]
    w_sig, b_sig = p["sigma_out"]                                # (F,1), (1,1)
    # sigma column placed at lane SIGMA_LANE of a 128-wide padded block
    w_sig_pad = jnp.pad(w_sig, ((0, 0), (SIGMA_LANE, LANES - SIGMA_LANE - 1)))
    b_sig_pad = jnp.pad(b_sig, ((0, 0), (SIGMA_LANE, LANES - SIGMA_LANE - 1)))
    w8s = jnp.concatenate([w8, w_sig_pad], axis=1)               # (256, 384)
    b8s = jnp.concatenate([b8, b_sig_pad], axis=1)               # (1, 384)

    w9, b9 = p["hidden_fc_9"]                                    # (F+21, 128)
    w9a = w9[:F]
    w9b = jnp.pad(w9[F:], ((0, PAD_IN - D_DIM), (0, 0)))         # (128, 128)

    w_out, b_out = p["output_fc"]                                # (128, 3), (1, 3)
    w_out = jnp.pad(w_out, ((0, 0), (0, LANES - 3)))             # (128, 128)
    b_out = jnp.pad(b_out, ((0, 0), (0, LANES - 3)))             # (1, 128)

    flat = [wcast(w_in5b), b_in]
    for name in ("hidden_fc_1", "hidden_fc_2", "hidden_fc_3", "hidden_fc_4"):
        w, b = p[name]
        flat += [wcast(w), b]
    flat += [wcast(w5a), b5]
    for name in ("hidden_fc_6", "hidden_fc_7"):
        w, b = p[name]
        flat += [wcast(w), b]
    flat += [wcast(w8s), b8s]
    flat += [wcast(w9a), wcast(w9b), b9]
    flat += [wcast(w_out), b_out]
    return flat


@functools.partial(jax.jit, static_argnames=("tm",))
def nerf_forward_pallas(x, d, params, tm=256):
    N = x.shape[0]
    flat = pack_params(params)

    # Ragged N: pad the row axis up to a multiple of tm (zero rows are inert),
    # slice the valid rows back out at the end.
    n_tiles = pl.cdiv(N, tm)
    n_pad = n_tiles * tm
    if n_pad != N:
        x = jnp.pad(x, ((0, n_pad - N), (0, 0)))
        d = jnp.pad(d, ((0, n_pad - N), (0, 0)))

    # Lane-dense bf16 inputs (feature axis zero-padded to 128).
    x_p = jnp.pad(x, ((0, 0), (0, PAD_IN - X_DIM))).astype(jnp.bfloat16)
    d_p = jnp.pad(d, ((0, 0), (0, PAD_IN - D_DIM))).astype(jnp.bfloat16)

    x_spec = pl.BlockSpec((tm, PAD_IN), lambda i: (i, 0))
    d_spec = pl.BlockSpec((tm, PAD_IN), lambda i: (i, 0))
    # Weights/biases: full-array blocks with a constant index map -> DMA'd once
    # and VMEM-resident across the whole grid (~1.4 MB of bf16 weights).
    param_specs = [pl.BlockSpec(a.shape, lambda i: (0, 0)) for a in flat]

    # Advisory cost estimate (using the padded K/N dims actually executed).
    F = FILTER_SIZE
    macs_per_row = (PAD_IN * 2 * F                   # fused input_fc + x-skip
                    + 7 * F * F                      # fc1-4, fc5 main, fc6, fc7
                    + F * (F + LANES)                # fc8 + fused sigma head
                    + F * HALF + PAD_IN * HALF       # fc9 (h8 part + d-skip)
                    + HALF * LANES)                  # output_fc (padded)
    param_bytes = sum(int(a.size) * a.dtype.itemsize for a in flat)
    cost = pl.CostEstimate(
        flops=2 * n_pad * macs_per_row,
        transcendentals=n_pad * LANES,   # sigmoid exp over the padded rgb lanes
        bytes_accessed=param_bytes
        + int(x_p.size + d_p.size) * 2
        + n_pad * LANES * 4,
    )

    out = pl.pallas_call(
        nerf_kernel,
        out_shape=jax.ShapeDtypeStruct((n_pad, LANES), jnp.float32),
        grid_spec=pltpu.PrefetchScalarGridSpec(
            num_scalar_prefetch=0,
            grid=(n_tiles,),
            in_specs=[x_spec, d_spec] + param_specs,
            out_specs=pl.BlockSpec((tm, LANES), lambda i: (i, 0)),
        ),
        compiler_params=pltpu.CompilerParams(
            dimension_semantics=("parallel",)),
        cost_estimate=cost,
    )(x_p, d_p, *flat)

    rgb = out[:N, :3]
    sigma = out[:N, SIGMA_LANE:SIGMA_LANE + 1]
    return rgb, sigma


def nerf_forward_ref(x, d, params, compute_dtype=jnp.float32):
    """Plain-JAX reference mirroring the torch forward exactly.

    compute_dtype=bfloat16 mirrors the kernel's MXU operand precision
    (f32 accumulation / elementwise) for a tight numeric comparison.
    """
    cd = compute_dtype
    relu = lambda v: jnp.maximum(v, 0.0)

    def lin(h, wb):
        w, b = wb
        return jnp.dot(h.astype(cd), w.astype(cd),
                       preferred_element_type=jnp.float32) + b

    h = relu(lin(x, params["input_fc"]))
    h = relu(lin(h, params["hidden_fc_1"]))
    h = relu(lin(h, params["hidden_fc_2"]))
    h = relu(lin(h, params["hidden_fc_3"]))
    h4 = relu(lin(h, params["hidden_fc_4"]))
    h4x = jnp.concatenate([h4, x], axis=-1)
    h5 = relu(lin(h4x, params["hidden_fc_5"]))
    h6 = relu(lin(h5, params["hidden_fc_6"]))
    h7 = relu(lin(h6, params["hidden_fc_7"]))
    sigma = lin(h7, params["sigma_out"])
    h8 = lin(h7, params["hidden_fc_8"])
    h8d = jnp.concatenate([h8, d], axis=-1)
    h9 = relu(lin(h8d, params["hidden_fc_9"]))
    rgb = jax.nn.sigmoid(lin(h9, params["output_fc"]))
    return rgb, sigma


if __name__ == "__main__":
    key = jax.random.PRNGKey(0)
    kp, kx, kd = jax.random.split(key, 3)

    # Deliberately not a multiple of tm to exercise the cdiv/padding path.
    N = 2000          # tm=256 -> grid of 8 (>= 4 steps per core on v7x megacore)
    params = init_params(kp)
    x = jax.random.normal(kx, (N, X_DIM), jnp.float32)
    d = jax.random.normal(kd, (N, D_DIM), jnp.float32)

    rgb, sigma = nerf_forward_pallas(x, d, params, tm=256)
    jax.block_until_ready((rgb, sigma))
    assert rgb.shape == (N, 3) and sigma.shape == (N, 1)

    # Tight check vs a reference that mirrors the kernel's bf16 MXU operands.
    rgb_bf, sigma_bf = nerf_forward_ref(x, d, params, compute_dtype=jnp.bfloat16)
    assert jnp.allclose(rgb, rgb_bf, atol=2e-3, rtol=2e-3), \
        float(jnp.max(jnp.abs(rgb - rgb_bf)))
    assert jnp.allclose(sigma, sigma_bf, atol=5e-3, rtol=5e-3), \
        float(jnp.max(jnp.abs(sigma - sigma_bf)))

    # Loose semantic check vs the full-f32 reference (bf16 quantization noise).
    rgb_f32, sigma_f32 = nerf_forward_ref(x, d, params, compute_dtype=jnp.float32)
    assert jnp.allclose(rgb, rgb_f32, atol=2e-2, rtol=2e-2), \
        float(jnp.max(jnp.abs(rgb - rgb_f32)))
    assert jnp.allclose(sigma, sigma_f32, atol=2e-2, rtol=5e-2), \
        float(jnp.max(jnp.abs(sigma - sigma_f32)))

    print("KERNEL_OK")
</pallas_src>

<mosaic_0001>
module attributes {stable_mosaic.version = 11 : i64} {
  func.func @nerf_kernel(%arg0: i32, %arg1: memref<256x128xbf16, #tpu.memory_space<vmem>>, %arg2: memref<256x128xbf16, #tpu.memory_space<vmem>>, %arg3: memref<128x512xbf16, #tpu.memory_space<vmem>>, %arg4: memref<1x256xf32, #tpu.memory_space<vmem>>, %arg5: memref<256x256xbf16, #tpu.memory_space<vmem>>, %arg6: memref<1x256xf32, #tpu.memory_space<vmem>>, %arg7: memref<256x256xbf16, #tpu.memory_space<vmem>>, %arg8: memref<1x256xf32, #tpu.memory_space<vmem>>, %arg9: memref<256x256xbf16, #tpu.memory_space<vmem>>, %arg10: memref<1x256xf32, #tpu.memory_space<vmem>>, %arg11: memref<256x256xbf16, #tpu.memory_space<vmem>>, %arg12: memref<1x256xf32, #tpu.memory_space<vmem>>, %arg13: memref<256x256xbf16, #tpu.memory_space<vmem>>, %arg14: memref<1x256xf32, #tpu.memory_space<vmem>>, %arg15: memref<256x256xbf16, #tpu.memory_space<vmem>>, %arg16: memref<1x256xf32, #tpu.memory_space<vmem>>, %arg17: memref<256x256xbf16, #tpu.memory_space<vmem>>, %arg18: memref<1x256xf32, #tpu.memory_space<vmem>>, %arg19: memref<256x384xbf16, #tpu.memory_space<vmem>>, %arg20: memref<1x384xf32, #tpu.memory_space<vmem>>, %arg21: memref<256x128xbf16, #tpu.memory_space<vmem>>, %arg22: memref<128x128xbf16, #tpu.memory_space<vmem>>, %arg23: memref<1x128xf32, #tpu.memory_space<vmem>>, %arg24: memref<128x128xbf16, #tpu.memory_space<vmem>>, %arg25: memref<1x128xf32, #tpu.memory_space<vmem>>, %arg26: memref<256x128xf32, #tpu.memory_space<vmem>>) attributes {dimension_semantics = [#tpu.dimension_semantics<parallel>], iteration_bounds = array<i64: 8>, scalar_prefetch = 0 : i64, scratch_operands = 0 : i64, tpu.core_type = #tpu.core_type<tc>, window_params = [{transform_indices = @transform_0, window_bounds = array<i64: 256, 128>}, {transform_indices = @transform_1, window_bounds = array<i64: 256, 128>}, {pipeline_mode = #tpu.pipeline_mode<synchronous>, transform_indices = @transform_2, window_bounds = array<i64: 128, 512>}, {pipeline_mode = #tpu.pipeline_mode<synchronous>, transform_indices = @transform_3, window_bounds = array<i64: 1, 256>}, {pipeline_mode = #tpu.pipeline_mode<synchronous>, transform_indices = @transform_4, window_bounds = array<i64: 256, 256>}, {pipeline_mode = #tpu.pipeline_mode<synchronous>, transform_indices = @transform_5, window_bounds = array<i64: 1, 256>}, {pipeline_mode = #tpu.pipeline_mode<synchronous>, transform_indices = @transform_6, window_bounds = array<i64: 256, 256>}, {pipeline_mode = #tpu.pipeline_mode<synchronous>, transform_indices = @transform_7, window_bounds = array<i64: 1, 256>}, {pipeline_mode = #tpu.pipeline_mode<synchronous>, transform_indices = @transform_8, window_bounds = array<i64: 256, 256>}, {pipeline_mode = #tpu.pipeline_mode<synchronous>, transform_indices = @transform_9, window_bounds = array<i64: 1, 256>}, {pipeline_mode = #tpu.pipeline_mode<synchronous>, transform_indices = @transform_10, window_bounds = array<i64: 256, 256>}, {pipeline_mode = #tpu.pipeline_mode<synchronous>, transform_indices = @transform_11, window_bounds = array<i64: 1, 256>}, {pipeline_mode = #tpu.pipeline_mode<synchronous>, transform_indices = @transform_12, window_bounds = array<i64: 256, 256>}, {pipeline_mode = #tpu.pipeline_mode<synchronous>, transform_indices = @transform_13, window_bounds = array<i64: 1, 256>}, {pipeline_mode = #tpu.pipeline_mode<synchronous>, transform_indices = @transform_14, window_bounds = array<i64: 256, 256>}, {pipeline_mode = #tpu.pipeline_mode<synchronous>, transform_indices = @transform_15, window_bounds = array<i64: 1, 256>}, {pipeline_mode = #tpu.pipeline_mode<synchronous>, transform_indices = @transform_16, window_bounds = array<i64: 256, 256>}, {pipeline_mode = #tpu.pipeline_mode<synchronous>, transform_indices = @transform_17, window_bounds = array<i64: 1, 256>}, {pipeline_mode = #tpu.pipeline_mode<synchronous>, transform_indices = @transform_18, window_bounds = array<i64: 256, 384>}, {pipeline_mode = #tpu.pipeline_mode<synchronous>, transform_indices = @transform_19, window_bounds = array<i64: 1, 384>}, {pipeline_mode = #tpu.pipeline_mode<synchronous>, transform_indices = @transform_20, window_bounds = array<i64: 256, 128>}, {pipeline_mode = #tpu.pipeline_mode<synchronous>, transform_indices = @transform_21, window_bounds = array<i64: 128, 128>}, {pipeline_mode = #tpu.pipeline_mode<synchronous>, transform_indices = @transform_22, window_bounds = array<i64: 1, 128>}, {pipeline_mode = #tpu.pipeline_mode<synchronous>, transform_indices = @transform_23, window_bounds = array<i64: 128, 128>}, {pipeline_mode = #tpu.pipeline_mode<synchronous>, transform_indices = @transform_24, window_bounds = array<i64: 1, 128>}, {transform_indices = @transform_25, window_bounds = array<i64: 256, 128>}]} {
    %c0 = arith.constant 0 : index
    %c0_0 = arith.constant 0 : index
    %0 = vector.load %arg1[%c0, %c0_0] : memref<256x128xbf16, #tpu.memory_space<vmem>>, vector<256x128xbf16>
    %c0_1 = arith.constant 0 : index
    %c0_2 = arith.constant 0 : index
    %1 = vector.load %arg2[%c0_1, %c0_2] : memref<256x128xbf16, #tpu.memory_space<vmem>>, vector<256x128xbf16>
    %c0_3 = arith.constant 0 : index
    %c0_4 = arith.constant 0 : index
    %2 = vector.load %arg3[%c0_3, %c0_4] : memref<128x512xbf16, #tpu.memory_space<vmem>>, vector<128x512xbf16>
    %cst = arith.constant dense<0.000000e+00> : vector<256x512xf32>
    %3 = tpu.matmul %0, %2, %cst {dimension_numbers = #tpu.dot_dimension_numbers<[1], [0], [0], [1], [0, 0, 1, 1], [], []>} : vector<256x128xbf16>, vector<128x512xbf16>, vector<256x512xf32> -> vector<256x512xf32>
    %4 = vector.extract_strided_slice %3 {offsets = [0, 0], sizes = [256, 256], strides = [1, 1]} : vector<256x512xf32> to vector<256x256xf32>
    %c0_5 = arith.constant 0 : index
    %c0_6 = arith.constant 0 : index
    %5 = vector.load %arg4[%c0_5, %c0_6] : memref<1x256xf32, #tpu.memory_space<vmem>>, vector<1x256xf32>
    %6 = vector.broadcast %5 : vector<1x256xf32> to vector<256x256xf32>
    %7 = arith.addf %4, %6 : vector<256x256xf32>
    %cst_7 = arith.constant 0.000000e+00 : f32
    %8 = vector.broadcast %cst_7 : f32 to vector<256x256xf32>
    %9 = arith.maximumf %7, %8 : vector<256x256xf32>
    %10 = arith.truncf %9 : vector<256x256xf32> to vector<256x256xbf16>
    %11 = vector.extract_strided_slice %3 {offsets = [0, 256], sizes = [256, 256], strides = [1, 1]} : vector<256x512xf32> to vector<256x256xf32>
    %c0_8 = arith.constant 0 : index
    %c0_9 = arith.constant 0 : index
    %12 = vector.load %arg5[%c0_8, %c0_9] : memref<256x256xbf16, #tpu.memory_space<vmem>>, vector<256x256xbf16>
    %cst_10 = arith.constant dense<0.000000e+00> : vector<256x256xf32>
    %13 = tpu.matmul %10, %12, %cst_10 {dimension_numbers = #tpu.dot_dimension_numbers<[1], [0], [0], [1], [0, 0, 1, 1], [], []>} : vector<256x256xbf16>, vector<256x256xbf16>, vector<256x256xf32> -> vector<256x256xf32>
    %c0_11 = arith.constant 0 : index
    %c0_12 = arith.constant 0 : index
    %14 = vector.load %arg6[%c0_11, %c0_12] : memref<1x256xf32, #tpu.memory_space<vmem>>, vector<1x256xf32>
    %15 = vector.broadcast %14 : vector<1x256xf32> to vector<256x256xf32>
    %16 = arith.addf %13, %15 : vector<256x256xf32>
    %cst_13 = arith.constant 0.000000e+00 : f32
    %17 = vector.broadcast %cst_13 : f32 to vector<256x256xf32>
    %18 = arith.maximumf %16, %17 : vector<256x256xf32>
    %19 = arith.truncf %18 : vector<256x256xf32> to vector<256x256xbf16>
    %c0_14 = arith.constant 0 : index
    %c0_15 = arith.constant 0 : index
    %20 = vector.load %arg7[%c0_14, %c0_15] : memref<256x256xbf16, #tpu.memory_space<vmem>>, vector<256x256xbf16>
    %cst_16 = arith.constant dense<0.000000e+00> : vector<256x256xf32>
    %21 = tpu.matmul %19, %20, %cst_16 {dimension_numbers = #tpu.dot_dimension_numbers<[1], [0], [0], [1], [0, 0, 1, 1], [], []>} : vector<256x256xbf16>, vector<256x256xbf16>, vector<256x256xf32> -> vector<256x256xf32>
    %c0_17 = arith.constant 0 : index
    %c0_18 = arith.constant 0 : index
    %22 = vector.load %arg8[%c0_17, %c0_18] : memref<1x256xf32, #tpu.memory_space<vmem>>, vector<1x256xf32>
    %23 = vector.broadcast %22 : vector<1x256xf32> to vector<256x256xf32>
    %24 = arith.addf %21, %23 : vector<256x256xf32>
    %cst_19 = arith.constant 0.000000e+00 : f32
    %25 = vector.broadcast %cst_19 : f32 to vector<256x256xf32>
    %26 = arith.maximumf %24, %25 : vector<256x256xf32>
    %27 = arith.truncf %26 : vector<256x256xf32> to vector<256x256xbf16>
    %c0_20 = arith.constant 0 : index
    %c0_21 = arith.constant 0 : index
    %28 = vector.load %arg9[%c0_20, %c0_21] : memref<256x256xbf16, #tpu.memory_space<vmem>>, vector<256x256xbf16>
    %cst_22 = arith.constant dense<0.000000e+00> : vector<256x256xf32>
    %29 = tpu.matmul %27, %28, %cst_22 {dimension_numbers = #tpu.dot_dimension_numbers<[1], [0], [0], [1], [0, 0, 1, 1], [], []>} : vector<256x256xbf16>, vector<256x256xbf16>, vector<256x256xf32> -> vector<256x256xf32>
    %c0_23 = arith.constant 0 : index
    %c0_24 = arith.constant 0 : index
    %30 = vector.load %arg10[%c0_23, %c0_24] : memref<1x256xf32, #tpu.memory_space<vmem>>, vector<1x256xf32>
    %31 = vector.broadcast %30 : vector<1x256xf32> to vector<256x256xf32>
    %32 = arith.addf %29, %31 : vector<256x256xf32>
    %cst_25 = arith.constant 0.000000e+00 : f32
    %33 = vector.broadcast %cst_25 : f32 to vector<256x256xf32>
    %34 = arith.maximumf %32, %33 : vector<256x256xf32>
    %35 = arith.truncf %34 : vector<256x256xf32> to vector<256x256xbf16>
    %c0_26 = arith.constant 0 : index
    %c0_27 = arith.constant 0 : index
    %36 = vector.load %arg11[%c0_26, %c0_27] : memref<256x256xbf16, #tpu.memory_space<vmem>>, vector<256x256xbf16>
    %cst_28 = arith.constant dense<0.000000e+00> : vector<256x256xf32>
    %37 = tpu.matmul %35, %36, %cst_28 {dimension_numbers = #tpu.dot_dimension_numbers<[1], [0], [0], [1], [0, 0, 1, 1], [], []>} : vector<256x256xbf16>, vector<256x256xbf16>, vector<256x256xf32> -> vector<256x256xf32>
    %c0_29 = arith.constant 0 : index
    %c0_30 = arith.constant 0 : index
    %38 = vector.load %arg12[%c0_29, %c0_30] : memref<1x256xf32, #tpu.memory_space<vmem>>, vector<1x256xf32>
    %39 = vector.broadcast %38 : vector<1x256xf32> to vector<256x256xf32>
    %40 = arith.addf %37, %39 : vector<256x256xf32>
    %cst_31 = arith.constant 0.000000e+00 : f32
    %41 = vector.broadcast %cst_31 : f32 to vector<256x256xf32>
    %42 = arith.maximumf %40, %41 : vector<256x256xf32>
    %43 = arith.truncf %42 : vector<256x256xf32> to vector<256x256xbf16>
    %c0_32 = arith.constant 0 : index
    %c0_33 = arith.constant 0 : index
    %44 = vector.load %arg13[%c0_32, %c0_33] : memref<256x256xbf16, #tpu.memory_space<vmem>>, vector<256x256xbf16>
    %cst_34 = arith.constant dense<0.000000e+00> : vector<256x256xf32>
    %45 = tpu.matmul %43, %44, %cst_34 {dimension_numbers = #tpu.dot_dimension_numbers<[1], [0], [0], [1], [0, 0, 1, 1], [], []>} : vector<256x256xbf16>, vector<256x256xbf16>, vector<256x256xf32> -> vector<256x256xf32>
    %46 = arith.addf %45, %11 : vector<256x256xf32>
    %c0_35 = arith.constant 0 : index
    %c0_36 = arith.constant 0 : index
    %47 = vector.load %arg14[%c0_35, %c0_36] : memref<1x256xf32, #tpu.memory_space<vmem>>, vector<1x256xf32>
    %48 = vector.broadcast %47 : vector<1x256xf32> to vector<256x256xf32>
    %49 = arith.addf %46, %48 : vector<256x256xf32>
    %cst_37 = arith.constant 0.000000e+00 : f32
    %50 = vector.broadcast %cst_37 : f32 to vector<256x256xf32>
    %51 = arith.maximumf %49, %50 : vector<256x256xf32>
    %52 = arith.truncf %51 : vector<256x256xf32> to vector<256x256xbf16>
    %c0_38 = arith.constant 0 : index
    %c0_39 = arith.constant 0 : index
    %53 = vector.load %arg15[%c0_38, %c0_39] : memref<256x256xbf16, #tpu.memory_space<vmem>>, vector<256x256xbf16>
    %cst_40 = arith.constant dense<0.000000e+00> : vector<256x256xf32>
    %54 = tpu.matmul %52, %53, %cst_40 {dimension_numbers = #tpu.dot_dimension_numbers<[1], [0], [0], [1], [0, 0, 1, 1], [], []>} : vector<256x256xbf16>, vector<256x256xbf16>, vector<256x256xf32> -> vector<256x256xf32>
    %c0_41 = arith.constant 0 : index
    %c0_42 = arith.constant 0 : index
    %55 = vector.load %arg16[%c0_41, %c0_42] : memref<1x256xf32, #tpu.memory_space<vmem>>, vector<1x256xf32>
    %56 = vector.broadcast %55 : vector<1x256xf32> to vector<256x256xf32>
    %57 = arith.addf %54, %56 : vector<256x256xf32>
    %cst_43 = arith.constant 0.000000e+00 : f32
    %58 = vector.broadcast %cst_43 : f32 to vector<256x256xf32>
    %59 = arith.maximumf %57, %58 : vector<256x256xf32>
    %60 = arith.truncf %59 : vector<256x256xf32> to vector<256x256xbf16>
    %c0_44 = arith.constant 0 : index
    %c0_45 = arith.constant 0 : index
    %61 = vector.load %arg17[%c0_44, %c0_45] : memref<256x256xbf16, #tpu.memory_space<vmem>>, vector<256x256xbf16>
    %cst_46 = arith.constant dense<0.000000e+00> : vector<256x256xf32>
    %62 = tpu.matmul %60, %61, %cst_46 {dimension_numbers = #tpu.dot_dimension_numbers<[1], [0], [0], [1], [0, 0, 1, 1], [], []>} : vector<256x256xbf16>, vector<256x256xbf16>, vector<256x256xf32> -> vector<256x256xf32>
    %c0_47 = arith.constant 0 : index
    %c0_48 = arith.constant 0 : index
    %63 = vector.load %arg18[%c0_47, %c0_48] : memref<1x256xf32, #tpu.memory_space<vmem>>, vector<1x256xf32>
    %64 = vector.broadcast %63 : vector<1x256xf32> to vector<256x256xf32>
    %65 = arith.addf %62, %64 : vector<256x256xf32>
    %cst_49 = arith.constant 0.000000e+00 : f32
    %66 = vector.broadcast %cst_49 : f32 to vector<256x256xf32>
    %67 = arith.maximumf %65, %66 : vector<256x256xf32>
    %68 = arith.truncf %67 : vector<256x256xf32> to vector<256x256xbf16>
    %c0_50 = arith.constant 0 : index
    %c0_51 = arith.constant 0 : index
    %69 = vector.load %arg19[%c0_50, %c0_51] : memref<256x384xbf16, #tpu.memory_space<vmem>>, vector<256x384xbf16>
    %cst_52 = arith.constant dense<0.000000e+00> : vector<256x384xf32>
    %70 = tpu.matmul %68, %69, %cst_52 {dimension_numbers = #tpu.dot_dimension_numbers<[1], [0], [0], [1], [0, 0, 1, 1], [], []>} : vector<256x256xbf16>, vector<256x384xbf16>, vector<256x384xf32> -> vector<256x384xf32>
    %c0_53 = arith.constant 0 : index
    %c0_54 = arith.constant 0 : index
    %71 = vector.load %arg20[%c0_53, %c0_54] : memref<1x384xf32, #tpu.memory_space<vmem>>, vector<1x384xf32>
    %72 = vector.broadcast %71 : vector<1x384xf32> to vector<256x384xf32>
    %73 = arith.addf %70, %72 : vector<256x384xf32>
    %74 = vector.extract_strided_slice %73 {offsets = [0, 0], sizes = [256, 256], strides = [1, 1]} : vector<256x384xf32> to vector<256x256xf32>
    %75 = arith.truncf %74 : vector<256x256xf32> to vector<256x256xbf16>
    %76 = vector.extract_strided_slice %73 {offsets = [0, 256], sizes = [256, 128], strides = [1, 1]} : vector<256x384xf32> to vector<256x128xf32>
    %c0_55 = arith.constant 0 : index
    %c0_56 = arith.constant 0 : index
    %77 = vector.load %arg21[%c0_55, %c0_56] : memref<256x128xbf16, #tpu.memory_space<vmem>>, vector<256x128xbf16>
    %cst_57 = arith.constant dense<0.000000e+00> : vector<256x128xf32>
    %78 = tpu.matmul %75, %77, %cst_57 {dimension_numbers = #tpu.dot_dimension_numbers<[1], [0], [0], [1], [0, 0, 1, 1], [], []>} : vector<256x256xbf16>, vector<256x128xbf16>, vector<256x128xf32> -> vector<256x128xf32>
    %c0_58 = arith.constant 0 : index
    %c0_59 = arith.constant 0 : index
    %79 = vector.load %arg22[%c0_58, %c0_59] : memref<128x128xbf16, #tpu.memory_space<vmem>>, vector<128x128xbf16>
    %cst_60 = arith.constant dense<0.000000e+00> : vector<256x128xf32>
    %80 = tpu.matmul %1, %79, %cst_60 {dimension_numbers = #tpu.dot_dimension_numbers<[1], [0], [0], [1], [0, 0, 1, 1], [], []>} : vector<256x128xbf16>, vector<128x128xbf16>, vector<256x128xf32> -> vector<256x128xf32>
    %81 = arith.addf %78, %80 : vector<256x128xf32>
    %c0_61 = arith.constant 0 : index
    %c0_62 = arith.constant 0 : index
    %82 = vector.load %arg23[%c0_61, %c0_62] : memref<1x128xf32, #tpu.memory_space<vmem>>, vector<1x128xf32>
    %83 = vector.broadcast %82 : vector<1x128xf32> to vector<256x128xf32>
    %84 = arith.addf %81, %83 : vector<256x128xf32>
    %cst_63 = arith.constant 0.000000e+00 : f32
    %85 = vector.broadcast %cst_63 : f32 to vector<256x128xf32>
    %86 = arith.maximumf %84, %85 : vector<256x128xf32>
    %87 = arith.truncf %86 : vector<256x128xf32> to vector<256x128xbf16>
    %c0_64 = arith.constant 0 : index
    %c0_65 = arith.constant 0 : index
    %88 = vector.load %arg24[%c0_64, %c0_65] : memref<128x128xbf16, #tpu.memory_space<vmem>>, vector<128x128xbf16>
    %cst_66 = arith.constant dense<0.000000e+00> : vector<256x128xf32>
    %89 = tpu.matmul %87, %88, %cst_66 {dimension_numbers = #tpu.dot_dimension_numbers<[1], [0], [0], [1], [0, 0, 1, 1], [], []>} : vector<256x128xbf16>, vector<128x128xbf16>, vector<256x128xf32> -> vector<256x128xf32>
    %c0_67 = arith.constant 0 : index
    %c0_68 = arith.constant 0 : index
    %90 = vector.load %arg25[%c0_67, %c0_68] : memref<1x128xf32, #tpu.memory_space<vmem>>, vector<1x128xf32>
    %91 = vector.broadcast %90 : vector<1x128xf32> to vector<256x128xf32>
    %92 = arith.addf %89, %91 : vector<256x128xf32>
    %93 = arith.negf %92 : vector<256x128xf32>
    %94 = math.exp %93 : vector<256x128xf32>
    %cst_69 = arith.constant 1.000000e+00 : f32
    %95 = vector.broadcast %cst_69 : f32 to vector<256x128xf32>
    %96 = arith.addf %95, %94 : vector<256x128xf32>
    %97 = arith.divf %95, %96 : vector<256x128xf32>
    %98 = tpu.iota {dimensions = array<i32: 1>} : vector<256x128xi32>
    %c3_i32 = arith.constant 3 : i32
    %99 = vector.broadcast %c3_i32 : i32 to vector<256x128xi32>
    %100 = arith.cmpi eq, %98, %99 : vector<256x128xi32>
    %101 = arith.select %100, %76, %97 : vector<256x128xi1>, vector<256x128xf32>
    %c0_70 = arith.constant 0 : index
    %c0_71 = arith.constant 0 : index
    %102 = vector.load %arg26[%c0_70, %c0_71] : memref<256x128xf32, #tpu.memory_space<vmem>>, vector<256x128xf32>
    tpu.vector_store %arg26[%c0_70, %c0_71], %101 {strides = array<i32>} : memref<256x128xf32, #tpu.memory_space<vmem>>, vector<256x128xf32>,
    return
  }
  func.func @transform_0(%arg0: i32) -> (i32, i32) {
    %c0_i32 = arith.constant 0 : i32
    %c0_i32_0 = arith.constant 0 : i32
    return %arg0, %c0_i32 : i32, i32
  }
  func.func @transform_1(%arg0: i32) -> (i32, i32) {
    %c0_i32 = arith.constant 0 : i32
    %c0_i32_0 = arith.constant 0 : i32
    return %arg0, %c0_i32 : i32, i32
  }
  func.func @transform_2(%arg0: i32) -> (i32, i32) {
    %c0_i32 = arith.constant 0 : i32
    %c0_i32_0 = arith.constant 0 : i32
    %c0_i32_1 = arith.constant 0 : i32
    return %c0_i32, %c0_i32_0 : i32, i32
  }
  func.func @transform_3(%arg0: i32) -> (i32, i32) {
    %c0_i32 = arith.constant 0 : i32
    %c0_i32_0 = arith.constant 0 : i32
    %c0_i32_1 = arith.constant 0 : i32
    return %c0_i32, %c0_i32_0 : i32, i32
  }
  func.func @transform_4(%arg0: i32) -> (i32, i32) {
    %c0_i32 = arith.constant 0 : i32
    %c0_i32_0 = arith.constant 0 : i32
    %c0_i32_1 = arith.constant 0 : i32
    return %c0_i32, %c0_i32_0 : i32, i32
  }
  func.func @transform_5(%arg0: i32) -> (i32, i32) {
    %c0_i32 = arith.constant 0 : i32
    %c0_i32_0 = arith.constant 0 : i32
    %c0_i32_1 = arith.constant 0 : i32
    return %c0_i32, %c0_i32_0 : i32, i32
  }
  func.func @transform_6(%arg0: i32) -> (i32, i32) {
    %c0_i32 = arith.constant 0 : i32
    %c0_i32_0 = arith.constant 0 : i32
    %c0_i32_1 = arith.constant 0 : i32
    return %c0_i32, %c0_i32_0 : i32, i32
  }
  func.func @transform_7(%arg0: i32) -> (i32, i32) {
    %c0_i32 = arith.constant 0 : i32
    %c0_i32_0 = arith.constant 0 : i32
    %c0_i32_1 = arith.constant 0 : i32
    return %c0_i32, %c0_i32_0 : i32, i32
  }
  func.func @transform_8(%arg0: i32) -> (i32, i32) {
    %c0_i32 = arith.constant 0 : i32
    %c0_i32_0 = arith.constant 0 : i32
    %c0_i32_1 = arith.constant 0 : i32
    return %c0_i32, %c0_i32_0 : i32, i32
  }
  func.func @transform_9(%arg0: i32) -> (i32, i32) {
    %c0_i32 = arith.constant 0 : i32
    %c0_i32_0 = arith.constant 0 : i32
    %c0_i32_1 = arith.constant 0 : i32
    return %c0_i32, %c0_i32_0 : i32, i32
  }
  func.func @transform_10(%arg0: i32) -> (i32, i32) {
    %c0_i32 = arith.constant 0 : i32
    %c0_i32_0 = arith.constant 0 : i32
    %c0_i32_1 = arith.constant 0 : i32
    return %c0_i32, %c0_i32_0 : i32, i32
  }
  func.func @transform_11(%arg0: i32) -> (i32, i32) {
    %c0_i32 = arith.constant 0 : i32
    %c0_i32_0 = arith.constant 0 : i32
    %c0_i32_1 = arith.constant 0 : i32
    return %c0_i32, %c0_i32_0 : i32, i32
  }
  func.func @transform_12(%arg0: i32) -> (i32, i32) {
    %c0_i32 = arith.constant 0 : i32
    %c0_i32_0 = arith.constant 0 : i32
    %c0_i32_1 = arith.constant 0 : i32
    return %c0_i32, %c0_i32_0 : i32, i32
  }
  func.func @transform_13(%arg0: i32) -> (i32, i32) {
    %c0_i32 = arith.constant 0 : i32
    %c0_i32_0 = arith.constant 0 : i32
    %c0_i32_1 = arith.constant 0 : i32
    return %c0_i32, %c0_i32_0 : i32, i32
  }
  func.func @transform_14(%arg0: i32) -> (i32, i32) {
    %c0_i32 = arith.constant 0 : i32
    %c0_i32_0 = arith.constant 0 : i32
    %c0_i32_1 = arith.constant 0 : i32
    return %c0_i32, %c0_i32_0 : i32, i32
  }
  func.func @transform_15(%arg0: i32) -> (i32, i32) {
    %c0_i32 = arith.constant 0 : i32
    %c0_i32_0 = arith.constant 0 : i32
    %c0_i32_1 = arith.constant 0 : i32
    return %c0_i32, %c0_i32_0 : i32, i32
  }
  func.func @transform_16(%arg0: i32) -> (i32, i32) {
    %c0_i32 = arith.constant 0 : i32
    %c0_i32_0 = arith.constant 0 : i32
    %c0_i32_1 = arith.constant 0 : i32
    return %c0_i32, %c0_i32_0 : i32, i32
  }
  func.func @transform_17(%arg0: i32) -> (i32, i32) {
    %c0_i32 = arith.constant 0 : i32
    %c0_i32_0 = arith.constant 0 : i32
    %c0_i32_1 = arith.constant 0 : i32
    return %c0_i32, %c0_i32_0 : i32, i32
  }
  func.func @transform_18(%arg0: i32) -> (i32, i32) {
    %c0_i32 = arith.constant 0 : i32
    %c0_i32_0 = arith.constant 0 : i32
    %c0_i32_1 = arith.constant 0 : i32
    return %c0_i32, %c0_i32_0 : i32, i32
  }
  func.func @transform_19(%arg0: i32) -> (i32, i32) {
    %c0_i32 = arith.constant 0 : i32
    %c0_i32_0 = arith.constant 0 : i32
    %c0_i32_1 = arith.constant 0 : i32
    return %c0_i32, %c0_i32_0 : i32, i32
  }
  func.func @transform_20(%arg0: i32) -> (i32, i32) {
    %c0_i32 = arith.constant 0 : i32
    %c0_i32_0 = arith.constant 0 : i32
    %c0_i32_1 = arith.constant 0 : i32
    return %c0_i32, %c0_i32_0 : i32, i32
  }
  func.func @transform_21(%arg0: i32) -> (i32, i32) {
    %c0_i32 = arith.constant 0 : i32
    %c0_i32_0 = arith.constant 0 : i32
    %c0_i32_1 = arith.constant 0 : i32
    return %c0_i32, %c0_i32_0 : i32, i32
  }
  func.func @transform_22(%arg0: i32) -> (i32, i32) {
    %c0_i32 = arith.constant 0 : i32
    %c0_i32_0 = arith.constant 0 : i32
    %c0_i32_1 = arith.constant 0 : i32
    return %c0_i32, %c0_i32_0 : i32, i32
  }
  func.func @transform_23(%arg0: i32) -> (i32, i32) {
    %c0_i32 = arith.constant 0 : i32
    %c0_i32_0 = arith.constant 0 : i32
    %c0_i32_1 = arith.constant 0 : i32
    return %c0_i32, %c0_i32_0 : i32, i32
  }
  func.func @transform_24(%arg0: i32) -> (i32, i32) {
    %c0_i32 = arith.constant 0 : i32
    %c0_i32_0 = arith.constant 0 : i32
    %c0_i32_1 = arith.constant 0 : i32
    return %c0_i32, %c0_i32_0 : i32, i32
  }
  func.func @transform_25(%arg0: i32) -> (i32, i32) {
    %c0_i32 = arith.constant 0 : i32
    %c0_i32_0 = arith.constant 0 : i32
    return %arg0, %c0_i32 : i32, i32
  }
}

</mosaic_0001>

<llo_original>
// kernel: nerf_forward_pallas.1
$region0: #{nerf_forward_pallas.1}
  #allocation0 [shape = 'u32[]', space=smem, size = 0x4, offset = 0x4, fixed_abs, tag = 'smem constant byte address 0x4 - core index']
  #allocation1 [shape = 'u32[144,128]{1,0:T(1,128)}', space=vmem, size = 0x12000, scoped, tag = 'internal scratch']
  %s0 = inlined_call_operand.vmem [shape: bf16[2048,128], index: 0, kind: input, shape index: {}]
  %s1 = inlined_call_operand.vmem [shape: bf16[2048,128], index: 1, kind: input, shape index: {}]
  %s2 = inlined_call_operand.vmem [shape: bf16[128,512], index: 2, kind: input, shape index: {}]
  %s3 = inlined_call_operand.vmem [shape: f32[1,256], index: 3, kind: input, shape index: {}]
  %s4 = inlined_call_operand.vmem [shape: bf16[256,256], index: 4, kind: input, shape index: {}]
  %s5 = inlined_call_operand.vmem [shape: f32[1,256], index: 5, kind: input, shape index: {}]
  %s6 = inlined_call_operand.vmem [shape: bf16[256,256], index: 6, kind: input, shape index: {}]
  %s7 = inlined_call_operand.vmem [shape: f32[1,256], index: 7, kind: input, shape index: {}]
  %s8 = inlined_call_operand.vmem [shape: bf16[256,256], index: 8, kind: input, shape index: {}]
  %s9 = inlined_call_operand.vmem [shape: f32[1,256], index: 9, kind: input, shape index: {}]
  %s10 = inlined_call_operand.vmem [shape: bf16[256,256], index: 10, kind: input, shape index: {}]
  %s11 = inlined_call_operand.vmem [shape: f32[1,256], index: 11, kind: input, shape index: {}]
  %s12 = inlined_call_operand.vmem [shape: bf16[256,256], index: 12, kind: input, shape index: {}]
  %s13 = inlined_call_operand.vmem [shape: f32[1,256], index: 13, kind: input, shape index: {}]
  %s14 = inlined_call_operand.vmem [shape: bf16[256,256], index: 14, kind: input, shape index: {}]
  %s15 = inlined_call_operand.vmem [shape: f32[1,256], index: 15, kind: input, shape index: {}]
  %s16 = inlined_call_operand.vmem [shape: bf16[256,256], index: 16, kind: input, shape index: {}]
  %s17 = inlined_call_operand.vmem [shape: f32[1,256], index: 17, kind: input, shape index: {}]
  %s18 = inlined_call_operand.vmem [shape: bf16[256,384], index: 18, kind: input, shape index: {}]
  %s19 = inlined_call_operand.vmem [shape: f32[1,384], index: 19, kind: input, shape index: {}]
  %s20 = inlined_call_operand.vmem [shape: bf16[256,128], index: 20, kind: input, shape index: {}]
  %s21 = inlined_call_operand.vmem [shape: bf16[128,128], index: 21, kind: input, shape index: {}]
  %s22 = inlined_call_operand.vmem [shape: f32[1,128], index: 22, kind: input, shape index: {}]
  %s23 = inlined_call_operand.vmem [shape: bf16[128,128], index: 23, kind: input, shape index: {}]
  %s24 = inlined_call_operand.vmem [shape: f32[1,128], index: 24, kind: input, shape index: {}]
  %s25 = inlined_call_operand.vmem [shape: f32[2048,128], index: 25, kind: output, shape index: {}]
  %s26 = sld [smem:[#allocation0]]
  $region133: #{nerf_forward_pallas.1} parent=0
    _
  %s28 = ssub.s32 1, %s26
  %s29 = scalar_select 0, %s28, %s26
  loop: start=0, step=1, limit=10
  $region2: #{nerf_forward_pallas.1} parent=0 // loop_pre_header
    _
  $region3: #{nerf_forward_pallas.1} parent=0 // loop_header
    %s31 = sphi 0, %s35
    %p32 = scmp.ge.s32.totalorder %s31, 10
    %s41 = sphi 0, %s43
    %s44 = sphi 0, %s41
    %s45 = sphi 0, %s44
    %s61 = sphi 0, %s45
    %s67 = sphi 0, %s69
    %s70 = sphi 0, %s67
    %s71 = sphi 0, %s70
    %s87 = sphi 0, %s71
    %s91 = sphi 0, %s91
    %s93 = sphi 0, %s91
    %s94 = sphi 0, %s93
    %s108 = sphi 0, %s94
    %s112 = sphi 0, %s112
    %s114 = sphi 0, %s112
    %s115 = sphi 0, %s114
    %s129 = sphi 0, %s115
    %s133 = sphi 0, %s133
    %s135 = sphi 0, %s133
    %s136 = sphi 0, %s135
    %s150 = sphi 0, %s136
    %s154 = sphi 0, %s154
    %s156 = sphi 0, %s154
    %s157 = sphi 0, %s156
    %s171 = sphi 0, %s157
    %s175 = sphi 0, %s175
    %s177 = sphi 0, %s175
    %s178 = sphi 0, %s177
    %s192 = sphi 0, %s178
    %s196 = sphi 0, %s196
    %s198 = sphi 0, %s196
    %s199 = sphi 0, %s198
    %s213 = sphi 0, %s199
    %s217 = sphi 0, %s217
    %s219 = sphi 0, %s217
    %s220 = sphi 0, %s219
    %s234 = sphi 0, %s220
    %s238 = sphi 0, %s238
    %s240 = sphi 0, %s238
    %s241 = sphi 0, %s240
    %s255 = sphi 0, %s241
    %s259 = sphi 0, %s259
    %s261 = sphi 0, %s259
    %s262 = sphi 0, %s261
    %s276 = sphi 0, %s262
    %s280 = sphi 0, %s280
    %s282 = sphi 0, %s280
    %s283 = sphi 0, %s282
    %s297 = sphi 0, %s283
    %s301 = sphi 0, %s301
    %s303 = sphi 0, %s301
    %s304 = sphi 0, %s303
    %s318 = sphi 0, %s304
    %s322 = sphi 0, %s322
    %s324 = sphi 0, %s322
    %s325 = sphi 0, %s324
    %s339 = sphi 0, %s325
    %s343 = sphi 0, %s343
    %s345 = sphi 0, %s343
    %s346 = sphi 0, %s345
    %s360 = sphi 0, %s346
    %s364 = sphi 0, %s364
    %s366 = sphi 0, %s364
    %s367 = sphi 0, %s366
    %s381 = sphi 0, %s367
    %s385 = sphi 0, %s385
    %s387 = sphi 0, %s385
    %s388 = sphi 0, %s387
    %s402 = sphi 0, %s388
    %s406 = sphi 0, %s406
    %s408 = sphi 0, %s406
    %s409 = sphi 0, %s408
    %s423 = sphi 0, %s409
    %s427 = sphi 0, %s427
    %s429 = sphi 0, %s427
    %s430 = sphi 0, %s429
    %s444 = sphi 0, %s430
    %s448 = sphi 0, %s448
    %s450 = sphi 0, %s448
    %s451 = sphi 0, %s450
    %s465 = sphi 0, %s451
    %s469 = sphi 0, %s469
    %s471 = sphi 0, %s469
    %s472 = sphi 0, %s471
    %s486 = sphi 0, %s472
    %s490 = sphi 0, %s490
    %s492 = sphi 0, %s490
    %s493 = sphi 0, %s492
    %s507 = sphi 0, %s493
    %s511 = sphi 0, %s511
    %s513 = sphi 0, %s511
    %s514 = sphi 0, %s513
    %s528 = sphi 0, %s514
    %s532 = sphi 0, %s532
    %s534 = sphi 0, %s532
    %s535 = sphi 0, %s534
    %s549 = sphi 0, %s535
    %s553 = sphi 0, %s553
    %s555 = sphi 0, %s553
    %s556 = sphi 0, %s555
    %s570 = sphi 0, %s556
    %s576 = sphi 0, %s578
    %s579 = sphi 0, %s576
    %s580 = sphi 0, %s579
    %s596 = sphi 0, %s580
  $region4: #{nerf_forward_pallas.1} parent=0 // loop_header_branch
    %34 = sbr.rel (%p32) target = $region8
  $region5: #{nerf_forward_pallas.1} parent=0 // loop_body
    %s36 = ssub.s32 %s31, 1
    %s37 = ssub.s32 %s31, 2
    %s38 = sadd.s32 %s31, 1
    %s39 = ssub.s32 %s31, %s38
    %p40 = scmp.eq.s32.totalorder %s39, 0
    %s42 = sadd.s32 %s41, 1
    %s43 = scalar_select %p40, %s41, %s42
    %p46 = pneg %p40
    %p47 = scmp.eq.s32.totalorder %s31, 7
    %p48 = por %p46, %p47
    %p49 = scmp.ne.s32.totalorder %s41, %s44
    %p50 = scmp.eq.s32.totalorder %s31, 0
    %p51 = por %p49, %p50
    %p52 = scmp.ne.s32.totalorder %s41, %s44
    %p53 = scmp.eq.s32.totalorder %s36, 7
    %p54 = por %p52, %p53
    %p55 = scmp.ne.s32.totalorder %s44, %s45
    %p56 = scmp.eq.s32.totalorder %s36, 0
    %p57 = por %p55, %p56
    %p58 = scmp.ne.s32.totalorder %s44, %s45
    %p59 = scmp.eq.s32.totalorder %s37, 7
    %p60 = por %p58, %p59
    %p62 = scmp.ne.s32.totalorder %s45, %s61
    %p63 = scmp.eq.s32.totalorder %s37, 0
    %p64 = por %p62, %p63
    %s65 = ssub.s32 %s31, %s38
    %p66 = scmp.eq.s32.totalorder %s65, 0
    %s68 = sadd.s32 %s67, 1
    %s69 = scalar_select %p66, %s67, %s68
    %p72 = pneg %p66
    %p73 = scmp.eq.s32.totalorder %s31, 7
    %p74 = por %p72, %p73
    %p75 = scmp.ne.s32.totalorder %s67, %s70
    %p76 = scmp.eq.s32.totalorder %s31, 0
    %p77 = por %p75, %p76
    %p78 = scmp.ne.s32.totalorder %s67, %s70
    %p79 = scmp.eq.s32.totalorder %s36, 7
    %p80 = por %p78, %p79
    %p81 = scmp.ne.s32.totalorder %s70, %s71
    %p82 = scmp.eq.s32.totalorder %s36, 0
    %p83 = por %p81, %p82
    %p84 = scmp.ne.s32.totalorder %s70, %s71
    %p85 = scmp.eq.s32.totalorder %s37, 7
    %p86 = por %p84, %p85
    %p88 = scmp.ne.s32.totalorder %s71, %s87
    %p89 = scmp.eq.s32.totalorder %s37, 0
    %p90 = por %p88, %p89
    %s92 = sadd.s32 %s91, 1
    %p95 = scmp.eq.s32.totalorder %s31, 7
    %p96 = scmp.ne.s32.totalorder %s91, %s93
    %p97 = scmp.eq.s32.totalorder %s31, 0
    %p98 = por %p96, %p97
    %p99 = scmp.ne.s32.totalorder %s91, %s93
    %p100 = scmp.eq.s32.totalorder %s36, 7
    %p101 = por %p99, %p100
    %p102 = scmp.ne.s32.totalorder %s93, %s94
    %p103 = scmp.eq.s32.totalorder %s36, 0
    %p104 = por %p102, %p103
    %p105 = scmp.ne.s32.totalorder %s93, %s94
    %p106 = scmp.eq.s32.totalorder %s37, 7
    %p107 = por %p105, %p106
    %p109 = scmp.ne.s32.totalorder %s94, %s108
    %p110 = scmp.eq.s32.totalorder %s37, 0
    %p111 = por %p109, %p110
    %s113 = sadd.s32 %s112, 1
    %p116 = scmp.eq.s32.totalorder %s31, 7
    %p117 = scmp.ne.s32.totalorder %s112, %s114
    %p118 = scmp.eq.s32.totalorder %s31, 0
    %p119 = por %p117, %p118
    %p120 = scmp.ne.s32.totalorder %s112, %s114
    %p121 = scmp.eq.s32.totalorder %s36, 7
    %p122 = por %p120, %p121
    %p123 = scmp.ne.s32.totalorder %s114, %s115
    %p124 = scmp.eq.s32.totalorder %s36, 0
    %p125 = por %p123, %p124
    %p126 = scmp.ne.s32.totalorder %s114, %s115
    %p127 = scmp.eq.s32.totalorder %s37, 7
    %p128 = por %p126, %p127
    %p130 = scmp.ne.s32.totalorder %s115, %s129
    %p131 = scmp.eq.s32.totalorder %s37, 0
    %p132 = por %p130, %p131
    %s134 = sadd.s32 %s133, 1
    %p137 = scmp.eq.s32.totalorder %s31, 7
    %p138 = scmp.ne.s32.totalorder %s133, %s135
    %p139 = scmp.eq.s32.totalorder %s31, 0
    %p140 = por %p138, %p139
    %p141 = scmp.ne.s32.totalorder %s133, %s135
    %p142 = scmp.eq.s32.totalorder %s36, 7
    %p143 = por %p141, %p142
    %p144 = scmp.ne.s32.totalorder %s135, %s136
    %p145 = scmp.eq.s32.totalorder %s36, 0
    %p146 = por %p144, %p145
    %p147 = scmp.ne.s32.totalorder %s135, %s136
    %p148 = scmp.eq.s32.totalorder %s37, 7
    %p149 = por %p147, %p148
    %p151 = scmp.ne.s32.totalorder %s136, %s150
    %p152 = scmp.eq.s32.totalorder %s37, 0
    %p153 = por %p151, %p152
    %s155 = sadd.s32 %s154, 1
    %p158 = scmp.eq.s32.totalorder %s31, 7
    %p159 = scmp.ne.s32.totalorder %s154, %s156
    %p160 = scmp.eq.s32.totalorder %s31, 0
    %p161 = por %p159, %p160
    %p162 = scmp.ne.s32.totalorder %s154, %s156
    %p163 = scmp.eq.s32.totalorder %s36, 7
    %p164 = por %p162, %p163
    %p165 = scmp.ne.s32.totalorder %s156, %s157
    %p166 = scmp.eq.s32.totalorder %s36, 0
    %p167 = por %p165, %p166
    %p168 = scmp.ne.s32.totalorder %s156, %s157
    %p169 = scmp.eq.s32.totalorder %s37, 7
    %p170 = por %p168, %p169
    %p172 = scmp.ne.s32.totalorder %s157, %s171
    %p173 = scmp.eq.s32.totalorder %s37, 0
    %p174 = por %p172, %p173
    %s176 = sadd.s32 %s175, 1
    %p179 = scmp.eq.s32.totalorder %s31, 7
    %p180 = scmp.ne.s32.totalorder %s175, %s177
    %p181 = scmp.eq.s32.totalorder %s31, 0
    %p182 = por %p180, %p181
    %p183 = scmp.ne.s32.totalorder %s175, %s177
    %p184 = scmp.eq.s32.totalorder %s36, 7
    %p185 = por %p183, %p184
    %p186 = scmp.ne.s32.totalorder %s177, %s178
    %p187 = scmp.eq.s32.totalorder %s36, 0
    %p188 = por %p186, %p187
    %p189 = scmp.ne.s32.totalorder %s177, %s178
    %p190 = scmp.eq.s32.totalorder %s37, 7
    %p191 = por %p189, %p190
    %p193 = scmp.ne.s32.totalorder %s178, %s192
    %p194 = scmp.eq.s32.totalorder %s37, 0
    %p195 = por %p193, %p194
    %s197 = sadd.s32 %s196, 1
    %p200 = scmp.eq.s32.totalorder %s31, 7
    %p201 = scmp.ne.s32.totalorder %s196, %s198
    %p202 = scmp.eq.s32.totalorder %s31, 0
    %p203 = por %p201, %p202
    %p204 = scmp.ne.s32.totalorder %s196, %s198
    %p205 = scmp.eq.s32.totalorder %s36, 7
    %p206 = por %p204, %p205
    %p207 = scmp.ne.s32.totalorder %s198, %s199
    %p208 = scmp.eq.s32.totalorder %s36, 0
    %p209 = por %p207, %p208
    %p210 = scmp.ne.s32.totalorder %s198, %s199
    %p211 = scmp.eq.s32.totalorder %s37, 7
    %p212 = por %p210, %p211
    %p214 = scmp.ne.s32.totalorder %s199, %s213
    %p215 = scmp.eq.s32.totalorder %s37, 0
    %p216 = por %p214, %p215
    %s218 = sadd.s32 %s217, 1
    %p221 = scmp.eq.s32.totalorder %s31, 7
    %p222 = scmp.ne.s32.totalorder %s217, %s219
    %p223 = scmp.eq.s32.totalorder %s31, 0
    %p224 = por %p222, %p223
    %p225 = scmp.ne.s32.totalorder %s217, %s219
    %p226 = scmp.eq.s32.totalorder %s36, 7
    %p227 = por %p225, %p226
    %p228 = scmp.ne.s32.totalorder %s219, %s220
    %p229 = scmp.eq.s32.totalorder %s36, 0
    %p230 = por %p228, %p229
    %p231 = scmp.ne.s32.totalorder %s219, %s220
    %p232 = scmp.eq.s32.totalorder %s37, 7
    %p233 = por %p231, %p232
    %p235 = scmp.ne.s32.totalorder %s220, %s234
    %p236 = scmp.eq.s32.totalorder %s37, 0
    %p237 = por %p235, %p236
    %s239 = sadd.s32 %s238, 1
    %p242 = scmp.eq.s32.totalorder %s31, 7
    %p243 = scmp.ne.s32.totalorder %s238, %s240
    %p244 = scmp.eq.s32.totalorder %s31, 0
    %p245 = por %p243, %p244
    %p246 = scmp.ne.s32.totalorder %s238, %s240
    %p247 = scmp.eq.s32.totalorder %s36, 7
    %p248 = por %p246, %p247
    %p249 = scmp.ne.s32.totalorder %s240, %s241
    %p250 = scmp.eq.s32.totalorder %s36, 0
    %p251 = por %p249, %p250
    %p252 = scmp.ne.s32.totalorder %s240, %s241
    %p253 = scmp.eq.s32.totalorder %s37, 7
    %p254 = por %p252, %p253
    %p256 = scmp.ne.s32.totalorder %s241, %s255
    %p257 = scmp.eq.s32.totalorder %s37, 0
    %p258 = por %p256, %p257
    %s260 = sadd.s32 %s259, 1
    %p263 = scmp.eq.s32.totalorder %s31, 7
    %p264 = scmp.ne.s32.totalorder %s259, %s261
    %p265 = scmp.eq.s32.totalorder %s31, 0
    %p266 = por %p264, %p265
    %p267 = scmp.ne.s32.totalorder %s259, %s261
    %p268 = scmp.eq.s32.totalorder %s36, 7
    %p269 = por %p267, %p268
    %p270 = scmp.ne.s32.totalorder %s261, %s262
    %p271 = scmp.eq.s32.totalorder %s36, 0
    %p272 = por %p270, %p271
    %p273 = scmp.ne.s32.totalorder %s261, %s262
    %p274 = scmp.eq.s32.totalorder %s37, 7
    %p275 = por %p273, %p274
    %p277 = scmp.ne.s32.totalorder %s262, %s276
    %p278 = scmp.eq.s32.totalorder %s37, 0
    %p279 = por %p277, %p278
    %s281 = sadd.s32 %s280, 1
    %p284 = scmp.eq.s32.totalorder %s31, 7
    %p285 = scmp.ne.s32.totalorder %s280, %s282
    %p286 = scmp.eq.s32.totalorder %s31, 0
    %p287 = por %p285, %p286
    %p288 = scmp.ne.s32.totalorder %s280, %s282
    %p289 = scmp.eq.s32.totalorder %s36, 7
    %p290 = por %p288, %p289
    %p291 = scmp.ne.s32.totalorder %s282, %s283
    %p292 = scmp.eq.s32.totalorder %s36, 0
    %p293 = por %p291, %p292
    %p294 = scmp.ne.s32.totalorder %s282, %s283
    %p295 = scmp.eq.s32.totalorder %s37, 7
    %p296 = por %p294, %p295
    %p298 = scmp.ne.s32.totalorder %s283, %s297
    %p299 = scmp.eq.s32.totalorder %s37, 0
    %p300 = por %p298, %p299
    %s302 = sadd.s32 %s301, 1
    %p305 = scmp.eq.s32.totalorder %s31, 7
    %p306 = scmp.ne.s32.totalorder %s301, %s303
    %p307 = scmp.eq.s32.totalorder %s31, 0
    %p308 = por %p306, %p307
    %p309 = scmp.ne.s32.totalorder %s301, %s303
    %p310 = scmp.eq.s32.totalorder %s36, 7
    %p311 = por %p309, %p310
    %p312 = scmp.ne.s32.totalorder %s303, %s304
    %p313 = scmp.eq.s32.totalorder %s36, 0
    %p314 = por %p312, %p313
    %p315 = scmp.ne.s32.totalorder %s303, %s304
    %p316 = scmp.eq.s32.totalorder %s37, 7
    %p317 = por %p315, %p316
    %p319 = scmp.ne.s32.totalorder %s304, %s318
    %p320 = scmp.eq.s32.totalorder %s37, 0
    %p321 = por %p319, %p320
    %s323 = sadd.s32 %s322, 1
    %p326 = scmp.eq.s32.totalorder %s31, 7
    %p327 = scmp.ne.s32.totalorder %s322, %s324
    %p328 = scmp.eq.s32.totalorder %s31, 0
    %p329 = por %p327, %p328
    %p330 = scmp.ne.s32.totalorder %s322, %s324
    %p331 = scmp.eq.s32.totalorder %s36, 7
    %p332 = por %p330, %p331
    %p333 = scmp.ne.s32.totalorder %s324, %s325
    %p334 = scmp.eq.s32.totalorder %s36, 0
    %p335 = por %p333, %p334
    %p336 = scmp.ne.s32.totalorder %s324, %s325
    %p337 = scmp.eq.s32.totalorder %s37, 7
    %p338 = por %p336, %p337
    %p340 = scmp.ne.s32.totalorder %s325, %s339
    %p341 = scmp.eq.s32.totalorder %s37, 0
    %p342 = por %p340, %p341
    %s344 = sadd.s32 %s343, 1
    %p347 = scmp.eq.s32.totalorder %s31, 7
    %p348 = scmp.ne.s32.totalorder %s343, %s345
    %p349 = scmp.eq.s32.totalorder %s31, 0
    %p350 = por %p348, %p349
    %p351 = scmp.ne.s32.totalorder %s343, %s345
    %p352 = scmp.eq.s32.totalorder %s36, 7
    %p353 = por %p351, %p352
    %p354 = scmp.ne.s32.totalorder %s345, %s346
    %p355 = scmp.eq.s32.totalorder %s36, 0
    %p356 = por %p354, %p355
    %p357 = scmp.ne.s32.totalorder %s345, %s346
    %p358 = scmp.eq.s32.totalorder %s37, 7
    %p359 = por %p357, %p358
    %p361 = scmp.ne.s32.totalorder %s346, %s360
    %p362 = scmp.eq.s32.totalorder %s37, 0
    %p363 = por %p361, %p362
    %s365 = sadd.s32 %s364, 1
    %p368 = scmp.eq.s32.totalorder %s31, 7
    %p369 = scmp.ne.s32.totalorder %s364, %s366
    %p370 = scmp.eq.s32.totalorder %s31, 0
    %p371 = por %p369, %p370
    %p372 = scmp.ne.s32.totalorder %s364, %s366
    %p373 = scmp.eq.s32.totalorder %s36, 7
    %p374 = por %p372, %p373
    %p375 = scmp.ne.s32.totalorder %s366, %s367
    %p376 = scmp.eq.s32.totalorder %s36, 0
    %p377 = por %p375, %p376
    %p378 = scmp.ne.s32.totalorder %s366, %s367
    %p379 = scmp.eq.s32.totalorder %s37, 7
    %p380 = por %p378, %p379
    %p382 = scmp.ne.s32.totalorder %s367, %s381
    %p383 = scmp.eq.s32.totalorder %s37, 0
    %p384 = por %p382, %p383
    %s386 = sadd.s32 %s385, 1
    %p389 = scmp.eq.s32.totalorder %s31, 7
    %p390 = scmp.ne.s32.totalorder %s385, %s387
    %p391 = scmp.eq.s32.totalorder %s31, 0
    %p392 = por %p390, %p391
    %p393 = scmp.ne.s32.totalorder %s385, %s387
    %p394 = scmp.eq.s32.totalorder %s36, 7
    %p395 = por %p393, %p394
    %p396 = scmp.ne.s32.totalorder %s387, %s388
    %p397 = scmp.eq.s32.totalorder %s36, 0
    %p398 = por %p396, %p397
    %p399 = scmp.ne.s32.totalorder %s387, %s388
    %p400 = scmp.eq.s32.totalorder %s37, 7
    %p401 = por %p399, %p400
    %p403 = scmp.ne.s32.totalorder %s388, %s402
    %p404 = scmp.eq.s32.totalorder %s37, 0
    %p405 = por %p403, %p404
    %s407 = sadd.s32 %s406, 1
    %p410 = scmp.eq.s32.totalorder %s31, 7
    %p411 = scmp.ne.s32.totalorder %s406, %s408
    %p412 = scmp.eq.s32.totalorder %s31, 0
    %p413 = por %p411, %p412
    %p414 = scmp.ne.s32.totalorder %s406, %s408
    %p415 = scmp.eq.s32.totalorder %s36, 7
    %p416 = por %p414, %p415
    %p417 = scmp.ne.s32.totalorder %s408, %s409
    %p418 = scmp.eq.s32.totalorder %s36, 0
    %p419 = por %p417, %p418
    %p420 = scmp.ne.s32.totalorder %s408, %s409
    %p421 = scmp.eq.s32.totalorder %s37, 7
    %p422 = por %p420, %p421
    %p424 = scmp.ne.s32.totalorder %s409, %s423
    %p425 = scmp.eq.s32.totalorder %s37, 0
    %p426 = por %p424, %p425
    %s428 = sadd.s32 %s427, 1
    %p431 = scmp.eq.s32.totalorder %s31, 7
    %p432 = scmp.ne.s32.totalorder %s427, %s429
    %p433 = scmp.eq.s32.totalorder %s31, 0
    %p434 = por %p432, %p433
    %p435 = scmp.ne.s32.totalorder %s427, %s429
    %p436 = scmp.eq.s32.totalorder %s36, 7
    %p437 = por %p435, %p436
    %p438 = scmp.ne.s32.totalorder %s429, %s430
    %p439 = scmp.eq.s32.totalorder %s36, 0
    %p440 = por %p438, %p439
    %p441 = scmp.ne.s32.totalorder %s429, %s430
    %p442 = scmp.eq.s32.totalorder %s37, 7
    %p443 = por %p441, %p442
    %p445 = scmp.ne.s32.totalorder %s430, %s444
    %p446 = scmp.eq.s32.totalorder %s37, 0
    %p447 = por %p445, %p446
    %s449 = sadd.s32 %s448, 1
    %p452 = scmp.eq.s32.totalorder %s31, 7
    %p453 = scmp.ne.s32.totalorder %s448, %s450
    %p454 = scmp.eq.s32.totalorder %s31, 0
    %p455 = por %p453, %p454
    %p456 = scmp.ne.s32.totalorder %s448, %s450
    %p457 = scmp.eq.s32.totalorder %s36, 7
    %p458 = por %p456, %p457
    %p459 = scmp.ne.s32.totalorder %s450, %s451
    %p460 = scmp.eq.s32.totalorder %s36, 0
    %p461 = por %p459, %p460
    %p462 = scmp.ne.s32.totalorder %s450, %s451
    %p463 = scmp.eq.s32.totalorder %s37, 7
    %p464 = por %p462, %p463
    %p466 = scmp.ne.s32.totalorder %s451, %s465
    %p467 = scmp.eq.s32.totalorder %s37, 0
    %p468 = por %p466, %p467
    %s470 = sadd.s32 %s469, 1
    %p473 = scmp.eq.s32.totalorder %s31, 7
    %p474 = scmp.ne.s32.totalorder %s469, %s471
    %p475 = scmp.eq.s32.totalorder %s31, 0
    %p476 = por %p474, %p475
    %p477 = scmp.ne.s32.totalorder %s469, %s471
    %p478 = scmp.eq.s32.totalorder %s36, 7
    %p479 = por %p477, %p478
    %p480 = scmp.ne.s32.totalorder %s471, %s472
    %p481 = scmp.eq.s32.totalorder %s36, 0
    %p482 = por %p480, %p481
    %p483 = scmp.ne.s32.totalorder %s471, %s472
    %p484 = scmp.eq.s32.totalorder %s37, 7
    %p485 = por %p483, %p484
    %p487 = scmp.ne.s32.totalorder %s472, %s486
    %p488 = scmp.eq.s32.totalorder %s37, 0
    %p489 = por %p487, %p488
    %s491 = sadd.s32 %s490, 1
    %p494 = scmp.eq.s32.totalorder %s31, 7
    %p495 = scmp.ne.s32.totalorder %s490, %s492
    %p496 = scmp.eq.s32.totalorder %s31, 0
    %p497 = por %p495, %p496
    %p498 = scmp.ne.s32.totalorder %s490, %s492
    %p499 = scmp.eq.s32.totalorder %s36, 7
    %p500 = por %p498, %p499
    %p501 = scmp.ne.s32.totalorder %s492, %s493
    %p502 = scmp.eq.s32.totalorder %s36, 0
    %p503 = por %p501, %p502
    %p504 = scmp.ne.s32.totalorder %s492, %s493
    %p505 = scmp.eq.s32.totalorder %s37, 7
    %p506 = por %p504, %p505
    %p508 = scmp.ne.s32.totalorder %s493, %s507
    %p509 = scmp.eq.s32.totalorder %s37, 0
    %p510 = por %p508, %p509
    %s512 = sadd.s32 %s511, 1
    %p515 = scmp.eq.s32.totalorder %s31, 7
    %p516 = scmp.ne.s32.totalorder %s511, %s513
    %p517 = scmp.eq.s32.totalorder %s31, 0
    %p518 = por %p516, %p517
    %p519 = scmp.ne.s32.totalorder %s511, %s513
    %p520 = scmp.eq.s32.totalorder %s36, 7
    %p521 = por %p519, %p520
    %p522 = scmp.ne.s32.totalorder %s513, %s514
    %p523 = scmp.eq.s32.totalorder %s36, 0
    %p524 = por %p522, %p523
    %p525 = scmp.ne.s32.totalorder %s513, %s514
    %p526 = scmp.eq.s32.totalorder %s37, 7
    %p527 = por %p525, %p526
    %p529 = scmp.ne.s32.totalorder %s514, %s528
    %p530 = scmp.eq.s32.totalorder %s37, 0
    %p531 = por %p529, %p530
    %s533 = sadd.s32 %s532, 1
    %p536 = scmp.eq.s32.totalorder %s31, 7
    %p537 = scmp.ne.s32.totalorder %s532, %s534
    %p538 = scmp.eq.s32.totalorder %s31, 0
    %p539 = por %p537, %p538
    %p540 = scmp.ne.s32.totalorder %s532, %s534
    %p541 = scmp.eq.s32.totalorder %s36, 7
    %p542 = por %p540, %p541
    %p543 = scmp.ne.s32.totalorder %s534, %s535
    %p544 = scmp.eq.s32.totalorder %s36, 0
    %p545 = por %p543, %p544
    %p546 = scmp.ne.s32.totalorder %s534, %s535
    %p547 = scmp.eq.s32.totalorder %s37, 7
    %p548 = por %p546, %p547
    %p550 = scmp.ne.s32.totalorder %s535, %s549
    %p551 = scmp.eq.s32.totalorder %s37, 0
    %p552 = por %p550, %p551
    %s554 = sadd.s32 %s553, 1
    %p557 = scmp.eq.s32.totalorder %s31, 7
    %p558 = scmp.ne.s32.totalorder %s553, %s555
    %p559 = scmp.eq.s32.totalorder %s31, 0
    %p560 = por %p558, %p559
    %p561 = scmp.ne.s32.totalorder %s553, %s555
    %p562 = scmp.eq.s32.totalorder %s36, 7
    %p563 = por %p561, %p562
    %p564 = scmp.ne.s32.totalorder %s555, %s556
    %p565 = scmp.eq.s32.totalorder %s36, 0
    %p566 = por %p564, %p565
    %p567 = scmp.ne.s32.totalorder %s555, %s556
    %p568 = scmp.eq.s32.totalorder %s37, 7
    %p569 = por %p567, %p568
    %p571 = scmp.ne.s32.totalorder %s556, %s570
    %p572 = scmp.eq.s32.totalorder %s37, 0
    %p573 = por %p571, %p572
    %s574 = ssub.s32 %s31, %s38
    %p575 = scmp.eq.s32.totalorder %s574, 0
    %s577 = sadd.s32 %s576, 1
    %s578 = scalar_select %p575, %s576, %s577
    %p581 = pneg %p575
    %p582 = scmp.eq.s32.totalorder %s31, 7
    %p583 = por %p581, %p582
    %p584 = scmp.ne.s32.totalorder %s576, %s579
    %p585 = scmp.eq.s32.totalorder %s31, 0
    %p586 = por %p584, %p585
    %p587 = scmp.ne.s32.totalorder %s576, %s579
    %p588 = scmp.eq.s32.totalorder %s36, 7
    %p589 = por %p587, %p588
    %p590 = scmp.ne.s32.totalorder %s579, %s580
    %p591 = scmp.eq.s32.totalorder %s36, 0
    %p592 = por %p590, %p591
    %p593 = scmp.ne.s32.totalorder %s579, %s580
    %p594 = scmp.eq.s32.totalorder %s37, 7
    %p595 = por %p593, %p594
    %p597 = scmp.ne.s32.totalorder %s580, %s596
    %p598 = scmp.eq.s32.totalorder %s37, 0
    %p599 = por %p597, %p598
    %p600 = scmp.le.s32.totalorder 1, %s31
    %p601 = scmp.lt.s32.totalorder %s31, 9
    %p602 = pnand %p600, %p601
    %p603 = pneg %p602
    // Predicated region
    $region9: #{nerf_forward_pallas.1} parent=5 // pred_check
      _
    $region10: #{nerf_forward_pallas.1} parent=5 // pred_check_branch
      %605 = sbr.rel (%p602) target = $region12
    $region11: #{nerf_forward_pallas.1} parent=5 // pred_region
      %s606 = ssub.s32 %s31, 1
      // Predicated region
      $region13: #{nerf_forward_pallas.1} parent=11 // pred_check
        %p607 = pneg %p104
      $region14: #{nerf_forward_pallas.1} parent=11 // pred_check_branch
        %609 = sbr.rel (%p607) target = $region16
      $region15: #{nerf_forward_pallas.1} parent=11 // pred_region
        _
      $region16: #{nerf_forward_pallas.1} parent=11 // pred_fallthru
        _
      // Predicated region
      $region17: #{nerf_forward_pallas.1} parent=11 // pred_check
        %p610 = pneg %p125
      $region18: #{nerf_forward_pallas.1} parent=11 // pred_check_branch
        %612 = sbr.rel (%p610) target = $region20
      $region19: #{nerf_forward_pallas.1} parent=11 // pred_region
        _
      $region20: #{nerf_forward_pallas.1} parent=11 // pred_fallthru
        _
      // Predicated region
      $region21: #{nerf_forward_pallas.1} parent=11 // pred_check
        %p613 = pneg %p146
      $region22: #{nerf_forward_pallas.1} parent=11 // pred_check_branch
        %615 = sbr.rel (%p613) target = $region24
      $region23: #{nerf_forward_pallas.1} parent=11 // pred_region
        _
      $region24: #{nerf_forward_pallas.1} parent=11 // pred_fallthru
        _
      // Predicated region
      $region25: #{nerf_forward_pallas.1} parent=11 // pred_check
        %p616 = pneg %p167
      $region26: #{nerf_forward_pallas.1} parent=11 // pred_check_branch
        %618 = sbr.rel (%p616) target = $region28
      $region27: #{nerf_forward_pallas.1} parent=11 // pred_region
        _
      $region28: #{nerf_forward_pallas.1} parent=11 // pred_fallthru
        _
      // Predicated region
      $region29: #{nerf_forward_pallas.1} parent=11 // pred_check
        %p619 = pneg %p188
      $region30: #{nerf_forward_pallas.1} parent=11 // pred_check_branch
        %621 = sbr.rel (%p619) target = $region32
      $region31: #{nerf_forward_pallas.1} parent=11 // pred_region
        _
      $region32: #{nerf_forward_pallas.1} parent=11 // pred_fallthru
        _
      // Predicated region
      $region33: #{nerf_forward_pallas.1} parent=11 // pred_check
        %p622 = pneg %p209
      $region34: #{nerf_forward_pallas.1} parent=11 // pred_check_branch
        %624 = sbr.rel (%p622) target = $region36
      $region35: #{nerf_forward_pallas.1} parent=11 // pred_region
        _
      $region36: #{nerf_forward_pallas.1} parent=11 // pred_fallthru
        _
      // Predicated region
      $region37: #{nerf_forward_pallas.1} parent=11 // pred_check
        %p625 = pneg %p230
      $region38: #{nerf_forward_pallas.1} parent=11 // pred_check_branch
        %627 = sbr.rel (%p625) target = $region40
      $region39: #{nerf_forward_pallas.1} parent=11 // pred_region
        _
      $region40: #{nerf_forward_pallas.1} parent=11 // pred_fallthru
        _
      // Predicated region
      $region41: #{nerf_forward_pallas.1} parent=11 // pred_check
        %p628 = pneg %p251
      $region42: #{nerf_forward_pallas.1} parent=11 // pred_check_branch
        %630 = sbr.rel (%p628) target = $region44
      $region43: #{nerf_forward_pallas.1} parent=11 // pred_region
        _
      $region44: #{nerf_forward_pallas.1} parent=11 // pred_fallthru
        _
      // Predicated region
      $region45: #{nerf_forward_pallas.1} parent=11 // pred_check
        %p631 = pneg %p272
      $region46: #{nerf_forward_pallas.1} parent=11 // pred_check_branch
        %633 = sbr.rel (%p631) target = $region48
      $region47: #{nerf_forward_pallas.1} parent=11 // pred_region
        _
      $region48: #{nerf_forward_pallas.1} parent=11 // pred_fallthru
        _
      // Predicated region
      $region49: #{nerf_forward_pallas.1} parent=11 // pred_check
        %p634 = pneg %p293
      $region50: #{nerf_forward_pallas.1} parent=11 // pred_check_branch
        %636 = sbr.rel (%p634) target = $region52
      $region51: #{nerf_forward_pallas.1} parent=11 // pred_region
        _
      $region52: #{nerf_forward_pallas.1} parent=11 // pred_fallthru
        _
      // Predicated region
      $region53: #{nerf_forward_pallas.1} parent=11 // pred_check
        %p637 = pneg %p314
      $region54: #{nerf_forward_pallas.1} parent=11 // pred_check_branch
        %639 = sbr.rel (%p637) target = $region56
      $region55: #{nerf_forward_pallas.1} parent=11 // pred_region
        _
      $region56: #{nerf_forward_pallas.1} parent=11 // pred_fallthru
        _
      // Predicated region
      $region57: #{nerf_forward_pallas.1} parent=11 // pred_check
        %p640 = pneg %p335
      $region58: #{nerf_forward_pallas.1} parent=11 // pred_check_branch
        %642 = sbr.rel (%p640) target = $region60
      $region59: #{nerf_forward_pallas.1} parent=11 // pred_region
        _
      $region60: #{nerf_forward_pallas.1} parent=11 // pred_fallthru
        _
      // Predicated region
      $region61: #{nerf_forward_pallas.1} parent=11 // pred_check
        %p643 = pneg %p356
      $region62: #{nerf_forward_pallas.1} parent=11 // pred_check_branch
        %645 = sbr.rel (%p643) target = $region64
      $region63: #{nerf_forward_pallas.1} parent=11 // pred_region
        _
      $region64: #{nerf_forward_pallas.1} parent=11 // pred_fallthru
        _
      // Predicated region
      $region65: #{nerf_forward_pallas.1} parent=11 // pred_check
        %p646 = pneg %p377
      $region66: #{nerf_forward_pallas.1} parent=11 // pred_check_branch
        %648 = sbr.rel (%p646) target = $region68
      $region67: #{nerf_forward_pallas.1} parent=11 // pred_region
        _
      $region68: #{nerf_forward_pallas.1} parent=11 // pred_fallthru
        _
      // Predicated region
      $region69: #{nerf_forward_pallas.1} parent=11 // pred_check
        %p649 = pneg %p398
      $region70: #{nerf_forward_pallas.1} parent=11 // pred_check_branch
        %651 = sbr.rel (%p649) target = $region72
      $region71: #{nerf_forward_pallas.1} parent=11 // pred_region
        _
      $region72: #{nerf_forward_pallas.1} parent=11 // pred_fallthru
        _
      // Predicated region
      $region73: #{nerf_forward_pallas.1} parent=11 // pred_check
        %p652 = pneg %p419
      $region74: #{nerf_forward_pallas.1} parent=11 // pred_check_branch
        %654 = sbr.rel (%p652) target = $region76
      $region75: #{nerf_forward_pallas.1} parent=11 // pred_region
        _
      $region76: #{nerf_forward_pallas.1} parent=11 // pred_fallthru
        _
      // Predicated region
      $region77: #{nerf_forward_pallas.1} parent=11 // pred_check
        %p655 = pneg %p440
      $region78: #{nerf_forward_pallas.1} parent=11 // pred_check_branch
        %657 = sbr.rel (%p655) target = $region80
      $region79: #{nerf_forward_pallas.1} parent=11 // pred_region
        _
      $region80: #{nerf_forward_pallas.1} parent=11 // pred_fallthru
        _
      // Predicated region
      $region81: #{nerf_forward_pallas.1} parent=11 // pred_check
        %p658 = pneg %p461
      $region82: #{nerf_forward_pallas.1} parent=11 // pred_check_branch
        %660 = sbr.rel (%p658) target = $region84
      $region83: #{nerf_forward_pallas.1} parent=11 // pred_region
        _
      $region84: #{nerf_forward_pallas.1} parent=11 // pred_fallthru
        _
      // Predicated region
      $region85: #{nerf_forward_pallas.1} parent=11 // pred_check
        %p661 = pneg %p482
      $region86: #{nerf_forward_pallas.1} parent=11 // pred_check_branch
        %663 = sbr.rel (%p661) target = $region88
      $region87: #{nerf_forward_pallas.1} parent=11 // pred_region
        _
      $region88: #{nerf_forward_pallas.1} parent=11 // pred_fallthru
        _
      // Predicated region
      $region89: #{nerf_forward_pallas.1} parent=11 // pred_check
        %p664 = pneg %p503
      $region90: #{nerf_forward_pallas.1} parent=11 // pred_check_branch
        %666 = sbr.rel (%p664) target = $region92
      $region91: #{nerf_forward_pallas.1} parent=11 // pred_region
        _
      $region92: #{nerf_forward_pallas.1} parent=11 // pred_fallthru
        _
      // Predicated region
      $region93: #{nerf_forward_pallas.1} parent=11 // pred_check
        %p667 = pneg %p524
      $region94: #{nerf_forward_pallas.1} parent=11 // pred_check_branch
        %669 = sbr.rel (%p667) target = $region96
      $region95: #{nerf_forward_pallas.1} parent=11 // pred_region
        _
      $region96: #{nerf_forward_pallas.1} parent=11 // pred_fallthru
        _
      // Predicated region
      $region97: #{nerf_forward_pallas.1} parent=11 // pred_check
        %p670 = pneg %p545
      $region98: #{nerf_forward_pallas.1} parent=11 // pred_check_branch
        %672 = sbr.rel (%p670) target = $region100
      $region99: #{nerf_forward_pallas.1} parent=11 // pred_region
        _
      $region100: #{nerf_forward_pallas.1} parent=11 // pred_fallthru
        _
      // Predicated region
      $region101: #{nerf_forward_pallas.1} parent=11 // pred_check
        %p673 = pneg %p566
      $region102: #{nerf_forward_pallas.1} parent=11 // pred_check_branch
        %675 = sbr.rel (%p673) target = $region104
      $region103: #{nerf_forward_pallas.1} parent=11 // pred_region
        _
      $region104: #{nerf_forward_pallas.1} parent=11 // pred_fallthru
        _
    $region12: #{nerf_forward_pallas.1} parent=5 // pred_fallthru
      _
    %p676 = scmp.lt.s32.totalorder %s31, 8
    // Predicated region
    $region105: #{nerf_forward_pallas.1} parent=5 // pred_check
      %p677 = pneg %p676
    $region106: #{nerf_forward_pallas.1} parent=5 // pred_check_branch
      %679 = sbr.rel (%p677) target = $region108
    $region107: #{nerf_forward_pallas.1} parent=5 // pred_region
      // Predicated region
      $region109: #{nerf_forward_pallas.1} parent=107 // pred_check
        %p680 = pneg %p51
      $region110: #{nerf_forward_pallas.1} parent=107 // pred_check_branch
        %682 = sbr.rel (%p680) target = $region112
      $region111: #{nerf_forward_pallas.1} parent=107 // pred_region
        %s683 = smul.u32 32, %s31
        %p684 = scmp.lt.s32.totalorder %s683, 255
        %s685 = scalar_select %p684, %s683, 255
        %s686 = smul.addr %s685, 4
        %s687 = scalar_lea.vmem %s0, %s686
        %s688 = smul.u32 32, %s31
      $region112: #{nerf_forward_pallas.1} parent=107 // pred_fallthru
        _
      // Predicated region
      $region113: #{nerf_forward_pallas.1} parent=107 // pred_check
        %p689 = pneg %p77
      $region114: #{nerf_forward_pallas.1} parent=107 // pred_check_branch
        %691 = sbr.rel (%p689) target = $region116
      $region115: #{nerf_forward_pallas.1} parent=107 // pred_region
        %s692 = smul.u32 32, %s31
        %p693 = scmp.lt.s32.totalorder %s692, 255
        %s694 = scalar_select %p693, %s692, 255
        %s695 = smul.addr %s694, 4
        %s696 = scalar_lea.vmem %s1, %s695
        %s697 = smul.u32 32, %s31
      $region116: #{nerf_forward_pallas.1} parent=107 // pred_fallthru
        _
    $region108: #{nerf_forward_pallas.1} parent=5 // pred_fallthru
      _
    %p698 = scmp.le.s32.totalorder 1, %s31
    %p699 = scmp.lt.s32.totalorder %s31, 9
    %p700 = pnand %p698, %p699
    %p701 = pneg %p700
    // Predicated region
    $region117: #{nerf_forward_pallas.1} parent=5 // pred_check
      _
    $region118: #{nerf_forward_pallas.1} parent=5 // pred_check_branch
      %703 = sbr.rel (%p700) target = $region120
    $region119: #{nerf_forward_pallas.1} parent=5 // pred_region
      %s704 = ssub.s32 %s31, 1
      %s705 = smul.u32 32, %s36
      %p706 = scmp.lt.s32.totalorder %s705, 255
      %s707 = scalar_select %p706, %s705, 255
      %s708 = smul.addr %s707, 4
      %s709 = scalar_lea.vmem %s0, %s708
      %p710 = pneg %p57
      %p711 = pneg %p54
      %s712 = smul.u32 32, %s36
      %p713 = scmp.lt.s32.totalorder %s712, 255
      %s714 = scalar_select %p713, %s712, 255
      %s715 = smul.addr %s714, 4
      %s716 = scalar_lea.vmem %s1, %s715
      %p717 = pneg %p83
      %p718 = pneg %p80
      %p719 = pneg %p104
      %p720 = pneg %p101
      %p721 = pneg %p125
      %p722 = pneg %p122
      %p723 = pneg %p146
      %p724 = pneg %p143
      %p725 = pneg %p167
      %p726 = pneg %p164
      %p727 = pneg %p188
      %p728 = pneg %p185
      %p729 = pneg %p209
      %p730 = pneg %p206
      %p731 = pneg %p230
      %p732 = pneg %p227
      %p733 = pneg %p251
      %p734 = pneg %p248
      %p735 = pneg %p272
      %p736 = pneg %p269
      %p737 = pneg %p293
      %p738 = pneg %p290
      %p739 = pneg %p314
      %p740 = pneg %p311
      %p741 = pneg %p335
      %p742 = pneg %p332
      %p743 = pneg %p356
      %p744 = pneg %p353
      %p745 = pneg %p377
      %p746 = pneg %p374
      %p747 = pneg %p398
      %p748 = pneg %p395
      %p749 = pneg %p419
      %p750 = pneg %p416
      %p751 = pneg %p440
      %p752 = pneg %p437
      %p753 = pneg %p461
      %p754 = pneg %p458
      %p755 = pneg %p482
      %p756 = pneg %p479
      %p757 = pneg %p503
      %p758 = pneg %p500
      %p759 = pneg %p524
      %p760 = pneg %p521
      %p761 = pneg %p545
      %p762 = pneg %p542
      %p763 = pneg %p566
      %p764 = pneg %p563
      %p765 = pneg %p592
      %p766 = pneg %p589
      %s767 = smul.u32 32, %s36
      %p768 = scmp.lt.s32.totalorder %s767, 255
      %s769 = scalar_select %p768, %s767, 255
      %s770 = smul.addr %s769, 8
      %s771 = scalar_lea.vmem %s25, %s770
      %s772 = smul.u32 32, %s36
      %p773 = scmp.lt.s32.totalorder %s772, 255
      %s774 = scalar_select %p773, %s772, 255
      %s775 = smul.addr %s774, 4
      %s776 = scalar_lea.vmem %s0, %s775
      %s777 = smul.u32 32, %s36
      %s778 = smul.u32 32, %s36
      %p779 = scmp.lt.s32.totalorder %s778, 255
      %s780 = scalar_select %p779, %s778, 255
      %s781 = smul.addr %s780, 4
      %s782 = scalar_lea.vmem %s1, %s781
      %s783 = smul.u32 32, %s36
      %s784 = smul.u32 32, %s36
      %p785 = scmp.lt.s32.totalorder %s784, 255
      %s786 = scalar_select %p785, %s784, 255
      %s787 = smul.addr %s786, 8
      %s788 = scalar_lea.vmem %s25, %s787
      %s789 = smul.u32 32, %s36
      %v791 = vld [vmem:[%s776] sm:$0xf]
      %v792 = vld [vmem:[%s776 + $0x4] sm:$0xf]
      %v793 = vld [vmem:[%s776 + $0x8] sm:$0xf]
      %v794 = vld [vmem:[%s776 + $0xc] sm:$0xf]
      %v795 = vld [vmem:[%s776 + $0x10] sm:$0xf]
      %v796 = vld [vmem:[%s776 + $0x14] sm:$0xf]
      %v797 = vld [vmem:[%s776 + $0x18] sm:$0xf]
      %v798 = vld [vmem:[%s776 + $0x1c] sm:$0xf]
      %v799 = vld [vmem:[%s776 + $0x20] sm:$0xf]
      %v800 = vld [vmem:[%s776 + $0x24] sm:$0xf]
      %v801 = vld [vmem:[%s776 + $0x28] sm:$0xf]
      %v802 = vld [vmem:[%s776 + $0x2c] sm:$0xf]
      %v803 = vld [vmem:[%s776 + $0x30] sm:$0xf]
      %v804 = vld [vmem:[%s776 + $0x34] sm:$0xf]
      %v805 = vld [vmem:[%s776 + $0x38] sm:$0xf]
      %v806 = vld [vmem:[%s776 + $0x3c] sm:$0xf]
      %v807 = vld [vmem:[%s776 + $0x40] sm:$0xf]
      %v808 = vld [vmem:[%s776 + $0x44] sm:$0xf]
      %v809 = vld [vmem:[%s776 + $0x48] sm:$0xf]
      %v810 = vld [vmem:[%s776 + $0x4c] sm:$0xf]
      %v811 = vld [vmem:[%s776 + $0x50] sm:$0xf]
      %v812 = vld [vmem:[%s776 + $0x54] sm:$0xf]
      %v813 = vld [vmem:[%s776 + $0x58] sm:$0xf]
      %v814 = vld [vmem:[%s776 + $0x5c] sm:$0xf]
      %v815 = vld [vmem:[%s776 + $0x60] sm:$0xf]
      %v816 = vld [vmem:[%s776 + $0x64] sm:$0xf]
      %v817 = vld [vmem:[%s776 + $0x68] sm:$0xf]
      %v818 = vld [vmem:[%s776 + $0x6c] sm:$0xf]
      %v819 = vld [vmem:[%s776 + $0x70] sm:$0xf]
      %v820 = vld [vmem:[%s776 + $0x74] sm:$0xf]
      %v821 = vld [vmem:[%s776 + $0x78] sm:$0xf]
      %v822 = vld [vmem:[%s776 + $0x7c] sm:$0xf]
      %v823 = vld [vmem:[%s782] sm:$0xf]
      %v824 = vld [vmem:[%s782 + $0x4] sm:$0xf]
      %v825 = vld [vmem:[%s782 + $0x8] sm:$0xf]
      %v826 = vld [vmem:[%s782 + $0xc] sm:$0xf]
      %v827 = vld [vmem:[%s782 + $0x10] sm:$0xf]
      %v828 = vld [vmem:[%s782 + $0x14] sm:$0xf]
      %v829 = vld [vmem:[%s782 + $0x18] sm:$0xf]
      %v830 = vld [vmem:[%s782 + $0x1c] sm:$0xf]
      %v831 = vld [vmem:[%s782 + $0x20] sm:$0xf]
      %v832 = vld [vmem:[%s782 + $0x24] sm:$0xf]
      %v833 = vld [vmem:[%s782 + $0x28] sm:$0xf]
      %v834 = vld [vmem:[%s782 + $0x2c] sm:$0xf]
      %v835 = vld [vmem:[%s782 + $0x30] sm:$0xf]
      %v836 = vld [vmem:[%s782 + $0x34] sm:$0xf]
      %v837 = vld [vmem:[%s782 + $0x38] sm:$0xf]
      %v838 = vld [vmem:[%s782 + $0x3c] sm:$0xf]
      %v839 = vld [vmem:[%s782 + $0x40] sm:$0xf]
      %v840 = vld [vmem:[%s782 + $0x44] sm:$0xf]
      %v841 = vld [vmem:[%s782 + $0x48] sm:$0xf]
      %v842 = vld [vmem:[%s782 + $0x4c] sm:$0xf]
      %v843 = vld [vmem:[%s782 + $0x50] sm:$0xf]
      %v844 = vld [vmem:[%s782 + $0x54] sm:$0xf]
      %v845 = vld [vmem:[%s782 + $0x58] sm:$0xf]
      %v846 = vld [vmem:[%s782 + $0x5c] sm:$0xf]
      %v847 = vld [vmem:[%s782 + $0x60] sm:$0xf]
      %v848 = vld [vmem:[%s782 + $0x64] sm:$0xf]
      %v849 = vld [vmem:[%s782 + $0x68] sm:$0xf]
      %v850 = vld [vmem:[%s782 + $0x6c] sm:$0xf]
      %v851 = vld [vmem:[%s782 + $0x70] sm:$0xf]
      %v852 = vld [vmem:[%s782 + $0x74] sm:$0xf]
      %v853 = vld [vmem:[%s782 + $0x78] sm:$0xf]
      %v854 = vld [vmem:[%s782 + $0x7c] sm:$0xf]
      %v855 = vld [vmem:[%s2] sm:$0xff]
      %v856 = vld [vmem:[%s2 + $0x8] sm:$0xff]
      %v857 = vld [vmem:[%s2 + $0x10] sm:$0xff]
      %v858 = vld [vmem:[%s2 + $0x18] sm:$0xff]
      %v859 = vld [vmem:[%s2 + $0x20] sm:$0xff]
      %v860 = vld [vmem:[%s2 + $0x28] sm:$0xff]
      %v861 = vld [vmem:[%s2 + $0x30] sm:$0xff]
      %v862 = vld [vmem:[%s2 + $0x38] sm:$0xff]
      %v863 = vld [vmem:[%s2 + $0x40] sm:$0xff]
      %v864 = vld [vmem:[%s2 + $0x48] sm:$0xff]
      %v865 = vld [vmem:[%s2 + $0x50] sm:$0xff]
      %v866 = vld [vmem:[%s2 + $0x58] sm:$0xff]
      %v867 = vld [vmem:[%s2 + $0x60] sm:$0xff]
      %v868 = vld [vmem:[%s2 + $0x68] sm:$0xff]
      %v869 = vld [vmem:[%s2 + $0x70] sm:$0xff]
      %v870 = vld [vmem:[%s2 + $0x78] sm:$0xff]
      %v871 = vld [vmem:[%s2 + $0x80] sm:$0xff]
      %v872 = vld [vmem:[%s2 + $0x88] sm:$0xff]
      %v873 = vld [vmem:[%s2 + $0x90] sm:$0xff]
      %v874 = vld [vmem:[%s2 + $0x98] sm:$0xff]
      %v875 = vld [vmem:[%s2 + $0xa0] sm:$0xff]
      %v876 = vld [vmem:[%s2 + $0xa8] sm:$0xff]
      %v877 = vld [vmem:[%s2 + $0xb0] sm:$0xff]
      %v878 = vld [vmem:[%s2 + $0xb8] sm:$0xff]
      %v879 = vld [vmem:[%s2 + $0xc0] sm:$0xff]
      %v880 = vld [vmem:[%s2 + $0xc8] sm:$0xff]
      %v881 = vld [vmem:[%s2 + $0xd0] sm:$0xff]
      %v882 = vld [vmem:[%s2 + $0xd8] sm:$0xff]
      %v883 = vld [vmem:[%s2 + $0xe0] sm:$0xff]
      %v884 = vld [vmem:[%s2 + $0xe8] sm:$0xff]
      %v885 = vld [vmem:[%s2 + $0xf0] sm:$0xff]
      %v886 = vld [vmem:[%s2 + $0xf8] sm:$0xff]
      %v919 = vunpack.c.l.b16 %v791
      %v920 = vunpack.c.l.b16 %v792
      %v921 = vunpack.c.l.b16 %v793
      %v922 = vunpack.c.l.b16 %v794
      %v923 = vunpack.c.l.b16 %v795
      %v924 = vunpack.c.l.b16 %v796
      %v925 = vunpack.c.l.b16 %v797
      %v926 = vunpack.c.l.b16 %v798
      %v927 = vunpack.c.l.b16 %v799
      %v928 = vunpack.c.l.b16 %v800
      %v929 = vunpack.c.l.b16 %v801
      %v930 = vunpack.c.l.b16 %v802
      %v931 = vunpack.c.l.b16 %v803
      %v932 = vunpack.c.l.b16 %v804
      %v933 = vunpack.c.l.b16 %v805
      %v934 = vunpack.c.l.b16 %v806
      %v935 = vunpack.c.l.b16 %v807
      %v936 = vunpack.c.l.b16 %v808
      %v937 = vunpack.c.l.b16 %v809
      %v938 = vunpack.c.l.b16 %v810
      %v939 = vunpack.c.l.b16 %v811
      %v940 = vunpack.c.l.b16 %v812
      %v941 = vunpack.c.l.b16 %v813
      %v942 = vunpack.c.l.b16 %v814
      %v943 = vunpack.c.l.b16 %v815
      %v944 = vunpack.c.l.b16 %v816
      %v945 = vunpack.c.l.b16 %v817
      %v946 = vunpack.c.l.b16 %v818
      %v947 = vunpack.c.l.b16 %v819
      %v948 = vunpack.c.l.b16 %v820
      %v949 = vunpack.c.l.b16 %v821
      %v950 = vunpack.c.l.b16 %v822
      %v951 = vpack.c.b16 %v920, %v919
      %v952 = vpack.c.b16 %v922, %v921
      %v953 = vpack.c.b16 %v924, %v923
      %v954 = vpack.c.b16 %v926, %v925
      %v955 = vpack.c.b16 %v928, %v927
      %v956 = vpack.c.b16 %v930, %v929
      %v957 = vpack.c.b16 %v932, %v931
      %v958 = vpack.c.b16 %v934, %v933
      %v959 = vpack.c.b16 %v936, %v935
      %v960 = vpack.c.b16 %v938, %v937
      %v961 = vpack.c.b16 %v940, %v939
      %v962 = vpack.c.b16 %v942, %v941
      %v963 = vpack.c.b16 %v944, %v943
      %v964 = vpack.c.b16 %v946, %v945
      %v965 = vpack.c.b16 %v948, %v947
      %v966 = vpack.c.b16 %v950, %v949
      %v1015 = vunpack.c.l.b16 %v855
      %v1016 = vunpack.c.h.b16 %v855
      %v1017 = vunpack.c.l.b16 %v856
      %v1018 = vunpack.c.h.b16 %v856
      %v1019 = vunpack.c.l.b16 %v857
      %v1020 = vunpack.c.h.b16 %v857
      %v1021 = vunpack.c.l.b16 %v858
      %v1022 = vunpack.c.h.b16 %v858
      %v1023 = vunpack.c.l.b16 %v859
      %v1024 = vunpack.c.h.b16 %v859
      %v1025 = vunpack.c.l.b16 %v860
      %v1026 = vunpack.c.h.b16 %v860
      %v1027 = vunpack.c.l.b16 %v861
      %v1028 = vunpack.c.h.b16 %v861
      %v1029 = vunpack.c.l.b16 %v862
      %v1030 = vunpack.c.h.b16 %v862
      %v1031 = vunpack.c.l.b16 %v863
      %v1032 = vunpack.c.h.b16 %v863
      %v1033 = vunpack.c.l.b16 %v864
      %v1034 = vunpack.c.h.b16 %v864
      %v1035 = vunpack.c.l.b16 %v865
      %v1036 = vunpack.c.h.b16 %v865
      %v1037 = vunpack.c.l.b16 %v866
      %v1038 = vunpack.c.h.b16 %v866
      %v1039 = vunpack.c.l.b16 %v867
      %v1040 = vunpack.c.h.b16 %v867
      %v1041 = vunpack.c.l.b16 %v868
      %v1042 = vunpack.c.h.b16 %v868
      %v1043 = vunpack.c.l.b16 %v869
      %v1044 = vunpack.c.h.b16 %v869
      %v1045 = vunpack.c.l.b16 %v870
      %v1046 = vunpack.c.h.b16 %v870
      %v1047 = vunpack.c.l.b16 %v871
      %v1048 = vunpack.c.h.b16 %v871
      %v1049 = vunpack.c.l.b16 %v872
      %v1050 = vunpack.c.h.b16 %v872
      %v1051 = vunpack.c.l.b16 %v873
      %v1052 = vunpack.c.h.b16 %v873
      %v1053 = vunpack.c.l.b16 %v874
      %v1054 = vunpack.c.h.b16 %v874
      %v1055 = vunpack.c.l.b16 %v875
      %v1056 = vunpack.c.h.b16 %v875
      %v1057 = vunpack.c.l.b16 %v876
      %v1058 = vunpack.c.h.b16 %v876
      %v1059 = vunpack.c.l.b16 %v877
      %v1060 = vunpack.c.h.b16 %v877
      %v1061 = vunpack.c.l.b16 %v878
      %v1062 = vunpack.c.h.b16 %v878
      %v1063 = vunpack.c.l.b16 %v879
      %v1064 = vunpack.c.h.b16 %v879
      %v1065 = vunpack.c.l.b16 %v880
      %v1066 = vunpack.c.h.b16 %v880
      %v1067 = vunpack.c.l.b16 %v881
      %v1068 = vunpack.c.h.b16 %v881
      %v1069 = vunpack.c.l.b16 %v882
      %v1070 = vunpack.c.h.b16 %v882
      %v1071 = vunpack.c.l.b16 %v883
      %v1072 = vunpack.c.h.b16 %v883
      %v1073 = vunpack.c.l.b16 %v884
      %v1074 = vunpack.c.h.b16 %v884
      %v1075 = vunpack.c.l.b16 %v885
      %v1076 = vunpack.c.h.b16 %v885
      %v1077 = vunpack.c.l.b16 %v886
      %v1078 = vunpack.c.h.b16 %v886
      %v1079 = vpack.c.b16 %v1019, %v1015
      %v1080 = vpack.c.b16 %v1020, %v1016
      %v1081 = vpack.c.b16 %v1021, %v1017
      %v1082 = vpack.c.b16 %v1022, %v1018
      %v1083 = vpack.c.b16 %v1027, %v1023
      %v1084 = vpack.c.b16 %v1028, %v1024
      %v1085 = vpack.c.b16 %v1029, %v1025
      %v1086 = vpack.c.b16 %v1030, %v1026
      %v1087 = vpack.c.b16 %v1035, %v1031
      %v1088 = vpack.c.b16 %v1036, %v1032
      %v1089 = vpack.c.b16 %v1037, %v1033
      %v1090 = vpack.c.b16 %v1038, %v1034
      %v1091 = vpack.c.b16 %v1043, %v1039
      %v1092 = vpack.c.b16 %v1044, %v1040
      %v1093 = vpack.c.b16 %v1045, %v1041
      %v1094 = vpack.c.b16 %v1046, %v1042
      %v1095 = vpack.c.b16 %v1051, %v1047
      %v1096 = vpack.c.b16 %v1052, %v1048
      %v1097 = vpack.c.b16 %v1053, %v1049
      %v1098 = vpack.c.b16 %v1054, %v1050
      %v1099 = vpack.c.b16 %v1059, %v1055
      %v1100 = vpack.c.b16 %v1060, %v1056
      %v1101 = vpack.c.b16 %v1061, %v1057
      %v1102 = vpack.c.b16 %v1062, %v1058
      %v1103 = vpack.c.b16 %v1067, %v1063
      %v1104 = vpack.c.b16 %v1068, %v1064
      %v1105 = vpack.c.b16 %v1069, %v1065
      %v1106 = vpack.c.b16 %v1070, %v1066
      %v1107 = vpack.c.b16 %v1075, %v1071
      %v1108 = vpack.c.b16 %v1076, %v1072
      %v1109 = vpack.c.b16 %v1077, %v1073
      %v1110 = vpack.c.b16 %v1078, %v1074
      %1143 = vmatprep.subr.bf16.mxu0 %v1080
      %1144 = vmatpush1.bf16.msra.mxu0 %v1079
      %1145 = vmatprep.subr.bf16.mxu0 %v1084
      %1146 = vmatpush1.bf16.msra.mxu0 %v1083
      %1147 = vmatprep.subr.bf16.mxu0 %v1088
      %1148 = vmatpush1.bf16.msra.mxu0 %v1087
      %1149 = vmatprep.subr.bf16.mxu0 %v1092
      %1150 = vmatpush1.bf16.msra.mxu0 %v1091
      %1151 = vmatprep.subr.bf16.mxu0 %v1096
      %1152 = vmatpush1.bf16.msra.mxu0 %v1095
      %1153 = vmatprep.subr.bf16.mxu0 %v1100
      %1154 = vmatpush1.bf16.msra.mxu0 %v1099
      %1155 = vmatprep.subr.bf16.mxu0 %v1104
      %1156 = vmatpush1.bf16.msra.mxu0 %v1103
      %1157 = vmatprep.subr.bf16.mxu0 %v1108
      %1158 = vmatpush1.bf16.msra.mxu0 %v1107
      %1159 = vmatprep.subr.bf16.mxu0 0
      %1160 = vmatpush1.bf16.msra.mxu0 0
      %1161 = vmatprep.subr.bf16.mxu0 0
      %1162 = vmatpush1.bf16.msra.mxu0 0
      %1163 = vmatprep.subr.bf16.mxu0 0
      %1164 = vmatpush1.bf16.msra.mxu0 0
      %1165 = vmatprep.subr.bf16.mxu0 0
      %1166 = vmatpush1.bf16.msra.mxu0 0
      %1167 = vmatprep.subr.bf16.mxu0 0
      %1168 = vmatpush1.bf16.msra.mxu0 0
      %1169 = vmatprep.subr.bf16.mxu0 0
      %1170 = vmatpush1.bf16.msra.mxu0 0
      %1171 = vmatprep.subr.bf16.mxu0 0
      %1172 = vmatpush1.bf16.msra.mxu0 0
      %1173 = vmatprep.subr.bf16.mxu0 0
      %1174 = vmatpush1.bf16.msra.mxu0 0
      %1175 = vmatprep.mubr.bf16.mxu0 0
      %1176 = vmatmul.mubr.bf16.gmra.mrb[0].mxu0 %v951
      %v1177 = vpop.f32.mrb[0].mxu0
      %v1178 = vadd.f32 0.0, %v1177
      %v1179 = vpop.f32.mrb[0].mxu0
      %v1180 = vadd.f32 0.0, %v1179
      %v1181 = vpop.f32.mrb[0].mxu0
      %v1182 = vadd.f32 0.0, %v1181
      %v1183 = vpop.f32.mrb[0].mxu0
      %v1184 = vadd.f32 0.0, %v1183
      %1185 = vmatprep.mubr.bf16.mxu0 0
      %1186 = vmatmul.mubr.bf16.gmra.mrb[0].mxu0 %v952
      %v1187 = vpop.f32.mrb[0].mxu0
      %v1188 = vadd.f32 0.0, %v1187
      %v1189 = vpop.f32.mrb[0].mxu0
      %v1190 = vadd.f32 0.0, %v1189
      %v1191 = vpop.f32.mrb[0].mxu0
      %v1192 = vadd.f32 0.0, %v1191
      %v1193 = vpop.f32.mrb[0].mxu0
      %v1194 = vadd.f32 0.0, %v1193
      %1195 = vmatprep.mubr.bf16.mxu0 0
      %1196 = vmatmul.mubr.bf16.gmra.mrb[0].mxu0 %v953
      %v1197 = vpop.f32.mrb[0].mxu0
      %v1198 = vadd.f32 0.0, %v1197
      %v1199 = vpop.f32.mrb[0].mxu0
      %v1200 = vadd.f32 0.0, %v1199
      %v1201 = vpop.f32.mrb[0].mxu0
      %v1202 = vadd.f32 0.0, %v1201
      %v1203 = vpop.f32.mrb[0].mxu0
      %v1204 = vadd.f32 0.0, %v1203
      %1205 = vmatprep.mubr.bf16.mxu0 0
      %1206 = vmatmul.mubr.bf16.gmra.mrb[0].mxu0 %v954
      %v1207 = vpop.f32.mrb[0].mxu0
      %v1208 = vadd.f32 0.0, %v1207
      %v1209 = vpop.f32.mrb[0].mxu0
      %v1210 = vadd.f32 0.0, %v1209
      %v1211 = vpop.f32.mrb[0].mxu0
      %v1212 = vadd.f32 0.0, %v1211
      %v1213 = vpop.f32.mrb[0].mxu0
      %v1214 = vadd.f32 0.0, %v1213
      %1215 = vmatprep.mubr.bf16.mxu0 0
      %1216 = vmatmul.mubr.bf16.gmra.mrb[0].mxu0 %v955
      %v1217 = vpop.f32.mrb[0].mxu0
      %v1218 = vadd.f32 0.0, %v1217
      %v1219 = vpop.f32.mrb[0].mxu0
      %v1220 = vadd.f32 0.0, %v1219
      %v1221 = vpop.f32.mrb[0].mxu0
      %v1222 = vadd.f32 0.0, %v1221
      %v1223 = vpop.f32.mrb[0].mxu0
      %v1224 = vadd.f32 0.0, %v1223
      %1225 = vmatprep.mubr.bf16.mxu0 0
      %1226 = vmatmul.mubr.bf16.gmra.mrb[0].mxu0 %v956
      %v1227 = vpop.f32.mrb[0].mxu0
      %v1228 = vadd.f32 0.0, %v1227
      %v1229 = vpop.f32.mrb[0].mxu0
      %v1230 = vadd.f32 0.0, %v1229
      %v1231 = vpop.f32.mrb[0].mxu0
      %v1232 = vadd.f32 0.0, %v1231
      %v1233 = vpop.f32.mrb[0].mxu0
      %v1234 = vadd.f32 0.0, %v1233
      %1235 = vmatprep.mubr.bf16.mxu0 0
      %1236 = vmatmul.mubr.bf16.gmra.mrb[0].mxu0 %v957
      %v1237 = vpop.f32.mrb[0].mxu0
      %v1238 = vadd.f32 0.0, %v1237
      %v1239 = vpop.f32.mrb[0].mxu0
      %v1240 = vadd.f32 0.0, %v1239
      %v1241 = vpop.f32.mrb[0].mxu0
      %v1242 = vadd.f32 0.0, %v1241
      %v1243 = vpop.f32.mrb[0].mxu0
      %v1244 = vadd.f32 0.0, %v1243
      %1245 = vmatprep.mubr.bf16.mxu0 0
      %1246 = vmatmul.mubr.bf16.gmra.mrb[0].mxu0 %v958
      %v1247 = vpop.f32.mrb[0].mxu0
      %v1248 = vadd.f32 0.0, %v1247
      %v1249 = vpop.f32.mrb[0].mxu0
      %v1250 = vadd.f32 0.0, %v1249
      %v1251 = vpop.f32.mrb[0].mxu0
      %v1252 = vadd.f32 0.0, %v1251
      %v1253 = vpop.f32.mrb[0].mxu0
      %v1254 = vadd.f32 0.0, %v1253
      %1255 = vmatprep.mubr.bf16.mxu0 0
      %1256 = vmatmul.mubr.bf16.gmra.mrb[0].mxu0 %v959
      %v1257 = vpop.f32.mrb[0].mxu0
      %v1258 = vadd.f32 0.0, %v1257
      %v1259 = vpop.f32.mrb[0].mxu0
      %v1260 = vadd.f32 0.0, %v1259
      %v1261 = vpop.f32.mrb[0].mxu0
      %v1262 = vadd.f32 0.0, %v1261
      %v1263 = vpop.f32.mrb[0].mxu0
      %v1264 = vadd.f32 0.0, %v1263
      %1265 = vmatprep.mubr.bf16.mxu0 0
      %1266 = vmatmul.mubr.bf16.gmra.mrb[0].mxu0 %v960
      %v1267 = vpop.f32.mrb[0].mxu0
      %v1268 = vadd.f32 0.0, %v1267
      %v1269 = vpop.f32.mrb[0].mxu0
      %v1270 = vadd.f32 0.0, %v1269
      %v1271 = vpop.f32.mrb[0].mxu0
      %v1272 = vadd.f32 0.0, %v1271
      %v1273 = vpop.f32.mrb[0].mxu0
      %v1274 = vadd.f32 0.0, %v1273
      %1275 = vmatprep.mubr.bf16.mxu0 0
      %1276 = vmatmul.mubr.bf16.gmra.mrb[0].mxu0 %v961
      %v1277 = vpop.f32.mrb[0].mxu0
      %v1278 = vadd.f32 0.0, %v1277
      %v1279 = vpop.f32.mrb[0].mxu0
      %v1280 = vadd.f32 0.0, %v1279
      %v1281 = vpop.f32.mrb[0].mxu0
      %v1282 = vadd.f32 0.0, %v1281
      %v1283 = vpop.f32.mrb[0].mxu0
      %v1284 = vadd.f32 0.0, %v1283
      %1285 = vmatprep.mubr.bf16.mxu0 0
      %1286 = vmatmul.mubr.bf16.gmra.mrb[0].mxu0 %v962
      %v1287 = vpop.f32.mrb[0].mxu0
      %v1288 = vadd.f32 0.0, %v1287
      %v1289 = vpop.f32.mrb[0].mxu0
      %v1290 = vadd.f32 0.0, %v1289
      %v1291 = vpop.f32.mrb[0].mxu0
      %v1292 = vadd.f32 0.0, %v1291
      %v1293 = vpop.f32.mrb[0].mxu0
      %v1294 = vadd.f32 0.0, %v1293
      %1295 = vmatprep.mubr.bf16.mxu0 0
      %1296 = vmatmul.mubr.bf16.gmra.mrb[0].mxu0 %v963
      %v1297 = vpop.f32.mrb[0].mxu0
      %v1298 = vadd.f32 0.0, %v1297
      %v1299 = vpop.f32.mrb[0].mxu0
      %v1300 = vadd.f32 0.0, %v1299
      %v1301 = vpop.f32.mrb[0].mxu0
      %v1302 = vadd.f32 0.0, %v1301
      %v1303 = vpop.f32.mrb[0].mxu0
      %v1304 = vadd.f32 0.0, %v1303
      %1305 = vmatprep.mubr.bf16.mxu0 0
      %1306 = vmatmul.mubr.bf16.gmra.mrb[0].mxu0 %v964
      %v1307 = vpop.f32.mrb[0].mxu0
      %v1308 = vadd.f32 0.0, %v1307
      %v1309 = vpop.f32.mrb[0].mxu0
      %v1310 = vadd.f32 0.0, %v1309
      %v1311 = vpop.f32.mrb[0].mxu0
      %v1312 = vadd.f32 0.0, %v1311
      %v1313 = vpop.f32.mrb[0].mxu0
      %v1314 = vadd.f32 0.0, %v1313
      %1315 = vmatprep.mubr.bf16.mxu0 0
      %1316 = vmatmul.mubr.bf16.gmra.mrb[0].mxu0 %v965
      %v1317 = vpop.f32.mrb[0].mxu0
      %v1318 = vadd.f32 0.0, %v1317
      %v1319 = vpop.f32.mrb[0].mxu0
      %v1320 = vadd.f32 0.0, %v1319
      %v1321 = vpop.f32.mrb[0].mxu0
      %v1322 = vadd.f32 0.0, %v1321
      %v1323 = vpop.f32.mrb[0].mxu0
      %v1324 = vadd.f32 0.0, %v1323
      %1325 = vmatprep.mubr.bf16.mxu0 0
      %1326 = vmatmul.mubr.bf16.gmra.mrb[0].mxu0 %v966
      %v1327 = vpop.f32.mrb[0].mxu0
      %v1328 = vadd.f32 0.0, %v1327
      %v1329 = vpop.f32.mrb[0].mxu0
      %v1330 = vadd.f32 0.0, %v1329
      %v1331 = vpop.f32.mrb[0].mxu0
      %v1332 = vadd.f32 0.0, %v1331
      %v1333 = vpop.f32.mrb[0].mxu0
      %v1334 = vadd.f32 0.0, %v1333
      %1335 = vdwg.mxu0
      %1336 = vmatprep.subr.bf16.mxu0 %v1082
      %1337 = vmatpush1.bf16.msra.mxu0 %v1081
      %1338 = vmatprep.subr.bf16.mxu0 %v1086
      %1339 = vmatpush1.bf16.msra.mxu0 %v1085
      %1340 = vmatprep.subr.bf16.mxu0 %v1090
      %1341 = vmatpush1.bf16.msra.mxu0 %v1089
      %1342 = vmatprep.subr.bf16.mxu0 %v1094
      %1343 = vmatpush1.bf16.msra.mxu0 %v1093
      %1344 = vmatprep.subr.bf16.mxu0 %v1098
      %1345 = vmatpush1.bf16.msra.mxu0 %v1097
      %1346 = vmatprep.subr.bf16.mxu0 %v1102
      %1347 = vmatpush1.bf16.msra.mxu0 %v1101
      %1348 = vmatprep.subr.bf16.mxu0 %v1106
      %1349 = vmatpush1.bf16.msra.mxu0 %v1105
      %1350 = vmatprep.subr.bf16.mxu0 %v1110
      %1351 = vmatpush1.bf16.msra.mxu0 %v1109
      %1352 = vmatprep.subr.bf16.mxu0 0
      %1353 = vmatpush1.bf16.msra.mxu0 0
      %1354 = vmatprep.subr.bf16.mxu0 0
      %1355 = vmatpush1.bf16.msra.mxu0 0
      %1356 = vmatprep.subr.bf16.mxu0 0
      %1357 = vmatpush1.bf16.msra.mxu0 0
      %1358 = vmatprep.subr.bf16.mxu0 0
      %1359 = vmatpush1.bf16.msra.mxu0 0
      %1360 = vmatprep.subr.bf16.mxu0 0
      %1361 = vmatpush1.bf16.msra.mxu0 0
      %1362 = vmatprep.subr.bf16.mxu0 0
      %1363 = vmatpush1.bf16.msra.mxu0 0
      %1364 = vmatprep.subr.bf16.mxu0 0
      %1365 = vmatpush1.bf16.msra.mxu0 0
      %1366 = vmatprep.subr.bf16.mxu0 0
      %1367 = vmatpush1.bf16.msra.mxu0 0
      %1368 = vmatprep.mubr.bf16.mxu0 0
      %1369 = vmatmul.mubr.bf16.gmra.mrb[0].mxu0 %v951
      %v1370 = vpop.f32.mrb[0].mxu0
      %v1371 = vadd.f32 0.0, %v1370
      %v1372 = vpop.f32.mrb[0].mxu0
      %v1373 = vadd.f32 0.0, %v1372
      %v1374 = vpop.f32.mrb[0].mxu0
      %v1375 = vadd.f32 0.0, %v1374
      %v1376 = vpop.f32.mrb[0].mxu0
      %v1377 = vadd.f32 0.0, %v1376
      %1378 = vmatprep.mubr.bf16.mxu0 0
      %1379 = vmatmul.mubr.bf16.gmra.mrb[0].mxu0 %v952
      %v1380 = vpop.f32.mrb[0].mxu0
      %v1381 = vadd.f32 0.0, %v1380
      %v1382 = vpop.f32.mrb[0].mxu0
      %v1383 = vadd.f32 0.0, %v1382
      %v1384 = vpop.f32.mrb[0].mxu0
      %v1385 = vadd.f32 0.0, %v1384
      %v1386 = vpop.f32.mrb[0].mxu0
      %v1387 = vadd.f32 0.0, %v1386
      %1388 = vmatprep.mubr.bf16.mxu0 0
      %1389 = vmatmul.mubr.bf16.gmra.mrb[0].mxu0 %v953
      %v1390 = vpop.f32.mrb[0].mxu0
      %v1391 = vadd.f32 0.0, %v1390
      %v1392 = vpop.f32.mrb[0].mxu0
      %v1393 = vadd.f32 0.0, %v1392
      %v1394 = vpop.f32.mrb[0].mxu0
      %v1395 = vadd.f32 0.0, %v1394
      %v1396 = vpop.f32.mrb[0].mxu0
      %v1397 = vadd.f32 0.0, %v1396
      %1398 = vmatprep.mubr.bf16.mxu0 0
      %1399 = vmatmul.mubr.bf16.gmra.mrb[0].mxu0 %v954
      %v1400 = vpop.f32.mrb[0].mxu0
      %v1401 = vadd.f32 0.0, %v1400
      %v1402 = vpop.f32.mrb[0].mxu0
      %v1403 = vadd.f32 0.0, %v1402
      %v1404 = vpop.f32.mrb[0].mxu0
      %v1405 = vadd.f32 0.0, %v1404
      %v1406 = vpop.f32.mrb[0].mxu0
      %v1407 = vadd.f32 0.0, %v1406
      %1408 = vmatprep.mubr.bf16.mxu0 0
      %1409 = vmatmul.mubr.bf16.gmra.mrb[0].mxu0 %v955
      %v1410 = vpop.f32.mrb[0].mxu0
      %v1411 = vadd.f32 0.0, %v1410
      %v1412 = vpop.f32.mrb[0].mxu0
      %v1413 = vadd.f32 0.0, %v1412
      %v1414 = vpop.f32.mrb[0].mxu0
      %v1415 = vadd.f32 0.0, %v1414
      %v1416 = vpop.f32.mrb[0].mxu0
      %v1417 = vadd.f32 0.0, %v1416
      %1418 = vmatprep.mubr.bf16.mxu0 0
      %1419 = vmatmul.mubr.bf16.gmra.mrb[0].mxu0 %v956
      %v1420 = vpop.f32.mrb[0].mxu0
      %v1421 = vadd.f32 0.0, %v1420
      %v1422 = vpop.f32.mrb[0].mxu0
      %v1423 = vadd.f32 0.0, %v1422
      %v1424 = vpop.f32.mrb[0].mxu0
      %v1425 = vadd.f32 0.0, %v1424
      %v1426 = vpop.f32.mrb[0].mxu0
      %v1427 = vadd.f32 0.0, %v1426
      %1428 = vmatprep.mubr.bf16.mxu0 0
      %1429 = vmatmul.mubr.bf16.gmra.mrb[0].mxu0 %v957
      %v1430 = vpop.f32.mrb[0].mxu0
      %v1431 = vadd.f32 0.0, %v1430
      %v1432 = vpop.f32.mrb[0].mxu0
      %v1433 = vadd.f32 0.0, %v1432
      %v1434 = vpop.f32.mrb[0].mxu0
      %v1435 = vadd.f32 0.0, %v1434
      %v1436 = vpop.f32.mrb[0].mxu0
      %v1437 = vadd.f32 0.0, %v1436
      %1438 = vmatprep.mubr.bf16.mxu0 0
      %1439 = vmatmul.mubr.bf16.gmra.mrb[0].mxu0 %v958
      %v1440 = vpop.f32.mrb[0].mxu0
      %v1441 = vadd.f32 0.0, %v1440
      %v1442 = vpop.f32.mrb[0].mxu0
      %v1443 = vadd.f32 0.0, %v1442
      %v1444 = vpop.f32.mrb[0].mxu0
      %v1445 = vadd.f32 0.0, %v1444
      %v1446 = vpop.f32.mrb[0].mxu0
      %v1447 = vadd.f32 0.0, %v1446
      %1448 = vmatprep.mubr.bf16.mxu0 0
      %1449 = vmatmul.mubr.bf16.gmra.mrb[0].mxu0 %v959
      %v1450 = vpop.f32.mrb[0].mxu0
      %v1451 = vadd.f32 0.0, %v1450
      %v1452 = vpop.f32.mrb[0].mxu0
      %v1453 = vadd.f32 0.0, %v1452
      %v1454 = vpop.f32.mrb[0].mxu0
      %v1455 = vadd.f32 0.0, %v1454
      %v1456 = vpop.f32.mrb[0].mxu0
      %v1457 = vadd.f32 0.0, %v1456
      %1458 = vmatprep.mubr.bf16.mxu0 0
      %1459 = vmatmul.mubr.bf16.gmra.mrb[0].mxu0 %v960
      %v1460 = vpop.f32.mrb[0].mxu0
      %v1461 = vadd.f32 0.0, %v1460
      %v1462 = vpop.f32.mrb[0].mxu0
      %v1463 = vadd.f32 0.0, %v1462
      %v1464 = vpop.f32.mrb[0].mxu0
      %v1465 = vadd.f32 0.0, %v1464
      %v1466 = vpop.f32.mrb[0].mxu0
      %v1467 = vadd.f32 0.0, %v1466
      %1468 = vmatprep.mubr.bf16.mxu0 0
      %1469 = vmatmul.mubr.bf16.gmra.mrb[0].mxu0 %v961
      %v1470 = vpop.f32.mrb[0].mxu0
      %v1471 = vadd.f32 0.0, %v1470
      %v1472 = vpop.f32.mrb[0].mxu0
      %v1473 = vadd.f32 0.0, %v1472
      %v1474 = vpop.f32.mrb[0].mxu0
      %v1475 = vadd.f32 0.0, %v1474
      %v1476 = vpop.f32.mrb[0].mxu0
      %v1477 = vadd.f32 0.0, %v1476
      %1478 = vmatprep.mubr.bf16.mxu0 0
      %1479 = vmatmul.mubr.bf16.gmra.mrb[0].mxu0 %v962
      %v1480 = vpop.f32.mrb[0].mxu0
      %v1481 = vadd.f32 0.0, %v1480
      %v1482 = vpop.f32.mrb[0].mxu0
      %v1483 = vadd.f32 0.0, %v1482
      %v1484 = vpop.f32.mrb[0].mxu0
      %v1485 = vadd.f32 0.0, %v1484
      %v1486 = vpop.f32.mrb[0].mxu0
      %v1487 = vadd.f32 0.0, %v1486
      %1488 = vmatprep.mubr.bf16.mxu0 0
      %1489 = vmatmul.mubr.bf16.gmra.mrb[0].mxu0 %v963
      %v1490 = vpop.f32.mrb[0].mxu0
      %v1491 = vadd.f32 0.0, %v1490
      %v1492 = vpop.f32.mrb[0].mxu0
      %v1493 = vadd.f32 0.0, %v1492
      %v1494 = vpop.f32.mrb[0].mxu0
      %v1495 = vadd.f32 0.0, %v1494
      %v1496 = vpop.f32.mrb[0].mxu0
      %v1497 = vadd.f32 0.0, %v1496
      %1498 = vmatprep.mubr.bf16.mxu0 0
      %1499 = vmatmul.mubr.bf16.gmra.mrb[0].mxu0 %v964
      %v1500 = vpop.f32.mrb[0].mxu0
      %v1501 = vadd.f32 0.0, %v1500
      %v1502 = vpop.f32.mrb[0].mxu0
      %v1503 = vadd.f32 0.0, %v1502
      %v1504 = vpop.f32.mrb[0].mxu0
      %v1505 = vadd.f32 0.0, %v1504
      %v1506 = vpop.f32.mrb[0].mxu0
      %v1507 = vadd.f32 0.0, %v1506
      %1508 = vmatprep.mubr.bf16.mxu0 0
      %1509 = vmatmul.mubr.bf16.gmra.mrb[0].mxu0 %v965
      %v1510 = vpop.f32.mrb[0].mxu0
      %v1511 = vadd.f32 0.0, %v1510
      %v1512 = vpop.f32.mrb[0].mxu0
      %v1513 = vadd.f32 0.0, %v1512
      %v1514 = vpop.f32.mrb[0].mxu0
      %v1515 = vadd.f32 0.0, %v1514
      %v1516 = vpop.f32.mrb[0].mxu0
      %v1517 = vadd.f32 0.0, %v1516
      %1518 = vmatprep.mubr.bf16.mxu0 0
      %1519 = vmatmul.mubr.bf16.gmra.mrb[0].mxu0 %v966
      %v1520 = vpop.f32.mrb[0].mxu0
      %v1521 = vadd.f32 0.0, %v1520
      %v1522 = vpop.f32.mrb[0].mxu0
      %v1523 = vadd.f32 0.0, %v1522
      %v1524 = vpop.f32.mrb[0].mxu0
      %v1525 = vadd.f32 0.0, %v1524
      %v1526 = vpop.f32.mrb[0].mxu0
      %v1527 = vadd.f32 0.0, %v1526
      %1528 = vdwg.mxu0
      %v1529 = vld [vmem:[%s3] sm:$0x3]
      %v1531 = vlaneseq
      %v1532 = vshrl.u32 %v1531, 7
      %v1533 = vsub.s32 0, %v1532
      %v1534 = vrot.slane %v1529, %v1533
      %v1535 = vlaneseq
      %v1536 = vshrl.u32 %v1535, 7
      %v1537 = vsub.s32 1, %v1536
      %v1538 = vrot.slane %v1529, %v1537
      %v1541 = vadd.f32 %v1178, %v1534
      %v1542 = vadd.f32 %v1180, %v1538
      %v1543 = vadd.f32 %v1182, %v1534
      %v1544 = vadd.f32 %v1184, %v1538
      %v1545 = vadd.f32 %v1188, %v1534
      %v1546 = vadd.f32 %v1190, %v1538
      %v1547 = vadd.f32 %v1192, %v1534
      %v1548 = vadd.f32 %v1194, %v1538
      %v1549 = vadd.f32 %v1198, %v1534
      %v1550 = vadd.f32 %v1200, %v1538
      %v1551 = vadd.f32 %v1202, %v1534
      %v1552 = vadd.f32 %v1204, %v1538
      %v1553 = vadd.f32 %v1208, %v1534
      %v1554 = vadd.f32 %v1210, %v1538
      %v1555 = vadd.f32 %v1212, %v1534
      %v1556 = vadd.f32 %v1214, %v1538
      %v1557 = vadd.f32 %v1218, %v1534
      %v1558 = vadd.f32 %v1220, %v1538
      %v1559 = vadd.f32 %v1222, %v1534
      %v1560 = vadd.f32 %v1224, %v1538
      %v1561 = vadd.f32 %v1228, %v1534
      %v1562 = vadd.f32 %v1230, %v1538
      %v1563 = vadd.f32 %v1232, %v1534
      %v1564 = vadd.f32 %v1234, %v1538
      %v1565 = vadd.f32 %v1238, %v1534
      %v1566 = vadd.f32 %v1240, %v1538
      %v1567 = vadd.f32 %v1242, %v1534
      %v1568 = vadd.f32 %v1244, %v1538
      %v1569 = vadd.f32 %v1248, %v1534
      %v1570 = vadd.f32 %v1250, %v1538
      %v1571 = vadd.f32 %v1252, %v1534
      %v1572 = vadd.f32 %v1254, %v1538
      %v1573 = vadd.f32 %v1258, %v1534
      %v1574 = vadd.f32 %v1260, %v1538
      %v1575 = vadd.f32 %v1262, %v1534
      %v1576 = vadd.f32 %v1264, %v1538
      %v1577 = vadd.f32 %v1268, %v1534
      %v1578 = vadd.f32 %v1270, %v1538
      %v1579 = vadd.f32 %v1272, %v1534
      %v1580 = vadd.f32 %v1274, %v1538
      %v1581 = vadd.f32 %v1278, %v1534
      %v1582 = vadd.f32 %v1280, %v1538
      %v1583 = vadd.f32 %v1282, %v1534
      %v1584 = vadd.f32 %v1284, %v1538
      %v1585 = vadd.f32 %v1288, %v1534
      %v1586 = vadd.f32 %v1290, %v1538
      %v1587 = vadd.f32 %v1292, %v1534
      %v1588 = vadd.f32 %v1294, %v1538
      %v1589 = vadd.f32 %v1298, %v1534
      %v1590 = vadd.f32 %v1300, %v1538
      %v1591 = vadd.f32 %v1302, %v1534
      %v1592 = vadd.f32 %v1304, %v1538
      %v1593 = vadd.f32 %v1308, %v1534
      %v1594 = vadd.f32 %v1310, %v1538
      %v1595 = vadd.f32 %v1312, %v1534
      %v1596 = vadd.f32 %v1314, %v1538
      %v1597 = vadd.f32 %v1318, %v1534
      %v1598 = vadd.f32 %v1320, %v1538
      %v1599 = vadd.f32 %v1322, %v1534
      %v1600 = vadd.f32 %v1324, %v1538
      %v1601 = vadd.f32 %v1328, %v1534
      %v1602 = vadd.f32 %v1330, %v1538
      %v1603 = vadd.f32 %v1332, %v1534
      %v1604 = vadd.f32 %v1334, %v1538
      %v1605 = vmax.f32 %v1541, 0.0
      %v1606 = vmax.f32 %v1542, 0.0
      %v1607 = vmax.f32 %v1543, 0.0
      %v1608 = vmax.f32 %v1544, 0.0
      %v1609 = vmax.f32 %v1545, 0.0
      %v1610 = vmax.f32 %v1546, 0.0
      %v1611 = vmax.f32 %v1547, 0.0
      %v1612 = vmax.f32 %v1548, 0.0
      %v1613 = vmax.f32 %v1549, 0.0
      %v1614 = vmax.f32 %v1550, 0.0
      %v1615 = vmax.f32 %v1551, 0.0
      %v1616 = vmax.f32 %v1552, 0.0
      %v1617 = vmax.f32 %v1553, 0.0
      %v1618 = vmax.f32 %v1554, 0.0
      %v1619 = vmax.f32 %v1555, 0.0
      %v1620 = vmax.f32 %v1556, 0.0
      %v1621 = vmax.f32 %v1557, 0.0
      %v1622 = vmax.f32 %v1558, 0.0
      %v1623 = vmax.f32 %v1559, 0.0
      %v1624 = vmax.f32 %v1560, 0.0
      %v1625 = vmax.f32 %v1561, 0.0
      %v1626 = vmax.f32 %v1562, 0.0
      %v1627 = vmax.f32 %v1563, 0.0
      %v1628 = vmax.f32 %v1564, 0.0
      %v1629 = vmax.f32 %v1565, 0.0
      %v1630 = vmax.f32 %v1566, 0.0
      %v1631 = vmax.f32 %v1567, 0.0
      %v1632 = vmax.f32 %v1568, 0.0
      %v1633 = vmax.f32 %v1569, 0.0
      %v1634 = vmax.f32 %v1570, 0.0
      %v1635 = vmax.f32 %v1571, 0.0
      %v1636 = vmax.f32 %v1572, 0.0
      %v1637 = vmax.f32 %v1573, 0.0
      %v1638 = vmax.f32 %v1574, 0.0
      %v1639 = vmax.f32 %v1575, 0.0
      %v1640 = vmax.f32 %v1576, 0.0
      %v1641 = vmax.f32 %v1577, 0.0
      %v1642 = vmax.f32 %v1578, 0.0
      %v1643 = vmax.f32 %v1579, 0.0
      %v1644 = vmax.f32 %v1580, 0.0
      %v1645 = vmax.f32 %v1581, 0.0
      %v1646 = vmax.f32 %v1582, 0.0
      %v1647 = vmax.f32 %v1583, 0.0
      %v1648 = vmax.f32 %v1584, 0.0
      %v1649 = vmax.f32 %v1585, 0.0
      %v1650 = vmax.f32 %v1586, 0.0
      %v1651 = vmax.f32 %v1587, 0.0
      %v1652 = vmax.f32 %v1588, 0.0
      %v1653 = vmax.f32 %v1589, 0.0
      %v1654 = vmax.f32 %v1590, 0.0
      %v1655 = vmax.f32 %v1591, 0.0
      %v1656 = vmax.f32 %v1592, 0.0
      %v1657 = vmax.f32 %v1593, 0.0
      %v1658 = vmax.f32 %v1594, 0.0
      %v1659 = vmax.f32 %v1595, 0.0
      %v1660 = vmax.f32 %v1596, 0.0
      %v1661 = vmax.f32 %v1597, 0.0
      %v1662 = vmax.f32 %v1598, 0.0
      %v1663 = vmax.f32 %v1599, 0.0
      %v1664 = vmax.f32 %v1600, 0.0
      %v1665 = vmax.f32 %v1601, 0.0
      %v1666 = vmax.f32 %v1602, 0.0
      %v1667 = vmax.f32 %v1603, 0.0
      %v1668 = vmax.f32 %v1604, 0.0
      %v1669 = vpack.c.bf16 %v1607, %v1605
      %v1670 = vpack.c.bf16 %v1608, %v1606
      %v1671 = vpack.c.bf16 %v1611, %v1609
      %v1672 = vpack.c.bf16 %v1612, %v1610
      %v1673 = vpack.c.bf16 %v1615, %v1613
      %v1674 = vpack.c.bf16 %v1616, %v1614
      %v1675 = vpack.c.bf16 %v1619, %v1617
      %v1676 = vpack.c.bf16 %v1620, %v1618
      %v1677 = vpack.c.bf16 %v1623, %v1621
      %v1678 = vpack.c.bf16 %v1624, %v1622
      %v1679 = vpack.c.bf16 %v1627, %v1625
      %v1680 = vpack.c.bf16 %v1628, %v1626
      %v1681 = vpack.c.bf16 %v1631, %v1629
      %v1682 = vpack.c.bf16 %v1632, %v1630
      %v1683 = vpack.c.bf16 %v1635, %v1633
      %v1684 = vpack.c.bf16 %v1636, %v1634
      %v1685 = vpack.c.bf16 %v1639, %v1637
      %v1686 = vpack.c.bf16 %v1640, %v1638
      %v1687 = vpack.c.bf16 %v1643, %v1641
      %v1688 = vpack.c.bf16 %v1644, %v1642
      %v1689 = vpack.c.bf16 %v1647, %v1645
      %v1690 = vpack.c.bf16 %v1648, %v1646
      %v1691 = vpack.c.bf16 %v1651, %v1649
      %v1692 = vpack.c.bf16 %v1652, %v1650
      %v1693 = vpack.c.bf16 %v1655, %v1653
      %v1694 = vpack.c.bf16 %v1656, %v1654
      %v1695 = vpack.c.bf16 %v1659, %v1657
      %v1696 = vpack.c.bf16 %v1660, %v1658
      %v1697 = vpack.c.bf16 %v1663, %v1661
      %v1698 = vpack.c.bf16 %v1664, %v1662
      %v1699 = vpack.c.bf16 %v1667, %v1665
      %v1700 = vpack.c.bf16 %v1668, %v1666
      %v1701 = vld [vmem:[%s4] sm:$0xff]
      %v1702 = vld [vmem:[%s4 + $0x8] sm:$0xff]
      %v1703 = vld [vmem:[%s4 + $0x10] sm:$0xff]
      %v1704 = vld [vmem:[%s4 + $0x18] sm:$0xff]
      %v1705 = vld [vmem:[%s4 + $0x20] sm:$0xff]
      %v1706 = vld [vmem:[%s4 + $0x28] sm:$0xff]
      %v1707 = vld [vmem:[%s4 + $0x30] sm:$0xff]
      %v1708 = vld [vmem:[%s4 + $0x38] sm:$0xff]
      %v1709 = vld [vmem:[%s4 + $0x40] sm:$0xff]
      %v1710 = vld [vmem:[%s4 + $0x48] sm:$0xff]
      %v1711 = vld [vmem:[%s4 + $0x50] sm:$0xff]
      %v1712 = vld [vmem:[%s4 + $0x58] sm:$0xff]
      %v1713 = vld [vmem:[%s4 + $0x60] sm:$0xff]
      %v1714 = vld [vmem:[%s4 + $0x68] sm:$0xff]
      %v1715 = vld [vmem:[%s4 + $0x70] sm:$0xff]
      %v1716 = vld [vmem:[%s4 + $0x78] sm:$0xff]
      %v1717 = vld [vmem:[%s4 + $0x80] sm:$0xff]
      %v1718 = vld [vmem:[%s4 + $0x88] sm:$0xff]
      %v1719 = vld [vmem:[%s4 + $0x90] sm:$0xff]
      %v1720 = vld [vmem:[%s4 + $0x98] sm:$0xff]
      %v1721 = vld [vmem:[%s4 + $0xa0] sm:$0xff]
      %v1722 = vld [vmem:[%s4 + $0xa8] sm:$0xff]
      %v1723 = vld [vmem:[%s4 + $0xb0] sm:$0xff]
      %v1724 = vld [vmem:[%s4 + $0xb8] sm:$0xff]
      %v1725 = vld [vmem:[%s4 + $0xc0] sm:$0xff]
      %v1726 = vld [vmem:[%s4 + $0xc8] sm:$0xff]
      %v1727 = vld [vmem:[%s4 + $0xd0] sm:$0xff]
      %v1728 = vld [vmem:[%s4 + $0xd8] sm:$0xff]
      %v1729 = vld [vmem:[%s4 + $0xe0] sm:$0xff]
      %v1730 = vld [vmem:[%s4 + $0xe8] sm:$0xff]
      %v1731 = vld [vmem:[%s4 + $0xf0] sm:$0xff]
      %v1732 = vld [vmem:[%s4 + $0xf8] sm:$0xff]
      %v1733 = vld [vmem:[%s5] sm:$0x3]
      %v1735 = vlaneseq
      %v1736 = vshrl.u32 %v1735, 7
      %v1737 = vsub.s32 0, %v1736
      %v1738 = vrot.slane %v1733, %v1737
      %v1739 = vlaneseq
      %v1740 = vshrl.u32 %v1739, 7
      %v1741 = vsub.s32 1, %v1740
      %v1742 = vrot.slane %v1733, %v1741
      %v1777 = vunpack.c.l.b16 %v1701
      %v1778 = vunpack.c.h.b16 %v1701
      %v1779 = vunpack.c.l.b16 %v1702
      %v1780 = vunpack.c.h.b16 %v1702
      %v1781 = vunpack.c.l.b16 %v1703
      %v1782 = vunpack.c.h.b16 %v1703
      %v1783 = vunpack.c.l.b16 %v1704
      %v1784 = vunpack.c.h.b16 %v1704
      %v1785 = vunpack.c.l.b16 %v1705
      %v1786 = vunpack.c.h.b16 %v1705
      %v1787 = vunpack.c.l.b16 %v1706
      %v1788 = vunpack.c.h.b16 %v1706
      %v1789 = vunpack.c.l.b16 %v1707
      %v1790 = vunpack.c.h.b16 %v1707
      %v1791 = vunpack.c.l.b16 %v1708
      %v1792 = vunpack.c.h.b16 %v1708
      %v1793 = vunpack.c.l.b16 %v1709
      %v1794 = vunpack.c.h.b16 %v1709
      %v1795 = vunpack.c.l.b16 %v1710
      %v1796 = vunpack.c.h.b16 %v1710
      %v1797 = vunpack.c.l.b16 %v1711
      %v1798 = vunpack.c.h.b16 %v1711
      %v1799 = vunpack.c.l.b16 %v1712
      %v1800 = vunpack.c.h.b16 %v1712
      %v1801 = vunpack.c.l.b16 %v1713
      %v1802 = vunpack.c.h.b16 %v1713
      %v1803 = vunpack.c.l.b16 %v1714
      %v1804 = vunpack.c.h.b16 %v1714
      %v1805 = vunpack.c.l.b16 %v1715
      %v1806 = vunpack.c.h.b16 %v1715
      %v1807 = vunpack.c.l.b16 %v1716
      %v1808 = vunpack.c.h.b16 %v1716
      %v1809 = vunpack.c.l.b16 %v1717
      %v1810 = vunpack.c.h.b16 %v1717
      %v1811 = vunpack.c.l.b16 %v1718
      %v1812 = vunpack.c.h.b16 %v1718
      %v1813 = vunpack.c.l.b16 %v1719
      %v1814 = vunpack.c.h.b16 %v1719
      %v1815 = vunpack.c.l.b16 %v1720
      %v1816 = vunpack.c.h.b16 %v1720
      %v1817 = vunpack.c.l.b16 %v1721
      %v1818 = vunpack.c.h.b16 %v1721
      %v1819 = vunpack.c.l.b16 %v1722
      %v1820 = vunpack.c.h.b16 %v1722
      %v1821 = vunpack.c.l.b16 %v1723
      %v1822 = vunpack.c.h.b16 %v1723
      %v1823 = vunpack.c.l.b16 %v1724
      %v1824 = vunpack.c.h.b16 %v1724
      %v1825 = vunpack.c.l.b16 %v1725
      %v1826 = vunpack.c.h.b16 %v1725
      %v1827 = vunpack.c.l.b16 %v1726
      %v1828 = vunpack.c.h.b16 %v1726
      %v1829 = vunpack.c.l.b16 %v1727
      %v1830 = vunpack.c.h.b16 %v1727
      %v1831 = vunpack.c.l.b16 %v1728
      %v1832 = vunpack.c.h.b16 %v1728
      %v1833 = vunpack.c.l.b16 %v1729
      %v1834 = vunpack.c.h.b16 %v1729
      %v1835 = vunpack.c.l.b16 %v1730
      %v1836 = vunpack.c.h.b16 %v1730
      %v1837 = vunpack.c.l.b16 %v1731
      %v1838 = vunpack.c.h.b16 %v1731
      %v1839 = vunpack.c.l.b16 %v1732
      %v1840 = vunpack.c.h.b16 %v1732
      %v1841 = vpack.c.b16 %v1779, %v1777
      %v1842 = vpack.c.b16 %v1780, %v1778
      %v1843 = vpack.c.b16 %v1783, %v1781
      %v1844 = vpack.c.b16 %v1784, %v1782
      %v1845 = vpack.c.b16 %v1787, %v1785
      %v1846 = vpack.c.b16 %v1788, %v1786
      %v1847 = vpack.c.b16 %v1791, %v1789
      %v1848 = vpack.c.b16 %v1792, %v1790
      %v1849 = vpack.c.b16 %v1795, %v1793
      %v1850 = vpack.c.b16 %v1796, %v1794
      %v1851 = vpack.c.b16 %v1799, %v1797
      %v1852 = vpack.c.b16 %v1800, %v1798
      %v1853 = vpack.c.b16 %v1803, %v1801
      %v1854 = vpack.c.b16 %v1804, %v1802
      %v1855 = vpack.c.b16 %v1807, %v1805
      %v1856 = vpack.c.b16 %v1808, %v1806
      %v1857 = vpack.c.b16 %v1811, %v1809
      %v1858 = vpack.c.b16 %v1812, %v1810
      %v1859 = vpack.c.b16 %v1815, %v1813
      %v1860 = vpack.c.b16 %v1816, %v1814
      %v1861 = vpack.c.b16 %v1819, %v1817
      %v1862 = vpack.c.b16 %v1820, %v1818
      %v1863 = vpack.c.b16 %v1823, %v1821
      %v1864 = vpack.c.b16 %v1824, %v1822
      %v1865 = vpack.c.b16 %v1827, %v1825
      %v1866 = vpack.c.b16 %v1828, %v1826
      %v1867 = vpack.c.b16 %v1831, %v1829
      %v1868 = vpack.c.b16 %v1832, %v1830
      %v1869 = vpack.c.b16 %v1835, %v1833
      %v1870 = vpack.c.b16 %v1836, %v1834
      %v1871 = vpack.c.b16 %v1839, %v1837
      %v1872 = vpack.c.b16 %v1840, %v1838
      %1905 = vmatprep.subr.bf16.mxu0 %v1842
      %1906 = vmatpush1.bf16.msra.mxu0 %v1841
      %1907 = vmatprep.subr.bf16.mxu0 %v1844
      %1908 = vmatpush1.bf16.msra.mxu0 %v1843
      %1909 = vmatprep.subr.bf16.mxu0 %v1846
      %1910 = vmatpush1.bf16.msra.mxu0 %v1845
      %1911 = vmatprep.subr.bf16.mxu0 %v1848
      %1912 = vmatpush1.bf16.msra.mxu0 %v1847
      %1913 = vmatprep.subr.bf16.mxu0 %v1850
      %1914 = vmatpush1.bf16.msra.mxu0 %v1849
      %1915 = vmatprep.subr.bf16.mxu0 %v1852
      %1916 = vmatpush1.bf16.msra.mxu0 %v1851
      %1917 = vmatprep.subr.bf16.mxu0 %v1854
      %1918 = vmatpush1.bf16.msra.mxu0 %v1853
      %1919 = vmatprep.subr.bf16.mxu0 %v1856
      %1920 = vmatpush1.bf16.msra.mxu0 %v1855
      %1921 = vmatprep.subr.bf16.mxu0 %v1858
      %1922 = vmatpush1.bf16.msra.mxu0 %v1857
      %1923 = vmatprep.subr.bf16.mxu0 %v1860
      %1924 = vmatpush1.bf16.msra.mxu0 %v1859
      %1925 = vmatprep.subr.bf16.mxu0 %v1862
      %1926 = vmatpush1.bf16.msra.mxu0 %v1861
      %1927 = vmatprep.subr.bf16.mxu0 %v1864
      %1928 = vmatpush1.bf16.msra.mxu0 %v1863
      %1929 = vmatprep.subr.bf16.mxu0 %v1866
      %1930 = vmatpush1.bf16.msra.mxu0 %v1865
      %1931 = vmatprep.subr.bf16.mxu0 %v1868
      %1932 = vmatpush1.bf16.msra.mxu0 %v1867
      %1933 = vmatprep.subr.bf16.mxu0 %v1870
      %1934 = vmatpush1.bf16.msra.mxu0 %v1869
      %1935 = vmatprep.subr.bf16.mxu0 %v1872
      %1936 = vmatpush1.bf16.msra.mxu0 %v1871
      %1937 = vmatprep.mubr.bf16.mxu0 %v1670
      %1938 = vmatmul.mubr.bf16.gmra.mrb[0].mxu0 %v1669
      %v1939 = vpop.f32.mrb[0].mxu0
      %v1940 = vadd.f32 %v1738, %v1939
      %v1941 = vpop.f32.mrb[0].mxu0
      %v1942 = vadd.f32 %v1742, %v1941
      %v1943 = vpop.f32.mrb[0].mxu0
      %v1944 = vadd.f32 %v1738, %v1943
      %v1945 = vpop.f32.mrb[0].mxu0
      %v1946 = vadd.f32 %v1742, %v1945
      %1947 = vmatprep.mubr.bf16.mxu0 %v1672
      %1948 = vmatmul.mubr.bf16.gmra.mrb[0].mxu0 %v1671
      %v1949 = vpop.f32.mrb[0].mxu0
      %v1950 = vadd.f32 %v1738, %v1949
      %v1951 = vpop.f32.mrb[0].mxu0
      %v1952 = vadd.f32 %v1742, %v1951
      %v1953 = vpop.f32.mrb[0].mxu0
      %v1954 = vadd.f32 %v1738, %v1953
      %v1955 = vpop.f32.mrb[0].mxu0
      %v1956 = vadd.f32 %v1742, %v1955
      %1957 = vmatprep.mubr.bf16.mxu0 %v1674
      %1958 = vmatmul.mubr.bf16.gmra.mrb[0].mxu0 %v1673
      %v1959 = vpop.f32.mrb[0].mxu0
      %v1960 = vadd.f32 %v1738, %v1959
      %v1961 = vpop.f32.mrb[0].mxu0
      %v1962 = vadd.f32 %v1742, %v1961
      %v1963 = vpop.f32.mrb[0].mxu0
      %v1964 = vadd.f32 %v1738, %v1963
      %v1965 = vpop.f32.mrb[0].mxu0
      %v1966 = vadd.f32 %v1742, %v1965
      %1967 = vmatprep.mubr.bf16.mxu0 %v1676
      %1968 = vmatmul.mubr.bf16.gmra.mrb[0].mxu0 %v1675
      %v1969 = vpop.f32.mrb[0].mxu0
      %v1970 = vadd.f32 %v1738, %v1969
      %v1971 = vpop.f32.mrb[0].mxu0
      %v1972 = vadd.f32 %v1742, %v1971
      %v1973 = vpop.f32.mrb[0].mxu0
      %v1974 = vadd.f32 %v1738, %v1973
      %v1975 = vpop.f32.mrb[0].mxu0
      %v1976 = vadd.f32 %v1742, %v1975
      %1977 = vmatprep.mubr.bf16.mxu0 %v1678
      %1978 = vmatmul.mubr.bf16.gmra.mrb[0].mxu0 %v1677
      %v1979 = vpop.f32.mrb[0].mxu0
      %v1980 = vadd.f32 %v1738, %v1979
      %v1981 = vpop.f32.mrb[0].mxu0
      %v1982 = vadd.f32 %v1742, %v1981
      %v1983 = vpop.f32.mrb[0].mxu0
      %v1984 = vadd.f32 %v1738, %v1983
      %v1985 = vpop.f32.mrb[0].mxu0
      %v1986 = vadd.f32 %v1742, %v1985
      %1987 = vmatprep.mubr.bf16.mxu0 %v1680
      %1988 = vmatmul.mubr.bf16.gmra.mrb[0].mxu0 %v1679
      %v1989 = vpop.f32.mrb[0].mxu0
      %v1990 = vadd.f32 %v1738, %v1989
      %v1991 = vpop.f32.mrb[0].mxu0
      %v1992 = vadd.f32 %v1742, %v1991
      %v1993 = vpop.f32.mrb[0].mxu0
      %v1994 = vadd.f32 %v1738, %v1993
      %v1995 = vpop.f32.mrb[0].mxu0
      %v1996 = vadd.f32 %v1742, %v1995
      %1997 = vmatprep.mubr.bf16.mxu0 %v1682
      %1998 = vmatmul.mubr.bf16.gmra.mrb[0].mxu0 %v1681
      %v1999 = vpop.f32.mrb[0].mxu0
      %v2000 = vadd.f32 %v1738, %v1999
      %v2001 = vpop.f32.mrb[0].mxu0
      %v2002 = vadd.f32 %v1742, %v2001
      %v2003 = vpop.f32.mrb[0].mxu0
      %v2004 = vadd.f32 %v1738, %v2003
      %v2005 = vpop.f32.mrb[0].mxu0
      %v2006 = vadd.f32 %v1742, %v2005
      %2007 = vmatprep.mubr.bf16.mxu0 %v1684
      %2008 = vmatmul.mubr.bf16.gmra.mrb[0].mxu0 %v1683
      %v2009 = vpop.f32.mrb[0].mxu0
      %v2010 = vadd.f32 %v1738, %v2009
      %v2011 = vpop.f32.mrb[0].mxu0
      %v2012 = vadd.f32 %v1742, %v2011
      %v2013 = vpop.f32.mrb[0].mxu0
      %v2014 = vadd.f32 %v1738, %v2013
      %v2015 = vpop.f32.mrb[0].mxu0
      %v2016 = vadd.f32 %v1742, %v2015
      %2017 = vmatprep.mubr.bf16.mxu0 %v1686
      %2018 = vmatmul.mubr.bf16.gmra.mrb[0].mxu0 %v1685
      %v2019 = vpop.f32.mrb[0].mxu0
      %v2020 = vadd.f32 %v1738, %v2019
      %v2021 = vpop.f32.mrb[0].mxu0
      %v2022 = vadd.f32 %v1742, %v2021
      %v2023 = vpop.f32.mrb[0].mxu0
      %v2024 = vadd.f32 %v1738, %v2023
      %v2025 = vpop.f32.mrb[0].mxu0
      %v2026 = vadd.f32 %v1742, %v2025
      %2027 = vmatprep.mubr.bf16.mxu0 %v1688
      %2028 = vmatmul.mubr.bf16.gmra.mrb[0].mxu0 %v1687
      %v2029 = vpop.f32.mrb[0].mxu0
      %v2030 = vadd.f32 %v1738, %v2029
      %v2031 = vpop.f32.mrb[0].mxu0
      %v2032 = vadd.f32 %v1742, %v2031
      %v2033 = vpop.f32.mrb[0].mxu0
      %v2034 = vadd.f32 %v1738, %v2033
      %v2035 = vpop.f32.mrb[0].mxu0
      %v2036 = vadd.f32 %v1742, %v2035
      %2037 = vmatprep.mubr.bf16.mxu0 %v1690
      %2038 = vmatmul.mubr.bf16.gmra.mrb[0].mxu0 %v1689
      %v2039 = vpop.f32.mrb[0].mxu0
      %v2040 = vadd.f32 %v1738, %v2039
      %v2041 = vpop.f32.mrb[0].mxu0
      %v2042 = vadd.f32 %v1742, %v2041
      %v2043 = vpop.f32.mrb[0].mxu0
      %v2044 = vadd.f32 %v1738, %v2043
      %v2045 = vpop.f32.mrb[0].mxu0
      %v2046 = vadd.f32 %v1742, %v2045
      %2047 = vmatprep.mubr.bf16.mxu0 %v1692
      %2048 = vmatmul.mubr.bf16.gmra.mrb[0].mxu0 %v1691
      %v2049 = vpop.f32.mrb[0].mxu0
      %v2050 = vadd.f32 %v1738, %v2049
      %v2051 = vpop.f32.mrb[0].mxu0
      %v2052 = vadd.f32 %v1742, %v2051
      %v2053 = vpop.f32.mrb[0].mxu0
      %v2054 = vadd.f32 %v1738, %v2053
      %v2055 = vpop.f32.mrb[0].mxu0
      %v2056 = vadd.f32 %v1742, %v2055
      %2057 = vmatprep.mubr.bf16.mxu0 %v1694
      %2058 = vmatmul.mubr.bf16.gmra.mrb[0].mxu0 %v1693
      %v2059 = vpop.f32.mrb[0].mxu0
      %v2060 = vadd.f32 %v1738, %v2059
      %v2061 = vpop.f32.mrb[0].mxu0
      %v2062 = vadd.f32 %v1742, %v2061
      %v2063 = vpop.f32.mrb[0].mxu0
      %v2064 = vadd.f32 %v1738, %v2063
      %v2065 = vpop.f32.mrb[0].mxu0
      %v2066 = vadd.f32 %v1742, %v2065
      %2067 = vmatprep.mubr.bf16.mxu0 %v1696
      %2068 = vmatmul.mubr.bf16.gmra.mrb[0].mxu0 %v1695
      %v2069 = vpop.f32.mrb[0].mxu0
      %v2070 = vadd.f32 %v1738, %v2069
      %v2071 = vpop.f32.mrb[0].mxu0
      %v2072 = vadd.f32 %v1742, %v2071
      %v2073 = vpop.f32.mrb[0].mxu0
      %v2074 = vadd.f32 %v1738, %v2073
      %v2075 = vpop.f32.mrb[0].mxu0
      %v2076 = vadd.f32 %v1742, %v2075
      %2077 = vmatprep.mubr.bf16.mxu0 %v1698
      %2078 = vmatmul.mubr.bf16.gmra.mrb[0].mxu0 %v1697
      %v2079 = vpop.f32.mrb[0].mxu0
      %v2080 = vadd.f32 %v1738, %v2079
      %v2081 = vpop.f32.mrb[0].mxu0
      %v2082 = vadd.f32 %v1742, %v2081
      %v2083 = vpop.f32.mrb[0].mxu0
      %v2084 = vadd.f32 %v1738, %v2083
      %v2085 = vpop.f32.mrb[0].mxu0
      %v2086 = vadd.f32 %v1742, %v2085
      %2087 = vmatprep.mubr.bf16.mxu0 %v1700
      %2088 = vmatmul.mubr.bf16.gmra.mrb[0].mxu0 %v1699
      %v2089 = vpop.f32.mrb[0].mxu0
      %v2090 = vadd.f32 %v1738, %v2089
      %v2091 = vpop.f32.mrb[0].mxu0
      %v2092 = vadd.f32 %v1742, %v2091
      %v2093 = vpop.f32.mrb[0].mxu0
      %v2094 = vadd.f32 %v1738, %v2093
      %v2095 = vpop.f32.mrb[0].mxu0
      %v2096 = vadd.f32 %v1742, %v2095
      %2097 = vdwg.mxu0
      %v2098 = vmax.f32 %v1940, 0.0
      %v2099 = vmax.f32 %v1942, 0.0
      %v2100 = vmax.f32 %v1944, 0.0
      %v2101 = vmax.f32 %v1946, 0.0
      %v2102 = vmax.f32 %v1950, 0.0
      %v2103 = vmax.f32 %v1952, 0.0
      %v2104 = vmax.f32 %v1954, 0.0
      %v2105 = vmax.f32 %v1956, 0.0
      %v2106 = vmax.f32 %v1960, 0.0
      %v2107 = vmax.f32 %v1962, 0.0
      %v2108 = vmax.f32 %v1964, 0.0
      %v2109 = vmax.f32 %v1966, 0.0
      %v2110 = vmax.f32 %v1970, 0.0
      %v2111 = vmax.f32 %v1972, 0.0
      %v2112 = vmax.f32 %v1974, 0.0
      %v2113 = vmax.f32 %v1976, 0.0
      %v2114 = vmax.f32 %v1980, 0.0
      %v2115 = vmax.f32 %v1982, 0.0
      %v2116 = vmax.f32 %v1984, 0.0
      %v2117 = vmax.f32 %v1986, 0.0
      %v2118 = vmax.f32 %v1990, 0.0
      %v2119 = vmax.f32 %v1992, 0.0
      %v2120 = vmax.f32 %v1994, 0.0
      %v2121 = vmax.f32 %v1996, 0.0
      %v2122 = vmax.f32 %v2000, 0.0
      %v2123 = vmax.f32 %v2002, 0.0
      %v2124 = vmax.f32 %v2004, 0.0
      %v2125 = vmax.f32 %v2006, 0.0
      %v2126 = vmax.f32 %v2010, 0.0
      %v2127 = vmax.f32 %v2012, 0.0
      %v2128 = vmax.f32 %v2014, 0.0
      %v2129 = vmax.f32 %v2016, 0.0
      %v2130 = vmax.f32 %v2020, 0.0
      %v2131 = vmax.f32 %v2022, 0.0
      %v2132 = vmax.f32 %v2024, 0.0
      %v2133 = vmax.f32 %v2026, 0.0
      %v2134 = vmax.f32 %v2030, 0.0
      %v2135 = vmax.f32 %v2032, 0.0
      %v2136 = vmax.f32 %v2034, 0.0
      %v2137 = vmax.f32 %v2036, 0.0
      %v2138 = vmax.f32 %v2040, 0.0
      %v2139 = vmax.f32 %v2042, 0.0
      %v2140 = vmax.f32 %v2044, 0.0
      %v2141 = vmax.f32 %v2046, 0.0
      %v2142 = vmax.f32 %v2050, 0.0
      %v2143 = vmax.f32 %v2052, 0.0
      %v2144 = vmax.f32 %v2054, 0.0
      %v2145 = vmax.f32 %v2056, 0.0
      %v2146 = vmax.f32 %v2060, 0.0
      %v2147 = vmax.f32 %v2062, 0.0
      %v2148 = vmax.f32 %v2064, 0.0
      %v2149 = vmax.f32 %v2066, 0.0
      %v2150 = vmax.f32 %v2070, 0.0
      %v2151 = vmax.f32 %v2072, 0.0
      %v2152 = vmax.f32 %v2074, 0.0
      %v2153 = vmax.f32 %v2076, 0.0
      %v2154 = vmax.f32 %v2080, 0.0
      %v2155 = vmax.f32 %v2082, 0.0
      %v2156 = vmax.f32 %v2084, 0.0
      %v2157 = vmax.f32 %v2086, 0.0
      %v2158 = vmax.f32 %v2090, 0.0
      %v2159 = vmax.f32 %v2092, 0.0
      %v2160 = vmax.f32 %v2094, 0.0
      %v2161 = vmax.f32 %v2096, 0.0
      %v2162 = vpack.c.bf16 %v2100, %v2098
      %v2163 = vpack.c.bf16 %v2101, %v2099
      %v2164 = vpack.c.bf16 %v2104, %v2102
      %v2165 = vpack.c.bf16 %v2105, %v2103
      %v2166 = vpack.c.bf16 %v2108, %v2106
      %v2167 = vpack.c.bf16 %v2109, %v2107
      %v2168 = vpack.c.bf16 %v2112, %v2110
      %v2169 = vpack.c.bf16 %v2113, %v2111
      %v2170 = vpack.c.bf16 %v2116, %v2114
      %v2171 = vpack.c.bf16 %v2117, %v2115
      %v2172 = vpack.c.bf16 %v2120, %v2118
      %v2173 = vpack.c.bf16 %v2121, %v2119
      %v2174 = vpack.c.bf16 %v2124, %v2122
      %v2175 = vpack.c.bf16 %v2125, %v2123
      %v2176 = vpack.c.bf16 %v2128, %v2126
      %v2177 = vpack.c.bf16 %v2129, %v2127
      %v2178 = vpack.c.bf16 %v2132, %v2130
      %v2179 = vpack.c.bf16 %v2133, %v2131
      %v2180 = vpack.c.bf16 %v2136, %v2134
      %v2181 = vpack.c.bf16 %v2137, %v2135
      %v2182 = vpack.c.bf16 %v2140, %v2138
      %v2183 = vpack.c.bf16 %v2141, %v2139
      %v2184 = vpack.c.bf16 %v2144, %v2142
      %v2185 = vpack.c.bf16 %v2145, %v2143
      %v2186 = vpack.c.bf16 %v2148, %v2146
      %v2187 = vpack.c.bf16 %v2149, %v2147
      %v2188 = vpack.c.bf16 %v2152, %v2150
      %v2189 = vpack.c.bf16 %v2153, %v2151
      %v2190 = vpack.c.bf16 %v2156, %v2154
      %v2191 = vpack.c.bf16 %v2157, %v2155
      %v2192 = vpack.c.bf16 %v2160, %v2158
      %v2193 = vpack.c.bf16 %v2161, %v2159
      %v2194 = vld [vmem:[%s6] sm:$0xff]
      %v2195 = vld [vmem:[%s6 + $0x8] sm:$0xff]
      %v2196 = vld [vmem:[%s6 + $0x10] sm:$0xff]
      %v2197 = vld [vmem:[%s6 + $0x18] sm:$0xff]
      %v2198 = vld [vmem:[%s6 + $0x20] sm:$0xff]
      %v2199 = vld [vmem:[%s6 + $0x28] sm:$0xff]
      %v2200 = vld [vmem:[%s6 + $0x30] sm:$0xff]
      %v2201 = vld [vmem:[%s6 + $0x38] sm:$0xff]
      %v2202 = vld [vmem:[%s6 + $0x40] sm:$0xff]
      %v2203 = vld [vmem:[%s6 + $0x48] sm:$0xff]
      %v2204 = vld [vmem:[%s6 + $0x50] sm:$0xff]
      %v2205 = vld [vmem:[%s6 + $0x58] sm:$0xff]
      %v2206 = vld [vmem:[%s6 + $0x60] sm:$0xff]
      %v2207 = vld [vmem:[%s6 + $0x68] sm:$0xff]
      %v2208 = vld [vmem:[%s6 + $0x70] sm:$0xff]
      %v2209 = vld [vmem:[%s6 + $0x78] sm:$0xff]
      %v2210 = vld [vmem:[%s6 + $0x80] sm:$0xff]
      %v2211 = vld [vmem:[%s6 + $0x88] sm:$0xff]
      %v2212 = vld [vmem:[%s6 + $0x90] sm:$0xff]
      %v2213 = vld [vmem:[%s6 + $0x98] sm:$0xff]
      %v2214 = vld [vmem:[%s6 + $0xa0] sm:$0xff]
      %v2215 = vld [vmem:[%s6 + $0xa8] sm:$0xff]
      %v2216 = vld [vmem:[%s6 + $0xb0] sm:$0xff]
      %v2217 = vld [vmem:[%s6 + $0xb8] sm:$0xff]
      %v2218 = vld [vmem:[%s6 + $0xc0] sm:$0xff]
      %v2219 = vld [vmem:[%s6 + $0xc8] sm:$0xff]
      %v2220 = vld [vmem:[%s6 + $0xd0] sm:$0xff]
      %v2221 = vld [vmem:[%s6 + $0xd8] sm:$0xff]
      %v2222 = vld [vmem:[%s6 + $0xe0] sm:$0xff]
      %v2223 = vld [vmem:[%s6 + $0xe8] sm:$0xff]
      %v2224 = vld [vmem:[%s6 + $0xf0] sm:$0xff]
      %v2225 = vld [vmem:[%s6 + $0xf8] sm:$0xff]
      %v2226 = vld [vmem:[%s7] sm:$0x3]
      %v2228 = vlaneseq
      %v2229 = vshrl.u32 %v2228, 7
      %v2230 = vsub.s32 0, %v2229
      %v2231 = vrot.slane %v2226, %v2230
      %v2232 = vlaneseq
      %v2233 = vshrl.u32 %v2232, 7
      %v2234 = vsub.s32 1, %v2233
      %v2235 = vrot.slane %v2226, %v2234
      %v2270 = vunpack.c.l.b16 %v2194
      %v2271 = vunpack.c.h.b16 %v2194
      %v2272 = vunpack.c.l.b16 %v2195
      %v2273 = vunpack.c.h.b16 %v2195
      %v2274 = vunpack.c.l.b16 %v2196
      %v2275 = vunpack.c.h.b16 %v2196
      %v2276 = vunpack.c.l.b16 %v2197
      %v2277 = vunpack.c.h.b16 %v2197
      %v2278 = vunpack.c.l.b16 %v2198
      %v2279 = vunpack.c.h.b16 %v2198
      %v2280 = vunpack.c.l.b16 %v2199
      %v2281 = vunpack.c.h.b16 %v2199
      %v2282 = vunpack.c.l.b16 %v2200
      %v2283 = vunpack.c.h.b16 %v2200
      %v2284 = vunpack.c.l.b16 %v2201
      %v2285 = vunpack.c.h.b16 %v2201
      %v2286 = vunpack.c.l.b16 %v2202
      %v2287 = vunpack.c.h.b16 %v2202
      %v2288 = vunpack.c.l.b16 %v2203
      %v2289 = vunpack.c.h.b16 %v2203
      %v2290 = vunpack.c.l.b16 %v2204
      %v2291 = vunpack.c.h.b16 %v2204
      %v2292 = vunpack.c.l.b16 %v2205
      %v2293 = vunpack.c.h.b16 %v2205
      %v2294 = vunpack.c.l.b16 %v2206
      %v2295 = vunpack.c.h.b16 %v2206
      %v2296 = vunpack.c.l.b16 %v2207
      %v2297 = vunpack.c.h.b16 %v2207
      %v2298 = vunpack.c.l.b16 %v2208
      %v2299 = vunpack.c.h.b16 %v2208
      %v2300 = vunpack.c.l.b16 %v2209
      %v2301 = vunpack.c.h.b16 %v2209
      %v2302 = vunpack.c.l.b16 %v2210
      %v2303 = vunpack.c.h.b16 %v2210
      %v2304 = vunpack.c.l.b16 %v2211
      %v2305 = vunpack.c.h.b16 %v2211
      %v2306 = vunpack.c.l.b16 %v2212
      %v2307 = vunpack.c.h.b16 %v2212
      %v2308 = vunpack.c.l.b16 %v2213
      %v2309 = vunpack.c.h.b16 %v2213
      %v2310 = vunpack.c.l.b16 %v2214
      %v2311 = vunpack.c.h.b16 %v2214
      %v2312 = vunpack.c.l.b16 %v2215
      %v2313 = vunpack.c.h.b16 %v2215
      %v2314 = vunpack.c.l.b16 %v2216
      %v2315 = vunpack.c.h.b16 %v2216
      %v2316 = vunpack.c.l.b16 %v2217
      %v2317 = vunpack.c.h.b16 %v2217
      %v2318 = vunpack.c.l.b16 %v2218
      %v2319 = vunpack.c.h.b16 %v2218
      %v2320 = vunpack.c.l.b16 %v2219
      %v2321 = vunpack.c.h.b16 %v2219
      %v2322 = vunpack.c.l.b16 %v2220
      %v2323 = vunpack.c.h.b16 %v2220
      %v2324 = vunpack.c.l.b16 %v2221
      %v2325 = vunpack.c.h.b16 %v2221
      %v2326 = vunpack.c.l.b16 %v2222
      %v2327 = vunpack.c.h.b16 %v2222
      %v2328 = vunpack.c.l.b16 %v2223
      %v2329 = vunpack.c.h.b16 %v2223
      %v2330 = vunpack.c.l.b16 %v2224
      %v2331 = vunpack.c.h.b16 %v2224
      %v2332 = vunpack.c.l.b16 %v2225
      %v2333 = vunpack.c.h.b16 %v2225
      %v2334 = vpack.c.b16 %v2272, %v2270
      %v2335 = vpack.c.b16 %v2273, %v2271
      %v2336 = vpack.c.b16 %v2276, %v2274
      %v2337 = vpack.c.b16 %v2277, %v2275
      %v2338 = vpack.c.b16 %v2280, %v2278
      %v2339 = vpack.c.b16 %v2281, %v2279
      %v2340 = vpack.c.b16 %v2284, %v2282
      %v2341 = vpack.c.b16 %v2285, %v2283
      %v2342 = vpack.c.b16 %v2288, %v2286
      %v2343 = vpack.c.b16 %v2289, %v2287
      %v2344 = vpack.c.b16 %v2292, %v2290
      %v2345 = vpack.c.b16 %v2293, %v2291
      %v2346 = vpack.c.b16 %v2296, %v2294
      %v2347 = vpack.c.b16 %v2297, %v2295
      %v2348 = vpack.c.b16 %v2300, %v2298
      %v2349 = vpack.c.b16 %v2301, %v2299
      %v2350 = vpack.c.b16 %v2304, %v2302
      %v2351 = vpack.c.b16 %v2305, %v2303
      %v2352 = vpack.c.b16 %v2308, %v2306
      %v2353 = vpack.c.b16 %v2309, %v2307
      %v2354 = vpack.c.b16 %v2312, %v2310
      %v2355 = vpack.c.b16 %v2313, %v2311
      %v2356 = vpack.c.b16 %v2316, %v2314
      %v2357 = vpack.c.b16 %v2317, %v2315
      %v2358 = vpack.c.b16 %v2320, %v2318
      %v2359 = vpack.c.b16 %v2321, %v2319
      %v2360 = vpack.c.b16 %v2324, %v2322
      %v2361 = vpack.c.b16 %v2325, %v2323
      %v2362 = vpack.c.b16 %v2328, %v2326
      %v2363 = vpack.c.b16 %v2329, %v2327
      %v2364 = vpack.c.b16 %v2332, %v2330
      %v2365 = vpack.c.b16 %v2333, %v2331
      %2398 = vmatprep.subr.bf16.mxu0 %v2335
      %2399 = vmatpush1.bf16.msra.mxu0 %v2334
      %2400 = vmatprep.subr.bf16.mxu0 %v2337
      %2401 = vmatpush1.bf16.msra.mxu0 %v2336
      %2402 = vmatprep.subr.bf16.mxu0 %v2339
      %2403 = vmatpush1.bf16.msra.mxu0 %v2338
      %2404 = vmatprep.subr.bf16.mxu0 %v2341
      %2405 = vmatpush1.bf16.msra.mxu0 %v2340
      %2406 = vmatprep.subr.bf16.mxu0 %v2343
      %2407 = vmatpush1.bf16.msra.mxu0 %v2342
      %2408 = vmatprep.subr.bf16.mxu0 %v2345
      %2409 = vmatpush1.bf16.msra.mxu0 %v2344
      %2410 = vmatprep.subr.bf16.mxu0 %v2347
      %2411 = vmatpush1.bf16.msra.mxu0 %v2346
      %2412 = vmatprep.subr.bf16.mxu0 %v2349
      %2413 = vmatpush1.bf16.msra.mxu0 %v2348
      %2414 = vmatprep.subr.bf16.mxu0 %v2351
      %2415 = vmatpush1.bf16.msra.mxu0 %v2350
      %2416 = vmatprep.subr.bf16.mxu0 %v2353
      %2417 = vmatpush1.bf16.msra.mxu0 %v2352
      %2418 = vmatprep.subr.bf16.mxu0 %v2355
      %2419 = vmatpush1.bf16.msra.mxu0 %v2354
      %2420 = vmatprep.subr.bf16.mxu0 %v2357
      %2421 = vmatpush1.bf16.msra.mxu0 %v2356
      %2422 = vmatprep.subr.bf16.mxu0 %v2359
      %2423 = vmatpush1.bf16.msra.mxu0 %v2358
      %2424 = vmatprep.subr.bf16.mxu0 %v2361
      %2425 = vmatpush1.bf16.msra.mxu0 %v2360
      %2426 = vmatprep.subr.bf16.mxu0 %v2363
      %2427 = vmatpush1.bf16.msra.mxu0 %v2362
      %2428 = vmatprep.subr.bf16.mxu0 %v2365
      %2429 = vmatpush1.bf16.msra.mxu0 %v2364
      %2430 = vmatprep.mubr.bf16.mxu0 %v2163
      %2431 = vmatmul.mubr.bf16.gmra.mrb[0].mxu0 %v2162
      %v2432 = vpop.f32.mrb[0].mxu0
      %v2433 = vadd.f32 %v2231, %v2432
      %v2434 = vpop.f32.mrb[0].mxu0
      %v2435 = vadd.f32 %v2235, %v2434
      %v2436 = vpop.f32.mrb[0].mxu0
      %v2437 = vadd.f32 %v2231, %v2436
      %v2438 = vpop.f32.mrb[0].mxu0
      %v2439 = vadd.f32 %v2235, %v2438
      %2440 = vmatprep.mubr.bf16.mxu0 %v2165
      %2441 = vmatmul.mubr.bf16.gmra.mrb[0].mxu0 %v2164
      %v2442 = vpop.f32.mrb[0].mxu0
      %v2443 = vadd.f32 %v2231, %v2442
      %v2444 = vpop.f32.mrb[0].mxu0
      %v2445 = vadd.f32 %v2235, %v2444
      %v2446 = vpop.f32.mrb[0].mxu0
      %v2447 = vadd.f32 %v2231, %v2446
      %v2448 = vpop.f32.mrb[0].mxu0
      %v2449 = vadd.f32 %v2235, %v2448
      %2450 = vmatprep.mubr.bf16.mxu0 %v2167
      %2451 = vmatmul.mubr.bf16.gmra.mrb[0].mxu0 %v2166
      %v2452 = vpop.f32.mrb[0].mxu0
      %v2453 = vadd.f32 %v2231, %v2452
      %v2454 = vpop.f32.mrb[0].mxu0
      %v2455 = vadd.f32 %v2235, %v2454
      %v2456 = vpop.f32.mrb[0].mxu0
      %v2457 = vadd.f32 %v2231, %v2456
      %v2458 = vpop.f32.mrb[0].mxu0
      %v2459 = vadd.f32 %v2235, %v2458
      %2460 = vmatprep.mubr.bf16.mxu0 %v2169
      %2461 = vmatmul.mubr.bf16.gmra.mrb[0].mxu0 %v2168
      %v2462 = vpop.f32.mrb[0].mxu0
      %v2463 = vadd.f32 %v2231, %v2462
      %v2464 = vpop.f32.mrb[0].mxu0
      %v2465 = vadd.f32 %v2235, %v2464
      %v2466 = vpop.f32.mrb[0].mxu0
      %v2467 = vadd.f32 %v2231, %v2466
      %v2468 = vpop.f32.mrb[0].mxu0
      %v2469 = vadd.f32 %v2235, %v2468
      %2470 = vmatprep.mubr.bf16.mxu0 %v2171
      %2471 = vmatmul.mubr.bf16.gmra.mrb[0].mxu0 %v2170
      %v2472 = vpop.f32.mrb[0].mxu0
      %v2473 = vadd.f32 %v2231, %v2472
      %v2474 = vpop.f32.mrb[0].mxu0
      %v2475 = vadd.f32 %v2235, %v2474
      %v2476 = vpop.f32.mrb[0].mxu0
      %v2477 = vadd.f32 %v2231, %v2476
      %v2478 = vpop.f32.mrb[0].mxu0
      %v2479 = vadd.f32 %v2235, %v2478
      %2480 = vmatprep.mubr.bf16.mxu0 %v2173
      %2481 = vmatmul.mubr.bf16.gmra.mrb[0].mxu0 %v2172
      %v2482 = vpop.f32.mrb[0].mxu0
      %v2483 = vadd.f32 %v2231, %v2482
      %v2484 = vpop.f32.mrb[0].mxu0
      %v2485 = vadd.f32 %v2235, %v2484
      %v2486 = vpop.f32.mrb[0].mxu0
      %v2487 = vadd.f32 %v2231, %v2486
      %v2488 = vpop.f32.mrb[0].mxu0
      %v2489 = vadd.f32 %v2235, %v2488
      %2490 = vmatprep.mubr.bf16.mxu0 %v2175
      %2491 = vmatmul.mubr.bf16.gmra.mrb[0].mxu0 %v2174
      %v2492 = vpop.f32.mrb[0].mxu0
      %v2493 = vadd.f32 %v2231, %v2492
      %v2494 = vpop.f32.mrb[0].mxu0
      %v2495 = vadd.f32 %v2235, %v2494
      %v2496 = vpop.f32.mrb[0].mxu0
      %v2497 = vadd.f32 %v2231, %v2496
      %v2498 = vpop.f32.mrb[0].mxu0
      %v2499 = vadd.f32 %v2235, %v2498
      %2500 = vmatprep.mubr.bf16.mxu0 %v2177
      %2501 = vmatmul.mubr.bf16.gmra.mrb[0].mxu0 %v2176
      %v2502 = vpop.f32.mrb[0].mxu0
      %v2503 = vadd.f32 %v2231, %v2502
      %v2504 = vpop.f32.mrb[0].mxu0
      %v2505 = vadd.f32 %v2235, %v2504
      %v2506 = vpop.f32.mrb[0].mxu0
      %v2507 = vadd.f32 %v2231, %v2506
      %v2508 = vpop.f32.mrb[0].mxu0
      %v2509 = vadd.f32 %v2235, %v2508
      %2510 = vmatprep.mubr.bf16.mxu0 %v2179
      %2511 = vmatmul.mubr.bf16.gmra.mrb[0].mxu0 %v2178
      %v2512 = vpop.f32.mrb[0].mxu0
      %v2513 = vadd.f32 %v2231, %v2512
      %v2514 = vpop.f32.mrb[0].mxu0
      %v2515 = vadd.f32 %v2235, %v2514
      %v2516 = vpop.f32.mrb[0].mxu0
      %v2517 = vadd.f32 %v2231, %v2516
      %v2518 = vpop.f32.mrb[0].mxu0
      %v2519 = vadd.f32 %v2235, %v2518
      %2520 = vmatprep.mubr.bf16.mxu0 %v2181
      %2521 = vmatmul.mubr.bf16.gmra.mrb[0].mxu0 %v2180
      %v2522 = vpop.f32.mrb[0].mxu0
      %v2523 = vadd.f32 %v2231, %v2522
      %v2524 = vpop.f32.mrb[0].mxu0
      %v2525 = vadd.f32 %v2235, %v2524
      %v2526 = vpop.f32.mrb[0].mxu0
      %v2527 = vadd.f32 %v2231, %v2526
      %v2528 = vpop.f32.mrb[0].mxu0
      %v2529 = vadd.f32 %v2235, %v2528
      %2530 = vmatprep.mubr.bf16.mxu0 %v2183
      %2531 = vmatmul.mubr.bf16.gmra.mrb[0].mxu0 %v2182
      %v2532 = vpop.f32.mrb[0].mxu0
      %v2533 = vadd.f32 %v2231, %v2532
      %v2534 = vpop.f32.mrb[0].mxu0
      %v2535 = vadd.f32 %v2235, %v2534
      %v2536 = vpop.f32.mrb[0].mxu0
      %v2537 = vadd.f32 %v2231, %v2536
      %v2538 = vpop.f32.mrb[0].mxu0
      %v2539 = vadd.f32 %v2235, %v2538
      %2540 = vmatprep.mubr.bf16.mxu0 %v2185
      %2541 = vmatmul.mubr.bf16.gmra.mrb[0].mxu0 %v2184
      %v2542 = vpop.f32.mrb[0].mxu0
      %v2543 = vadd.f32 %v2231, %v2542
      %v2544 = vpop.f32.mrb[0].mxu0
      %v2545 = vadd.f32 %v2235, %v2544
      %v2546 = vpop.f32.mrb[0].mxu0
      %v2547 = vadd.f32 %v2231, %v2546
      %v2548 = vpop.f32.mrb[0].mxu0
      %v2549 = vadd.f32 %v2235, %v2548
      %2550 = vmatprep.mubr.bf16.mxu0 %v2187
      %2551 = vmatmul.mubr.bf16.gmra.mrb[0].mxu0 %v2186
      %v2552 = vpop.f32.mrb[0].mxu0
      %v2553 = vadd.f32 %v2231, %v2552
      %v2554 = vpop.f32.mrb[0].mxu0
      %v2555 = vadd.f32 %v2235, %v2554
      %v2556 = vpop.f32.mrb[0].mxu0
      %v2557 = vadd.f32 %v2231, %v2556
      %v2558 = vpop.f32.mrb[0].mxu0
      %v2559 = vadd.f32 %v2235, %v2558
      %2560 = vmatprep.mubr.bf16.mxu0 %v2189
      %2561 = vmatmul.mubr.bf16.gmra.mrb[0].mxu0 %v2188
      %v2562 = vpop.f32.mrb[0].mxu0
      %v2563 = vadd.f32 %v2231, %v2562
      %v2564 = vpop.f32.mrb[0].mxu0
      %v2565 = vadd.f32 %v2235, %v2564
      %v2566 = vpop.f32.mrb[0].mxu0
      %v2567 = vadd.f32 %v2231, %v2566
      %v2568 = vpop.f32.mrb[0].mxu0
      %v2569 = vadd.f32 %v2235, %v2568
      %2570 = vmatprep.mubr.bf16.mxu0 %v2191
      %2571 = vmatmul.mubr.bf16.gmra.mrb[0].mxu0 %v2190
      %v2572 = vpop.f32.mrb[0].mxu0
      %v2573 = vadd.f32 %v2231, %v2572
      %v2574 = vpop.f32.mrb[0].mxu0
      %v2575 = vadd.f32 %v2235, %v2574
      %v2576 = vpop.f32.mrb[0].mxu0
      %v2577 = vadd.f32 %v2231, %v2576
      %v2578 = vpop.f32.mrb[0].mxu0
      %v2579 = vadd.f32 %v2235, %v2578
      %2580 = vmatprep.mubr.bf16.mxu0 %v2193
      %2581 = vmatmul.mubr.bf16.gmra.mrb[0].mxu0 %v2192
      %v2582 = vpop.f32.mrb[0].mxu0
      %v2583 = vadd.f32 %v2231, %v2582
      %v2584 = vpop.f32.mrb[0].mxu0
      %v2585 = vadd.f32 %v2235, %v2584
      %v2586 = vpop.f32.mrb[0].mxu0
      %v2587 = vadd.f32 %v2231, %v2586
      %v2588 = vpop.f32.mrb[0].mxu0
      %v2589 = vadd.f32 %v2235, %v2588
      %2590 = vdwg.mxu0
      %v2591 = vmax.f32 %v2433, 0.0
      %v2592 = vmax.f32 %v2435, 0.0
      %v2593 = vmax.f32 %v2437, 0.0
      %v2594 = vmax.f32 %v2439, 0.0
      %v2595 = vmax.f32 %v2443, 0.0
      %v2596 = vmax.f32 %v2445, 0.0
      %v2597 = vmax.f32 %v2447, 0.0
      %v2598 = vmax.f32 %v2449, 0.0
      %v2599 = vmax.f32 %v2453, 0.0
      %v2600 = vmax.f32 %v2455, 0.0
      %v2601 = vmax.f32 %v2457, 0.0
      %v2602 = vmax.f32 %v2459, 0.0
      %v2603 = vmax.f32 %v2463, 0.0
      %v2604 = vmax.f32 %v2465, 0.0
      %v2605 = vmax.f32 %v2467, 0.0
      %v2606 = vmax.f32 %v2469, 0.0
      %v2607 = vmax.f32 %v2473, 0.0
      %v2608 = vmax.f32 %v2475, 0.0
      %v2609 = vmax.f32 %v2477, 0.0
      %v2610 = vmax.f32 %v2479, 0.0
      %v2611 = vmax.f32 %v2483, 0.0
      %v2612 = vmax.f32 %v2485, 0.0
      %v2613 = vmax.f32 %v2487, 0.0
      %v2614 = vmax.f32 %v2489, 0.0
      %v2615 = vmax.f32 %v2493, 0.0
      %v2616 = vmax.f32 %v2495, 0.0
      %v2617 = vmax.f32 %v2497, 0.0
      %v2618 = vmax.f32 %v2499, 0.0
      %v2619 = vmax.f32 %v2503, 0.0
      %v2620 = vmax.f32 %v2505, 0.0
      %v2621 = vmax.f32 %v2507, 0.0
      %v2622 = vmax.f32 %v2509, 0.0
      %v2623 = vmax.f32 %v2513, 0.0
      %v2624 = vmax.f32 %v2515, 0.0
      %v2625 = vmax.f32 %v2517, 0.0
      %v2626 = vmax.f32 %v2519, 0.0
      %v2627 = vmax.f32 %v2523, 0.0
      %v2628 = vmax.f32 %v2525, 0.0
      %v2629 = vmax.f32 %v2527, 0.0
      %v2630 = vmax.f32 %v2529, 0.0
      %v2631 = vmax.f32 %v2533, 0.0
      %v2632 = vmax.f32 %v2535, 0.0
      %v2633 = vmax.f32 %v2537, 0.0
      %v2634 = vmax.f32 %v2539, 0.0
      %v2635 = vmax.f32 %v2543, 0.0
      %v2636 = vmax.f32 %v2545, 0.0
      %v2637 = vmax.f32 %v2547, 0.0
      %v2638 = vmax.f32 %v2549, 0.0
      %v2639 = vmax.f32 %v2553, 0.0
      %v2640 = vmax.f32 %v2555, 0.0
      %v2641 = vmax.f32 %v2557, 0.0
      %v2642 = vmax.f32 %v2559, 0.0
      %v2643 = vmax.f32 %v2563, 0.0
      %v2644 = vmax.f32 %v2565, 0.0
      %v2645 = vmax.f32 %v2567, 0.0
      %v2646 = vmax.f32 %v2569, 0.0
      %v2647 = vmax.f32 %v2573, 0.0
      %v2648 = vmax.f32 %v2575, 0.0
      %v2649 = vmax.f32 %v2577, 0.0
      %v2650 = vmax.f32 %v2579, 0.0
      %v2651 = vmax.f32 %v2583, 0.0
      %v2652 = vmax.f32 %v2585, 0.0
      %v2653 = vmax.f32 %v2587, 0.0
      %v2654 = vmax.f32 %v2589, 0.0
      %v2655 = vpack.c.bf16 %v2593, %v2591
      %v2656 = vpack.c.bf16 %v2594, %v2592
      %v2657 = vpack.c.bf16 %v2597, %v2595
      %v2658 = vpack.c.bf16 %v2598, %v2596
      %v2659 = vpack.c.bf16 %v2601, %v2599
      %v2660 = vpack.c.bf16 %v2602, %v2600
      %v2661 = vpack.c.bf16 %v2605, %v2603
      %v2662 = vpack.c.bf16 %v2606, %v2604
      %v2663 = vpack.c.bf16 %v2609, %v2607
      %v2664 = vpack.c.bf16 %v2610, %v2608
      %v2665 = vpack.c.bf16 %v2613, %v2611
      %v2666 = vpack.c.bf16 %v2614, %v2612
      %v2667 = vpack.c.bf16 %v2617, %v2615
      %v2668 = vpack.c.bf16 %v2618, %v2616
      %v2669 = vpack.c.bf16 %v2621, %v2619
      %v2670 = vpack.c.bf16 %v2622, %v2620
      %v2671 = vpack.c.bf16 %v2625, %v2623
      %v2672 = vpack.c.bf16 %v2626, %v2624
      %v2673 = vpack.c.bf16 %v2629, %v2627
      %v2674 = vpack.c.bf16 %v2630, %v2628
      %v2675 = vpack.c.bf16 %v2633, %v2631
      %v2676 = vpack.c.bf16 %v2634, %v2632
      %v2677 = vpack.c.bf16 %v2637, %v2635
      %v2678 = vpack.c.bf16 %v2638, %v2636
      %v2679 = vpack.c.bf16 %v2641, %v2639
      %v2680 = vpack.c.bf16 %v2642, %v2640
      %v2681 = vpack.c.bf16 %v2645, %v2643
      %v2682 = vpack.c.bf16 %v2646, %v2644
      %v2683 = vpack.c.bf16 %v2649, %v2647
      %v2684 = vpack.c.bf16 %v2650, %v2648
      %v2685 = vpack.c.bf16 %v2653, %v2651
      %v2686 = vpack.c.bf16 %v2654, %v2652
      %v2687 = vld [vmem:[%s8] sm:$0xff]
      %v2688 = vld [vmem:[%s8 + $0x8] sm:$0xff]
      %v2689 = vld [vmem:[%s8 + $0x10] sm:$0xff]
      %v2690 = vld [vmem:[%s8 + $0x18] sm:$0xff]
      %v2691 = vld [vmem:[%s8 + $0x20] sm:$0xff]
      %v2692 = vld [vmem:[%s8 + $0x28] sm:$0xff]
      %v2693 = vld [vmem:[%s8 + $0x30] sm:$0xff]
      %v2694 = vld [vmem:[%s8 + $0x38] sm:$0xff]
      %v2695 = vld [vmem:[%s8 + $0x40] sm:$0xff]
      %v2696 = vld [vmem:[%s8 + $0x48] sm:$0xff]
      %v2697 = vld [vmem:[%s8 + $0x50] sm:$0xff]
      %v2698 = vld [vmem:[%s8 + $0x58] sm:$0xff]
      %v2699 = vld [vmem:[%s8 + $0x60] sm:$0xff]
      %v2700 = vld [vmem:[%s8 + $0x68] sm:$0xff]
      %v2701 = vld [vmem:[%s8 + $0x70] sm:$0xff]
      %v2702 = vld [vmem:[%s8 + $0x78] sm:$0xff]
      %v2703 = vld [vmem:[%s8 + $0x80] sm:$0xff]
      %v2704 = vld [vmem:[%s8 + $0x88] sm:$0xff]
      %v2705 = vld [vmem:[%s8 + $0x90] sm:$0xff]
      %v2706 = vld [vmem:[%s8 + $0x98] sm:$0xff]
      %v2707 = vld [vmem:[%s8 + $0xa0] sm:$0xff]
      %v2708 = vld [vmem:[%s8 + $0xa8] sm:$0xff]
      %v2709 = vld [vmem:[%s8 + $0xb0] sm:$0xff]
      %v2710 = vld [vmem:[%s8 + $0xb8] sm:$0xff]
      %v2711 = vld [vmem:[%s8 + $0xc0] sm:$0xff]
      %v2712 = vld [vmem:[%s8 + $0xc8] sm:$0xff]
      %v2713 = vld [vmem:[%s8 + $0xd0] sm:$0xff]
      %v2714 = vld [vmem:[%s8 + $0xd8] sm:$0xff]
      %v2715 = vld [vmem:[%s8 + $0xe0] sm:$0xff]
      %v2716 = vld [vmem:[%s8 + $0xe8] sm:$0xff]
      %v2717 = vld [vmem:[%s8 + $0xf0] sm:$0xff]
      %v2718 = vld [vmem:[%s8 + $0xf8] sm:$0xff]
      %v2719 = vld [vmem:[%s9] sm:$0x3]
      %v2721 = vlaneseq
      %v2722 = vshrl.u32 %v2721, 7
      %v2723 = vsub.s32 0, %v2722
      %v2724 = vrot.slane %v2719, %v2723
      %v2725 = vlaneseq
      %v2726 = vshrl.u32 %v2725, 7
      %v2727 = vsub.s32 1, %v2726
      %v2728 = vrot.slane %v2719, %v2727
      %v2763 = vunpack.c.l.b16 %v2687
      %v2764 = vunpack.c.h.b16 %v2687
      %v2765 = vunpack.c.l.b16 %v2688
      %v2766 = vunpack.c.h.b16 %v2688
      %v2767 = vunpack.c.l.b16 %v2689
      %v2768 = vunpack.c.h.b16 %v2689
      %v2769 = vunpack.c.l.b16 %v2690
      %v2770 = vunpack.c.h.b16 %v2690
      %v2771 = vunpack.c.l.b16 %v2691
      %v2772 = vunpack.c.h.b16 %v2691
      %v2773 = vunpack.c.l.b16 %v2692
      %v2774 = vunpack.c.h.b16 %v2692
      %v2775 = vunpack.c.l.b16 %v2693
      %v2776 = vunpack.c.h.b16 %v2693
      %v2777 = vunpack.c.l.b16 %v2694
      %v2778 = vunpack.c.h.b16 %v2694
      %v2779 = vunpack.c.l.b16 %v2695
      %v2780 = vunpack.c.h.b16 %v2695
      %v2781 = vunpack.c.l.b16 %v2696
      %v2782 = vunpack.c.h.b16 %v2696
      %v2783 = vunpack.c.l.b16 %v2697
      %v2784 = vunpack.c.h.b16 %v2697
      %v2785 = vunpack.c.l.b16 %v2698
      %v2786 = vunpack.c.h.b16 %v2698
      %v2787 = vunpack.c.l.b16 %v2699
      %v2788 = vunpack.c.h.b16 %v2699
      %v2789 = vunpack.c.l.b16 %v2700
      %v2790 = vunpack.c.h.b16 %v2700
      %v2791 = vunpack.c.l.b16 %v2701
      %v2792 = vunpack.c.h.b16 %v2701
      %v2793 = vunpack.c.l.b16 %v2702
      %v2794 = vunpack.c.h.b16 %v2702
      %v2795 = vunpack.c.l.b16 %v2703
      %v2796 = vunpack.c.h.b16 %v2703
      %v2797 = vunpack.c.l.b16 %v2704
      %v2798 = vunpack.c.h.b16 %v2704
      %v2799 = vunpack.c.l.b16 %v2705
      %v2800 = vunpack.c.h.b16 %v2705
      %v2801 = vunpack.c.l.b16 %v2706
      %v2802 = vunpack.c.h.b16 %v2706
      %v2803 = vunpack.c.l.b16 %v2707
      %v2804 = vunpack.c.h.b16 %v2707
      %v2805 = vunpack.c.l.b16 %v2708
      %v2806 = vunpack.c.h.b16 %v2708
      %v2807 = vunpack.c.l.b16 %v2709
      %v2808 = vunpack.c.h.b16 %v2709
      %v2809 = vunpack.c.l.b16 %v2710
      %v2810 = vunpack.c.h.b16 %v2710
      %v2811 = vunpack.c.l.b16 %v2711
      %v2812 = vunpack.c.h.b16 %v2711
      %v2813 = vunpack.c.l.b16 %v2712
      %v2814 = vunpack.c.h.b16 %v2712
      %v2815 = vunpack.c.l.b16 %v2713
      %v2816 = vunpack.c.h.b16 %v2713
      %v2817 = vunpack.c.l.b16 %v2714
      %v2818 = vunpack.c.h.b16 %v2714
      %v2819 = vunpack.c.l.b16 %v2715
      %v2820 = vunpack.c.h.b16 %v2715
      %v2821 = vunpack.c.l.b16 %v2716
      %v2822 = vunpack.c.h.b16 %v2716
      %v2823 = vunpack.c.l.b16 %v2717
      %v2824 = vunpack.c.h.b16 %v2717
      %v2825 = vunpack.c.l.b16 %v2718
      %v2826 = vunpack.c.h.b16 %v2718
      %v2827 = vpack.c.b16 %v2765, %v2763
      %v2828 = vpack.c.b16 %v2766, %v2764
      %v2829 = vpack.c.b16 %v2769, %v2767
      %v2830 = vpack.c.b16 %v2770, %v2768
      %v2831 = vpack.c.b16 %v2773, %v2771
      %v2832 = vpack.c.b16 %v2774, %v2772
      %v2833 = vpack.c.b16 %v2777, %v2775
      %v2834 = vpack.c.b16 %v2778, %v2776
      %v2835 = vpack.c.b16 %v2781, %v2779
      %v2836 = vpack.c.b16 %v2782, %v2780
      %v2837 = vpack.c.b16 %v2785, %v2783
      %v2838 = vpack.c.b16 %v2786, %v2784
      %v2839 = vpack.c.b16 %v2789, %v2787
      %v2840 = vpack.c.b16 %v2790, %v2788
      %v2841 = vpack.c.b16 %v2793, %v2791
      %v2842 = vpack.c.b16 %v2794, %v2792
      %v2843 = vpack.c.b16 %v2797, %v2795
      %v2844 = vpack.c.b16 %v2798, %v2796
      %v2845 = vpack.c.b16 %v2801, %v2799
      %v2846 = vpack.c.b16 %v2802, %v2800
      %v2847 = vpack.c.b16 %v2805, %v2803
      %v2848 = vpack.c.b16 %v2806, %v2804
      %v2849 = vpack.c.b16 %v2809, %v2807
      %v2850 = vpack.c.b16 %v2810, %v2808
      %v2851 = vpack.c.b16 %v2813, %v2811
      %v2852 = vpack.c.b16 %v2814, %v2812
      %v2853 = vpack.c.b16 %v2817, %v2815
      %v2854 = vpack.c.b16 %v2818, %v2816
      %v2855 = vpack.c.b16 %v2821, %v2819
      %v2856 = vpack.c.b16 %v2822, %v2820
      %v2857 = vpack.c.b16 %v2825, %v2823
      %v2858 = vpack.c.b16 %v2826, %v2824
      %2891 = vmatprep.subr.bf16.mxu0 %v2828
      %2892 = vmatpush1.bf16.msra.mxu0 %v2827
      %2893 = vmatprep.subr.bf16.mxu0 %v2830
      %2894 = vmatpush1.bf16.msra.mxu0 %v2829
      %2895 = vmatprep.subr.bf16.mxu0 %v2832
      %2896 = vmatpush1.bf16.msra.mxu0 %v2831
      %2897 = vmatprep.subr.bf16.mxu0 %v2834
      %2898 = vmatpush1.bf16.msra.mxu0 %v2833
      %2899 = vmatprep.subr.bf16.mxu0 %v2836
      %2900 = vmatpush1.bf16.msra.mxu0 %v2835
      %2901 = vmatprep.subr.bf16.mxu0 %v2838
      %2902 = vmatpush1.bf16.msra.mxu0 %v2837
      %2903 = vmatprep.subr.bf16.mxu0 %v2840
      %2904 = vmatpush1.bf16.msra.mxu0 %v2839
      %2905 = vmatprep.subr.bf16.mxu0 %v2842
      %2906 = vmatpush1.bf16.msra.mxu0 %v2841
      %2907 = vmatprep.subr.bf16.mxu0 %v2844
      %2908 = vmatpush1.bf16.msra.mxu0 %v2843
      %2909 = vmatprep.subr.bf16.mxu0 %v2846
      %2910 = vmatpush1.bf16.msra.mxu0 %v2845
      %2911 = vmatprep.subr.bf16.mxu0 %v2848
      %2912 = vmatpush1.bf16.msra.mxu0 %v2847
      %2913 = vmatprep.subr.bf16.mxu0 %v2850
      %2914 = vmatpush1.bf16.msra.mxu0 %v2849
      %2915 = vmatprep.subr.bf16.mxu0 %v2852
      %2916 = vmatpush1.bf16.msra.mxu0 %v2851
      %2917 = vmatprep.subr.bf16.mxu0 %v2854
      %2918 = vmatpush1.bf16.msra.mxu0 %v2853
      %2919 = vmatprep.subr.bf16.mxu0 %v2856
      %2920 = vmatpush1.bf16.msra.mxu0 %v2855
      %2921 = vmatprep.subr.bf16.mxu0 %v2858
      %2922 = vmatpush1.bf16.msra.mxu0 %v2857
      %2923 = vmatprep.mubr.bf16.mxu0 %v2656
      %2924 = vmatmul.mubr.bf16.gmra.mrb[0].mxu0 %v2655
      %v2925 = vpop.f32.mrb[0].mxu0
      %v2926 = vadd.f32 %v2724, %v2925
      %v2927 = vpop.f32.mrb[0].mxu0
      %v2928 = vadd.f32 %v2728, %v2927
      %v2929 = vpop.f32.mrb[0].mxu0
      %v2930 = vadd.f32 %v2724, %v2929
      %v2931 = vpop.f32.mrb[0].mxu0
      %v2932 = vadd.f32 %v2728, %v2931
      %2933 = vmatprep.mubr.bf16.mxu0 %v2658
      %2934 = vmatmul.mubr.bf16.gmra.mrb[0].mxu0 %v2657
      %v2935 = vpop.f32.mrb[0].mxu0
      %v2936 = vadd.f32 %v2724, %v2935
      %v2937 = vpop.f32.mrb[0].mxu0
      %v2938 = vadd.f32 %v2728, %v2937
      %v2939 = vpop.f32.mrb[0].mxu0
      %v2940 = vadd.f32 %v2724, %v2939
      %v2941 = vpop.f32.mrb[0].mxu0
      %v2942 = vadd.f32 %v2728, %v2941
      %2943 = vmatprep.mubr.bf16.mxu0 %v2660
      %2944 = vmatmul.mubr.bf16.gmra.mrb[0].mxu0 %v2659
      %v2945 = vpop.f32.mrb[0].mxu0
      %v2946 = vadd.f32 %v2724, %v2945
      %v2947 = vpop.f32.mrb[0].mxu0
      %v2948 = vadd.f32 %v2728, %v2947
      %v2949 = vpop.f32.mrb[0].mxu0
      %v2950 = vadd.f32 %v2724, %v2949
      %v2951 = vpop.f32.mrb[0].mxu0
      %v2952 = vadd.f32 %v2728, %v2951
      %2953 = vmatprep.mubr.bf16.mxu0 %v2662
      %2954 = vmatmul.mubr.bf16.gmra.mrb[0].mxu0 %v2661
      %v2955 = vpop.f32.mrb[0].mxu0
      %v2956 = vadd.f32 %v2724, %v2955
      %v2957 = vpop.f32.mrb[0].mxu0
      %v2958 = vadd.f32 %v2728, %v2957
      %v2959 = vpop.f32.mrb[0].mxu0
      %v2960 = vadd.f32 %v2724, %v2959
      %v2961 = vpop.f32.mrb[0].mxu0
      %v2962 = vadd.f32 %v2728, %v2961
      %2963 = vmatprep.mubr.bf16.mxu0 %v2664
      %2964 = vmatmul.mubr.bf16.gmra.mrb[0].mxu0 %v2663
      %v2965 = vpop.f32.mrb[0].mxu0
      %v2966 = vadd.f32 %v2724, %v2965
      %v2967 = vpop.f32.mrb[0].mxu0
      %v2968 = vadd.f32 %v2728, %v2967
      %v2969 = vpop.f32.mrb[0].mxu0
      %v2970 = vadd.f32 %v2724, %v2969
      %v2971 = vpop.f32.mrb[0].mxu0
      %v2972 = vadd.f32 %v2728, %v2971
      %2973 = vmatprep.mubr.bf16.mxu0 %v2666
      %2974 = vmatmul.mubr.bf16.gmra.mrb[0].mxu0 %v2665
      %v2975 = vpop.f32.mrb[0].mxu0
      %v2976 = vadd.f32 %v2724, %v2975
      %v2977 = vpop.f32.mrb[0].mxu0
      %v2978 = vadd.f32 %v2728, %v2977
      %v2979 = vpop.f32.mrb[0].mxu0
      %v2980 = vadd.f32 %v2724, %v2979
      %v2981 = vpop.f32.mrb[0].mxu0
      %v2982 = vadd.f32 %v2728, %v2981
      %2983 = vmatprep.mubr.bf16.mxu0 %v2668
      %2984 = vmatmul.mubr.bf16.gmra.mrb[0].mxu0 %v2667
      %v2985 = vpop.f32.mrb[0].mxu0
      %v2986 = vadd.f32 %v2724, %v2985
      %v2987 = vpop.f32.mrb[0].mxu0
      %v2988 = vadd.f32 %v2728, %v2987
      %v2989 = vpop.f32.mrb[0].mxu0
      %v2990 = vadd.f32 %v2724, %v2989
      %v2991 = vpop.f32.mrb[0].mxu0
      %v2992 = vadd.f32 %v2728, %v2991
      %2993 = vmatprep.mubr.bf16.mxu0 %v2670
      %2994 = vmatmul.mubr.bf16.gmra.mrb[0].mxu0 %v2669
      %v2995 = vpop.f32.mrb[0].mxu0
      %v2996 = vadd.f32 %v2724, %v2995
      %v2997 = vpop.f32.mrb[0].mxu0
      %v2998 = vadd.f32 %v2728, %v2997
      %v2999 = vpop.f32.mrb[0].mxu0
      %v3000 = vadd.f32 %v2724, %v2999
      %v3001 = vpop.f32.mrb[0].mxu0
      %v3002 = vadd.f32 %v2728, %v3001
      %3003 = vmatprep.mubr.bf16.mxu0 %v2672
      %3004 = vmatmul.mubr.bf16.gmra.mrb[0].mxu0 %v2671
      %v3005 = vpop.f32.mrb[0].mxu0
      %v3006 = vadd.f32 %v2724, %v3005
      %v3007 = vpop.f32.mrb[0].mxu0
      %v3008 = vadd.f32 %v2728, %v3007
      %v3009 = vpop.f32.mrb[0].mxu0
      %v3010 = vadd.f32 %v2724, %v3009
      %v3011 = vpop.f32.mrb[0].mxu0
      %v3012 = vadd.f32 %v2728, %v3011
      %3013 = vmatprep.mubr.bf16.mxu0 %v2674
      %3014 = vmatmul.mubr.bf16.gmra.mrb[0].mxu0 %v2673
      %v3015 = vpop.f32.mrb[0].mxu0
      %v3016 = vadd.f32 %v2724, %v3015
      %v3017 = vpop.f32.mrb[0].mxu0
      %v3018 = vadd.f32 %v2728, %v3017
      %v3019 = vpop.f32.mrb[0].mxu0
      %v3020 = vadd.f32 %v2724, %v3019
      %v3021 = vpop.f32.mrb[0].mxu0
      %v3022 = vadd.f32 %v2728, %v3021
      %3023 = vmatprep.mubr.bf16.mxu0 %v2676
      %3024 = vmatmul.mubr.bf16.gmra.mrb[0].mxu0 %v2675
      %v3025 = vpop.f32.mrb[0].mxu0
      %v3026 = vadd.f32 %v2724, %v3025
      %v3027 = vpop.f32.mrb[0].mxu0
      %v3028 = vadd.f32 %v2728, %v3027
      %v3029 = vpop.f32.mrb[0].mxu0
      %v3030 = vadd.f32 %v2724, %v3029
      %v3031 = vpop.f32.mrb[0].mxu0
      %v3032 = vadd.f32 %v2728, %v3031
      %3033 = vmatprep.mubr.bf16.mxu0 %v2678
      %3034 = vmatmul.mubr.bf16.gmra.mrb[0].mxu0 %v2677
      %v3035 = vpop.f32.mrb[0].mxu0
      %v3036 = vadd.f32 %v2724, %v3035
      %v3037 = vpop.f32.mrb[0].mxu0
      %v3038 = vadd.f32 %v2728, %v3037
      %v3039 = vpop.f32.mrb[0].mxu0
      %v3040 = vadd.f32 %v2724, %v3039
      %v3041 = vpop.f32.mrb[0].mxu0
      %v3042 = vadd.f32 %v2728, %v3041
      %3043 = vmatprep.mubr.bf16.mxu0 %v2680
      %3044 = vmatmul.mubr.bf16.gmra.mrb[0].mxu0 %v2679
      %v3045 = vpop.f32.mrb[0].mxu0
      %v3046 = vadd.f32 %v2724, %v3045
      %v3047 = vpop.f32.mrb[0].mxu0
      %v3048 = vadd.f32 %v2728, %v3047
      %v3049 = vpop.f32.mrb[0].mxu0
      %v3050 = vadd.f32 %v2724, %v3049
      %v3051 = vpop.f32.mrb[0].mxu0
      %v3052 = vadd.f32 %v2728, %v3051
      %3053 = vmatprep.mubr.bf16.mxu0 %v2682
      %3054 = vmatmul.mubr.bf16.gmra.mrb[0].mxu0 %v2681
      %v3055 = vpop.f32.mrb[0].mxu0
      %v3056 = vadd.f32 %v2724, %v3055
      %v3057 = vpop.f32.mrb[0].mxu0
      %v3058 = vadd.f32 %v2728, %v3057
      %v3059 = vpop.f32.mrb[0].mxu0
      %v3060 = vadd.f32 %v2724, %v3059
      %v3061 = vpop.f32.mrb[0].mxu0
      %v3062 = vadd.f32 %v2728, %v3061
      %3063 = vmatprep.mubr.bf16.mxu0 %v2684
      %3064 = vmatmul.mubr.bf16.gmra.mrb[0].mxu0 %v2683
      %v3065 = vpop.f32.mrb[0].mxu0
      %v3066 = vadd.f32 %v2724, %v3065
      %v3067 = vpop.f32.mrb[0].mxu0
      %v3068 = vadd.f32 %v2728, %v3067
      %v3069 = vpop.f32.mrb[0].mxu0
      %v3070 = vadd.f32 %v2724, %v3069
      %v3071 = vpop.f32.mrb[0].mxu0
      %v3072 = vadd.f32 %v2728, %v3071
      %3073 = vmatprep.mubr.bf16.mxu0 %v2686
      %3074 = vmatmul.mubr.bf16.gmra.mrb[0].mxu0 %v2685
      %v3075 = vpop.f32.mrb[0].mxu0
      %v3076 = vadd.f32 %v2724, %v3075
      %v3077 = vpop.f32.mrb[0].mxu0
      %v3078 = vadd.f32 %v2728, %v3077
      %v3079 = vpop.f32.mrb[0].mxu0
      %v3080 = vadd.f32 %v2724, %v3079
      %v3081 = vpop.f32.mrb[0].mxu0
      %v3082 = vadd.f32 %v2728, %v3081
      %3083 = vdwg.mxu0
      %v3084 = vmax.f32 %v2926, 0.0
      %v3085 = vmax.f32 %v2928, 0.0
      %v3086 = vmax.f32 %v2930, 0.0
      %v3087 = vmax.f32 %v2932, 0.0
      %v3088 = vmax.f32 %v2936, 0.0
      %v3089 = vmax.f32 %v2938, 0.0
      %v3090 = vmax.f32 %v2940, 0.0
      %v3091 = vmax.f32 %v2942, 0.0
      %v3092 = vmax.f32 %v2946, 0.0
      %v3093 = vmax.f32 %v2948, 0.0
      %v3094 = vmax.f32 %v2950, 0.0
      %v3095 = vmax.f32 %v2952, 0.0
      %v3096 = vmax.f32 %v2956, 0.0
      %v3097 = vmax.f32 %v2958, 0.0
      %v3098 = vmax.f32 %v2960, 0.0
      %v3099 = vmax.f32 %v2962, 0.0
      %v3100 = vmax.f32 %v2966, 0.0
      %v3101 = vmax.f32 %v2968, 0.0
      %v3102 = vmax.f32 %v2970, 0.0
      %v3103 = vmax.f32 %v2972, 0.0
      %v3104 = vmax.f32 %v2976, 0.0
      %v3105 = vmax.f32 %v2978, 0.0
      %v3106 = vmax.f32 %v2980, 0.0
      %v3107 = vmax.f32 %v2982, 0.0
      %v3108 = vmax.f32 %v2986, 0.0
      %v3109 = vmax.f32 %v2988, 0.0
      %v3110 = vmax.f32 %v2990, 0.0
      %v3111 = vmax.f32 %v2992, 0.0
      %v3112 = vmax.f32 %v2996, 0.0
      %v3113 = vmax.f32 %v2998, 0.0
      %v3114 = vmax.f32 %v3000, 0.0
      %v3115 = vmax.f32 %v3002, 0.0
      %v3116 = vmax.f32 %v3006, 0.0
      %v3117 = vmax.f32 %v3008, 0.0
      %v3118 = vmax.f32 %v3010, 0.0
      %v3119 = vmax.f32 %v3012, 0.0
      %v3120 = vmax.f32 %v3016, 0.0
      %v3121 = vmax.f32 %v3018, 0.0
      %v3122 = vmax.f32 %v3020, 0.0
      %v3123 = vmax.f32 %v3022, 0.0
      %v3124 = vmax.f32 %v3026, 0.0
      %v3125 = vmax.f32 %v3028, 0.0
      %v3126 = vmax.f32 %v3030, 0.0
      %v3127 = vmax.f32 %v3032, 0.0
      %v3128 = vmax.f32 %v3036, 0.0
      %v3129 = vmax.f32 %v3038, 0.0
      %v3130 = vmax.f32 %v3040, 0.0
      %v3131 = vmax.f32 %v3042, 0.0
      %v3132 = vmax.f32 %v3046, 0.0
      %v3133 = vmax.f32 %v3048, 0.0
      %v3134 = vmax.f32 %v3050, 0.0
      %v3135 = vmax.f32 %v3052, 0.0
      %v3136 = vmax.f32 %v3056, 0.0
      %v3137 = vmax.f32 %v3058, 0.0
      %v3138 = vmax.f32 %v3060, 0.0
      %v3139 = vmax.f32 %v3062, 0.0
      %v3140 = vmax.f32 %v3066, 0.0
      %v3141 = vmax.f32 %v3068, 0.0
      %v3142 = vmax.f32 %v3070, 0.0
      %v3143 = vmax.f32 %v3072, 0.0
      %v3144 = vmax.f32 %v3076, 0.0
      %v3145 = vmax.f32 %v3078, 0.0
      %v3146 = vmax.f32 %v3080, 0.0
      %v3147 = vmax.f32 %v3082, 0.0
      %v3148 = vpack.c.bf16 %v3086, %v3084
      %v3149 = vpack.c.bf16 %v3087, %v3085
      %v3150 = vpack.c.bf16 %v3090, %v3088
      %v3151 = vpack.c.bf16 %v3091, %v3089
      %v3152 = vpack.c.bf16 %v3094, %v3092
      %v3153 = vpack.c.bf16 %v3095, %v3093
      %v3154 = vpack.c.bf16 %v3098, %v3096
      %v3155 = vpack.c.bf16 %v3099, %v3097
      %v3156 = vpack.c.bf16 %v3102, %v3100
      %v3157 = vpack.c.bf16 %v3103, %v3101
      %v3158 = vpack.c.bf16 %v3106, %v3104
      %v3159 = vpack.c.bf16 %v3107, %v3105
      %v3160 = vpack.c.bf16 %v3110, %v3108
      %v3161 = vpack.c.bf16 %v3111, %v3109
      %v3162 = vpack.c.bf16 %v3114, %v3112
      %v3163 = vpack.c.bf16 %v3115, %v3113
      %v3164 = vpack.c.bf16 %v3118, %v3116
      %v3165 = vpack.c.bf16 %v3119, %v3117
      %v3166 = vpack.c.bf16 %v3122, %v3120
      %v3167 = vpack.c.bf16 %v3123, %v3121
      %v3168 = vpack.c.bf16 %v3126, %v3124
      %v3169 = vpack.c.bf16 %v3127, %v3125
      %v3170 = vpack.c.bf16 %v3130, %v3128
      %v3171 = vpack.c.bf16 %v3131, %v3129
      %v3172 = vpack.c.bf16 %v3134, %v3132
      %v3173 = vpack.c.bf16 %v3135, %v3133
      %v3174 = vpack.c.bf16 %v3138, %v3136
      %v3175 = vpack.c.bf16 %v3139, %v3137
      %v3176 = vpack.c.bf16 %v3142, %v3140
      %v3177 = vpack.c.bf16 %v3143, %v3141
      %v3178 = vpack.c.bf16 %v3146, %v3144
      %v3179 = vpack.c.bf16 %v3147, %v3145
      %v3180 = vld [vmem:[%s10] sm:$0xff]
      %v3181 = vld [vmem:[%s10 + $0x8] sm:$0xff]
      %v3182 = vld [vmem:[%s10 + $0x10] sm:$0xff]
      %v3183 = vld [vmem:[%s10 + $0x18] sm:$0xff]
      %v3184 = vld [vmem:[%s10 + $0x20] sm:$0xff]
      %v3185 = vld [vmem:[%s10 + $0x28] sm:$0xff]
      %v3186 = vld [vmem:[%s10 + $0x30] sm:$0xff]
      %v3187 = vld [vmem:[%s10 + $0x38] sm:$0xff]
      %v3188 = vld [vmem:[%s10 + $0x40] sm:$0xff]
      %v3189 = vld [vmem:[%s10 + $0x48] sm:$0xff]
      %v3190 = vld [vmem:[%s10 + $0x50] sm:$0xff]
      %v3191 = vld [vmem:[%s10 + $0x58] sm:$0xff]
      %v3192 = vld [vmem:[%s10 + $0x60] sm:$0xff]
      %v3193 = vld [vmem:[%s10 + $0x68] sm:$0xff]
      %v3194 = vld [vmem:[%s10 + $0x70] sm:$0xff]
      %v3195 = vld [vmem:[%s10 + $0x78] sm:$0xff]
      %v3196 = vld [vmem:[%s10 + $0x80] sm:$0xff]
      %v3197 = vld [vmem:[%s10 + $0x88] sm:$0xff]
      %v3198 = vld [vmem:[%s10 + $0x90] sm:$0xff]
      %v3199 = vld [vmem:[%s10 + $0x98] sm:$0xff]
      %v3200 = vld [vmem:[%s10 + $0xa0] sm:$0xff]
      %v3201 = vld [vmem:[%s10 + $0xa8] sm:$0xff]
      %v3202 = vld [vmem:[%s10 + $0xb0] sm:$0xff]
      %v3203 = vld [vmem:[%s10 + $0xb8] sm:$0xff]
      %v3204 = vld [vmem:[%s10 + $0xc0] sm:$0xff]
      %v3205 = vld [vmem:[%s10 + $0xc8] sm:$0xff]
      %v3206 = vld [vmem:[%s10 + $0xd0] sm:$0xff]
      %v3207 = vld [vmem:[%s10 + $0xd8] sm:$0xff]
      %v3208 = vld [vmem:[%s10 + $0xe0] sm:$0xff]
      %v3209 = vld [vmem:[%s10 + $0xe8] sm:$0xff]
      %v3210 = vld [vmem:[%s10 + $0xf0] sm:$0xff]
      %v3211 = vld [vmem:[%s10 + $0xf8] sm:$0xff]
      %v3212 = vld [vmem:[%s11] sm:$0x3]
      %v3214 = vlaneseq
      %v3215 = vshrl.u32 %v3214, 7
      %v3216 = vsub.s32 0, %v3215
      %v3217 = vrot.slane %v3212, %v3216
      %v3218 = vlaneseq
      %v3219 = vshrl.u32 %v3218, 7
      %v3220 = vsub.s32 1, %v3219
      %v3221 = vrot.slane %v3212, %v3220
      %v3256 = vunpack.c.l.b16 %v3180
      %v3257 = vunpack.c.h.b16 %v3180
      %v3258 = vunpack.c.l.b16 %v3181
      %v3259 = vunpack.c.h.b16 %v3181
      %v3260 = vunpack.c.l.b16 %v3182
      %v3261 = vunpack.c.h.b16 %v3182
      %v3262 = vunpack.c.l.b16 %v3183
      %v3263 = vunpack.c.h.b16 %v3183
      %v3264 = vunpack.c.l.b16 %v3184
      %v3265 = vunpack.c.h.b16 %v3184
      %v3266 = vunpack.c.l.b16 %v3185
      %v3267 = vunpack.c.h.b16 %v3185
      %v3268 = vunpack.c.l.b16 %v3186
      %v3269 = vunpack.c.h.b16 %v3186
      %v3270 = vunpack.c.l.b16 %v3187
      %v3271 = vunpack.c.h.b16 %v3187
      %v3272 = vunpack.c.l.b16 %v3188
      %v3273 = vunpack.c.h.b16 %v3188
      %v3274 = vunpack.c.l.b16 %v3189
      %v3275 = vunpack.c.h.b16 %v3189
      %v3276 = vunpack.c.l.b16 %v3190
      %v3277 = vunpack.c.h.b16 %v3190
      %v3278 = vunpack.c.l.b16 %v3191
      %v3279 = vunpack.c.h.b16 %v3191
      %v3280 = vunpack.c.l.b16 %v3192
      %v3281 = vunpack.c.h.b16 %v3192
      %v3282 = vunpack.c.l.b16 %v3193
      %v3283 = vunpack.c.h.b16 %v3193
      %v3284 = vunpack.c.l.b16 %v3194
      %v3285 = vunpack.c.h.b16 %v3194
      %v3286 = vunpack.c.l.b16 %v3195
      %v3287 = vunpack.c.h.b16 %v3195
      %v3288 = vunpack.c.l.b16 %v3196
      %v3289 = vunpack.c.h.b16 %v3196
      %v3290 = vunpack.c.l.b16 %v3197
      %v3291 = vunpack.c.h.b16 %v3197
      %v3292 = vunpack.c.l.b16 %v3198
      %v3293 = vunpack.c.h.b16 %v3198
      %v3294 = vunpack.c.l.b16 %v3199
      %v3295 = vunpack.c.h.b16 %v3199
      %v3296 = vunpack.c.l.b16 %v3200
      %v3297 = vunpack.c.h.b16 %v3200
      %v3298 = vunpack.c.l.b16 %v3201
      %v3299 = vunpack.c.h.b16 %v3201
      %v3300 = vunpack.c.l.b16 %v3202
      %v3301 = vunpack.c.h.b16 %v3202
      %v3302 = vunpack.c.l.b16 %v3203
      %v3303 = vunpack.c.h.b16 %v3203
      %v3304 = vunpack.c.l.b16 %v3204
      %v3305 = vunpack.c.h.b16 %v3204
      %v3306 = vunpack.c.l.b16 %v3205
      %v3307 = vunpack.c.h.b16 %v3205
      %v3308 = vunpack.c.l.b16 %v3206
      %v3309 = vunpack.c.h.b16 %v3206
      %v3310 = vunpack.c.l.b16 %v3207
      %v3311 = vunpack.c.h.b16 %v3207
      %v3312 = vunpack.c.l.b16 %v3208
      %v3313 = vunpack.c.h.b16 %v3208
      %v3314 = vunpack.c.l.b16 %v3209
      %v3315 = vunpack.c.h.b16 %v3209
      %v3316 = vunpack.c.l.b16 %v3210
      %v3317 = vunpack.c.h.b16 %v3210
      %v3318 = vunpack.c.l.b16 %v3211
      %v3319 = vunpack.c.h.b16 %v3211
      %v3320 = vpack.c.b16 %v3258, %v3256
      %v3321 = vpack.c.b16 %v3259, %v3257
      %v3322 = vpack.c.b16 %v3262, %v3260
      %v3323 = vpack.c.b16 %v3263, %v3261
      %v3324 = vpack.c.b16 %v3266, %v3264
      %v3325 = vpack.c.b16 %v3267, %v3265
      %v3326 = vpack.c.b16 %v3270, %v3268
      %v3327 = vpack.c.b16 %v3271, %v3269
      %v3328 = vpack.c.b16 %v3274, %v3272
      %v3329 = vpack.c.b16 %v3275, %v3273
      %v3330 = vpack.c.b16 %v3278, %v3276
      %v3331 = vpack.c.b16 %v3279, %v3277
      %v3332 = vpack.c.b16 %v3282, %v3280
      %v3333 = vpack.c.b16 %v3283, %v3281
      %v3334 = vpack.c.b16 %v3286, %v3284
      %v3335 = vpack.c.b16 %v3287, %v3285
      %v3336 = vpack.c.b16 %v3290, %v3288
      %v3337 = vpack.c.b16 %v3291, %v3289
      %v3338 = vpack.c.b16 %v3294, %v3292
      %v3339 = vpack.c.b16 %v3295, %v3293
      %v3340 = vpack.c.b16 %v3298, %v3296
      %v3341 = vpack.c.b16 %v3299, %v3297
      %v3342 = vpack.c.b16 %v3302, %v3300
      %v3343 = vpack.c.b16 %v3303, %v3301
      %v3344 = vpack.c.b16 %v3306, %v3304
      %v3345 = vpack.c.b16 %v3307, %v3305
      %v3346 = vpack.c.b16 %v3310, %v3308
      %v3347 = vpack.c.b16 %v3311, %v3309
      %v3348 = vpack.c.b16 %v3314, %v3312
      %v3349 = vpack.c.b16 %v3315, %v3313
      %v3350 = vpack.c.b16 %v3318, %v3316
      %v3351 = vpack.c.b16 %v3319, %v3317
      %3384 = vmatprep.subr.bf16.mxu0 %v3321
      %3385 = vmatpush1.bf16.msra.mxu0 %v3320
      %3386 = vmatprep.subr.bf16.mxu0 %v3323
      %3387 = vmatpush1.bf16.msra.mxu0 %v3322
      %3388 = vmatprep.subr.bf16.mxu0 %v3325
      %3389 = vmatpush1.bf16.msra.mxu0 %v3324
      %3390 = vmatprep.subr.bf16.mxu0 %v3327
      %3391 = vmatpush1.bf16.msra.mxu0 %v3326
      %3392 = vmatprep.subr.bf16.mxu0 %v3329
      %3393 = vmatpush1.bf16.msra.mxu0 %v3328
      %3394 = vmatprep.subr.bf16.mxu0 %v3331
      %3395 = vmatpush1.bf16.msra.mxu0 %v3330
      %3396 = vmatprep.subr.bf16.mxu0 %v3333
      %3397 = vmatpush1.bf16.msra.mxu0 %v3332
      %3398 = vmatprep.subr.bf16.mxu0 %v3335
      %3399 = vmatpush1.bf16.msra.mxu0 %v3334
      %3400 = vmatprep.subr.bf16.mxu0 %v3337
      %3401 = vmatpush1.bf16.msra.mxu0 %v3336
      %3402 = vmatprep.subr.bf16.mxu0 %v3339
      %3403 = vmatpush1.bf16.msra.mxu0 %v3338
      %3404 = vmatprep.subr.bf16.mxu0 %v3341
      %3405 = vmatpush1.bf16.msra.mxu0 %v3340
      %3406 = vmatprep.subr.bf16.mxu0 %v3343
      %3407 = vmatpush1.bf16.msra.mxu0 %v3342
      %3408 = vmatprep.subr.bf16.mxu0 %v3345
      %3409 = vmatpush1.bf16.msra.mxu0 %v3344
      %3410 = vmatprep.subr.bf16.mxu0 %v3347
      %3411 = vmatpush1.bf16.msra.mxu0 %v3346
      %3412 = vmatprep.subr.bf16.mxu0 %v3349
      %3413 = vmatpush1.bf16.msra.mxu0 %v3348
      %3414 = vmatprep.subr.bf16.mxu0 %v3351
      %3415 = vmatpush1.bf16.msra.mxu0 %v3350
      %3416 = vmatprep.mubr.bf16.mxu0 %v3149
      %3417 = vmatmul.mubr.bf16.gmra.mrb[0].mxu0 %v3148
      %v3418 = vpop.f32.mrb[0].mxu0
      %v3419 = vadd.f32 %v3217, %v3418
      %v3420 = vpop.f32.mrb[0].mxu0
      %v3421 = vadd.f32 %v3221, %v3420
      %v3422 = vpop.f32.mrb[0].mxu0
      %v3423 = vadd.f32 %v3217, %v3422
      %v3424 = vpop.f32.mrb[0].mxu0
      %v3425 = vadd.f32 %v3221, %v3424
      %3426 = vmatprep.mubr.bf16.mxu0 %v3151
      %3427 = vmatmul.mubr.bf16.gmra.mrb[0].mxu0 %v3150
      %v3428 = vpop.f32.mrb[0].mxu0
      %v3429 = vadd.f32 %v3217, %v3428
      %v3430 = vpop.f32.mrb[0].mxu0
      %v3431 = vadd.f32 %v3221, %v3430
      %v3432 = vpop.f32.mrb[0].mxu0
      %v3433 = vadd.f32 %v3217, %v3432
      %v3434 = vpop.f32.mrb[0].mxu0
      %v3435 = vadd.f32 %v3221, %v3434
      %3436 = vmatprep.mubr.bf16.mxu0 %v3153
      %3437 = vmatmul.mubr.bf16.gmra.mrb[0].mxu0 %v3152
      %v3438 = vpop.f32.mrb[0].mxu0
      %v3439 = vadd.f32 %v3217, %v3438
      %v3440 = vpop.f32.mrb[0].mxu0
      %v3441 = vadd.f32 %v3221, %v3440
      %v3442 = vpop.f32.mrb[0].mxu0
      %v3443 = vadd.f32 %v3217, %v3442
      %v3444 = vpop.f32.mrb[0].mxu0
      %v3445 = vadd.f32 %v3221, %v3444
      %3446 = vmatprep.mubr.bf16.mxu0 %v3155
      %3447 = vmatmul.mubr.bf16.gmra.mrb[0].mxu0 %v3154
      %v3448 = vpop.f32.mrb[0].mxu0
      %v3449 = vadd.f32 %v3217, %v3448
      %v3450 = vpop.f32.mrb[0].mxu0
      %v3451 = vadd.f32 %v3221, %v3450
      %v3452 = vpop.f32.mrb[0].mxu0
      %v3453 = vadd.f32 %v3217, %v3452
      %v3454 = vpop.f32.mrb[0].mxu0
      %v3455 = vadd.f32 %v3221, %v3454
      %3456 = vmatprep.mubr.bf16.mxu0 %v3157
      %3457 = vmatmul.mubr.bf16.gmra.mrb[0].mxu0 %v3156
      %v3458 = vpop.f32.mrb[0].mxu0
      %v3459 = vadd.f32 %v3217, %v3458
      %v3460 = vpop.f32.mrb[0].mxu0
      %v3461 = vadd.f32 %v3221, %v3460
      %v3462 = vpop.f32.mrb[0].mxu0
      %v3463 = vadd.f32 %v3217, %v3462
      %v3464 = vpop.f32.mrb[0].mxu0
      %v3465 = vadd.f32 %v3221, %v3464
      %3466 = vmatprep.mubr.bf16.mxu0 %v3159
      %3467 = vmatmul.mubr.bf16.gmra.mrb[0].mxu0 %v3158
      %v3468 = vpop.f32.mrb[0].mxu0
      %v3469 = vadd.f32 %v3217, %v3468
      %v3470 = vpop.f32.mrb[0].mxu0
      %v3471 = vadd.f32 %v3221, %v3470
      %v3472 = vpop.f32.mrb[0].mxu0
      %v3473 = vadd.f32 %v3217, %v3472
      %v3474 = vpop.f32.mrb[0].mxu0
      %v3475 = vadd.f32 %v3221, %v3474
      %3476 = vmatprep.mubr.bf16.mxu0 %v3161
      %3477 = vmatmul.mubr.bf16.gmra.mrb[0].mxu0 %v3160
      %v3478 = vpop.f32.mrb[0].mxu0
      %v3479 = vadd.f32 %v3217, %v3478
      %v3480 = vpop.f32.mrb[0].mxu0
      %v3481 = vadd.f32 %v3221, %v3480
      %v3482 = vpop.f32.mrb[0].mxu0
      %v3483 = vadd.f32 %v3217, %v3482
      %v3484 = vpop.f32.mrb[0].mxu0
      %v3485 = vadd.f32 %v3221, %v3484
      %3486 = vmatprep.mubr.bf16.mxu0 %v3163
      %3487 = vmatmul.mubr.bf16.gmra.mrb[0].mxu0 %v3162
      %v3488 = vpop.f32.mrb[0].mxu0
      %v3489 = vadd.f32 %v3217, %v3488
      %v3490 = vpop.f32.mrb[0].mxu0
      %v3491 = vadd.f32 %v3221, %v3490
      %v3492 = vpop.f32.mrb[0].mxu0
      %v3493 = vadd.f32 %v3217, %v3492
      %v3494 = vpop.f32.mrb[0].mxu0
      %v3495 = vadd.f32 %v3221, %v3494
      %3496 = vmatprep.mubr.bf16.mxu0 %v3165
      %3497 = vmatmul.mubr.bf16.gmra.mrb[0].mxu0 %v3164
      %v3498 = vpop.f32.mrb[0].mxu0
      %v3499 = vadd.f32 %v3217, %v3498
      %v3500 = vpop.f32.mrb[0].mxu0
      %v3501 = vadd.f32 %v3221, %v3500
      %v3502 = vpop.f32.mrb[0].mxu0
      %v3503 = vadd.f32 %v3217, %v3502
      %v3504 = vpop.f32.mrb[0].mxu0
      %v3505 = vadd.f32 %v3221, %v3504
      %3506 = vmatprep.mubr.bf16.mxu0 %v3167
      %3507 = vmatmul.mubr.bf16.gmra.mrb[0].mxu0 %v3166
      %v3508 = vpop.f32.mrb[0].mxu0
      %v3509 = vadd.f32 %v3217, %v3508
      %v3510 = vpop.f32.mrb[0].mxu0
      %v3511 = vadd.f32 %v3221, %v3510
      %v3512 = vpop.f32.mrb[0].mxu0
      %v3513 = vadd.f32 %v3217, %v3512
      %v3514 = vpop.f32.mrb[0].mxu0
      %v3515 = vadd.f32 %v3221, %v3514
      %3516 = vmatprep.mubr.bf16.mxu0 %v3169
      %3517 = vmatmul.mubr.bf16.gmra.mrb[0].mxu0 %v3168
      %v3518 = vpop.f32.mrb[0].mxu0
      %v3519 = vadd.f32 %v3217, %v3518
      %v3520 = vpop.f32.mrb[0].mxu0
      %v3521 = vadd.f32 %v3221, %v3520
      %v3522 = vpop.f32.mrb[0].mxu0
      %v3523 = vadd.f32 %v3217, %v3522
      %v3524 = vpop.f32.mrb[0].mxu0
      %v3525 = vadd.f32 %v3221, %v3524
      %3526 = vmatprep.mubr.bf16.mxu0 %v3171
      %3527 = vmatmul.mubr.bf16.gmra.mrb[0].mxu0 %v3170
      %v3528 = vpop.f32.mrb[0].mxu0
      %v3529 = vadd.f32 %v3217, %v3528
      %v3530 = vpop.f32.mrb[0].mxu0
      %v3531 = vadd.f32 %v3221, %v3530
      %v3532 = vpop.f32.mrb[0].mxu0
      %v3533 = vadd.f32 %v3217, %v3532
      %v3534 = vpop.f32.mrb[0].mxu0
      %v3535 = vadd.f32 %v3221, %v3534
      %3536 = vmatprep.mubr.bf16.mxu0 %v3173
      %3537 = vmatmul.mubr.bf16.gmra.mrb[0].mxu0 %v3172
      %v3538 = vpop.f32.mrb[0].mxu0
      %v3539 = vadd.f32 %v3217, %v3538
      %v3540 = vpop.f32.mrb[0].mxu0
      %v3541 = vadd.f32 %v3221, %v3540
      %v3542 = vpop.f32.mrb[0].mxu0
      %v3543 = vadd.f32 %v3217, %v3542
      %v3544 = vpop.f32.mrb[0].mxu0
      %v3545 = vadd.f32 %v3221, %v3544
      %3546 = vmatprep.mubr.bf16.mxu0 %v3175
      %3547 = vmatmul.mubr.bf16.gmra.mrb[0].mxu0 %v3174
      %v3548 = vpop.f32.mrb[0].mxu0
      %v3549 = vadd.f32 %v3217, %v3548
      %v3550 = vpop.f32.mrb[0].mxu0
      %v3551 = vadd.f32 %v3221, %v3550
      %v3552 = vpop.f32.mrb[0].mxu0
      %v3553 = vadd.f32 %v3217, %v3552
      %v3554 = vpop.f32.mrb[0].mxu0
      %v3555 = vadd.f32 %v3221, %v3554
      %3556 = vmatprep.mubr.bf16.mxu0 %v3177
      %3557 = vmatmul.mubr.bf16.gmra.mrb[0].mxu0 %v3176
      %v3558 = vpop.f32.mrb[0].mxu0
      %v3559 = vadd.f32 %v3217, %v3558
      %v3560 = vpop.f32.mrb[0].mxu0
      %v3561 = vadd.f32 %v3221, %v3560
      %v3562 = vpop.f32.mrb[0].mxu0
      %v3563 = vadd.f32 %v3217, %v3562
      %v3564 = vpop.f32.mrb[0].mxu0
      %v3565 = vadd.f32 %v3221, %v3564
      %3566 = vmatprep.mubr.bf16.mxu0 %v3179
      %3567 = vmatmul.mubr.bf16.gmra.mrb[0].mxu0 %v3178
      %v3568 = vpop.f32.mrb[0].mxu0
      %v3569 = vadd.f32 %v3217, %v3568
      %v3570 = vpop.f32.mrb[0].mxu0
      %v3571 = vadd.f32 %v3221, %v3570
      %v3572 = vpop.f32.mrb[0].mxu0
      %v3573 = vadd.f32 %v3217, %v3572
      %v3574 = vpop.f32.mrb[0].mxu0
      %v3575 = vadd.f32 %v3221, %v3574
      %3576 = vdwg.mxu0
      %v3577 = vmax.f32 %v3419, 0.0
      %v3578 = vmax.f32 %v3421, 0.0
      %v3579 = vmax.f32 %v3423, 0.0
      %v3580 = vmax.f32 %v3425, 0.0
      %v3581 = vmax.f32 %v3429, 0.0
      %v3582 = vmax.f32 %v3431, 0.0
      %v3583 = vmax.f32 %v3433, 0.0
      %v3584 = vmax.f32 %v3435, 0.0
      %v3585 = vmax.f32 %v3439, 0.0
      %v3586 = vmax.f32 %v3441, 0.0
      %v3587 = vmax.f32 %v3443, 0.0
      %v3588 = vmax.f32 %v3445, 0.0
      %v3589 = vmax.f32 %v3449, 0.0
      %v3590 = vmax.f32 %v3451, 0.0
      %v3591 = vmax.f32 %v3453, 0.0
      %v3592 = vmax.f32 %v3455, 0.0
      %v3593 = vmax.f32 %v3459, 0.0
      %v3594 = vmax.f32 %v3461, 0.0
      %v3595 = vmax.f32 %v3463, 0.0
      %v3596 = vmax.f32 %v3465, 0.0
      %v3597 = vmax.f32 %v3469, 0.0
      %v3598 = vmax.f32 %v3471, 0.0
      %v3599 = vmax.f32 %v3473, 0.0
      %v3600 = vmax.f32 %v3475, 0.0
      %v3601 = vmax.f32 %v3479, 0.0
      %v3602 = vmax.f32 %v3481, 0.0
      %v3603 = vmax.f32 %v3483, 0.0
      %v3604 = vmax.f32 %v3485, 0.0
      %v3605 = vmax.f32 %v3489, 0.0
      %v3606 = vmax.f32 %v3491, 0.0
      %v3607 = vmax.f32 %v3493, 0.0
      %v3608 = vmax.f32 %v3495, 0.0
      %v3609 = vmax.f32 %v3499, 0.0
      %v3610 = vmax.f32 %v3501, 0.0
      %v3611 = vmax.f32 %v3503, 0.0
      %v3612 = vmax.f32 %v3505, 0.0
      %v3613 = vmax.f32 %v3509, 0.0
      %v3614 = vmax.f32 %v3511, 0.0
      %v3615 = vmax.f32 %v3513, 0.0
      %v3616 = vmax.f32 %v3515, 0.0
      %v3617 = vmax.f32 %v3519, 0.0
      %v3618 = vmax.f32 %v3521, 0.0
      %v3619 = vmax.f32 %v3523, 0.0
      %v3620 = vmax.f32 %v3525, 0.0
      %v3621 = vmax.f32 %v3529, 0.0
      %v3622 = vmax.f32 %v3531, 0.0
      %v3623 = vmax.f32 %v3533, 0.0
      %v3624 = vmax.f32 %v3535, 0.0
      %v3625 = vmax.f32 %v3539, 0.0
      %v3626 = vmax.f32 %v3541, 0.0
      %v3627 = vmax.f32 %v3543, 0.0
      %v3628 = vmax.f32 %v3545, 0.0
      %v3629 = vmax.f32 %v3549, 0.0
      %v3630 = vmax.f32 %v3551, 0.0
      %v3631 = vmax.f32 %v3553, 0.0
      %v3632 = vmax.f32 %v3555, 0.0
      %v3633 = vmax.f32 %v3559, 0.0
      %v3634 = vmax.f32 %v3561, 0.0
      %v3635 = vmax.f32 %v3563, 0.0
      %v3636 = vmax.f32 %v3565, 0.0
      %v3637 = vmax.f32 %v3569, 0.0
      %v3638 = vmax.f32 %v3571, 0.0
      %v3639 = vmax.f32 %v3573, 0.0
      %v3640 = vmax.f32 %v3575, 0.0
      %v3641 = vpack.c.bf16 %v3579, %v3577
      %v3642 = vpack.c.bf16 %v3580, %v3578
      %v3643 = vpack.c.bf16 %v3583, %v3581
      %v3644 = vpack.c.bf16 %v3584, %v3582
      %v3645 = vpack.c.bf16 %v3587, %v3585
      %v3646 = vpack.c.bf16 %v3588, %v3586
      %v3647 = vpack.c.bf16 %v3591, %v3589
      %v3648 = vpack.c.bf16 %v3592, %v3590
      %v3649 = vpack.c.bf16 %v3595, %v3593
      %v3650 = vpack.c.bf16 %v3596, %v3594
      %v3651 = vpack.c.bf16 %v3599, %v3597
      %v3652 = vpack.c.bf16 %v3600, %v3598
      %v3653 = vpack.c.bf16 %v3603, %v3601
      %v3654 = vpack.c.bf16 %v3604, %v3602
      %v3655 = vpack.c.bf16 %v3607, %v3605
      %v3656 = vpack.c.bf16 %v3608, %v3606
      %v3657 = vpack.c.bf16 %v3611, %v3609
      %v3658 = vpack.c.bf16 %v3612, %v3610
      %v3659 = vpack.c.bf16 %v3615, %v3613
      %v3660 = vpack.c.bf16 %v3616, %v3614
      %v3661 = vpack.c.bf16 %v3619, %v3617
      %v3662 = vpack.c.bf16 %v3620, %v3618
      %v3663 = vpack.c.bf16 %v3623, %v3621
      %v3664 = vpack.c.bf16 %v3624, %v3622
      %v3665 = vpack.c.bf16 %v3627, %v3625
      %v3666 = vpack.c.bf16 %v3628, %v3626
      %v3667 = vpack.c.bf16 %v3631, %v3629
      %v3668 = vpack.c.bf16 %v3632, %v3630
      %v3669 = vpack.c.bf16 %v3635, %v3633
      %v3670 = vpack.c.bf16 %v3636, %v3634
      %v3671 = vpack.c.bf16 %v3639, %v3637
      %v3672 = vpack.c.bf16 %v3640, %v3638
      %v3673 = vld [vmem:[%s12] sm:$0xff]
      %v3674 = vld [vmem:[%s12 + $0x8] sm:$0xff]
      %v3675 = vld [vmem:[%s12 + $0x10] sm:$0xff]
      %v3676 = vld [vmem:[%s12 + $0x18] sm:$0xff]
      %v3677 = vld [vmem:[%s12 + $0x20] sm:$0xff]
      %v3678 = vld [vmem:[%s12 + $0x28] sm:$0xff]
      %v3679 = vld [vmem:[%s12 + $0x30] sm:$0xff]
      %v3680 = vld [vmem:[%s12 + $0x38] sm:$0xff]
      %v3681 = vld [vmem:[%s12 + $0x40] sm:$0xff]
      %v3682 = vld [vmem:[%s12 + $0x48] sm:$0xff]
      %v3683 = vld [vmem:[%s12 + $0x50] sm:$0xff]
      %v3684 = vld [vmem:[%s12 + $0x58] sm:$0xff]
      %v3685 = vld [vmem:[%s12 + $0x60] sm:$0xff]
      %v3686 = vld [vmem:[%s12 + $0x68] sm:$0xff]
      %v3687 = vld [vmem:[%s12 + $0x70] sm:$0xff]
      %v3688 = vld [vmem:[%s12 + $0x78] sm:$0xff]
      %v3689 = vld [vmem:[%s12 + $0x80] sm:$0xff]
      %v3690 = vld [vmem:[%s12 + $0x88] sm:$0xff]
      %v3691 = vld [vmem:[%s12 + $0x90] sm:$0xff]
      %v3692 = vld [vmem:[%s12 + $0x98] sm:$0xff]
      %v3693 = vld [vmem:[%s12 + $0xa0] sm:$0xff]
      %v3694 = vld [vmem:[%s12 + $0xa8] sm:$0xff]
      %v3695 = vld [vmem:[%s12 + $0xb0] sm:$0xff]
      %v3696 = vld [vmem:[%s12 + $0xb8] sm:$0xff]
      %v3697 = vld [vmem:[%s12 + $0xc0] sm:$0xff]
      %v3698 = vld [vmem:[%s12 + $0xc8] sm:$0xff]
      %v3699 = vld [vmem:[%s12 + $0xd0] sm:$0xff]
      %v3700 = vld [vmem:[%s12 + $0xd8] sm:$0xff]
      %v3701 = vld [vmem:[%s12 + $0xe0] sm:$0xff]
      %v3702 = vld [vmem:[%s12 + $0xe8] sm:$0xff]
      %v3703 = vld [vmem:[%s12 + $0xf0] sm:$0xff]
      %v3704 = vld [vmem:[%s12 + $0xf8] sm:$0xff]
      %v3737 = vunpack.c.l.b16 %v3673
      %v3738 = vunpack.c.h.b16 %v3673
      %v3739 = vunpack.c.l.b16 %v3674
      %v3740 = vunpack.c.h.b16 %v3674
      %v3741 = vunpack.c.l.b16 %v3675
      %v3742 = vunpack.c.h.b16 %v3675
      %v3743 = vunpack.c.l.b16 %v3676
      %v3744 = vunpack.c.h.b16 %v3676
      %v3745 = vunpack.c.l.b16 %v3677
      %v3746 = vunpack.c.h.b16 %v3677
      %v3747 = vunpack.c.l.b16 %v3678
      %v3748 = vunpack.c.h.b16 %v3678
      %v3749 = vunpack.c.l.b16 %v3679
      %v3750 = vunpack.c.h.b16 %v3679
      %v3751 = vunpack.c.l.b16 %v3680
      %v3752 = vunpack.c.h.b16 %v3680
      %v3753 = vunpack.c.l.b16 %v3681
      %v3754 = vunpack.c.h.b16 %v3681
      %v3755 = vunpack.c.l.b16 %v3682
      %v3756 = vunpack.c.h.b16 %v3682
      %v3757 = vunpack.c.l.b16 %v3683
      %v3758 = vunpack.c.h.b16 %v3683
      %v3759 = vunpack.c.l.b16 %v3684
      %v3760 = vunpack.c.h.b16 %v3684
      %v3761 = vunpack.c.l.b16 %v3685
      %v3762 = vunpack.c.h.b16 %v3685
      %v3763 = vunpack.c.l.b16 %v3686
      %v3764 = vunpack.c.h.b16 %v3686
      %v3765 = vunpack.c.l.b16 %v3687
      %v3766 = vunpack.c.h.b16 %v3687
      %v3767 = vunpack.c.l.b16 %v3688
      %v3768 = vunpack.c.h.b16 %v3688
      %v3769 = vunpack.c.l.b16 %v3689
      %v3770 = vunpack.c.h.b16 %v3689
      %v3771 = vunpack.c.l.b16 %v3690
      %v3772 = vunpack.c.h.b16 %v3690
      %v3773 = vunpack.c.l.b16 %v3691
      %v3774 = vunpack.c.h.b16 %v3691
      %v3775 = vunpack.c.l.b16 %v3692
      %v3776 = vunpack.c.h.b16 %v3692
      %v3777 = vunpack.c.l.b16 %v3693
      %v3778 = vunpack.c.h.b16 %v3693
      %v3779 = vunpack.c.l.b16 %v3694
      %v3780 = vunpack.c.h.b16 %v3694
      %v3781 = vunpack.c.l.b16 %v3695
      %v3782 = vunpack.c.h.b16 %v3695
      %v3783 = vunpack.c.l.b16 %v3696
      %v3784 = vunpack.c.h.b16 %v3696
      %v3785 = vunpack.c.l.b16 %v3697
      %v3786 = vunpack.c.h.b16 %v3697
      %v3787 = vunpack.c.l.b16 %v3698
      %v3788 = vunpack.c.h.b16 %v3698
      %v3789 = vunpack.c.l.b16 %v3699
      %v3790 = vunpack.c.h.b16 %v3699
      %v3791 = vunpack.c.l.b16 %v3700
      %v3792 = vunpack.c.h.b16 %v3700
      %v3793 = vunpack.c.l.b16 %v3701
      %v3794 = vunpack.c.h.b16 %v3701
      %v3795 = vunpack.c.l.b16 %v3702
      %v3796 = vunpack.c.h.b16 %v3702
      %v3797 = vunpack.c.l.b16 %v3703
      %v3798 = vunpack.c.h.b16 %v3703
      %v3799 = vunpack.c.l.b16 %v3704
      %v3800 = vunpack.c.h.b16 %v3704
      %v3801 = vpack.c.b16 %v3739, %v3737
      %v3802 = vpack.c.b16 %v3740, %v3738
      %v3803 = vpack.c.b16 %v3743, %v3741
      %v3804 = vpack.c.b16 %v3744, %v3742
      %v3805 = vpack.c.b16 %v3747, %v3745
      %v3806 = vpack.c.b16 %v3748, %v3746
      %v3807 = vpack.c.b16 %v3751, %v3749
      %v3808 = vpack.c.b16 %v3752, %v3750
      %v3809 = vpack.c.b16 %v3755, %v3753
      %v3810 = vpack.c.b16 %v3756, %v3754
      %v3811 = vpack.c.b16 %v3759, %v3757
      %v3812 = vpack.c.b16 %v3760, %v3758
      %v3813 = vpack.c.b16 %v3763, %v3761
      %v3814 = vpack.c.b16 %v3764, %v3762
      %v3815 = vpack.c.b16 %v3767, %v3765
      %v3816 = vpack.c.b16 %v3768, %v3766
      %v3817 = vpack.c.b16 %v3771, %v3769
      %v3818 = vpack.c.b16 %v3772, %v3770
      %v3819 = vpack.c.b16 %v3775, %v3773
      %v3820 = vpack.c.b16 %v3776, %v3774
      %v3821 = vpack.c.b16 %v3779, %v3777
      %v3822 = vpack.c.b16 %v3780, %v3778
      %v3823 = vpack.c.b16 %v3783, %v3781
      %v3824 = vpack.c.b16 %v3784, %v3782
      %v3825 = vpack.c.b16 %v3787, %v3785
      %v3826 = vpack.c.b16 %v3788, %v3786
      %v3827 = vpack.c.b16 %v3791, %v3789
      %v3828 = vpack.c.b16 %v3792, %v3790
      %v3829 = vpack.c.b16 %v3795, %v3793
      %v3830 = vpack.c.b16 %v3796, %v3794
      %v3831 = vpack.c.b16 %v3799, %v3797
      %v3832 = vpack.c.b16 %v3800, %v3798
      %3865 = vmatprep.subr.bf16.mxu0 %v3802
      %3866 = vmatpush1.bf16.msra.mxu0 %v3801
      %3867 = vmatprep.subr.bf16.mxu0 %v3804
      %3868 = vmatpush1.bf16.msra.mxu0 %v3803
      %3869 = vmatprep.subr.bf16.mxu0 %v3806
      %3870 = vmatpush1.bf16.msra.mxu0 %v3805
      %3871 = vmatprep.subr.bf16.mxu0 %v3808
      %3872 = vmatpush1.bf16.msra.mxu0 %v3807
      %3873 = vmatprep.subr.bf16.mxu0 %v3810
      %3874 = vmatpush1.bf16.msra.mxu0 %v3809
      %3875 = vmatprep.subr.bf16.mxu0 %v3812
      %3876 = vmatpush1.bf16.msra.mxu0 %v3811
      %3877 = vmatprep.subr.bf16.mxu0 %v3814
      %3878 = vmatpush1.bf16.msra.mxu0 %v3813
      %3879 = vmatprep.subr.bf16.mxu0 %v3816
      %3880 = vmatpush1.bf16.msra.mxu0 %v3815
      %3881 = vmatprep.subr.bf16.mxu0 %v3818
      %3882 = vmatpush1.bf16.msra.mxu0 %v3817
      %3883 = vmatprep.subr.bf16.mxu0 %v3820
      %3884 = vmatpush1.bf16.msra.mxu0 %v3819
      %3885 = vmatprep.subr.bf16.mxu0 %v3822
      %3886 = vmatpush1.bf16.msra.mxu0 %v3821
      %3887 = vmatprep.subr.bf16.mxu0 %v3824
      %3888 = vmatpush1.bf16.msra.mxu0 %v3823
      %3889 = vmatprep.subr.bf16.mxu0 %v3826
      %3890 = vmatpush1.bf16.msra.mxu0 %v3825
      %3891 = vmatprep.subr.bf16.mxu0 %v3828
      %3892 = vmatpush1.bf16.msra.mxu0 %v3827
      %3893 = vmatprep.subr.bf16.mxu0 %v3830
      %3894 = vmatpush1.bf16.msra.mxu0 %v3829
      %3895 = vmatprep.subr.bf16.mxu0 %v3832
      %3896 = vmatpush1.bf16.msra.mxu0 %v3831
      %3897 = vmatprep.mubr.bf16.mxu0 %v3642
      %3898 = vmatmul.mubr.bf16.gmra.mrb[0].mxu0 %v3641
      %v3899 = vpop.f32.mrb[0].mxu0
      %v3900 = vadd.f32 %v1371, %v3899
      %v3901 = vpop.f32.mrb[0].mxu0
      %v3902 = vadd.f32 %v1373, %v3901
      %v3903 = vpop.f32.mrb[0].mxu0
      %v3904 = vadd.f32 %v1375, %v3903
      %v3905 = vpop.f32.mrb[0].mxu0
      %v3906 = vadd.f32 %v1377, %v3905
      %3907 = vmatprep.mubr.bf16.mxu0 %v3644
      %3908 = vmatmul.mubr.bf16.gmra.mrb[0].mxu0 %v3643
      %v3909 = vpop.f32.mrb[0].mxu0
      %v3910 = vadd.f32 %v1381, %v3909
      %v3911 = vpop.f32.mrb[0].mxu0
      %v3912 = vadd.f32 %v1383, %v3911
      %v3913 = vpop.f32.mrb[0].mxu0
      %v3914 = vadd.f32 %v1385, %v3913
      %v3915 = vpop.f32.mrb[0].mxu0
      %v3916 = vadd.f32 %v1387, %v3915
      %3917 = vmatprep.mubr.bf16.mxu0 %v3646
      %3918 = vmatmul.mubr.bf16.gmra.mrb[0].mxu0 %v3645
      %v3919 = vpop.f32.mrb[0].mxu0
      %v3920 = vadd.f32 %v1391, %v3919
      %v3921 = vpop.f32.mrb[0].mxu0
      %v3922 = vadd.f32 %v1393, %v3921
      %v3923 = vpop.f32.mrb[0].mxu0
      %v3924 = vadd.f32 %v1395, %v3923
      %v3925 = vpop.f32.mrb[0].mxu0
      %v3926 = vadd.f32 %v1397, %v3925
      %3927 = vmatprep.mubr.bf16.mxu0 %v3648
      %3928 = vmatmul.mubr.bf16.gmra.mrb[0].mxu0 %v3647
      %v3929 = vpop.f32.mrb[0].mxu0
      %v3930 = vadd.f32 %v1401, %v3929
      %v3931 = vpop.f32.mrb[0].mxu0
      %v3932 = vadd.f32 %v1403, %v3931
      %v3933 = vpop.f32.mrb[0].mxu0
      %v3934 = vadd.f32 %v1405, %v3933
      %v3935 = vpop.f32.mrb[0].mxu0
      %v3936 = vadd.f32 %v1407, %v3935
      %3937 = vmatprep.mubr.bf16.mxu0 %v3650
      %3938 = vmatmul.mubr.bf16.gmra.mrb[0].mxu0 %v3649
      %v3939 = vpop.f32.mrb[0].mxu0
      %v3940 = vadd.f32 %v1411, %v3939
      %v3941 = vpop.f32.mrb[0].mxu0
      %v3942 = vadd.f32 %v1413, %v3941
      %v3943 = vpop.f32.mrb[0].mxu0
      %v3944 = vadd.f32 %v1415, %v3943
      %v3945 = vpop.f32.mrb[0].mxu0
      %v3946 = vadd.f32 %v1417, %v3945
      %3947 = vmatprep.mubr.bf16.mxu0 %v3652
      %3948 = vmatmul.mubr.bf16.gmra.mrb[0].mxu0 %v3651
      %v3949 = vpop.f32.mrb[0].mxu0
      %v3950 = vadd.f32 %v1421, %v3949
      %v3951 = vpop.f32.mrb[0].mxu0
      %v3952 = vadd.f32 %v1423, %v3951
      %v3953 = vpop.f32.mrb[0].mxu0
      %v3954 = vadd.f32 %v1425, %v3953
      %v3955 = vpop.f32.mrb[0].mxu0
      %v3956 = vadd.f32 %v1427, %v3955
      %3957 = vmatprep.mubr.bf16.mxu0 %v3654
      %3958 = vmatmul.mubr.bf16.gmra.mrb[0].mxu0 %v3653
      %v3959 = vpop.f32.mrb[0].mxu0
      %v3960 = vadd.f32 %v1431, %v3959
      %v3961 = vpop.f32.mrb[0].mxu0
      %v3962 = vadd.f32 %v1433, %v3961
      %v3963 = vpop.f32.mrb[0].mxu0
      %v3964 = vadd.f32 %v1435, %v3963
      %v3965 = vpop.f32.mrb[0].mxu0
      %v3966 = vadd.f32 %v1437, %v3965
      %3967 = vmatprep.mubr.bf16.mxu0 %v3656
      %3968 = vmatmul.mubr.bf16.gmra.mrb[0].mxu0 %v3655
      %v3969 = vpop.f32.mrb[0].mxu0
      %v3970 = vadd.f32 %v1441, %v3969
      %v3971 = vpop.f32.mrb[0].mxu0
      %v3972 = vadd.f32 %v1443, %v3971
      %v3973 = vpop.f32.mrb[0].mxu0
      %v3974 = vadd.f32 %v1445, %v3973
      %v3975 = vpop.f32.mrb[0].mxu0
      %v3976 = vadd.f32 %v1447, %v3975
      %3977 = vmatprep.mubr.bf16.mxu0 %v3658
      %3978 = vmatmul.mubr.bf16.gmra.mrb[0].mxu0 %v3657
      %v3979 = vpop.f32.mrb[0].mxu0
      %v3980 = vadd.f32 %v1451, %v3979
      %v3981 = vpop.f32.mrb[0].mxu0
      %v3982 = vadd.f32 %v1453, %v3981
      %v3983 = vpop.f32.mrb[0].mxu0
      %v3984 = vadd.f32 %v1455, %v3983
      %v3985 = vpop.f32.mrb[0].mxu0
      %v3986 = vadd.f32 %v1457, %v3985
      %3987 = vmatprep.mubr.bf16.mxu0 %v3660
      %3988 = vmatmul.mubr.bf16.gmra.mrb[0].mxu0 %v3659
      %v3989 = vpop.f32.mrb[0].mxu0
      %v3990 = vadd.f32 %v1461, %v3989
      %v3991 = vpop.f32.mrb[0].mxu0
      %v3992 = vadd.f32 %v1463, %v3991
      %v3993 = vpop.f32.mrb[0].mxu0
      %v3994 = vadd.f32 %v1465, %v3993
      %v3995 = vpop.f32.mrb[0].mxu0
      %v3996 = vadd.f32 %v1467, %v3995
      %3997 = vmatprep.mubr.bf16.mxu0 %v3662
      %3998 = vmatmul.mubr.bf16.gmra.mrb[0].mxu0 %v3661
      %v3999 = vpop.f32.mrb[0].mxu0
      %v4000 = vadd.f32 %v1471, %v3999
      %v4001 = vpop.f32.mrb[0].mxu0
      %v4002 = vadd.f32 %v1473, %v4001
      %v4003 = vpop.f32.mrb[0].mxu0
      %v4004 = vadd.f32 %v1475, %v4003
      %v4005 = vpop.f32.mrb[0].mxu0
      %v4006 = vadd.f32 %v1477, %v4005
      %4007 = vmatprep.mubr.bf16.mxu0 %v3664
      %4008 = vmatmul.mubr.bf16.gmra.mrb[0].mxu0 %v3663
      %v4009 = vpop.f32.mrb[0].mxu0
      %v4010 = vadd.f32 %v1481, %v4009
      %v4011 = vpop.f32.mrb[0].mxu0
      %v4012 = vadd.f32 %v1483, %v4011
      %v4013 = vpop.f32.mrb[0].mxu0
      %v4014 = vadd.f32 %v1485, %v4013
      %v4015 = vpop.f32.mrb[0].mxu0
      %v4016 = vadd.f32 %v1487, %v4015
      %4017 = vmatprep.mubr.bf16.mxu0 %v3666
      %4018 = vmatmul.mubr.bf16.gmra.mrb[0].mxu0 %v3665
      %v4019 = vpop.f32.mrb[0].mxu0
      %v4020 = vadd.f32 %v1491, %v4019
      %v4021 = vpop.f32.mrb[0].mxu0
      %v4022 = vadd.f32 %v1493, %v4021
      %v4023 = vpop.f32.mrb[0].mxu0
      %v4024 = vadd.f32 %v1495, %v4023
      %v4025 = vpop.f32.mrb[0].mxu0
      %v4026 = vadd.f32 %v1497, %v4025
      %4027 = vmatprep.mubr.bf16.mxu0 %v3668
      %4028 = vmatmul.mubr.bf16.gmra.mrb[0].mxu0 %v3667
      %v4029 = vpop.f32.mrb[0].mxu0
      %v4030 = vadd.f32 %v1501, %v4029
      %v4031 = vpop.f32.mrb[0].mxu0
      %v4032 = vadd.f32 %v1503, %v4031
      %v4033 = vpop.f32.mrb[0].mxu0
      %v4034 = vadd.f32 %v1505, %v4033
      %v4035 = vpop.f32.mrb[0].mxu0
      %v4036 = vadd.f32 %v1507, %v4035
      %4037 = vmatprep.mubr.bf16.mxu0 %v3670
      %4038 = vmatmul.mubr.bf16.gmra.mrb[0].mxu0 %v3669
      %v4039 = vpop.f32.mrb[0].mxu0
      %v4040 = vadd.f32 %v1511, %v4039
      %v4041 = vpop.f32.mrb[0].mxu0
      %v4042 = vadd.f32 %v1513, %v4041
      %v4043 = vpop.f32.mrb[0].mxu0
      %v4044 = vadd.f32 %v1515, %v4043
      %v4045 = vpop.f32.mrb[0].mxu0
      %v4046 = vadd.f32 %v1517, %v4045
      %4047 = vmatprep.mubr.bf16.mxu0 %v3672
      %4048 = vmatmul.mubr.bf16.gmra.mrb[0].mxu0 %v3671
      %v4049 = vpop.f32.mrb[0].mxu0
      %v4050 = vadd.f32 %v1521, %v4049
      %v4051 = vpop.f32.mrb[0].mxu0
      %v4052 = vadd.f32 %v1523, %v4051
      %v4053 = vpop.f32.mrb[0].mxu0
      %v4054 = vadd.f32 %v1525, %v4053
      %v4055 = vpop.f32.mrb[0].mxu0
      %v4056 = vadd.f32 %v1527, %v4055
      %4057 = vdwg.mxu0
      %v4058 = vld [vmem:[%s13] sm:$0x3]
      %v4060 = vlaneseq
      %v4061 = vshrl.u32 %v4060, 7
      %v4062 = vsub.s32 0, %v4061
      %v4063 = vrot.slane %v4058, %v4062
      %v4064 = vlaneseq
      %v4065 = vshrl.u32 %v4064, 7
      %v4066 = vsub.s32 1, %v4065
      %v4067 = vrot.slane %v4058, %v4066
      %v4070 = vadd.f32 %v3900, %v4063
      %v4071 = vadd.f32 %v3902, %v4067
      %v4072 = vadd.f32 %v3904, %v4063
      %v4073 = vadd.f32 %v3906, %v4067
      %v4074 = vadd.f32 %v3910, %v4063
      %v4075 = vadd.f32 %v3912, %v4067
      %v4076 = vadd.f32 %v3914, %v4063
      %v4077 = vadd.f32 %v3916, %v4067
      %v4078 = vadd.f32 %v3920, %v4063
      %v4079 = vadd.f32 %v3922, %v4067
      %v4080 = vadd.f32 %v3924, %v4063
      %v4081 = vadd.f32 %v3926, %v4067
      %v4082 = vadd.f32 %v3930, %v4063
      %v4083 = vadd.f32 %v3932, %v4067
      %v4084 = vadd.f32 %v3934, %v4063
      %v4085 = vadd.f32 %v3936, %v4067
      %v4086 = vadd.f32 %v3940, %v4063
      %v4087 = vadd.f32 %v3942, %v4067
      %v4088 = vadd.f32 %v3944, %v4063
      %v4089 = vadd.f32 %v3946, %v4067
      %v4090 = vadd.f32 %v3950, %v4063
      %v4091 = vadd.f32 %v3952, %v4067
      %v4092 = vadd.f32 %v3954, %v4063
      %v4093 = vadd.f32 %v3956, %v4067
      %v4094 = vadd.f32 %v3960, %v4063
      %v4095 = vadd.f32 %v3962, %v4067
      %v4096 = vadd.f32 %v3964, %v4063
      %v4097 = vadd.f32 %v3966, %v4067
      %v4098 = vadd.f32 %v3970, %v4063
      %v4099 = vadd.f32 %v3972, %v4067
      %v4100 = vadd.f32 %v3974, %v4063
      %v4101 = vadd.f32 %v3976, %v4067
      %v4102 = vadd.f32 %v3980, %v4063
      %v4103 = vadd.f32 %v3982, %v4067
      %v4104 = vadd.f32 %v3984, %v4063
      %v4105 = vadd.f32 %v3986, %v4067
      %v4106 = vadd.f32 %v3990, %v4063
      %v4107 = vadd.f32 %v3992, %v4067
      %v4108 = vadd.f32 %v3994, %v4063
      %v4109 = vadd.f32 %v3996, %v4067
      %v4110 = vadd.f32 %v4000, %v4063
      %v4111 = vadd.f32 %v4002, %v4067
      %v4112 = vadd.f32 %v4004, %v4063
      %v4113 = vadd.f32 %v4006, %v4067
      %v4114 = vadd.f32 %v4010, %v4063
      %v4115 = vadd.f32 %v4012, %v4067
      %v4116 = vadd.f32 %v4014, %v4063
      %v4117 = vadd.f32 %v4016, %v4067
      %v4118 = vadd.f32 %v4020, %v4063
      %v4119 = vadd.f32 %v4022, %v4067
      %v4120 = vadd.f32 %v4024, %v4063
      %v4121 = vadd.f32 %v4026, %v4067
      %v4122 = vadd.f32 %v4030, %v4063
      %v4123 = vadd.f32 %v4032, %v4067
      %v4124 = vadd.f32 %v4034, %v4063
      %v4125 = vadd.f32 %v4036, %v4067
      %v4126 = vadd.f32 %v4040, %v4063
      %v4127 = vadd.f32 %v4042, %v4067
      %v4128 = vadd.f32 %v4044, %v4063
      %v4129 = vadd.f32 %v4046, %v4067
      %v4130 = vadd.f32 %v4050, %v4063
      %v4131 = vadd.f32 %v4052, %v4067
      %v4132 = vadd.f32 %v4054, %v4063
      %v4133 = vadd.f32 %v4056, %v4067
      %v4134 = vmax.f32 %v4070, 0.0
      %v4135 = vmax.f32 %v4071, 0.0
      %v4136 = vmax.f32 %v4072, 0.0
      %v4137 = vmax.f32 %v4073, 0.0
      %v4138 = vmax.f32 %v4074, 0.0
      %v4139 = vmax.f32 %v4075, 0.0
      %v4140 = vmax.f32 %v4076, 0.0
      %v4141 = vmax.f32 %v4077, 0.0
      %v4142 = vmax.f32 %v4078, 0.0
      %v4143 = vmax.f32 %v4079, 0.0
      %v4144 = vmax.f32 %v4080, 0.0
      %v4145 = vmax.f32 %v4081, 0.0
      %v4146 = vmax.f32 %v4082, 0.0
      %v4147 = vmax.f32 %v4083, 0.0
      %v4148 = vmax.f32 %v4084, 0.0
      %v4149 = vmax.f32 %v4085, 0.0
      %v4150 = vmax.f32 %v4086, 0.0
      %v4151 = vmax.f32 %v4087, 0.0
      %v4152 = vmax.f32 %v4088, 0.0
      %v4153 = vmax.f32 %v4089, 0.0
      %v4154 = vmax.f32 %v4090, 0.0
      %v4155 = vmax.f32 %v4091, 0.0
      %v4156 = vmax.f32 %v4092, 0.0
      %v4157 = vmax.f32 %v4093, 0.0
      %v4158 = vmax.f32 %v4094, 0.0
      %v4159 = vmax.f32 %v4095, 0.0
      %v4160 = vmax.f32 %v4096, 0.0
      %v4161 = vmax.f32 %v4097, 0.0
      %v4162 = vmax.f32 %v4098, 0.0
      %v4163 = vmax.f32 %v4099, 0.0
      %v4164 = vmax.f32 %v4100, 0.0
      %v4165 = vmax.f32 %v4101, 0.0
      %v4166 = vmax.f32 %v4102, 0.0
      %v4167 = vmax.f32 %v4103, 0.0
      %v4168 = vmax.f32 %v4104, 0.0
      %v4169 = vmax.f32 %v4105, 0.0
      %v4170 = vmax.f32 %v4106, 0.0
      %v4171 = vmax.f32 %v4107, 0.0
      %v4172 = vmax.f32 %v4108, 0.0
      %v4173 = vmax.f32 %v4109, 0.0
      %v4174 = vmax.f32 %v4110, 0.0
      %v4175 = vmax.f32 %v4111, 0.0
      %v4176 = vmax.f32 %v4112, 0.0
      %v4177 = vmax.f32 %v4113, 0.0
      %v4178 = vmax.f32 %v4114, 0.0
      %v4179 = vmax.f32 %v4115, 0.0
      %v4180 = vmax.f32 %v4116, 0.0
      %v4181 = vmax.f32 %v4117, 0.0
      %v4182 = vmax.f32 %v4118, 0.0
      %v4183 = vmax.f32 %v4119, 0.0
      %v4184 = vmax.f32 %v4120, 0.0
      %v4185 = vmax.f32 %v4121, 0.0
      %v4186 = vmax.f32 %v4122, 0.0
      %v4187 = vmax.f32 %v4123, 0.0
      %v4188 = vmax.f32 %v4124, 0.0
      %v4189 = vmax.f32 %v4125, 0.0
      %v4190 = vmax.f32 %v4126, 0.0
      %v4191 = vmax.f32 %v4127, 0.0
      %v4192 = vmax.f32 %v4128, 0.0
      %v4193 = vmax.f32 %v4129, 0.0
      %v4194 = vmax.f32 %v4130, 0.0
      %v4195 = vmax.f32 %v4131, 0.0
      %v4196 = vmax.f32 %v4132, 0.0
      %v4197 = vmax.f32 %v4133, 0.0
      %v4198 = vpack.c.bf16 %v4136, %v4134
      %v4199 = vpack.c.bf16 %v4137, %v4135
      %v4200 = vpack.c.bf16 %v4140, %v4138
      %v4201 = vpack.c.bf16 %v4141, %v4139
      %v4202 = vpack.c.bf16 %v4144, %v4142
      %v4203 = vpack.c.bf16 %v4145, %v4143
      %v4204 = vpack.c.bf16 %v4148, %v4146
      %v4205 = vpack.c.bf16 %v4149, %v4147
      %v4206 = vpack.c.bf16 %v4152, %v4150
      %v4207 = vpack.c.bf16 %v4153, %v4151
      %v4208 = vpack.c.bf16 %v4156, %v4154
      %v4209 = vpack.c.bf16 %v4157, %v4155
      %v4210 = vpack.c.bf16 %v4160, %v4158
      %v4211 = vpack.c.bf16 %v4161, %v4159
      %v4212 = vpack.c.bf16 %v4164, %v4162
      %v4213 = vpack.c.bf16 %v4165, %v4163
      %v4214 = vpack.c.bf16 %v4168, %v4166
      %v4215 = vpack.c.bf16 %v4169, %v4167
      %v4216 = vpack.c.bf16 %v4172, %v4170
      %v4217 = vpack.c.bf16 %v4173, %v4171
      %v4218 = vpack.c.bf16 %v4176, %v4174
      %v4219 = vpack.c.bf16 %v4177, %v4175
      %v4220 = vpack.c.bf16 %v4180, %v4178
      %v4221 = vpack.c.bf16 %v4181, %v4179
      %v4222 = vpack.c.bf16 %v4184, %v4182
      %v4223 = vpack.c.bf16 %v4185, %v4183
      %v4224 = vpack.c.bf16 %v4188, %v4186
      %v4225 = vpack.c.bf16 %v4189, %v4187
      %v4226 = vpack.c.bf16 %v4192, %v4190
      %v4227 = vpack.c.bf16 %v4193, %v4191
      %v4228 = vpack.c.bf16 %v4196, %v4194
      %v4229 = vpack.c.bf16 %v4197, %v4195
      %v4230 = vld [vmem:[%s14] sm:$0xff]
      %v4231 = vld [vmem:[%s14 + $0x8] sm:$0xff]
      %v4232 = vld [vmem:[%s14 + $0x10] sm:$0xff]
      %v4233 = vld [vmem:[%s14 + $0x18] sm:$0xff]
      %v4234 = vld [vmem:[%s14 + $0x20] sm:$0xff]
      %v4235 = vld [vmem:[%s14 + $0x28] sm:$0xff]
      %v4236 = vld [vmem:[%s14 + $0x30] sm:$0xff]
      %v4237 = vld [vmem:[%s14 + $0x38] sm:$0xff]
      %v4238 = vld [vmem:[%s14 + $0x40] sm:$0xff]
      %v4239 = vld [vmem:[%s14 + $0x48] sm:$0xff]
      %v4240 = vld [vmem:[%s14 + $0x50] sm:$0xff]
      %v4241 = vld [vmem:[%s14 + $0x58] sm:$0xff]
      %v4242 = vld [vmem:[%s14 + $0x60] sm:$0xff]
      %v4243 = vld [vmem:[%s14 + $0x68] sm:$0xff]
      %v4244 = vld [vmem:[%s14 + $0x70] sm:$0xff]
      %v4245 = vld [vmem:[%s14 + $0x78] sm:$0xff]
      %v4246 = vld [vmem:[%s14 + $0x80] sm:$0xff]
      %v4247 = vld [vmem:[%s14 + $0x88] sm:$0xff]
      %v4248 = vld [vmem:[%s14 + $0x90] sm:$0xff]
      %v4249 = vld [vmem:[%s14 + $0x98] sm:$0xff]
      %v4250 = vld [vmem:[%s14 + $0xa0] sm:$0xff]
      %v4251 = vld [vmem:[%s14 + $0xa8] sm:$0xff]
      %v4252 = vld [vmem:[%s14 + $0xb0] sm:$0xff]
      %v4253 = vld [vmem:[%s14 + $0xb8] sm:$0xff]
      %v4254 = vld [vmem:[%s14 + $0xc0] sm:$0xff]
      %v4255 = vld [vmem:[%s14 + $0xc8] sm:$0xff]
      %v4256 = vld [vmem:[%s14 + $0xd0] sm:$0xff]
      %v4257 = vld [vmem:[%s14 + $0xd8] sm:$0xff]
      %v4258 = vld [vmem:[%s14 + $0xe0] sm:$0xff]
      %v4259 = vld [vmem:[%s14 + $0xe8] sm:$0xff]
      %v4260 = vld [vmem:[%s14 + $0xf0] sm:$0xff]
      %v4261 = vld [vmem:[%s14 + $0xf8] sm:$0xff]
      %v4262 = vld [vmem:[%s15] sm:$0x3]
      %v4264 = vlaneseq
      %v4265 = vshrl.u32 %v4264, 7
      %v4266 = vsub.s32 0, %v4265
      %v4267 = vrot.slane %v4262, %v4266
      %v4268 = vlaneseq
      %v4269 = vshrl.u32 %v4268, 7
      %v4270 = vsub.s32 1, %v4269
      %v4271 = vrot.slane %v4262, %v4270
      %v4306 = vunpack.c.l.b16 %v4230
      %v4307 = vunpack.c.h.b16 %v4230
      %v4308 = vunpack.c.l.b16 %v4231
      %v4309 = vunpack.c.h.b16 %v4231
      %v4310 = vunpack.c.l.b16 %v4232
      %v4311 = vunpack.c.h.b16 %v4232
      %v4312 = vunpack.c.l.b16 %v4233
      %v4313 = vunpack.c.h.b16 %v4233
      %v4314 = vunpack.c.l.b16 %v4234
      %v4315 = vunpack.c.h.b16 %v4234
      %v4316 = vunpack.c.l.b16 %v4235
      %v4317 = vunpack.c.h.b16 %v4235
      %v4318 = vunpack.c.l.b16 %v4236
      %v4319 = vunpack.c.h.b16 %v4236
      %v4320 = vunpack.c.l.b16 %v4237
      %v4321 = vunpack.c.h.b16 %v4237
      %v4322 = vunpack.c.l.b16 %v4238
      %v4323 = vunpack.c.h.b16 %v4238
      %v4324 = vunpack.c.l.b16 %v4239
      %v4325 = vunpack.c.h.b16 %v4239
      %v4326 = vunpack.c.l.b16 %v4240
      %v4327 = vunpack.c.h.b16 %v4240
      %v4328 = vunpack.c.l.b16 %v4241
      %v4329 = vunpack.c.h.b16 %v4241
      %v4330 = vunpack.c.l.b16 %v4242
      %v4331 = vunpack.c.h.b16 %v4242
      %v4332 = vunpack.c.l.b16 %v4243
      %v4333 = vunpack.c.h.b16 %v4243
      %v4334 = vunpack.c.l.b16 %v4244
      %v4335 = vunpack.c.h.b16 %v4244
      %v4336 = vunpack.c.l.b16 %v4245
      %v4337 = vunpack.c.h.b16 %v4245
      %v4338 = vunpack.c.l.b16 %v4246
      %v4339 = vunpack.c.h.b16 %v4246
      %v4340 = vunpack.c.l.b16 %v4247
      %v4341 = vunpack.c.h.b16 %v4247
      %v4342 = vunpack.c.l.b16 %v4248
      %v4343 = vunpack.c.h.b16 %v4248
      %v4344 = vunpack.c.l.b16 %v4249
      %v4345 = vunpack.c.h.b16 %v4249
      %v4346 = vunpack.c.l.b16 %v4250
      %v4347 = vunpack.c.h.b16 %v4250
      %v4348 = vunpack.c.l.b16 %v4251
      %v4349 = vunpack.c.h.b16 %v4251
      %v4350 = vunpack.c.l.b16 %v4252
      %v4351 = vunpack.c.h.b16 %v4252
      %v4352 = vunpack.c.l.b16 %v4253
      %v4353 = vunpack.c.h.b16 %v4253
      %v4354 = vunpack.c.l.b16 %v4254
      %v4355 = vunpack.c.h.b16 %v4254
      %v4356 = vunpack.c.l.b16 %v4255
      %v4357 = vunpack.c.h.b16 %v4255
      %v4358 = vunpack.c.l.b16 %v4256
      %v4359 = vunpack.c.h.b16 %v4256
      %v4360 = vunpack.c.l.b16 %v4257
      %v4361 = vunpack.c.h.b16 %v4257
      %v4362 = vunpack.c.l.b16 %v4258
      %v4363 = vunpack.c.h.b16 %v4258
      %v4364 = vunpack.c.l.b16 %v4259
      %v4365 = vunpack.c.h.b16 %v4259
      %v4366 = vunpack.c.l.b16 %v4260
      %v4367 = vunpack.c.h.b16 %v4260
      %v4368 = vunpack.c.l.b16 %v4261
      %v4369 = vunpack.c.h.b16 %v4261
      %v4370 = vpack.c.b16 %v4308, %v4306
      %v4371 = vpack.c.b16 %v4309, %v4307
      %v4372 = vpack.c.b16 %v4312, %v4310
      %v4373 = vpack.c.b16 %v4313, %v4311
      %v4374 = vpack.c.b16 %v4316, %v4314
      %v4375 = vpack.c.b16 %v4317, %v4315
      %v4376 = vpack.c.b16 %v4320, %v4318
      %v4377 = vpack.c.b16 %v4321, %v4319
      %v4378 = vpack.c.b16 %v4324, %v4322
      %v4379 = vpack.c.b16 %v4325, %v4323
      %v4380 = vpack.c.b16 %v4328, %v4326
      %v4381 = vpack.c.b16 %v4329, %v4327
      %v4382 = vpack.c.b16 %v4332, %v4330
      %v4383 = vpack.c.b16 %v4333, %v4331
      %v4384 = vpack.c.b16 %v4336, %v4334
      %v4385 = vpack.c.b16 %v4337, %v4335
      %v4386 = vpack.c.b16 %v4340, %v4338
      %v4387 = vpack.c.b16 %v4341, %v4339
      %v4388 = vpack.c.b16 %v4344, %v4342
      %v4389 = vpack.c.b16 %v4345, %v4343
      %v4390 = vpack.c.b16 %v4348, %v4346
      %v4391 = vpack.c.b16 %v4349, %v4347
      %v4392 = vpack.c.b16 %v4352, %v4350
      %v4393 = vpack.c.b16 %v4353, %v4351
      %v4394 = vpack.c.b16 %v4356, %v4354
      %v4395 = vpack.c.b16 %v4357, %v4355
      %v4396 = vpack.c.b16 %v4360, %v4358
      %v4397 = vpack.c.b16 %v4361, %v4359
      %v4398 = vpack.c.b16 %v4364, %v4362
      %v4399 = vpack.c.b16 %v4365, %v4363
      %v4400 = vpack.c.b16 %v4368, %v4366
      %v4401 = vpack.c.b16 %v4369, %v4367
      %4434 = vmatprep.subr.bf16.mxu0 %v4371
      %4435 = vmatpush1.bf16.msra.mxu0 %v4370
      %4436 = vmatprep.subr.bf16.mxu0 %v4373
      %4437 = vmatpush1.bf16.msra.mxu0 %v4372
      %4438 = vmatprep.subr.bf16.mxu0 %v4375
      %4439 = vmatpush1.bf16.msra.mxu0 %v4374
      %4440 = vmatprep.subr.bf16.mxu0 %v4377
      %4441 = vmatpush1.bf16.msra.mxu0 %v4376
      %4442 = vmatprep.subr.bf16.mxu0 %v4379
      %4443 = vmatpush1.bf16.msra.mxu0 %v4378
      %4444 = vmatprep.subr.bf16.mxu0 %v4381
      %4445 = vmatpush1.bf16.msra.mxu0 %v4380
      %4446 = vmatprep.subr.bf16.mxu0 %v4383
      %4447 = vmatpush1.bf16.msra.mxu0 %v4382
      %4448 = vmatprep.subr.bf16.mxu0 %v4385
      %4449 = vmatpush1.bf16.msra.mxu0 %v4384
      %4450 = vmatprep.subr.bf16.mxu0 %v4387
      %4451 = vmatpush1.bf16.msra.mxu0 %v4386
      %4452 = vmatprep.subr.bf16.mxu0 %v4389
      %4453 = vmatpush1.bf16.msra.mxu0 %v4388
      %4454 = vmatprep.subr.bf16.mxu0 %v4391
      %4455 = vmatpush1.bf16.msra.mxu0 %v4390
      %4456 = vmatprep.subr.bf16.mxu0 %v4393
      %4457 = vmatpush1.bf16.msra.mxu0 %v4392
      %4458 = vmatprep.subr.bf16.mxu0 %v4395
      %4459 = vmatpush1.bf16.msra.mxu0 %v4394
      %4460 = vmatprep.subr.bf16.mxu0 %v4397
      %4461 = vmatpush1.bf16.msra.mxu0 %v4396
      %4462 = vmatprep.subr.bf16.mxu0 %v4399
      %4463 = vmatpush1.bf16.msra.mxu0 %v4398
      %4464 = vmatprep.subr.bf16.mxu0 %v4401
      %4465 = vmatpush1.bf16.msra.mxu0 %v4400
      %4466 = vmatprep.mubr.bf16.mxu0 %v4199
      %4467 = vmatmul.mubr.bf16.gmra.mrb[0].mxu0 %v4198
      %v4468 = vpop.f32.mrb[0].mxu0
      %v4469 = vadd.f32 %v4267, %v4468
      %v4470 = vpop.f32.mrb[0].mxu0
      %v4471 = vadd.f32 %v4271, %v4470
      %v4472 = vpop.f32.mrb[0].mxu0
      %v4473 = vadd.f32 %v4267, %v4472
      %v4474 = vpop.f32.mrb[0].mxu0
      %v4475 = vadd.f32 %v4271, %v4474
      %4476 = vmatprep.mubr.bf16.mxu0 %v4201
      %4477 = vmatmul.mubr.bf16.gmra.mrb[0].mxu0 %v4200
      %v4478 = vpop.f32.mrb[0].mxu0
      %v4479 = vadd.f32 %v4267, %v4478
      %v4480 = vpop.f32.mrb[0].mxu0
      %v4481 = vadd.f32 %v4271, %v4480
      %v4482 = vpop.f32.mrb[0].mxu0
      %v4483 = vadd.f32 %v4267, %v4482
      %v4484 = vpop.f32.mrb[0].mxu0
      %v4485 = vadd.f32 %v4271, %v4484
      %4486 = vmatprep.mubr.bf16.mxu0 %v4203
      %4487 = vmatmul.mubr.bf16.gmra.mrb[0].mxu0 %v4202
      %v4488 = vpop.f32.mrb[0].mxu0
      %v4489 = vadd.f32 %v4267, %v4488
      %v4490 = vpop.f32.mrb[0].mxu0
      %v4491 = vadd.f32 %v4271, %v4490
      %v4492 = vpop.f32.mrb[0].mxu0
      %v4493 = vadd.f32 %v4267, %v4492
      %v4494 = vpop.f32.mrb[0].mxu0
      %v4495 = vadd.f32 %v4271, %v4494
      %4496 = vmatprep.mubr.bf16.mxu0 %v4205
      %4497 = vmatmul.mubr.bf16.gmra.mrb[0].mxu0 %v4204
      %v4498 = vpop.f32.mrb[0].mxu0
      %v4499 = vadd.f32 %v4267, %v4498
      %v4500 = vpop.f32.mrb[0].mxu0
      %v4501 = vadd.f32 %v4271, %v4500
      %v4502 = vpop.f32.mrb[0].mxu0
      %v4503 = vadd.f32 %v4267, %v4502
      %v4504 = vpop.f32.mrb[0].mxu0
      %v4505 = vadd.f32 %v4271, %v4504
      %4506 = vmatprep.mubr.bf16.mxu0 %v4207
      %4507 = vmatmul.mubr.bf16.gmra.mrb[0].mxu0 %v4206
      %v4508 = vpop.f32.mrb[0].mxu0
      %v4509 = vadd.f32 %v4267, %v4508
      %v4510 = vpop.f32.mrb[0].mxu0
      %v4511 = vadd.f32 %v4271, %v4510
      %v4512 = vpop.f32.mrb[0].mxu0
      %v4513 = vadd.f32 %v4267, %v4512
      %v4514 = vpop.f32.mrb[0].mxu0
      %v4515 = vadd.f32 %v4271, %v4514
      %4516 = vmatprep.mubr.bf16.mxu0 %v4209
      %4517 = vmatmul.mubr.bf16.gmra.mrb[0].mxu0 %v4208
      %v4518 = vpop.f32.mrb[0].mxu0
      %v4519 = vadd.f32 %v4267, %v4518
      %v4520 = vpop.f32.mrb[0].mxu0
      %v4521 = vadd.f32 %v4271, %v4520
      %v4522 = vpop.f32.mrb[0].mxu0
      %v4523 = vadd.f32 %v4267, %v4522
      %v4524 = vpop.f32.mrb[0].mxu0
      %v4525 = vadd.f32 %v4271, %v4524
      %4526 = vmatprep.mubr.bf16.mxu0 %v4211
      %4527 = vmatmul.mubr.bf16.gmra.mrb[0].mxu0 %v4210
      %v4528 = vpop.f32.mrb[0].mxu0
      %v4529 = vadd.f32 %v4267, %v4528
      %v4530 = vpop.f32.mrb[0].mxu0
      %v4531 = vadd.f32 %v4271, %v4530
      %v4532 = vpop.f32.mrb[0].mxu0
      %v4533 = vadd.f32 %v4267, %v4532
      %v4534 = vpop.f32.mrb[0].mxu0
      %v4535 = vadd.f32 %v4271, %v4534
      %4536 = vmatprep.mubr.bf16.mxu0 %v4213
      %4537 = vmatmul.mubr.bf16.gmra.mrb[0].mxu0 %v4212
      %v4538 = vpop.f32.mrb[0].mxu0
      %v4539 = vadd.f32 %v4267, %v4538
      %v4540 = vpop.f32.mrb[0].mxu0
      %v4541 = vadd.f32 %v4271, %v4540
      %v4542 = vpop.f32.mrb[0].mxu0
      %v4543 = vadd.f32 %v4267, %v4542
      %v4544 = vpop.f32.mrb[0].mxu0
      %v4545 = vadd.f32 %v4271, %v4544
      %4546 = vmatprep.mubr.bf16.mxu0 %v4215
      %4547 = vmatmul.mubr.bf16.gmra.mrb[0].mxu0 %v4214
      %v4548 = vpop.f32.mrb[0].mxu0
      %v4549 = vadd.f32 %v4267, %v4548
      %v4550 = vpop.f32.mrb[0].mxu0
      %v4551 = vadd.f32 %v4271, %v4550
      %v4552 = vpop.f32.mrb[0].mxu0
      %v4553 = vadd.f32 %v4267, %v4552
      %v4554 = vpop.f32.mrb[0].mxu0
      %v4555 = vadd.f32 %v4271, %v4554
      %4556 = vmatprep.mubr.bf16.mxu0 %v4217
      %4557 = vmatmul.mubr.bf16.gmra.mrb[0].mxu0 %v4216
      %v4558 = vpop.f32.mrb[0].mxu0
      %v4559 = vadd.f32 %v4267, %v4558
      %v4560 = vpop.f32.mrb[0].mxu0
      %v4561 = vadd.f32 %v4271, %v4560
      %v4562 = vpop.f32.mrb[0].mxu0
      %v4563 = vadd.f32 %v4267, %v4562
      %v4564 = vpop.f32.mrb[0].mxu0
      %v4565 = vadd.f32 %v4271, %v4564
      %4566 = vmatprep.mubr.bf16.mxu0 %v4219
      %4567 = vmatmul.mubr.bf16.gmra.mrb[0].mxu0 %v4218
      %v4568 = vpop.f32.mrb[0].mxu0
      %v4569 = vadd.f32 %v4267, %v4568
      %v4570 = vpop.f32.mrb[0].mxu0
      %v4571 = vadd.f32 %v4271, %v4570
      %v4572 = vpop.f32.mrb[0].mxu0
      %v4573 = vadd.f32 %v4267, %v4572
      %v4574 = vpop.f32.mrb[0].mxu0
      %v4575 = vadd.f32 %v4271, %v4574
      %4576 = vmatprep.mubr.bf16.mxu0 %v4221
      %4577 = vmatmul.mubr.bf16.gmra.mrb[0].mxu0 %v4220
      %v4578 = vpop.f32.mrb[0].mxu0
      %v4579 = vadd.f32 %v4267, %v4578
      %v4580 = vpop.f32.mrb[0].mxu0
      %v4581 = vadd.f32 %v4271, %v4580
      %v4582 = vpop.f32.mrb[0].mxu0
      %v4583 = vadd.f32 %v4267, %v4582
      %v4584 = vpop.f32.mrb[0].mxu0
      %v4585 = vadd.f32 %v4271, %v4584
      %4586 = vmatprep.mubr.bf16.mxu0 %v4223
      %4587 = vmatmul.mubr.bf16.gmra.mrb[0].mxu0 %v4222
      %v4588 = vpop.f32.mrb[0].mxu0
      %v4589 = vadd.f32 %v4267, %v4588
      %v4590 = vpop.f32.mrb[0].mxu0
      %v4591 = vadd.f32 %v4271, %v4590
      %v4592 = vpop.f32.mrb[0].mxu0
      %v4593 = vadd.f32 %v4267, %v4592
      %v4594 = vpop.f32.mrb[0].mxu0
      %v4595 = vadd.f32 %v4271, %v4594
      %4596 = vmatprep.mubr.bf16.mxu0 %v4225
      %4597 = vmatmul.mubr.bf16.gmra.mrb[0].mxu0 %v4224
      %v4598 = vpop.f32.mrb[0].mxu0
      %v4599 = vadd.f32 %v4267, %v4598
      %v4600 = vpop.f32.mrb[0].mxu0
      %v4601 = vadd.f32 %v4271, %v4600
      %v4602 = vpop.f32.mrb[0].mxu0
      %v4603 = vadd.f32 %v4267, %v4602
      %v4604 = vpop.f32.mrb[0].mxu0
      %v4605 = vadd.f32 %v4271, %v4604
      %4606 = vmatprep.mubr.bf16.mxu0 %v4227
      %4607 = vmatmul.mubr.bf16.gmra.mrb[0].mxu0 %v4226
      %v4608 = vpop.f32.mrb[0].mxu0
      %v4609 = vadd.f32 %v4267, %v4608
      %v4610 = vpop.f32.mrb[0].mxu0
      %v4611 = vadd.f32 %v4271, %v4610
      %v4612 = vpop.f32.mrb[0].mxu0
      %v4613 = vadd.f32 %v4267, %v4612
      %v4614 = vpop.f32.mrb[0].mxu0
      %v4615 = vadd.f32 %v4271, %v4614
      %4616 = vmatprep.mubr.bf16.mxu0 %v4229
      %4617 = vmatmul.mubr.bf16.gmra.mrb[0].mxu0 %v4228
      %v4618 = vpop.f32.mrb[0].mxu0
      %v4619 = vadd.f32 %v4267, %v4618
      %v4620 = vpop.f32.mrb[0].mxu0
      %v4621 = vadd.f32 %v4271, %v4620
      %v4622 = vpop.f32.mrb[0].mxu0
      %v4623 = vadd.f32 %v4267, %v4622
      %v4624 = vpop.f32.mrb[0].mxu0
      %v4625 = vadd.f32 %v4271, %v4624
      %4626 = vdwg.mxu0
      %v4627 = vmax.f32 %v4469, 0.0
      %v4628 = vmax.f32 %v4471, 0.0
      %v4629 = vmax.f32 %v4473, 0.0
      %v4630 = vmax.f32 %v4475, 0.0
      %v4631 = vmax.f32 %v4479, 0.0
      %v4632 = vmax.f32 %v4481, 0.0
      %v4633 = vmax.f32 %v4483, 0.0
      %v4634 = vmax.f32 %v4485, 0.0
      %v4635 = vmax.f32 %v4489, 0.0
      %v4636 = vmax.f32 %v4491, 0.0
      %v4637 = vmax.f32 %v4493, 0.0
      %v4638 = vmax.f32 %v4495, 0.0
      %v4639 = vmax.f32 %v4499, 0.0
      %v4640 = vmax.f32 %v4501, 0.0
      %v4641 = vmax.f32 %v4503, 0.0
      %v4642 = vmax.f32 %v4505, 0.0
      %v4643 = vmax.f32 %v4509, 0.0
      %v4644 = vmax.f32 %v4511, 0.0
      %v4645 = vmax.f32 %v4513, 0.0
      %v4646 = vmax.f32 %v4515, 0.0
      %v4647 = vmax.f32 %v4519, 0.0
      %v4648 = vmax.f32 %v4521, 0.0
      %v4649 = vmax.f32 %v4523, 0.0
      %v4650 = vmax.f32 %v4525, 0.0
      %v4651 = vmax.f32 %v4529, 0.0
      %v4652 = vmax.f32 %v4531, 0.0
      %v4653 = vmax.f32 %v4533, 0.0
      %v4654 = vmax.f32 %v4535, 0.0
      %v4655 = vmax.f32 %v4539, 0.0
      %v4656 = vmax.f32 %v4541, 0.0
      %v4657 = vmax.f32 %v4543, 0.0
      %v4658 = vmax.f32 %v4545, 0.0
      %v4659 = vmax.f32 %v4549, 0.0
      %v4660 = vmax.f32 %v4551, 0.0
      %v4661 = vmax.f32 %v4553, 0.0
      %v4662 = vmax.f32 %v4555, 0.0
      %v4663 = vmax.f32 %v4559, 0.0
      %v4664 = vmax.f32 %v4561, 0.0
      %v4665 = vmax.f32 %v4563, 0.0
      %v4666 = vmax.f32 %v4565, 0.0
      %v4667 = vmax.f32 %v4569, 0.0
      %v4668 = vmax.f32 %v4571, 0.0
      %v4669 = vmax.f32 %v4573, 0.0
      %v4670 = vmax.f32 %v4575, 0.0
      %v4671 = vmax.f32 %v4579, 0.0
      %v4672 = vmax.f32 %v4581, 0.0
      %v4673 = vmax.f32 %v4583, 0.0
      %v4674 = vmax.f32 %v4585, 0.0
      %v4675 = vmax.f32 %v4589, 0.0
      %v4676 = vmax.f32 %v4591, 0.0
      %v4677 = vmax.f32 %v4593, 0.0
      %v4678 = vmax.f32 %v4595, 0.0
      %v4679 = vmax.f32 %v4599, 0.0
      %v4680 = vmax.f32 %v4601, 0.0
      %v4681 = vmax.f32 %v4603, 0.0
      %v4682 = vmax.f32 %v4605, 0.0
      %v4683 = vmax.f32 %v4609, 0.0
      %v4684 = vmax.f32 %v4611, 0.0
      %v4685 = vmax.f32 %v4613, 0.0
      %v4686 = vmax.f32 %v4615, 0.0
      %v4687 = vmax.f32 %v4619, 0.0
      %v4688 = vmax.f32 %v4621, 0.0
      %v4689 = vmax.f32 %v4623, 0.0
      %v4690 = vmax.f32 %v4625, 0.0
      %v4691 = vpack.c.bf16 %v4629, %v4627
      %v4692 = vpack.c.bf16 %v4630, %v4628
      %v4693 = vpack.c.bf16 %v4633, %v4631
      %v4694 = vpack.c.bf16 %v4634, %v4632
      %v4695 = vpack.c.bf16 %v4637, %v4635
      %v4696 = vpack.c.bf16 %v4638, %v4636
      %v4697 = vpack.c.bf16 %v4641, %v4639
      %v4698 = vpack.c.bf16 %v4642, %v4640
      %v4699 = vpack.c.bf16 %v4645, %v4643
      %v4700 = vpack.c.bf16 %v4646, %v4644
      %v4701 = vpack.c.bf16 %v4649, %v4647
      %v4702 = vpack.c.bf16 %v4650, %v4648
      %v4703 = vpack.c.bf16 %v4653, %v4651
      %v4704 = vpack.c.bf16 %v4654, %v4652
      %v4705 = vpack.c.bf16 %v4657, %v4655
      %v4706 = vpack.c.bf16 %v4658, %v4656
      %v4707 = vpack.c.bf16 %v4661, %v4659
      %v4708 = vpack.c.bf16 %v4662, %v4660
      %v4709 = vpack.c.bf16 %v4665, %v4663
      %v4710 = vpack.c.bf16 %v4666, %v4664
      %v4711 = vpack.c.bf16 %v4669, %v4667
      %v4712 = vpack.c.bf16 %v4670, %v4668
      %v4713 = vpack.c.bf16 %v4673, %v4671
      %v4714 = vpack.c.bf16 %v4674, %v4672
      %v4715 = vpack.c.bf16 %v4677, %v4675
      %v4716 = vpack.c.bf16 %v4678, %v4676
      %v4717 = vpack.c.bf16 %v4681, %v4679
      %v4718 = vpack.c.bf16 %v4682, %v4680
      %v4719 = vpack.c.bf16 %v4685, %v4683
      %v4720 = vpack.c.bf16 %v4686, %v4684
      %v4721 = vpack.c.bf16 %v4689, %v4687
      %v4722 = vpack.c.bf16 %v4690, %v4688
      %v4723 = vld [vmem:[%s16] sm:$0xff]
      %v4724 = vld [vmem:[%s16 + $0x8] sm:$0xff]
      %v4725 = vld [vmem:[%s16 + $0x10] sm:$0xff]
      %v4726 = vld [vmem:[%s16 + $0x18] sm:$0xff]
      %v4727 = vld [vmem:[%s16 + $0x20] sm:$0xff]
      %v4728 = vld [vmem:[%s16 + $0x28] sm:$0xff]
      %v4729 = vld [vmem:[%s16 + $0x30] sm:$0xff]
      %v4730 = vld [vmem:[%s16 + $0x38] sm:$0xff]
      %v4731 = vld [vmem:[%s16 + $0x40] sm:$0xff]
      %v4732 = vld [vmem:[%s16 + $0x48] sm:$0xff]
      %v4733 = vld [vmem:[%s16 + $0x50] sm:$0xff]
      %v4734 = vld [vmem:[%s16 + $0x58] sm:$0xff]
      %v4735 = vld [vmem:[%s16 + $0x60] sm:$0xff]
      %v4736 = vld [vmem:[%s16 + $0x68] sm:$0xff]
      %v4737 = vld [vmem:[%s16 + $0x70] sm:$0xff]
      %v4738 = vld [vmem:[%s16 + $0x78] sm:$0xff]
      %v4739 = vld [vmem:[%s16 + $0x80] sm:$0xff]
      %v4740 = vld [vmem:[%s16 + $0x88] sm:$0xff]
      %v4741 = vld [vmem:[%s16 + $0x90] sm:$0xff]
      %v4742 = vld [vmem:[%s16 + $0x98] sm:$0xff]
      %v4743 = vld [vmem:[%s16 + $0xa0] sm:$0xff]
      %v4744 = vld [vmem:[%s16 + $0xa8] sm:$0xff]
      %v4745 = vld [vmem:[%s16 + $0xb0] sm:$0xff]
      %v4746 = vld [vmem:[%s16 + $0xb8] sm:$0xff]
      %v4747 = vld [vmem:[%s16 + $0xc0] sm:$0xff]
      %v4748 = vld [vmem:[%s16 + $0xc8] sm:$0xff]
      %v4749 = vld [vmem:[%s16 + $0xd0] sm:$0xff]
      %v4750 = vld [vmem:[%s16 + $0xd8] sm:$0xff]
      %v4751 = vld [vmem:[%s16 + $0xe0] sm:$0xff]
      %v4752 = vld [vmem:[%s16 + $0xe8] sm:$0xff]
      %v4753 = vld [vmem:[%s16 + $0xf0] sm:$0xff]
      %v4754 = vld [vmem:[%s16 + $0xf8] sm:$0xff]
      %v4755 = vld [vmem:[%s17] sm:$0x3]
      %v4757 = vlaneseq
      %v4758 = vshrl.u32 %v4757, 7
      %v4759 = vsub.s32 0, %v4758
      %v4760 = vrot.slane %v4755, %v4759
      %v4761 = vlaneseq
      %v4762 = vshrl.u32 %v4761, 7
      %v4763 = vsub.s32 1, %v4762
      %v4764 = vrot.slane %v4755, %v4763
      %v4799 = vunpack.c.l.b16 %v4723
      %v4800 = vunpack.c.h.b16 %v4723
      %v4801 = vunpack.c.l.b16 %v4724
      %v4802 = vunpack.c.h.b16 %v4724
      %v4803 = vunpack.c.l.b16 %v4725
      %v4804 = vunpack.c.h.b16 %v4725
      %v4805 = vunpack.c.l.b16 %v4726
      %v4806 = vunpack.c.h.b16 %v4726
      %v4807 = vunpack.c.l.b16 %v4727
      %v4808 = vunpack.c.h.b16 %v4727
      %v4809 = vunpack.c.l.b16 %v4728
      %v4810 = vunpack.c.h.b16 %v4728
      %v4811 = vunpack.c.l.b16 %v4729
      %v4812 = vunpack.c.h.b16 %v4729
      %v4813 = vunpack.c.l.b16 %v4730
      %v4814 = vunpack.c.h.b16 %v4730
      %v4815 = vunpack.c.l.b16 %v4731
      %v4816 = vunpack.c.h.b16 %v4731
      %v4817 = vunpack.c.l.b16 %v4732
      %v4818 = vunpack.c.h.b16 %v4732
      %v4819 = vunpack.c.l.b16 %v4733
      %v4820 = vunpack.c.h.b16 %v4733
      %v4821 = vunpack.c.l.b16 %v4734
      %v4822 = vunpack.c.h.b16 %v4734
      %v4823 = vunpack.c.l.b16 %v4735
      %v4824 = vunpack.c.h.b16 %v4735
      %v4825 = vunpack.c.l.b16 %v4736
      %v4826 = vunpack.c.h.b16 %v4736
      %v4827 = vunpack.c.l.b16 %v4737
      %v4828 = vunpack.c.h.b16 %v4737
      %v4829 = vunpack.c.l.b16 %v4738
      %v4830 = vunpack.c.h.b16 %v4738
      %v4831 = vunpack.c.l.b16 %v4739
      %v4832 = vunpack.c.h.b16 %v4739
      %v4833 = vunpack.c.l.b16 %v4740
      %v4834 = vunpack.c.h.b16 %v4740
      %v4835 = vunpack.c.l.b16 %v4741
      %v4836 = vunpack.c.h.b16 %v4741
      %v4837 = vunpack.c.l.b16 %v4742
      %v4838 = vunpack.c.h.b16 %v4742
      %v4839 = vunpack.c.l.b16 %v4743
      %v4840 = vunpack.c.h.b16 %v4743
      %v4841 = vunpack.c.l.b16 %v4744
      %v4842 = vunpack.c.h.b16 %v4744
      %v4843 = vunpack.c.l.b16 %v4745
      %v4844 = vunpack.c.h.b16 %v4745
      %v4845 = vunpack.c.l.b16 %v4746
      %v4846 = vunpack.c.h.b16 %v4746
      %v4847 = vunpack.c.l.b16 %v4747
      %v4848 = vunpack.c.h.b16 %v4747
      %v4849 = vunpack.c.l.b16 %v4748
      %v4850 = vunpack.c.h.b16 %v4748
      %v4851 = vunpack.c.l.b16 %v4749
      %v4852 = vunpack.c.h.b16 %v4749
      %v4853 = vunpack.c.l.b16 %v4750
      %v4854 = vunpack.c.h.b16 %v4750
      %v4855 = vunpack.c.l.b16 %v4751
      %v4856 = vunpack.c.h.b16 %v4751
      %v4857 = vunpack.c.l.b16 %v4752
      %v4858 = vunpack.c.h.b16 %v4752
      %v4859 = vunpack.c.l.b16 %v4753
      %v4860 = vunpack.c.h.b16 %v4753
      %v4861 = vunpack.c.l.b16 %v4754
      %v4862 = vunpack.c.h.b16 %v4754
      %v4863 = vpack.c.b16 %v4801, %v4799
      %v4864 = vpack.c.b16 %v4802, %v4800
      %v4865 = vpack.c.b16 %v4805, %v4803
      %v4866 = vpack.c.b16 %v4806, %v4804
      %v4867 = vpack.c.b16 %v4809, %v4807
      %v4868 = vpack.c.b16 %v4810, %v4808
      %v4869 = vpack.c.b16 %v4813, %v4811
      %v4870 = vpack.c.b16 %v4814, %v4812
      %v4871 = vpack.c.b16 %v4817, %v4815
      %v4872 = vpack.c.b16 %v4818, %v4816
      %v4873 = vpack.c.b16 %v4821, %v4819
      %v4874 = vpack.c.b16 %v4822, %v4820
      %v4875 = vpack.c.b16 %v4825, %v4823
      %v4876 = vpack.c.b16 %v4826, %v4824
      %v4877 = vpack.c.b16 %v4829, %v4827
      %v4878 = vpack.c.b16 %v4830, %v4828
      %v4879 = vpack.c.b16 %v4833, %v4831
      %v4880 = vpack.c.b16 %v4834, %v4832
      %v4881 = vpack.c.b16 %v4837, %v4835
      %v4882 = vpack.c.b16 %v4838, %v4836
      %v4883 = vpack.c.b16 %v4841, %v4839
      %v4884 = vpack.c.b16 %v4842, %v4840
      %v4885 = vpack.c.b16 %v4845, %v4843
      %v4886 = vpack.c.b16 %v4846, %v4844
      %v4887 = vpack.c.b16 %v4849, %v4847
      %v4888 = vpack.c.b16 %v4850, %v4848
      %v4889 = vpack.c.b16 %v4853, %v4851
      %v4890 = vpack.c.b16 %v4854, %v4852
      %v4891 = vpack.c.b16 %v4857, %v4855
      %v4892 = vpack.c.b16 %v4858, %v4856
      %v4893 = vpack.c.b16 %v4861, %v4859
      %v4894 = vpack.c.b16 %v4862, %v4860
      %4927 = vmatprep.subr.bf16.mxu0 %v4864
      %4928 = vmatpush1.bf16.msra.mxu0 %v4863
      %4929 = vmatprep.subr.bf16.mxu0 %v4866
      %4930 = vmatpush1.bf16.msra.mxu0 %v4865
      %4931 = vmatprep.subr.bf16.mxu0 %v4868
      %4932 = vmatpush1.bf16.msra.mxu0 %v4867
      %4933 = vmatprep.subr.bf16.mxu0 %v4870
      %4934 = vmatpush1.bf16.msra.mxu0 %v4869
      %4935 = vmatprep.subr.bf16.mxu0 %v4872
      %4936 = vmatpush1.bf16.msra.mxu0 %v4871
      %4937 = vmatprep.subr.bf16.mxu0 %v4874
      %4938 = vmatpush1.bf16.msra.mxu0 %v4873
      %4939 = vmatprep.subr.bf16.mxu0 %v4876
      %4940 = vmatpush1.bf16.msra.mxu0 %v4875
      %4941 = vmatprep.subr.bf16.mxu0 %v4878
      %4942 = vmatpush1.bf16.msra.mxu0 %v4877
      %4943 = vmatprep.subr.bf16.mxu0 %v4880
      %4944 = vmatpush1.bf16.msra.mxu0 %v4879
      %4945 = vmatprep.subr.bf16.mxu0 %v4882
      %4946 = vmatpush1.bf16.msra.mxu0 %v4881
      %4947 = vmatprep.subr.bf16.mxu0 %v4884
      %4948 = vmatpush1.bf16.msra.mxu0 %v4883
      %4949 = vmatprep.subr.bf16.mxu0 %v4886
      %4950 = vmatpush1.bf16.msra.mxu0 %v4885
      %4951 = vmatprep.subr.bf16.mxu0 %v4888
      %4952 = vmatpush1.bf16.msra.mxu0 %v4887
      %4953 = vmatprep.subr.bf16.mxu0 %v4890
      %4954 = vmatpush1.bf16.msra.mxu0 %v4889
      %4955 = vmatprep.subr.bf16.mxu0 %v4892
      %4956 = vmatpush1.bf16.msra.mxu0 %v4891
      %4957 = vmatprep.subr.bf16.mxu0 %v4894
      %4958 = vmatpush1.bf16.msra.mxu0 %v4893
      %4959 = vmatprep.mubr.bf16.mxu0 %v4692
      %4960 = vmatmul.mubr.bf16.gmra.mrb[0].mxu0 %v4691
      %v4961 = vpop.f32.mrb[0].mxu0
      %v4962 = vadd.f32 %v4760, %v4961
      %v4963 = vpop.f32.mrb[0].mxu0
      %v4964 = vadd.f32 %v4764, %v4963
      %v4965 = vpop.f32.mrb[0].mxu0
      %v4966 = vadd.f32 %v4760, %v4965
      %v4967 = vpop.f32.mrb[0].mxu0
      %v4968 = vadd.f32 %v4764, %v4967
      %4969 = vmatprep.mubr.bf16.mxu0 %v4694
      %4970 = vmatmul.mubr.bf16.gmra.mrb[0].mxu0 %v4693
      %v4971 = vpop.f32.mrb[0].mxu0
      %v4972 = vadd.f32 %v4760, %v4971
      %v4973 = vpop.f32.mrb[0].mxu0
      %v4974 = vadd.f32 %v4764, %v4973
      %v4975 = vpop.f32.mrb[0].mxu0
      %v4976 = vadd.f32 %v4760, %v4975
      %v4977 = vpop.f32.mrb[0].mxu0
      %v4978 = vadd.f32 %v4764, %v4977
      %4979 = vmatprep.mubr.bf16.mxu0 %v4696
      %4980 = vmatmul.mubr.bf16.gmra.mrb[0].mxu0 %v4695
      %v4981 = vpop.f32.mrb[0].mxu0
      %v4982 = vadd.f32 %v4760, %v4981
      %v4983 = vpop.f32.mrb[0].mxu0
      %v4984 = vadd.f32 %v4764, %v4983
      %v4985 = vpop.f32.mrb[0].mxu0
      %v4986 = vadd.f32 %v4760, %v4985
      %v4987 = vpop.f32.mrb[0].mxu0
      %v4988 = vadd.f32 %v4764, %v4987
      %4989 = vmatprep.mubr.bf16.mxu0 %v4698
      %4990 = vmatmul.mubr.bf16.gmra.mrb[0].mxu0 %v4697
      %v4991 = vpop.f32.mrb[0].mxu0
      %v4992 = vadd.f32 %v4760, %v4991
      %v4993 = vpop.f32.mrb[0].mxu0
      %v4994 = vadd.f32 %v4764, %v4993
      %v4995 = vpop.f32.mrb[0].mxu0
      %v4996 = vadd.f32 %v4760, %v4995
      %v4997 = vpop.f32.mrb[0].mxu0
      %v4998 = vadd.f32 %v4764, %v4997
      %4999 = vmatprep.mubr.bf16.mxu0 %v4700
      %5000 = vmatmul.mubr.bf16.gmra.mrb[0].mxu0 %v4699
      %v5001 = vpop.f32.mrb[0].mxu0
      %v5002 = vadd.f32 %v4760, %v5001
      %v5003 = vpop.f32.mrb[0].mxu0
      %v5004 = vadd.f32 %v4764, %v5003
      %v5005 = vpop.f32.mrb[0].mxu0
      %v5006 = vadd.f32 %v4760, %v5005
      %v5007 = vpop.f32.mrb[0].mxu0
      %v5008 = vadd.f32 %v4764, %v5007
      %5009 = vmatprep.mubr.bf16.mxu0 %v4702
      %5010 = vmatmul.mubr.bf16.gmra.mrb[0].mxu0 %v4701
      %v5011 = vpop.f32.mrb[0].mxu0
      %v5012 = vadd.f32 %v4760, %v5011
      %v5013 = vpop.f32.mrb[0].mxu0
      %v5014 = vadd.f32 %v4764, %v5013
      %v5015 = vpop.f32.mrb[0].mxu0
      %v5016 = vadd.f32 %v4760, %v5015
      %v5017 = vpop.f32.mrb[0].mxu0
      %v5018 = vadd.f32 %v4764, %v5017
      %5019 = vmatprep.mubr.bf16.mxu0 %v4704
      %5020 = vmatmul.mubr.bf16.gmra.mrb[0].mxu0 %v4703
      %v5021 = vpop.f32.mrb[0].mxu0
      %v5022 = vadd.f32 %v4760, %v5021
      %v5023 = vpop.f32.mrb[0].mxu0
      %v5024 = vadd.f32 %v4764, %v5023
      %v5025 = vpop.f32.mrb[0].mxu0
      %v5026 = vadd.f32 %v4760, %v5025
      %v5027 = vpop.f32.mrb[0].mxu0
      %v5028 = vadd.f32 %v4764, %v5027
      %5029 = vmatprep.mubr.bf16.mxu0 %v4706
      %5030 = vmatmul.mubr.bf16.gmra.mrb[0].mxu0 %v4705
      %v5031 = vpop.f32.mrb[0].mxu0
      %v5032 = vadd.f32 %v4760, %v5031
      %v5033 = vpop.f32.mrb[0].mxu0
      %v5034 = vadd.f32 %v4764, %v5033
      %v5035 = vpop.f32.mrb[0].mxu0
      %v5036 = vadd.f32 %v4760, %v5035
      %v5037 = vpop.f32.mrb[0].mxu0
      %v5038 = vadd.f32 %v4764, %v5037
      %5039 = vmatprep.mubr.bf16.mxu0 %v4708
      %5040 = vmatmul.mubr.bf16.gmra.mrb[0].mxu0 %v4707
      %v5041 = vpop.f32.mrb[0].mxu0
      %v5042 = vadd.f32 %v4760, %v5041
      %v5043 = vpop.f32.mrb[0].mxu0
      %v5044 = vadd.f32 %v4764, %v5043
      %v5045 = vpop.f32.mrb[0].mxu0
      %v5046 = vadd.f32 %v4760, %v5045
      %v5047 = vpop.f32.mrb[0].mxu0
      %v5048 = vadd.f32 %v4764, %v5047
      %5049 = vmatprep.mubr.bf16.mxu0 %v4710
      %5050 = vmatmul.mubr.bf16.gmra.mrb[0].mxu0 %v4709
      %v5051 = vpop.f32.mrb[0].mxu0
      %v5052 = vadd.f32 %v4760, %v5051
      %v5053 = vpop.f32.mrb[0].mxu0
      %v5054 = vadd.f32 %v4764, %v5053
      %v5055 = vpop.f32.mrb[0].mxu0
      %v5056 = vadd.f32 %v4760, %v5055
      %v5057 = vpop.f32.mrb[0].mxu0
      %v5058 = vadd.f32 %v4764, %v5057
      %5059 = vmatprep.mubr.bf16.mxu0 %v4712
      %5060 = vmatmul.mubr.bf16.gmra.mrb[0].mxu0 %v4711
      %v5061 = vpop.f32.mrb[0].mxu0
      %v5062 = vadd.f32 %v4760, %v5061
      %v5063 = vpop.f32.mrb[0].mxu0
      %v5064 = vadd.f32 %v4764, %v5063
      %v5065 = vpop.f32.mrb[0].mxu0
      %v5066 = vadd.f32 %v4760, %v5065
      %v5067 = vpop.f32.mrb[0].mxu0
      %v5068 = vadd.f32 %v4764, %v5067
      %5069 = vmatprep.mubr.bf16.mxu0 %v4714
      %5070 = vmatmul.mubr.bf16.gmra.mrb[0].mxu0 %v4713
      %v5071 = vpop.f32.mrb[0].mxu0
      %v5072 = vadd.f32 %v4760, %v5071
      %v5073 = vpop.f32.mrb[0].mxu0
      %v5074 = vadd.f32 %v4764, %v5073
      %v5075 = vpop.f32.mrb[0].mxu0
      %v5076 = vadd.f32 %v4760, %v5075
      %v5077 = vpop.f32.mrb[0].mxu0
      %v5078 = vadd.f32 %v4764, %v5077
      %5079 = vmatprep.mubr.bf16.mxu0 %v4716
      %5080 = vmatmul.mubr.bf16.gmra.mrb[0].mxu0 %v4715
      %v5081 = vpop.f32.mrb[0].mxu0
      %v5082 = vadd.f32 %v4760, %v5081
      %v5083 = vpop.f32.mrb[0].mxu0
      %v5084 = vadd.f32 %v4764, %v5083
      %v5085 = vpop.f32.mrb[0].mxu0
      %v5086 = vadd.f32 %v4760, %v5085
      %v5087 = vpop.f32.mrb[0].mxu0
      %v5088 = vadd.f32 %v4764, %v5087
      %5089 = vmatprep.mubr.bf16.mxu0 %v4718
      %5090 = vmatmul.mubr.bf16.gmra.mrb[0].mxu0 %v4717
      %v5091 = vpop.f32.mrb[0].mxu0
      %v5092 = vadd.f32 %v4760, %v5091
      %v5093 = vpop.f32.mrb[0].mxu0
      %v5094 = vadd.f32 %v4764, %v5093
      %v5095 = vpop.f32.mrb[0].mxu0
      %v5096 = vadd.f32 %v4760, %v5095
      %v5097 = vpop.f32.mrb[0].mxu0
      %v5098 = vadd.f32 %v4764, %v5097
      %5099 = vmatprep.mubr.bf16.mxu0 %v4720
      %5100 = vmatmul.mubr.bf16.gmra.mrb[0].mxu0 %v4719
      %v5101 = vpop.f32.mrb[0].mxu0
      %v5102 = vadd.f32 %v4760, %v5101
      %v5103 = vpop.f32.mrb[0].mxu0
      %v5104 = vadd.f32 %v4764, %v5103
      %v5105 = vpop.f32.mrb[0].mxu0
      %v5106 = vadd.f32 %v4760, %v5105
      %v5107 = vpop.f32.mrb[0].mxu0
      %v5108 = vadd.f32 %v4764, %v5107
      %5109 = vmatprep.mubr.bf16.mxu0 %v4722
      %5110 = vmatmul.mubr.bf16.gmra.mrb[0].mxu0 %v4721
      %v5111 = vpop.f32.mrb[0].mxu0
      %v5112 = vadd.f32 %v4760, %v5111
      %v5113 = vpop.f32.mrb[0].mxu0
      %v5114 = vadd.f32 %v4764, %v5113
      %v5115 = vpop.f32.mrb[0].mxu0
      %v5116 = vadd.f32 %v4760, %v5115
      %v5117 = vpop.f32.mrb[0].mxu0
      %v5118 = vadd.f32 %v4764, %v5117
      %5119 = vdwg.mxu0
      %v5120 = vmax.f32 %v4962, 0.0
      %v5121 = vmax.f32 %v4964, 0.0
      %v5122 = vmax.f32 %v4966, 0.0
      %v5123 = vmax.f32 %v4968, 0.0
      %v5124 = vmax.f32 %v4972, 0.0
      %v5125 = vmax.f32 %v4974, 0.0
      %v5126 = vmax.f32 %v4976, 0.0
      %v5127 = vmax.f32 %v4978, 0.0
      %v5128 = vmax.f32 %v4982, 0.0
      %v5129 = vmax.f32 %v4984, 0.0
      %v5130 = vmax.f32 %v4986, 0.0
      %v5131 = vmax.f32 %v4988, 0.0
      %v5132 = vmax.f32 %v4992, 0.0
      %v5133 = vmax.f32 %v4994, 0.0
      %v5134 = vmax.f32 %v4996, 0.0
      %v5135 = vmax.f32 %v4998, 0.0
      %v5136 = vmax.f32 %v5002, 0.0
      %v5137 = vmax.f32 %v5004, 0.0
      %v5138 = vmax.f32 %v5006, 0.0
      %v5139 = vmax.f32 %v5008, 0.0
      %v5140 = vmax.f32 %v5012, 0.0
      %v5141 = vmax.f32 %v5014, 0.0
      %v5142 = vmax.f32 %v5016, 0.0
      %v5143 = vmax.f32 %v5018, 0.0
      %v5144 = vmax.f32 %v5022, 0.0
      %v5145 = vmax.f32 %v5024, 0.0
      %v5146 = vmax.f32 %v5026, 0.0
      %v5147 = vmax.f32 %v5028, 0.0
      %v5148 = vmax.f32 %v5032, 0.0
      %v5149 = vmax.f32 %v5034, 0.0
      %v5150 = vmax.f32 %v5036, 0.0
      %v5151 = vmax.f32 %v5038, 0.0
      %v5152 = vmax.f32 %v5042, 0.0
      %v5153 = vmax.f32 %v5044, 0.0
      %v5154 = vmax.f32 %v5046, 0.0
      %v5155 = vmax.f32 %v5048, 0.0
      %v5156 = vmax.f32 %v5052, 0.0
      %v5157 = vmax.f32 %v5054, 0.0
      %v5158 = vmax.f32 %v5056, 0.0
      %v5159 = vmax.f32 %v5058, 0.0
      %v5160 = vmax.f32 %v5062, 0.0
      %v5161 = vmax.f32 %v5064, 0.0
      %v5162 = vmax.f32 %v5066, 0.0
      %v5163 = vmax.f32 %v5068, 0.0
      %v5164 = vmax.f32 %v5072, 0.0
      %v5165 = vmax.f32 %v5074, 0.0
      %v5166 = vmax.f32 %v5076, 0.0
      %v5167 = vmax.f32 %v5078, 0.0
      %v5168 = vmax.f32 %v5082, 0.0
      %v5169 = vmax.f32 %v5084, 0.0
      %v5170 = vmax.f32 %v5086, 0.0
      %v5171 = vmax.f32 %v5088, 0.0
      %v5172 = vmax.f32 %v5092, 0.0
      %v5173 = vmax.f32 %v5094, 0.0
      %v5174 = vmax.f32 %v5096, 0.0
      %v5175 = vmax.f32 %v5098, 0.0
      %v5176 = vmax.f32 %v5102, 0.0
      %v5177 = vmax.f32 %v5104, 0.0
      %v5178 = vmax.f32 %v5106, 0.0
      %v5179 = vmax.f32 %v5108, 0.0
      %v5180 = vmax.f32 %v5112, 0.0
      %v5181 = vmax.f32 %v5114, 0.0
      %v5182 = vmax.f32 %v5116, 0.0
      %v5183 = vmax.f32 %v5118, 0.0
      %v5184 = vpack.c.bf16 %v5122, %v5120
      %v5185 = vpack.c.bf16 %v5123, %v5121
      %v5186 = vpack.c.bf16 %v5126, %v5124
      %v5187 = vpack.c.bf16 %v5127, %v5125
      %v5188 = vpack.c.bf16 %v5130, %v5128
      %v5189 = vpack.c.bf16 %v5131, %v5129
      %v5190 = vpack.c.bf16 %v5134, %v5132
      %v5191 = vpack.c.bf16 %v5135, %v5133
      %v5192 = vpack.c.bf16 %v5138, %v5136
      %v5193 = vpack.c.bf16 %v5139, %v5137
      %v5194 = vpack.c.bf16 %v5142, %v5140
      %v5195 = vpack.c.bf16 %v5143, %v5141
      %v5196 = vpack.c.bf16 %v5146, %v5144
      %v5197 = vpack.c.bf16 %v5147, %v5145
      %v5198 = vpack.c.bf16 %v5150, %v5148
      %v5199 = vpack.c.bf16 %v5151, %v5149
      %v5200 = vpack.c.bf16 %v5154, %v5152
      %v5201 = vpack.c.bf16 %v5155, %v5153
      %v5202 = vpack.c.bf16 %v5158, %v5156
      %v5203 = vpack.c.bf16 %v5159, %v5157
      %v5204 = vpack.c.bf16 %v5162, %v5160
      %v5205 = vpack.c.bf16 %v5163, %v5161
      %v5206 = vpack.c.bf16 %v5166, %v5164
      %v5207 = vpack.c.bf16 %v5167, %v5165
      %v5208 = vpack.c.bf16 %v5170, %v5168
      %v5209 = vpack.c.bf16 %v5171, %v5169
      %v5210 = vpack.c.bf16 %v5174, %v5172
      %v5211 = vpack.c.bf16 %v5175, %v5173
      %v5212 = vpack.c.bf16 %v5178, %v5176
      %v5213 = vpack.c.bf16 %v5179, %v5177
      %v5214 = vpack.c.bf16 %v5182, %v5180
      %v5215 = vpack.c.bf16 %v5183, %v5181
      %v5216 = vld [vmem:[%s18] sm:$0xff]
      %v5217 = vld [vmem:[%s18 + $0x8] sm:$0xf]
      %v5218 = vld [vmem:[%s18 + $0xc] sm:$0xff]
      %v5219 = vld [vmem:[%s18 + $0x14] sm:$0xf]
      %v5220 = vld [vmem:[%s18 + $0x18] sm:$0xff]
      %v5221 = vld [vmem:[%s18 + $0x20] sm:$0xf]
      %v5222 = vld [vmem:[%s18 + $0x24] sm:$0xff]
      %v5223 = vld [vmem:[%s18 + $0x2c] sm:$0xf]
      %v5224 = vld [vmem:[%s18 + $0x30] sm:$0xff]
      %v5225 = vld [vmem:[%s18 + $0x38] sm:$0xf]
      %v5226 = vld [vmem:[%s18 + $0x3c] sm:$0xff]
      %v5227 = vld [vmem:[%s18 + $0x44] sm:$0xf]
      %v5228 = vld [vmem:[%s18 + $0x48] sm:$0xff]
      %v5229 = vld [vmem:[%s18 + $0x50] sm:$0xf]
      %v5230 = vld [vmem:[%s18 + $0x54] sm:$0xff]
      %v5231 = vld [vmem:[%s18 + $0x5c] sm:$0xf]
      %v5232 = vld [vmem:[%s18 + $0x60] sm:$0xff]
      %v5233 = vld [vmem:[%s18 + $0x68] sm:$0xf]
      %v5234 = vld [vmem:[%s18 + $0x6c] sm:$0xff]
      %v5235 = vld [vmem:[%s18 + $0x74] sm:$0xf]
      %v5236 = vld [vmem:[%s18 + $0x78] sm:$0xff]
      %v5237 = vld [vmem:[%s18 + $0x80] sm:$0xf]
      %v5238 = vld [vmem:[%s18 + $0x84] sm:$0xff]
      %v5239 = vld [vmem:[%s18 + $0x8c] sm:$0xf]
      %v5240 = vld [vmem:[%s18 + $0x90] sm:$0xff]
      %v5241 = vld [vmem:[%s18 + $0x98] sm:$0xf]
      %v5242 = vld [vmem:[%s18 + $0x9c] sm:$0xff]
      %v5243 = vld [vmem:[%s18 + $0xa4] sm:$0xf]
      %v5244 = vld [vmem:[%s18 + $0xa8] sm:$0xff]
      %v5245 = vld [vmem:[%s18 + $0xb0] sm:$0xf]
      %v5246 = vld [vmem:[%s18 + $0xb4] sm:$0xff]
      %v5247 = vld [vmem:[%s18 + $0xbc] sm:$0xf]
      %v5248 = vld [vmem:[%s18 + $0xc0] sm:$0xff]
      %v5249 = vld [vmem:[%s18 + $0xc8] sm:$0xf]
      %v5250 = vld [vmem:[%s18 + $0xcc] sm:$0xff]
      %v5251 = vld [vmem:[%s18 + $0xd4] sm:$0xf]
      %v5252 = vld [vmem:[%s18 + $0xd8] sm:$0xff]
      %v5253 = vld [vmem:[%s18 + $0xe0] sm:$0xf]
      %v5254 = vld [vmem:[%s18 + $0xe4] sm:$0xff]
      %v5255 = vld [vmem:[%s18 + $0xec] sm:$0xf]
      %v5256 = vld [vmem:[%s18 + $0xf0] sm:$0xff]
      %v5257 = vld [vmem:[%s18 + $0xf8] sm:$0xf]
      %v5258 = vld [vmem:[%s18 + $0xfc] sm:$0xff]
      %v5259 = vld [vmem:[%s18 + $0x104] sm:$0xf]
      %v5260 = vld [vmem:[%s18 + $0x108] sm:$0xff]
      %v5261 = vld [vmem:[%s18 + $0x110] sm:$0xf]
      %v5262 = vld [vmem:[%s18 + $0x114] sm:$0xff]
      %v5263 = vld [vmem:[%s18 + $0x11c] sm:$0xf]
      %v5264 = vld [vmem:[%s18 + $0x120] sm:$0xff]
      %v5265 = vld [vmem:[%s18 + $0x128] sm:$0xf]
      %v5266 = vld [vmem:[%s18 + $0x12c] sm:$0xff]
      %v5267 = vld [vmem:[%s18 + $0x134] sm:$0xf]
      %v5268 = vld [vmem:[%s18 + $0x138] sm:$0xff]
      %v5269 = vld [vmem:[%s18 + $0x140] sm:$0xf]
      %v5270 = vld [vmem:[%s18 + $0x144] sm:$0xff]
      %v5271 = vld [vmem:[%s18 + $0x14c] sm:$0xf]
      %v5272 = vld [vmem:[%s18 + $0x150] sm:$0xff]
      %v5273 = vld [vmem:[%s18 + $0x158] sm:$0xf]
      %v5274 = vld [vmem:[%s18 + $0x15c] sm:$0xff]
      %v5275 = vld [vmem:[%s18 + $0x164] sm:$0xf]
      %v5276 = vld [vmem:[%s18 + $0x168] sm:$0xff]
      %v5277 = vld [vmem:[%s18 + $0x170] sm:$0xf]
      %v5278 = vld [vmem:[%s18 + $0x174] sm:$0xff]
      %v5279 = vld [vmem:[%s18 + $0x17c] sm:$0xf]
      %v5280 = vld [vmem:[%s19] sm:$0x7]
      %v5282 = vlaneseq
      %v5283 = vshrl.u32 %v5282, 7
      %v5284 = vsub.s32 0, %v5283
      %v5285 = vrot.slane %v5280, %v5284
      %v5286 = vlaneseq
      %v5287 = vshrl.u32 %v5286, 7
      %v5288 = vsub.s32 1, %v5287
      %v5289 = vrot.slane %v5280, %v5288
      %v5290 = vlaneseq
      %v5291 = vshrl.u32 %v5290, 7
      %v5292 = vsub.s32 2, %v5291
      %v5293 = vrot.slane %v5280, %v5292
      %v5361 = vunpack.c.l.b16 %v5216
      %v5362 = vunpack.c.h.b16 %v5216
      %v5363 = vunpack.c.l.b16 %v5217
      %v5364 = vunpack.c.l.b16 %v5218
      %v5365 = vunpack.c.h.b16 %v5218
      %v5366 = vunpack.c.l.b16 %v5219
      %v5367 = vunpack.c.l.b16 %v5220
      %v5368 = vunpack.c.h.b16 %v5220
      %v5369 = vunpack.c.l.b16 %v5221
      %v5370 = vunpack.c.l.b16 %v5222
      %v5371 = vunpack.c.h.b16 %v5222
      %v5372 = vunpack.c.l.b16 %v5223
      %v5373 = vunpack.c.l.b16 %v5224
      %v5374 = vunpack.c.h.b16 %v5224
      %v5375 = vunpack.c.l.b16 %v5225
      %v5376 = vunpack.c.l.b16 %v5226
      %v5377 = vunpack.c.h.b16 %v5226
      %v5378 = vunpack.c.l.b16 %v5227
      %v5379 = vunpack.c.l.b16 %v5228
      %v5380 = vunpack.c.h.b16 %v5228
      %v5381 = vunpack.c.l.b16 %v5229
      %v5382 = vunpack.c.l.b16 %v5230
      %v5383 = vunpack.c.h.b16 %v5230
      %v5384 = vunpack.c.l.b16 %v5231
      %v5385 = vunpack.c.l.b16 %v5232
      %v5386 = vunpack.c.h.b16 %v5232
      %v5387 = vunpack.c.l.b16 %v5233
      %v5388 = vunpack.c.l.b16 %v5234
      %v5389 = vunpack.c.h.b16 %v5234
      %v5390 = vunpack.c.l.b16 %v5235
      %v5391 = vunpack.c.l.b16 %v5236
      %v5392 = vunpack.c.h.b16 %v5236
      %v5393 = vunpack.c.l.b16 %v5237
      %v5394 = vunpack.c.l.b16 %v5238
      %v5395 = vunpack.c.h.b16 %v5238
      %v5396 = vunpack.c.l.b16 %v5239
      %v5397 = vunpack.c.l.b16 %v5240
      %v5398 = vunpack.c.h.b16 %v5240
      %v5399 = vunpack.c.l.b16 %v5241
      %v5400 = vunpack.c.l.b16 %v5242
      %v5401 = vunpack.c.h.b16 %v5242
      %v5402 = vunpack.c.l.b16 %v5243
      %v5403 = vunpack.c.l.b16 %v5244
      %v5404 = vunpack.c.h.b16 %v5244
      %v5405 = vunpack.c.l.b16 %v5245
      %v5406 = vunpack.c.l.b16 %v5246
      %v5407 = vunpack.c.h.b16 %v5246
      %v5408 = vunpack.c.l.b16 %v5247
      %v5409 = vunpack.c.l.b16 %v5248
      %v5410 = vunpack.c.h.b16 %v5248
      %v5411 = vunpack.c.l.b16 %v5249
      %v5412 = vunpack.c.l.b16 %v5250
      %v5413 = vunpack.c.h.b16 %v5250
      %v5414 = vunpack.c.l.b16 %v5251
      %v5415 = vunpack.c.l.b16 %v5252
      %v5416 = vunpack.c.h.b16 %v5252
      %v5417 = vunpack.c.l.b16 %v5253
      %v5418 = vunpack.c.l.b16 %v5254
      %v5419 = vunpack.c.h.b16 %v5254
      %v5420 = vunpack.c.l.b16 %v5255
      %v5421 = vunpack.c.l.b16 %v5256
      %v5422 = vunpack.c.h.b16 %v5256
      %v5423 = vunpack.c.l.b16 %v5257
      %v5424 = vunpack.c.l.b16 %v5258
      %v5425 = vunpack.c.h.b16 %v5258
      %v5426 = vunpack.c.l.b16 %v5259
      %v5427 = vunpack.c.l.b16 %v5260
      %v5428 = vunpack.c.h.b16 %v5260
      %v5429 = vunpack.c.l.b16 %v5261
      %v5430 = vunpack.c.l.b16 %v5262
      %v5431 = vunpack.c.h.b16 %v5262
      %v5432 = vunpack.c.l.b16 %v5263
      %v5433 = vunpack.c.l.b16 %v5264
      %v5434 = vunpack.c.h.b16 %v5264
      %v5435 = vunpack.c.l.b16 %v5265
      %v5436 = vunpack.c.l.b16 %v5266
      %v5437 = vunpack.c.h.b16 %v5266
      %v5438 = vunpack.c.l.b16 %v5267
      %v5439 = vunpack.c.l.b16 %v5268
      %v5440 = vunpack.c.h.b16 %v5268
      %v5441 = vunpack.c.l.b16 %v5269
      %v5442 = vunpack.c.l.b16 %v5270
      %v5443 = vunpack.c.h.b16 %v5270
      %v5444 = vunpack.c.l.b16 %v5271
      %v5445 = vunpack.c.l.b16 %v5272
      %v5446 = vunpack.c.h.b16 %v5272
      %v5447 = vunpack.c.l.b16 %v5273
      %v5448 = vunpack.c.l.b16 %v5274
      %v5449 = vunpack.c.h.b16 %v5274
      %v5450 = vunpack.c.l.b16 %v5275
      %v5451 = vunpack.c.l.b16 %v5276
      %v5452 = vunpack.c.h.b16 %v5276
      %v5453 = vunpack.c.l.b16 %v5277
      %v5454 = vunpack.c.l.b16 %v5278
      %v5455 = vunpack.c.h.b16 %v5278
      %v5456 = vunpack.c.l.b16 %v5279
      %v5457 = vpack.c.b16 %v5364, %v5361
      %v5458 = vpack.c.b16 %v5365, %v5362
      %v5459 = vpack.c.b16 %v5366, %v5363
      %v5460 = vpack.c.b16 %v5370, %v5367
      %v5461 = vpack.c.b16 %v5371, %v5368
      %v5462 = vpack.c.b16 %v5372, %v5369
      %v5463 = vpack.c.b16 %v5376, %v5373
      %v5464 = vpack.c.b16 %v5377, %v5374
      %v5465 = vpack.c.b16 %v5378, %v5375
      %v5466 = vpack.c.b16 %v5382, %v5379
      %v5467 = vpack.c.b16 %v5383, %v5380
      %v5468 = vpack.c.b16 %v5384, %v5381
      %v5469 = vpack.c.b16 %v5388, %v5385
      %v5470 = vpack.c.b16 %v5389, %v5386
      %v5471 = vpack.c.b16 %v5390, %v5387
      %v5472 = vpack.c.b16 %v5394, %v5391
      %v5473 = vpack.c.b16 %v5395, %v5392
      %v5474 = vpack.c.b16 %v5396, %v5393
      %v5475 = vpack.c.b16 %v5400, %v5397
      %v5476 = vpack.c.b16 %v5401, %v5398
      %v5477 = vpack.c.b16 %v5402, %v5399
      %v5478 = vpack.c.b16 %v5406, %v5403
      %v5479 = vpack.c.b16 %v5407, %v5404
      %v5480 = vpack.c.b16 %v5408, %v5405
      %v5481 = vpack.c.b16 %v5412, %v5409
      %v5482 = vpack.c.b16 %v5413, %v5410
      %v5483 = vpack.c.b16 %v5414, %v5411
      %v5484 = vpack.c.b16 %v5418, %v5415
      %v5485 = vpack.c.b16 %v5419, %v5416
      %v5486 = vpack.c.b16 %v5420, %v5417
      %v5487 = vpack.c.b16 %v5424, %v5421
      %v5488 = vpack.c.b16 %v5425, %v5422
      %v5489 = vpack.c.b16 %v5426, %v5423
      %v5490 = vpack.c.b16 %v5430, %v5427
      %v5491 = vpack.c.b16 %v5431, %v5428
      %v5492 = vpack.c.b16 %v5432, %v5429
      %v5493 = vpack.c.b16 %v5436, %v5433
      %v5494 = vpack.c.b16 %v5437, %v5434
      %v5495 = vpack.c.b16 %v5438, %v5435
      %v5496 = vpack.c.b16 %v5442, %v5439
      %v5497 = vpack.c.b16 %v5443, %v5440
      %v5498 = vpack.c.b16 %v5444, %v5441
      %v5499 = vpack.c.b16 %v5448, %v5445
      %v5500 = vpack.c.b16 %v5449, %v5446
      %v5501 = vpack.c.b16 %v5450, %v5447
      %v5502 = vpack.c.b16 %v5454, %v5451
      %v5503 = vpack.c.b16 %v5455, %v5452
      %v5504 = vpack.c.b16 %v5456, %v5453
      %5553 = vmatprep.subr.bf16.mxu0 %v5458
      %5554 = vmatpush1.bf16.msra.mxu0 %v5457
      %5555 = vmatprep.subr.bf16.mxu0 %v5461
      %5556 = vmatpush1.bf16.msra.mxu0 %v5460
      %5557 = vmatprep.subr.bf16.mxu0 %v5464
      %5558 = vmatpush1.bf16.msra.mxu0 %v5463
      %5559 = vmatprep.subr.bf16.mxu0 %v5467
      %5560 = vmatpush1.bf16.msra.mxu0 %v5466
      %5561 = vmatprep.subr.bf16.mxu0 %v5470
      %5562 = vmatpush1.bf16.msra.mxu0 %v5469
      %5563 = vmatprep.subr.bf16.mxu0 %v5473
      %5564 = vmatpush1.bf16.msra.mxu0 %v5472
      %5565 = vmatprep.subr.bf16.mxu0 %v5476
      %5566 = vmatpush1.bf16.msra.mxu0 %v5475
      %5567 = vmatprep.subr.bf16.mxu0 %v5479
      %5568 = vmatpush1.bf16.msra.mxu0 %v5478
      %5569 = vmatprep.subr.bf16.mxu0 %v5482
      %5570 = vmatpush1.bf16.msra.mxu0 %v5481
      %5571 = vmatprep.subr.bf16.mxu0 %v5485
      %5572 = vmatpush1.bf16.msra.mxu0 %v5484
      %5573 = vmatprep.subr.bf16.mxu0 %v5488
      %5574 = vmatpush1.bf16.msra.mxu0 %v5487
      %5575 = vmatprep.subr.bf16.mxu0 %v5491
      %5576 = vmatpush1.bf16.msra.mxu0 %v5490
      %5577 = vmatprep.subr.bf16.mxu0 %v5494
      %5578 = vmatpush1.bf16.msra.mxu0 %v5493
      %5579 = vmatprep.subr.bf16.mxu0 %v5497
      %5580 = vmatpush1.bf16.msra.mxu0 %v5496
      %5581 = vmatprep.subr.bf16.mxu0 %v5500
      %5582 = vmatpush1.bf16.msra.mxu0 %v5499
      %5583 = vmatprep.subr.bf16.mxu0 %v5503
      %5584 = vmatpush1.bf16.msra.mxu0 %v5502
      %5585 = vmatprep.mubr.bf16.mxu0 %v5185
      %5586 = vmatmul.mubr.bf16.gmra.mrb[0].mxu0 %v5184
      %v5587 = vpop.f32.mrb[0].mxu0
      %v5588 = vadd.f32 %v5285, %v5587
      %v5589 = vpop.f32.mrb[0].mxu0
      %v5590 = vadd.f32 %v5289, %v5589
      %v5591 = vpop.f32.mrb[0].mxu0
      %v5592 = vadd.f32 %v5285, %v5591
      %v5593 = vpop.f32.mrb[0].mxu0
      %v5594 = vadd.f32 %v5289, %v5593
      %5595 = vmatprep.mubr.bf16.mxu0 %v5187
      %5596 = vmatmul.mubr.bf16.gmra.mrb[0].mxu0 %v5186
      %v5597 = vpop.f32.mrb[0].mxu0
      %v5598 = vadd.f32 %v5285, %v5597
      %v5599 = vpop.f32.mrb[0].mxu0
      %v5600 = vadd.f32 %v5289, %v5599
      %v5601 = vpop.f32.mrb[0].mxu0
      %v5602 = vadd.f32 %v5285, %v5601
      %v5603 = vpop.f32.mrb[0].mxu0
      %v5604 = vadd.f32 %v5289, %v5603
      %5605 = vmatprep.mubr.bf16.mxu0 %v5189
      %5606 = vmatmul.mubr.bf16.gmra.mrb[0].mxu0 %v5188
      %v5607 = vpop.f32.mrb[0].mxu0
      %v5608 = vadd.f32 %v5285, %v5607
      %v5609 = vpop.f32.mrb[0].mxu0
      %v5610 = vadd.f32 %v5289, %v5609
      %v5611 = vpop.f32.mrb[0].mxu0
      %v5612 = vadd.f32 %v5285, %v5611
      %v5613 = vpop.f32.mrb[0].mxu0
      %v5614 = vadd.f32 %v5289, %v5613
      %5615 = vmatprep.mubr.bf16.mxu0 %v5191
      %5616 = vmatmul.mubr.bf16.gmra.mrb[0].mxu0 %v5190
      %v5617 = vpop.f32.mrb[0].mxu0
      %v5618 = vadd.f32 %v5285, %v5617
      %v5619 = vpop.f32.mrb[0].mxu0
      %v5620 = vadd.f32 %v5289, %v5619
      %v5621 = vpop.f32.mrb[0].mxu0
      %v5622 = vadd.f32 %v5285, %v5621
      %v5623 = vpop.f32.mrb[0].mxu0
      %v5624 = vadd.f32 %v5289, %v5623
      %5625 = vmatprep.mubr.bf16.mxu0 %v5193
      %5626 = vmatmul.mubr.bf16.gmra.mrb[0].mxu0 %v5192
      %v5627 = vpop.f32.mrb[0].mxu0
      %v5628 = vadd.f32 %v5285, %v5627
      %v5629 = vpop.f32.mrb[0].mxu0
      %v5630 = vadd.f32 %v5289, %v5629
      %v5631 = vpop.f32.mrb[0].mxu0
      %v5632 = vadd.f32 %v5285, %v5631
      %v5633 = vpop.f32.mrb[0].mxu0
      %v5634 = vadd.f32 %v5289, %v5633
      %5635 = vmatprep.mubr.bf16.mxu0 %v5195
      %5636 = vmatmul.mubr.bf16.gmra.mrb[0].mxu0 %v5194
      %v5637 = vpop.f32.mrb[0].mxu0
      %v5638 = vadd.f32 %v5285, %v5637
      %v5639 = vpop.f32.mrb[0].mxu0
      %v5640 = vadd.f32 %v5289, %v5639
      %v5641 = vpop.f32.mrb[0].mxu0
      %v5642 = vadd.f32 %v5285, %v5641
      %v5643 = vpop.f32.mrb[0].mxu0
      %v5644 = vadd.f32 %v5289, %v5643
      %5645 = vmatprep.mubr.bf16.mxu0 %v5197
      %5646 = vmatmul.mubr.bf16.gmra.mrb[0].mxu0 %v5196
      %v5647 = vpop.f32.mrb[0].mxu0
      %v5648 = vadd.f32 %v5285, %v5647
      %v5649 = vpop.f32.mrb[0].mxu0
      %v5650 = vadd.f32 %v5289, %v5649
      %v5651 = vpop.f32.mrb[0].mxu0
      %v5652 = vadd.f32 %v5285, %v5651
      %v5653 = vpop.f32.mrb[0].mxu0
      %v5654 = vadd.f32 %v5289, %v5653
      %5655 = vmatprep.mubr.bf16.mxu0 %v5199
      %5656 = vmatmul.mubr.bf16.gmra.mrb[0].mxu0 %v5198
      %v5657 = vpop.f32.mrb[0].mxu0
      %v5658 = vadd.f32 %v5285, %v5657
      %v5659 = vpop.f32.mrb[0].mxu0
      %v5660 = vadd.f32 %v5289, %v5659
      %v5661 = vpop.f32.mrb[0].mxu0
      %v5662 = vadd.f32 %v5285, %v5661
      %v5663 = vpop.f32.mrb[0].mxu0
      %v5664 = vadd.f32 %v5289, %v5663
      %5665 = vmatprep.mubr.bf16.mxu0 %v5201
      %5666 = vmatmul.mubr.bf16.gmra.mrb[0].mxu0 %v5200
      %v5667 = vpop.f32.mrb[0].mxu0
      %v5668 = vadd.f32 %v5285, %v5667
      %v5669 = vpop.f32.mrb[0].mxu0
      %v5670 = vadd.f32 %v5289, %v5669
      %v5671 = vpop.f32.mrb[0].mxu0
      %v5672 = vadd.f32 %v5285, %v5671
      %v5673 = vpop.f32.mrb[0].mxu0
      %v5674 = vadd.f32 %v5289, %v5673
      %5675 = vmatprep.mubr.bf16.mxu0 %v5203
      %5676 = vmatmul.mubr.bf16.gmra.mrb[0].mxu0 %v5202
      %v5677 = vpop.f32.mrb[0].mxu0
      %v5678 = vadd.f32 %v5285, %v5677
      %v5679 = vpop.f32.mrb[0].mxu0
      %v5680 = vadd.f32 %v5289, %v5679
      %v5681 = vpop.f32.mrb[0].mxu0
      %v5682 = vadd.f32 %v5285, %v5681
      %v5683 = vpop.f32.mrb[0].mxu0
      %v5684 = vadd.f32 %v5289, %v5683
      %5685 = vmatprep.mubr.bf16.mxu0 %v5205
      %5686 = vmatmul.mubr.bf16.gmra.mrb[0].mxu0 %v5204
      %v5687 = vpop.f32.mrb[0].mxu0
      %v5688 = vadd.f32 %v5285, %v5687
      %v5689 = vpop.f32.mrb[0].mxu0
      %v5690 = vadd.f32 %v5289, %v5689
      %v5691 = vpop.f32.mrb[0].mxu0
      %v5692 = vadd.f32 %v5285, %v5691
      %v5693 = vpop.f32.mrb[0].mxu0
      %v5694 = vadd.f32 %v5289, %v5693
      %5695 = vmatprep.mubr.bf16.mxu0 %v5207
      %5696 = vmatmul.mubr.bf16.gmra.mrb[0].mxu0 %v5206
      %v5697 = vpop.f32.mrb[0].mxu0
      %v5698 = vadd.f32 %v5285, %v5697
      %v5699 = vpop.f32.mrb[0].mxu0
      %v5700 = vadd.f32 %v5289, %v5699
      %v5701 = vpop.f32.mrb[0].mxu0
      %v5702 = vadd.f32 %v5285, %v5701
      %v5703 = vpop.f32.mrb[0].mxu0
      %v5704 = vadd.f32 %v5289, %v5703
      %5705 = vmatprep.mubr.bf16.mxu0 %v5209
      %5706 = vmatmul.mubr.bf16.gmra.mrb[0].mxu0 %v5208
      %v5707 = vpop.f32.mrb[0].mxu0
      %v5708 = vadd.f32 %v5285, %v5707
      %v5709 = vpop.f32.mrb[0].mxu0
      %v5710 = vadd.f32 %v5289, %v5709
      %v5711 = vpop.f32.mrb[0].mxu0
      %v5712 = vadd.f32 %v5285, %v5711
      %v5713 = vpop.f32.mrb[0].mxu0
      %v5714 = vadd.f32 %v5289, %v5713
      %5715 = vmatprep.mubr.bf16.mxu0 %v5211
      %5716 = vmatmul.mubr.bf16.gmra.mrb[0].mxu0 %v5210
      %v5717 = vpop.f32.mrb[0].mxu0
      %v5718 = vadd.f32 %v5285, %v5717
      %v5719 = vpop.f32.mrb[0].mxu0
      %v5720 = vadd.f32 %v5289, %v5719
      %v5721 = vpop.f32.mrb[0].mxu0
      %v5722 = vadd.f32 %v5285, %v5721
      %v5723 = vpop.f32.mrb[0].mxu0
      %v5724 = vadd.f32 %v5289, %v5723
      %5725 = vmatprep.mubr.bf16.mxu0 %v5213
      %5726 = vmatmul.mubr.bf16.gmra.mrb[0].mxu0 %v5212
      %v5727 = vpop.f32.mrb[0].mxu0
      %v5728 = vadd.f32 %v5285, %v5727
      %v5729 = vpop.f32.mrb[0].mxu0
      %v5730 = vadd.f32 %v5289, %v5729
      %v5731 = vpop.f32.mrb[0].mxu0
      %v5732 = vadd.f32 %v5285, %v5731
      %v5733 = vpop.f32.mrb[0].mxu0
      %v5734 = vadd.f32 %v5289, %v5733
      %5735 = vmatprep.mubr.bf16.mxu0 %v5215
      %5736 = vmatmul.mubr.bf16.gmra.mrb[0].mxu0 %v5214
      %v5737 = vpop.f32.mrb[0].mxu0
      %v5738 = vadd.f32 %v5285, %v5737
      %v5739 = vpop.f32.mrb[0].mxu0
      %v5740 = vadd.f32 %v5289, %v5739
      %v5741 = vpop.f32.mrb[0].mxu0
      %v5742 = vadd.f32 %v5285, %v5741
      %v5743 = vpop.f32.mrb[0].mxu0
      %v5744 = vadd.f32 %v5289, %v5743
      %5745 = vdwg.mxu0
      %5746 = vmatprep.subr.bf16.mxu0 0
      %5747 = vmatpush1.bf16.msra.mxu0 %v5459
      %5748 = vmatprep.subr.bf16.mxu0 0
      %5749 = vmatpush1.bf16.msra.mxu0 %v5462
      %5750 = vmatprep.subr.bf16.mxu0 0
      %5751 = vmatpush1.bf16.msra.mxu0 %v5465
      %5752 = vmatprep.subr.bf16.mxu0 0
      %5753 = vmatpush1.bf16.msra.mxu0 %v5468
      %5754 = vmatprep.subr.bf16.mxu0 0
      %5755 = vmatpush1.bf16.msra.mxu0 %v5471
      %5756 = vmatprep.subr.bf16.mxu0 0
      %5757 = vmatpush1.bf16.msra.mxu0 %v5474
      %5758 = vmatprep.subr.bf16.mxu0 0
      %5759 = vmatpush1.bf16.msra.mxu0 %v5477
      %5760 = vmatprep.subr.bf16.mxu0 0
      %5761 = vmatpush1.bf16.msra.mxu0 %v5480
      %5762 = vmatprep.subr.bf16.mxu0 0
      %5763 = vmatpush1.bf16.msra.mxu0 %v5483
      %5764 = vmatprep.subr.bf16.mxu0 0
      %5765 = vmatpush1.bf16.msra.mxu0 %v5486
      %5766 = vmatprep.subr.bf16.mxu0 0
      %5767 = vmatpush1.bf16.msra.mxu0 %v5489
      %5768 = vmatprep.subr.bf16.mxu0 0
      %5769 = vmatpush1.bf16.msra.mxu0 %v5492
      %5770 = vmatprep.subr.bf16.mxu0 0
      %5771 = vmatpush1.bf16.msra.mxu0 %v5495
      %5772 = vmatprep.subr.bf16.mxu0 0
      %5773 = vmatpush1.bf16.msra.mxu0 %v5498
      %5774 = vmatprep.subr.bf16.mxu0 0
      %5775 = vmatpush1.bf16.msra.mxu0 %v5501
      %5776 = vmatprep.subr.bf16.mxu0 0
      %5777 = vmatpush1.bf16.msra.mxu0 %v5504
      %5778 = vmatprep.mubr.bf16.mxu0 %v5185
      %5779 = vmatmul.mubr.bf16.gmra.mrb[0].mxu0 %v5184
      %v5780 = vpop.f32.mrb[0].mxu0
      %v5781 = vadd.f32 %v5293, %v5780
      %v5782 = vpop.f32.mrb[0].mxu0
      %v5783 = vpop.f32.mrb[0].mxu0
      %v5784 = vadd.f32 %v5293, %v5783
      %v5785 = vpop.f32.mrb[0].mxu0
      %5786 = vmatprep.mubr.bf16.mxu0 %v5187
      %5787 = vmatmul.mubr.bf16.gmra.mrb[0].mxu0 %v5186
      %v5788 = vpop.f32.mrb[0].mxu0
      %v5789 = vadd.f32 %v5293, %v5788
      %v5790 = vpop.f32.mrb[0].mxu0
      %v5791 = vpop.f32.mrb[0].mxu0
      %v5792 = vadd.f32 %v5293, %v5791
      %v5793 = vpop.f32.mrb[0].mxu0
      %5794 = vmatprep.mubr.bf16.mxu0 %v5189
      %5795 = vmatmul.mubr.bf16.gmra.mrb[0].mxu0 %v5188
      %v5796 = vpop.f32.mrb[0].mxu0
      %v5797 = vadd.f32 %v5293, %v5796
      %v5798 = vpop.f32.mrb[0].mxu0
      %v5799 = vpop.f32.mrb[0].mxu0
      %v5800 = vadd.f32 %v5293, %v5799
      %v5801 = vpop.f32.mrb[0].mxu0
      %5802 = vmatprep.mubr.bf16.mxu0 %v5191
      %5803 = vmatmul.mubr.bf16.gmra.mrb[0].mxu0 %v5190
      %v5804 = vpop.f32.mrb[0].mxu0
      %v5805 = vadd.f32 %v5293, %v5804
      %v5806 = vpop.f32.mrb[0].mxu0
      %v5807 = vpop.f32.mrb[0].mxu0
      %v5808 = vadd.f32 %v5293, %v5807
      %v5809 = vpop.f32.mrb[0].mxu0
      %5810 = vmatprep.mubr.bf16.mxu0 %v5193
      %5811 = vmatmul.mubr.bf16.gmra.mrb[0].mxu0 %v5192
      %v5812 = vpop.f32.mrb[0].mxu0
      %v5813 = vadd.f32 %v5293, %v5812
      %v5814 = vpop.f32.mrb[0].mxu0
      %v5815 = vpop.f32.mrb[0].mxu0
      %v5816 = vadd.f32 %v5293, %v5815
      %v5817 = vpop.f32.mrb[0].mxu0
      %5818 = vmatprep.mubr.bf16.mxu0 %v5195
      %5819 = vmatmul.mubr.bf16.gmra.mrb[0].mxu0 %v5194
      %v5820 = vpop.f32.mrb[0].mxu0
      %v5821 = vadd.f32 %v5293, %v5820
      %v5822 = vpop.f32.mrb[0].mxu0
      %v5823 = vpop.f32.mrb[0].mxu0
      %v5824 = vadd.f32 %v5293, %v5823
      %v5825 = vpop.f32.mrb[0].mxu0
      %5826 = vmatprep.mubr.bf16.mxu0 %v5197
      %5827 = vmatmul.mubr.bf16.gmra.mrb[0].mxu0 %v5196
      %v5828 = vpop.f32.mrb[0].mxu0
      %v5829 = vadd.f32 %v5293, %v5828
      %v5830 = vpop.f32.mrb[0].mxu0
      %v5831 = vpop.f32.mrb[0].mxu0
      %v5832 = vadd.f32 %v5293, %v5831
      %v5833 = vpop.f32.mrb[0].mxu0
      %5834 = vmatprep.mubr.bf16.mxu0 %v5199
      %5835 = vmatmul.mubr.bf16.gmra.mrb[0].mxu0 %v5198
      %v5836 = vpop.f32.mrb[0].mxu0
      %v5837 = vadd.f32 %v5293, %v5836
      %v5838 = vpop.f32.mrb[0].mxu0
      %v5839 = vpop.f32.mrb[0].mxu0
      %v5840 = vadd.f32 %v5293, %v5839
      %v5841 = vpop.f32.mrb[0].mxu0
      %5842 = vmatprep.mubr.bf16.mxu0 %v5201
      %5843 = vmatmul.mubr.bf16.gmra.mrb[0].mxu0 %v5200
      %v5844 = vpop.f32.mrb[0].mxu0
      %v5845 = vadd.f32 %v5293, %v5844
      %v5846 = vpop.f32.mrb[0].mxu0
      %v5847 = vpop.f32.mrb[0].mxu0
      %v5848 = vadd.f32 %v5293, %v5847
      %v5849 = vpop.f32.mrb[0].mxu0
      %5850 = vmatprep.mubr.bf16.mxu0 %v5203
      %5851 = vmatmul.mubr.bf16.gmra.mrb[0].mxu0 %v5202
      %v5852 = vpop.f32.mrb[0].mxu0
      %v5853 = vadd.f32 %v5293, %v5852
      %v5854 = vpop.f32.mrb[0].mxu0
      %v5855 = vpop.f32.mrb[0].mxu0
      %v5856 = vadd.f32 %v5293, %v5855
      %v5857 = vpop.f32.mrb[0].mxu0
      %5858 = vmatprep.mubr.bf16.mxu0 %v5205
      %5859 = vmatmul.mubr.bf16.gmra.mrb[0].mxu0 %v5204
      %v5860 = vpop.f32.mrb[0].mxu0
      %v5861 = vadd.f32 %v5293, %v5860
      %v5862 = vpop.f32.mrb[0].mxu0
      %v5863 = vpop.f32.mrb[0].mxu0
      %v5864 = vadd.f32 %v5293, %v5863
      %v5865 = vpop.f32.mrb[0].mxu0
      %5866 = vmatprep.mubr.bf16.mxu0 %v5207
      %5867 = vmatmul.mubr.bf16.gmra.mrb[0].mxu0 %v5206
      %v5868 = vpop.f32.mrb[0].mxu0
      %v5869 = vadd.f32 %v5293, %v5868
      %v5870 = vpop.f32.mrb[0].mxu0
      %v5871 = vpop.f32.mrb[0].mxu0
      %v5872 = vadd.f32 %v5293, %v5871
      %v5873 = vpop.f32.mrb[0].mxu0
      %5874 = vmatprep.mubr.bf16.mxu0 %v5209
      %5875 = vmatmul.mubr.bf16.gmra.mrb[0].mxu0 %v5208
      %v5876 = vpop.f32.mrb[0].mxu0
      %v5877 = vadd.f32 %v5293, %v5876
      %v5878 = vpop.f32.mrb[0].mxu0
      %v5879 = vpop.f32.mrb[0].mxu0
      %v5880 = vadd.f32 %v5293, %v5879
      %v5881 = vpop.f32.mrb[0].mxu0
      %5882 = vmatprep.mubr.bf16.mxu0 %v5211
      %5883 = vmatmul.mubr.bf16.gmra.mrb[0].mxu0 %v5210
      %v5884 = vpop.f32.mrb[0].mxu0
      %v5885 = vadd.f32 %v5293, %v5884
      %v5886 = vpop.f32.mrb[0].mxu0
      %v5887 = vpop.f32.mrb[0].mxu0
      %v5888 = vadd.f32 %v5293, %v5887
      %v5889 = vpop.f32.mrb[0].mxu0
      %5890 = vmatprep.mubr.bf16.mxu0 %v5213
      %5891 = vmatmul.mubr.bf16.gmra.mrb[0].mxu0 %v5212
      %v5892 = vpop.f32.mrb[0].mxu0
      %v5893 = vadd.f32 %v5293, %v5892
      %v5894 = vpop.f32.mrb[0].mxu0
      %v5895 = vpop.f32.mrb[0].mxu0
      %v5896 = vadd.f32 %v5293, %v5895
      %v5897 = vpop.f32.mrb[0].mxu0
      %5898 = vmatprep.mubr.bf16.mxu0 %v5215
      %5899 = vmatmul.mubr.bf16.gmra.mrb[0].mxu0 %v5214
      %v5900 = vpop.f32.mrb[0].mxu0
      %v5901 = vadd.f32 %v5293, %v5900
      %v5902 = vpop.f32.mrb[0].mxu0
      %v5903 = vpop.f32.mrb[0].mxu0
      %v5904 = vadd.f32 %v5293, %v5903
      %v5905 = vpop.f32.mrb[0].mxu0
      %5906 = vdwg.mxu0
      %v5907 = vpack.c.bf16 %v5592, %v5588
      %v5908 = vpack.c.bf16 %v5594, %v5590
      %v5909 = vpack.c.bf16 %v5602, %v5598
      %v5910 = vpack.c.bf16 %v5604, %v5600
      %v5911 = vpack.c.bf16 %v5612, %v5608
      %v5912 = vpack.c.bf16 %v5614, %v5610
      %v5913 = vpack.c.bf16 %v5622, %v5618
      %v5914 = vpack.c.bf16 %v5624, %v5620
      %v5915 = vpack.c.bf16 %v5632, %v5628
      %v5916 = vpack.c.bf16 %v5634, %v5630
      %v5917 = vpack.c.bf16 %v5642, %v5638
      %v5918 = vpack.c.bf16 %v5644, %v5640
      %v5919 = vpack.c.bf16 %v5652, %v5648
      %v5920 = vpack.c.bf16 %v5654, %v5650
      %v5921 = vpack.c.bf16 %v5662, %v5658
      %v5922 = vpack.c.bf16 %v5664, %v5660
      %v5923 = vpack.c.bf16 %v5672, %v5668
      %v5924 = vpack.c.bf16 %v5674, %v5670
      %v5925 = vpack.c.bf16 %v5682, %v5678
      %v5926 = vpack.c.bf16 %v5684, %v5680
      %v5927 = vpack.c.bf16 %v5692, %v5688
      %v5928 = vpack.c.bf16 %v5694, %v5690
      %v5929 = vpack.c.bf16 %v5702, %v5698
      %v5930 = vpack.c.bf16 %v5704, %v5700
      %v5931 = vpack.c.bf16 %v5712, %v5708
      %v5932 = vpack.c.bf16 %v5714, %v5710
      %v5933 = vpack.c.bf16 %v5722, %v5718
      %v5934 = vpack.c.bf16 %v5724, %v5720
      %v5935 = vpack.c.bf16 %v5732, %v5728
      %v5936 = vpack.c.bf16 %v5734, %v5730
      %v5937 = vpack.c.bf16 %v5742, %v5738
      %v5938 = vpack.c.bf16 %v5744, %v5740
      %v5939 = vld [vmem:[%s20] sm:$0xf]
      %v5940 = vld [vmem:[%s20 + $0x4] sm:$0xf]
      %v5941 = vld [vmem:[%s20 + $0x8] sm:$0xf]
      %v5942 = vld [vmem:[%s20 + $0xc] sm:$0xf]
      %v5943 = vld [vmem:[%s20 + $0x10] sm:$0xf]
      %v5944 = vld [vmem:[%s20 + $0x14] sm:$0xf]
      %v5945 = vld [vmem:[%s20 + $0x18] sm:$0xf]
      %v5946 = vld [vmem:[%s20 + $0x1c] sm:$0xf]
      %v5947 = vld [vmem:[%s20 + $0x20] sm:$0xf]
      %v5948 = vld [vmem:[%s20 + $0x24] sm:$0xf]
      %v5949 = vld [vmem:[%s20 + $0x28] sm:$0xf]
      %v5950 = vld [vmem:[%s20 + $0x2c] sm:$0xf]
      %v5951 = vld [vmem:[%s20 + $0x30] sm:$0xf]
      %v5952 = vld [vmem:[%s20 + $0x34] sm:$0xf]
      %v5953 = vld [vmem:[%s20 + $0x38] sm:$0xf]
      %v5954 = vld [vmem:[%s20 + $0x3c] sm:$0xf]
      %v5955 = vld [vmem:[%s20 + $0x40] sm:$0xf]
      %v5956 = vld [vmem:[%s20 + $0x44] sm:$0xf]
      %v5957 = vld [vmem:[%s20 + $0x48] sm:$0xf]
      %v5958 = vld [vmem:[%s20 + $0x4c] sm:$0xf]
      %v5959 = vld [vmem:[%s20 + $0x50] sm:$0xf]
      %v5960 = vld [vmem:[%s20 + $0x54] sm:$0xf]
      %v5961 = vld [vmem:[%s20 + $0x58] sm:$0xf]
      %v5962 = vld [vmem:[%s20 + $0x5c] sm:$0xf]
      %v5963 = vld [vmem:[%s20 + $0x60] sm:$0xf]
      %v5964 = vld [vmem:[%s20 + $0x64] sm:$0xf]
      %v5965 = vld [vmem:[%s20 + $0x68] sm:$0xf]
      %v5966 = vld [vmem:[%s20 + $0x6c] sm:$0xf]
      %v5967 = vld [vmem:[%s20 + $0x70] sm:$0xf]
      %v5968 = vld [vmem:[%s20 + $0x74] sm:$0xf]
      %v5969 = vld [vmem:[%s20 + $0x78] sm:$0xf]
      %v5970 = vld [vmem:[%s20 + $0x7c] sm:$0xf]
      %v5971 = vld [vmem:[%s21] sm:$0xf]
      %v5972 = vld [vmem:[%s21 + $0x4] sm:$0xf]
      %v5973 = vld [vmem:[%s21 + $0x8] sm:$0xf]
      %v5974 = vld [vmem:[%s21 + $0xc] sm:$0xf]
      %v5975 = vld [vmem:[%s21 + $0x10] sm:$0xf]
      %v5976 = vld [vmem:[%s21 + $0x14] sm:$0xf]
      %v5977 = vld [vmem:[%s21 + $0x18] sm:$0xf]
      %v5978 = vld [vmem:[%s21 + $0x1c] sm:$0xf]
      %v5979 = vld [vmem:[%s21 + $0x20] sm:$0xf]
      %v5980 = vld [vmem:[%s21 + $0x24] sm:$0xf]
      %v5981 = vld [vmem:[%s21 + $0x28] sm:$0xf]
      %v5982 = vld [vmem:[%s21 + $0x2c] sm:$0xf]
      %v5983 = vld [vmem:[%s21 + $0x30] sm:$0xf]
      %v5984 = vld [vmem:[%s21 + $0x34] sm:$0xf]
      %v5985 = vld [vmem:[%s21 + $0x38] sm:$0xf]
      %v5986 = vld [vmem:[%s21 + $0x3c] sm:$0xf]
      %v6019 = vunpack.c.l.b16 %v823
      %v6020 = vunpack.c.l.b16 %v824
      %v6021 = vunpack.c.l.b16 %v825
      %v6022 = vunpack.c.l.b16 %v826
      %v6023 = vunpack.c.l.b16 %v827
      %v6024 = vunpack.c.l.b16 %v828
      %v6025 = vunpack.c.l.b16 %v829
      %v6026 = vunpack.c.l.b16 %v830
      %v6027 = vunpack.c.l.b16 %v831
      %v6028 = vunpack.c.l.b16 %v832
      %v6029 = vunpack.c.l.b16 %v833
      %v6030 = vunpack.c.l.b16 %v834
      %v6031 = vunpack.c.l.b16 %v835
      %v6032 = vunpack.c.l.b16 %v836
      %v6033 = vunpack.c.l.b16 %v837
      %v6034 = vunpack.c.l.b16 %v838
      %v6035 = vunpack.c.l.b16 %v839
      %v6036 = vunpack.c.l.b16 %v840
      %v6037 = vunpack.c.l.b16 %v841
      %v6038 = vunpack.c.l.b16 %v842
      %v6039 = vunpack.c.l.b16 %v843
      %v6040 = vunpack.c.l.b16 %v844
      %v6041 = vunpack.c.l.b16 %v845
      %v6042 = vunpack.c.l.b16 %v846
      %v6043 = vunpack.c.l.b16 %v847
      %v6044 = vunpack.c.l.b16 %v848
      %v6045 = vunpack.c.l.b16 %v849
      %v6046 = vunpack.c.l.b16 %v850
      %v6047 = vunpack.c.l.b16 %v851
      %v6048 = vunpack.c.l.b16 %v852
      %v6049 = vunpack.c.l.b16 %v853
      %v6050 = vunpack.c.l.b16 %v854
      %v6051 = vpack.c.b16 %v6020, %v6019
      %v6052 = vpack.c.b16 %v6022, %v6021
      %v6053 = vpack.c.b16 %v6024, %v6023
      %v6054 = vpack.c.b16 %v6026, %v6025
      %v6055 = vpack.c.b16 %v6028, %v6027
      %v6056 = vpack.c.b16 %v6030, %v6029
      %v6057 = vpack.c.b16 %v6032, %v6031
      %v6058 = vpack.c.b16 %v6034, %v6033
      %v6059 = vpack.c.b16 %v6036, %v6035
      %v6060 = vpack.c.b16 %v6038, %v6037
      %v6061 = vpack.c.b16 %v6040, %v6039
      %v6062 = vpack.c.b16 %v6042, %v6041
      %v6063 = vpack.c.b16 %v6044, %v6043
      %v6064 = vpack.c.b16 %v6046, %v6045
      %v6065 = vpack.c.b16 %v6048, %v6047
      %v6066 = vpack.c.b16 %v6050, %v6049
      %v6099 = vunpack.c.l.b16 %v5971
      %v6100 = vunpack.c.l.b16 %v5972
      %v6101 = vunpack.c.l.b16 %v5973
      %v6102 = vunpack.c.l.b16 %v5974
      %v6103 = vunpack.c.l.b16 %v5975
      %v6104 = vunpack.c.l.b16 %v5976
      %v6105 = vunpack.c.l.b16 %v5977
      %v6106 = vunpack.c.l.b16 %v5978
      %v6107 = vunpack.c.l.b16 %v5979
      %v6108 = vunpack.c.l.b16 %v5980
      %v6109 = vunpack.c.l.b16 %v5981
      %v6110 = vunpack.c.l.b16 %v5982
      %v6111 = vunpack.c.l.b16 %v5983
      %v6112 = vunpack.c.l.b16 %v5984
      %v6113 = vunpack.c.l.b16 %v5985
      %v6114 = vunpack.c.l.b16 %v5986
      %v6115 = vpack.c.b16 %v6100, %v6099
      %v6116 = vpack.c.b16 %v6102, %v6101
      %v6117 = vpack.c.b16 %v6104, %v6103
      %v6118 = vpack.c.b16 %v6106, %v6105
      %v6119 = vpack.c.b16 %v6108, %v6107
      %v6120 = vpack.c.b16 %v6110, %v6109
      %v6121 = vpack.c.b16 %v6112, %v6111
      %v6122 = vpack.c.b16 %v6114, %v6113
      %6131 = vmatprep.subr.bf16.mxu0 0
      %6132 = vmatpush1.bf16.msra.mxu0 %v6115
      %6133 = vmatprep.subr.bf16.mxu0 0
      %6134 = vmatpush1.bf16.msra.mxu0 %v6116
      %6135 = vmatprep.subr.bf16.mxu0 0
      %6136 = vmatpush1.bf16.msra.mxu0 %v6117
      %6137 = vmatprep.subr.bf16.mxu0 0
      %6138 = vmatpush1.bf16.msra.mxu0 %v6118
      %6139 = vmatprep.subr.bf16.mxu0 0
      %6140 = vmatpush1.bf16.msra.mxu0 %v6119
      %6141 = vmatprep.subr.bf16.mxu0 0
      %6142 = vmatpush1.bf16.msra.mxu0 %v6120
      %6143 = vmatprep.subr.bf16.mxu0 0
      %6144 = vmatpush1.bf16.msra.mxu0 %v6121
      %6145 = vmatprep.subr.bf16.mxu0 0
      %6146 = vmatpush1.bf16.msra.mxu0 %v6122
      %6147 = vmatprep.subr.bf16.mxu0 0
      %6148 = vmatpush1.bf16.msra.mxu0 0
      %6149 = vmatprep.subr.bf16.mxu0 0
      %6150 = vmatpush1.bf16.msra.mxu0 0
      %6151 = vmatprep.subr.bf16.mxu0 0
      %6152 = vmatpush1.bf16.msra.mxu0 0
      %6153 = vmatprep.subr.bf16.mxu0 0
      %6154 = vmatpush1.bf16.msra.mxu0 0
      %6155 = vmatprep.subr.bf16.mxu0 0
      %6156 = vmatpush1.bf16.msra.mxu0 0
      %6157 = vmatprep.subr.bf16.mxu0 0
      %6158 = vmatpush1.bf16.msra.mxu0 0
      %6159 = vmatprep.subr.bf16.mxu0 0
      %6160 = vmatpush1.bf16.msra.mxu0 0
      %6161 = vmatprep.subr.bf16.mxu0 0
      %6162 = vmatpush1.bf16.msra.mxu0 0
      %6163 = vmatprep.mubr.bf16.mxu0 0
      %6164 = vmatmul.mubr.bf16.gmra.mrb[0].mxu0 %v6051
      %v6165 = vpop.f32.mrb[0].mxu0
      %v6166 = vadd.f32 0.0, %v6165
      %v6167 = vpop.f32.mrb[0].mxu0
      %v6168 = vpop.f32.mrb[0].mxu0
      %v6169 = vadd.f32 0.0, %v6168
      %v6170 = vpop.f32.mrb[0].mxu0
      %6171 = vmatprep.mubr.bf16.mxu0 0
      %6172 = vmatmul.mubr.bf16.gmra.mrb[0].mxu0 %v6052
      %v6173 = vpop.f32.mrb[0].mxu0
      %v6174 = vadd.f32 0.0, %v6173
      %v6175 = vpop.f32.mrb[0].mxu0
      %v6176 = vpop.f32.mrb[0].mxu0
      %v6177 = vadd.f32 0.0, %v6176
      %v6178 = vpop.f32.mrb[0].mxu0
      %6179 = vmatprep.mubr.bf16.mxu0 0
      %6180 = vmatmul.mubr.bf16.gmra.mrb[0].mxu0 %v6053
      %v6181 = vpop.f32.mrb[0].mxu0
      %v6182 = vadd.f32 0.0, %v6181
      %v6183 = vpop.f32.mrb[0].mxu0
      %v6184 = vpop.f32.mrb[0].mxu0
      %v6185 = vadd.f32 0.0, %v6184
      %v6186 = vpop.f32.mrb[0].mxu0
      %6187 = vmatprep.mubr.bf16.mxu0 0
      %6188 = vmatmul.mubr.bf16.gmra.mrb[0].mxu0 %v6054
      %v6189 = vpop.f32.mrb[0].mxu0
      %v6190 = vadd.f32 0.0, %v6189
      %v6191 = vpop.f32.mrb[0].mxu0
      %v6192 = vpop.f32.mrb[0].mxu0
      %v6193 = vadd.f32 0.0, %v6192
      %v6194 = vpop.f32.mrb[0].mxu0
      %6195 = vmatprep.mubr.bf16.mxu0 0
      %6196 = vmatmul.mubr.bf16.gmra.mrb[0].mxu0 %v6055
      %v6197 = vpop.f32.mrb[0].mxu0
      %v6198 = vadd.f32 0.0, %v6197
      %v6199 = vpop.f32.mrb[0].mxu0
      %v6200 = vpop.f32.mrb[0].mxu0
      %v6201 = vadd.f32 0.0, %v6200
      %v6202 = vpop.f32.mrb[0].mxu0
      %6203 = vmatprep.mubr.bf16.mxu0 0
      %6204 = vmatmul.mubr.bf16.gmra.mrb[0].mxu0 %v6056
      %v6205 = vpop.f32.mrb[0].mxu0
      %v6206 = vadd.f32 0.0, %v6205
      %v6207 = vpop.f32.mrb[0].mxu0
      %v6208 = vpop.f32.mrb[0].mxu0
      %v6209 = vadd.f32 0.0, %v6208
      %v6210 = vpop.f32.mrb[0].mxu0
      %6211 = vmatprep.mubr.bf16.mxu0 0
      %6212 = vmatmul.mubr.bf16.gmra.mrb[0].mxu0 %v6057
      %v6213 = vpop.f32.mrb[0].mxu0
      %v6214 = vadd.f32 0.0, %v6213
      %v6215 = vpop.f32.mrb[0].mxu0
      %v6216 = vpop.f32.mrb[0].mxu0
      %v6217 = vadd.f32 0.0, %v6216
      %v6218 = vpop.f32.mrb[0].mxu0
      %6219 = vmatprep.mubr.bf16.mxu0 0
      %6220 = vmatmul.mubr.bf16.gmra.mrb[0].mxu0 %v6058
      %v6221 = vpop.f32.mrb[0].mxu0
      %v6222 = vadd.f32 0.0, %v6221
      %v6223 = vpop.f32.mrb[0].mxu0
      %v6224 = vpop.f32.mrb[0].mxu0
      %v6225 = vadd.f32 0.0, %v6224
      %v6226 = vpop.f32.mrb[0].mxu0
      %6227 = vmatprep.mubr.bf16.mxu0 0
      %6228 = vmatmul.mubr.bf16.gmra.mrb[0].mxu0 %v6059
      %v6229 = vpop.f32.mrb[0].mxu0
      %v6230 = vadd.f32 0.0, %v6229
      %v6231 = vpop.f32.mrb[0].mxu0
      %v6232 = vpop.f32.mrb[0].mxu0
      %v6233 = vadd.f32 0.0, %v6232
      %v6234 = vpop.f32.mrb[0].mxu0
      %6235 = vmatprep.mubr.bf16.mxu0 0
      %6236 = vmatmul.mubr.bf16.gmra.mrb[0].mxu0 %v6060
      %v6237 = vpop.f32.mrb[0].mxu0
      %v6238 = vadd.f32 0.0, %v6237
      %v6239 = vpop.f32.mrb[0].mxu0
      %v6240 = vpop.f32.mrb[0].mxu0
      %v6241 = vadd.f32 0.0, %v6240
      %v6242 = vpop.f32.mrb[0].mxu0
      %6243 = vmatprep.mubr.bf16.mxu0 0
      %6244 = vmatmul.mubr.bf16.gmra.mrb[0].mxu0 %v6061
      %v6245 = vpop.f32.mrb[0].mxu0
      %v6246 = vadd.f32 0.0, %v6245
      %v6247 = vpop.f32.mrb[0].mxu0
      %v6248 = vpop.f32.mrb[0].mxu0
      %v6249 = vadd.f32 0.0, %v6248
      %v6250 = vpop.f32.mrb[0].mxu0
      %6251 = vmatprep.mubr.bf16.mxu0 0
      %6252 = vmatmul.mubr.bf16.gmra.mrb[0].mxu0 %v6062
      %v6253 = vpop.f32.mrb[0].mxu0
      %v6254 = vadd.f32 0.0, %v6253
      %v6255 = vpop.f32.mrb[0].mxu0
      %v6256 = vpop.f32.mrb[0].mxu0
      %v6257 = vadd.f32 0.0, %v6256
      %v6258 = vpop.f32.mrb[0].mxu0
      %6259 = vmatprep.mubr.bf16.mxu0 0
      %6260 = vmatmul.mubr.bf16.gmra.mrb[0].mxu0 %v6063
      %v6261 = vpop.f32.mrb[0].mxu0
      %v6262 = vadd.f32 0.0, %v6261
      %v6263 = vpop.f32.mrb[0].mxu0
      %v6264 = vpop.f32.mrb[0].mxu0
      %v6265 = vadd.f32 0.0, %v6264
      %v6266 = vpop.f32.mrb[0].mxu0
      %6267 = vmatprep.mubr.bf16.mxu0 0
      %6268 = vmatmul.mubr.bf16.gmra.mrb[0].mxu0 %v6064
      %v6269 = vpop.f32.mrb[0].mxu0
      %v6270 = vadd.f32 0.0, %v6269
      %v6271 = vpop.f32.mrb[0].mxu0
      %v6272 = vpop.f32.mrb[0].mxu0
      %v6273 = vadd.f32 0.0, %v6272
      %v6274 = vpop.f32.mrb[0].mxu0
      %6275 = vmatprep.mubr.bf16.mxu0 0
      %6276 = vmatmul.mubr.bf16.gmra.mrb[0].mxu0 %v6065
      %v6277 = vpop.f32.mrb[0].mxu0
      %v6278 = vadd.f32 0.0, %v6277
      %v6279 = vpop.f32.mrb[0].mxu0
      %v6280 = vpop.f32.mrb[0].mxu0
      %v6281 = vadd.f32 0.0, %v6280
      %v6282 = vpop.f32.mrb[0].mxu0
      %6283 = vmatprep.mubr.bf16.mxu0 0
      %6284 = vmatmul.mubr.bf16.gmra.mrb[0].mxu0 %v6066
      %v6285 = vpop.f32.mrb[0].mxu0
      %v6286 = vadd.f32 0.0, %v6285
      %v6287 = vpop.f32.mrb[0].mxu0
      %v6288 = vpop.f32.mrb[0].mxu0
      %v6289 = vadd.f32 0.0, %v6288
      %v6290 = vpop.f32.mrb[0].mxu0
      %6291 = vdwg.mxu0
      %v6324 = vunpack.c.l.b16 %v5939
      %v6325 = vunpack.c.l.b16 %v5940
      %v6326 = vunpack.c.l.b16 %v5941
      %v6327 = vunpack.c.l.b16 %v5942
      %v6328 = vunpack.c.l.b16 %v5943
      %v6329 = vunpack.c.l.b16 %v5944
      %v6330 = vunpack.c.l.b16 %v5945
      %v6331 = vunpack.c.l.b16 %v5946
      %v6332 = vunpack.c.l.b16 %v5947
      %v6333 = vunpack.c.l.b16 %v5948
      %v6334 = vunpack.c.l.b16 %v5949
      %v6335 = vunpack.c.l.b16 %v5950
      %v6336 = vunpack.c.l.b16 %v5951
      %v6337 = vunpack.c.l.b16 %v5952
      %v6338 = vunpack.c.l.b16 %v5953
      %v6339 = vunpack.c.l.b16 %v5954
      %v6340 = vunpack.c.l.b16 %v5955
      %v6341 = vunpack.c.l.b16 %v5956
      %v6342 = vunpack.c.l.b16 %v5957
      %v6343 = vunpack.c.l.b16 %v5958
      %v6344 = vunpack.c.l.b16 %v5959
      %v6345 = vunpack.c.l.b16 %v5960
      %v6346 = vunpack.c.l.b16 %v5961
      %v6347 = vunpack.c.l.b16 %v5962
      %v6348 = vunpack.c.l.b16 %v5963
      %v6349 = vunpack.c.l.b16 %v5964
      %v6350 = vunpack.c.l.b16 %v5965
      %v6351 = vunpack.c.l.b16 %v5966
      %v6352 = vunpack.c.l.b16 %v5967
      %v6353 = vunpack.c.l.b16 %v5968
      %v6354 = vunpack.c.l.b16 %v5969
      %v6355 = vunpack.c.l.b16 %v5970
      %v6356 = vpack.c.b16 %v6325, %v6324
      %v6357 = vpack.c.b16 %v6327, %v6326
      %v6358 = vpack.c.b16 %v6329, %v6328
      %v6359 = vpack.c.b16 %v6331, %v6330
      %v6360 = vpack.c.b16 %v6333, %v6332
      %v6361 = vpack.c.b16 %v6335, %v6334
      %v6362 = vpack.c.b16 %v6337, %v6336
      %v6363 = vpack.c.b16 %v6339, %v6338
      %v6364 = vpack.c.b16 %v6341, %v6340
      %v6365 = vpack.c.b16 %v6343, %v6342
      %v6366 = vpack.c.b16 %v6345, %v6344
      %v6367 = vpack.c.b16 %v6347, %v6346
      %v6368 = vpack.c.b16 %v6349, %v6348
      %v6369 = vpack.c.b16 %v6351, %v6350
      %v6370 = vpack.c.b16 %v6353, %v6352
      %v6371 = vpack.c.b16 %v6355, %v6354
      %6388 = vmatprep.subr.bf16.mxu0 0
      %6389 = vmatpush1.bf16.msra.mxu0 %v6356
      %6390 = vmatprep.subr.bf16.mxu0 0
      %6391 = vmatpush1.bf16.msra.mxu0 %v6357
      %6392 = vmatprep.subr.bf16.mxu0 0
      %6393 = vmatpush1.bf16.msra.mxu0 %v6358
      %6394 = vmatprep.subr.bf16.mxu0 0
      %6395 = vmatpush1.bf16.msra.mxu0 %v6359
      %6396 = vmatprep.subr.bf16.mxu0 0
      %6397 = vmatpush1.bf16.msra.mxu0 %v6360
      %6398 = vmatprep.subr.bf16.mxu0 0
      %6399 = vmatpush1.bf16.msra.mxu0 %v6361
      %6400 = vmatprep.subr.bf16.mxu0 0
      %6401 = vmatpush1.bf16.msra.mxu0 %v6362
      %6402 = vmatprep.subr.bf16.mxu0 0
      %6403 = vmatpush1.bf16.msra.mxu0 %v6363
      %6404 = vmatprep.subr.bf16.mxu0 0
      %6405 = vmatpush1.bf16.msra.mxu0 %v6364
      %6406 = vmatprep.subr.bf16.mxu0 0
      %6407 = vmatpush1.bf16.msra.mxu0 %v6365
      %6408 = vmatprep.subr.bf16.mxu0 0
      %6409 = vmatpush1.bf16.msra.mxu0 %v6366
      %6410 = vmatprep.subr.bf16.mxu0 0
      %6411 = vmatpush1.bf16.msra.mxu0 %v6367
      %6412 = vmatprep.subr.bf16.mxu0 0
      %6413 = vmatpush1.bf16.msra.mxu0 %v6368
      %6414 = vmatprep.subr.bf16.mxu0 0
      %6415 = vmatpush1.bf16.msra.mxu0 %v6369
      %6416 = vmatprep.subr.bf16.mxu0 0
      %6417 = vmatpush1.bf16.msra.mxu0 %v6370
      %6418 = vmatprep.subr.bf16.mxu0 0
      %6419 = vmatpush1.bf16.msra.mxu0 %v6371
      %6420 = vmatprep.mubr.bf16.mxu0 %v5908
      %6421 = vmatmul.mubr.bf16.gmra.mrb[0].mxu0 %v5907
      %v6422 = vpop.f32.mrb[0].mxu0
      %v6423 = vadd.f32 %v6166, %v6422
      %v6424 = vpop.f32.mrb[0].mxu0
      %v6425 = vpop.f32.mrb[0].mxu0
      %v6426 = vadd.f32 %v6169, %v6425
      %v6427 = vpop.f32.mrb[0].mxu0
      %6428 = vmatprep.mubr.bf16.mxu0 %v5910
      %6429 = vmatmul.mubr.bf16.gmra.mrb[0].mxu0 %v5909
      %v6430 = vpop.f32.mrb[0].mxu0
      %v6431 = vadd.f32 %v6174, %v6430
      %v6432 = vpop.f32.mrb[0].mxu0
      %v6433 = vpop.f32.mrb[0].mxu0
      %v6434 = vadd.f32 %v6177, %v6433
      %v6435 = vpop.f32.mrb[0].mxu0
      %6436 = vmatprep.mubr.bf16.mxu0 %v5912
      %6437 = vmatmul.mubr.bf16.gmra.mrb[0].mxu0 %v5911
      %v6438 = vpop.f32.mrb[0].mxu0
      %v6439 = vadd.f32 %v6182, %v6438
      %v6440 = vpop.f32.mrb[0].mxu0
      %v6441 = vpop.f32.mrb[0].mxu0
      %v6442 = vadd.f32 %v6185, %v6441
      %v6443 = vpop.f32.mrb[0].mxu0
      %6444 = vmatprep.mubr.bf16.mxu0 %v5914
      %6445 = vmatmul.mubr.bf16.gmra.mrb[0].mxu0 %v5913
      %v6446 = vpop.f32.mrb[0].mxu0
      %v6447 = vadd.f32 %v6190, %v6446
      %v6448 = vpop.f32.mrb[0].mxu0
      %v6449 = vpop.f32.mrb[0].mxu0
      %v6450 = vadd.f32 %v6193, %v6449
      %v6451 = vpop.f32.mrb[0].mxu0
      %6452 = vmatprep.mubr.bf16.mxu0 %v5916
      %6453 = vmatmul.mubr.bf16.gmra.mrb[0].mxu0 %v5915
      %v6454 = vpop.f32.mrb[0].mxu0
      %v6455 = vadd.f32 %v6198, %v6454
      %v6456 = vpop.f32.mrb[0].mxu0
      %v6457 = vpop.f32.mrb[0].mxu0
      %v6458 = vadd.f32 %v6201, %v6457
      %v6459 = vpop.f32.mrb[0].mxu0
      %6460 = vmatprep.mubr.bf16.mxu0 %v5918
      %6461 = vmatmul.mubr.bf16.gmra.mrb[0].mxu0 %v5917
      %v6462 = vpop.f32.mrb[0].mxu0
      %v6463 = vadd.f32 %v6206, %v6462
      %v6464 = vpop.f32.mrb[0].mxu0
      %v6465 = vpop.f32.mrb[0].mxu0
      %v6466 = vadd.f32 %v6209, %v6465
      %v6467 = vpop.f32.mrb[0].mxu0
      %6468 = vmatprep.mubr.bf16.mxu0 %v5920
      %6469 = vmatmul.mubr.bf16.gmra.mrb[0].mxu0 %v5919
      %v6470 = vpop.f32.mrb[0].mxu0
      %v6471 = vadd.f32 %v6214, %v6470
      %v6472 = vpop.f32.mrb[0].mxu0
      %v6473 = vpop.f32.mrb[0].mxu0
      %v6474 = vadd.f32 %v6217, %v6473
      %v6475 = vpop.f32.mrb[0].mxu0
      %6476 = vmatprep.mubr.bf16.mxu0 %v5922
      %6477 = vmatmul.mubr.bf16.gmra.mrb[0].mxu0 %v5921
      %v6478 = vpop.f32.mrb[0].mxu0
      %v6479 = vadd.f32 %v6222, %v6478
      %v6480 = vpop.f32.mrb[0].mxu0
      %v6481 = vpop.f32.mrb[0].mxu0
      %v6482 = vadd.f32 %v6225, %v6481
      %v6483 = vpop.f32.mrb[0].mxu0
      %6484 = vmatprep.mubr.bf16.mxu0 %v5924
      %6485 = vmatmul.mubr.bf16.gmra.mrb[0].mxu0 %v5923
      %v6486 = vpop.f32.mrb[0].mxu0
      %v6487 = vadd.f32 %v6230, %v6486
      %v6488 = vpop.f32.mrb[0].mxu0
      %v6489 = vpop.f32.mrb[0].mxu0
      %v6490 = vadd.f32 %v6233, %v6489
      %v6491 = vpop.f32.mrb[0].mxu0
      %6492 = vmatprep.mubr.bf16.mxu0 %v5926
      %6493 = vmatmul.mubr.bf16.gmra.mrb[0].mxu0 %v5925
      %v6494 = vpop.f32.mrb[0].mxu0
      %v6495 = vadd.f32 %v6238, %v6494
      %v6496 = vpop.f32.mrb[0].mxu0
      %v6497 = vpop.f32.mrb[0].mxu0
      %v6498 = vadd.f32 %v6241, %v6497
      %v6499 = vpop.f32.mrb[0].mxu0
      %6500 = vmatprep.mubr.bf16.mxu0 %v5928
      %6501 = vmatmul.mubr.bf16.gmra.mrb[0].mxu0 %v5927
      %v6502 = vpop.f32.mrb[0].mxu0
      %v6503 = vadd.f32 %v6246, %v6502
      %v6504 = vpop.f32.mrb[0].mxu0
      %v6505 = vpop.f32.mrb[0].mxu0
      %v6506 = vadd.f32 %v6249, %v6505
      %v6507 = vpop.f32.mrb[0].mxu0
      %6508 = vmatprep.mubr.bf16.mxu0 %v5930
      %6509 = vmatmul.mubr.bf16.gmra.mrb[0].mxu0 %v5929
      %v6510 = vpop.f32.mrb[0].mxu0
      %v6511 = vadd.f32 %v6254, %v6510
      %v6512 = vpop.f32.mrb[0].mxu0
      %v6513 = vpop.f32.mrb[0].mxu0
      %v6514 = vadd.f32 %v6257, %v6513
      %v6515 = vpop.f32.mrb[0].mxu0
      %6516 = vmatprep.mubr.bf16.mxu0 %v5932
      %6517 = vmatmul.mubr.bf16.gmra.mrb[0].mxu0 %v5931
      %v6518 = vpop.f32.mrb[0].mxu0
      %v6519 = vadd.f32 %v6262, %v6518
      %v6520 = vpop.f32.mrb[0].mxu0
      %v6521 = vpop.f32.mrb[0].mxu0
      %v6522 = vadd.f32 %v6265, %v6521
      %v6523 = vpop.f32.mrb[0].mxu0
      %6524 = vmatprep.mubr.bf16.mxu0 %v5934
      %6525 = vmatmul.mubr.bf16.gmra.mrb[0].mxu0 %v5933
      %v6526 = vpop.f32.mrb[0].mxu0
      %v6527 = vadd.f32 %v6270, %v6526
      %v6528 = vpop.f32.mrb[0].mxu0
      %v6529 = vpop.f32.mrb[0].mxu0
      %v6530 = vadd.f32 %v6273, %v6529
      %v6531 = vpop.f32.mrb[0].mxu0
      %6532 = vmatprep.mubr.bf16.mxu0 %v5936
      %6533 = vmatmul.mubr.bf16.gmra.mrb[0].mxu0 %v5935
      %v6534 = vpop.f32.mrb[0].mxu0
      %v6535 = vadd.f32 %v6278, %v6534
      %v6536 = vpop.f32.mrb[0].mxu0
      %v6537 = vpop.f32.mrb[0].mxu0
      %v6538 = vadd.f32 %v6281, %v6537
      %v6539 = vpop.f32.mrb[0].mxu0
      %6540 = vmatprep.mubr.bf16.mxu0 %v5938
      %6541 = vmatmul.mubr.bf16.gmra.mrb[0].mxu0 %v5937
      %v6542 = vpop.f32.mrb[0].mxu0
      %v6543 = vadd.f32 %v6286, %v6542
      %v6544 = vpop.f32.mrb[0].mxu0
      %v6545 = vpop.f32.mrb[0].mxu0
      %v6546 = vadd.f32 %v6289, %v6545
      %v6547 = vpop.f32.mrb[0].mxu0
      %6548 = vdwg.mxu0
      %v6549 = vld [vmem:[%s22] sm:$0x1]
      %v6551 = vlaneseq
      %v6552 = vshrl.u32 %v6551, 7
      %v6553 = vsub.s32 0, %v6552
      %v6554 = vrot.slane %v6549, %v6553
      %v6556 = vadd.f32 %v6423, %v6554
      %v6557 = vadd.f32 %v6426, %v6554
      %v6558 = vadd.f32 %v6431, %v6554
      %v6559 = vadd.f32 %v6434, %v6554
      %v6560 = vadd.f32 %v6439, %v6554
      %v6561 = vadd.f32 %v6442, %v6554
      %v6562 = vadd.f32 %v6447, %v6554
      %v6563 = vadd.f32 %v6450, %v6554
      %v6564 = vadd.f32 %v6455, %v6554
      %v6565 = vadd.f32 %v6458, %v6554
      %v6566 = vadd.f32 %v6463, %v6554
      %v6567 = vadd.f32 %v6466, %v6554
      %v6568 = vadd.f32 %v6471, %v6554
      %v6569 = vadd.f32 %v6474, %v6554
      %v6570 = vadd.f32 %v6479, %v6554
      %v6571 = vadd.f32 %v6482, %v6554
      %v6572 = vadd.f32 %v6487, %v6554
      %v6573 = vadd.f32 %v6490, %v6554
      %v6574 = vadd.f32 %v6495, %v6554
      %v6575 = vadd.f32 %v6498, %v6554
      %v6576 = vadd.f32 %v6503, %v6554
      %v6577 = vadd.f32 %v6506, %v6554
      %v6578 = vadd.f32 %v6511, %v6554
      %v6579 = vadd.f32 %v6514, %v6554
      %v6580 = vadd.f32 %v6519, %v6554
      %v6581 = vadd.f32 %v6522, %v6554
      %v6582 = vadd.f32 %v6527, %v6554
      %v6583 = vadd.f32 %v6530, %v6554
      %v6584 = vadd.f32 %v6535, %v6554
      %v6585 = vadd.f32 %v6538, %v6554
      %v6586 = vadd.f32 %v6543, %v6554
      %v6587 = vadd.f32 %v6546, %v6554
      %v6588 = vmax.f32 %v6556, 0.0
      %v6589 = vmax.f32 %v6557, 0.0
      %v6590 = vmax.f32 %v6558, 0.0
      %v6591 = vmax.f32 %v6559, 0.0
      %v6592 = vmax.f32 %v6560, 0.0
      %v6593 = vmax.f32 %v6561, 0.0
      %v6594 = vmax.f32 %v6562, 0.0
      %v6595 = vmax.f32 %v6563, 0.0
      %v6596 = vmax.f32 %v6564, 0.0
      %v6597 = vmax.f32 %v6565, 0.0
      %v6598 = vmax.f32 %v6566, 0.0
      %v6599 = vmax.f32 %v6567, 0.0
      %v6600 = vmax.f32 %v6568, 0.0
      %v6601 = vmax.f32 %v6569, 0.0
      %v6602 = vmax.f32 %v6570, 0.0
      %v6603 = vmax.f32 %v6571, 0.0
      %v6604 = vmax.f32 %v6572, 0.0
      %v6605 = vmax.f32 %v6573, 0.0
      %v6606 = vmax.f32 %v6574, 0.0
      %v6607 = vmax.f32 %v6575, 0.0
      %v6608 = vmax.f32 %v6576, 0.0
      %v6609 = vmax.f32 %v6577, 0.0
      %v6610 = vmax.f32 %v6578, 0.0
      %v6611 = vmax.f32 %v6579, 0.0
      %v6612 = vmax.f32 %v6580, 0.0
      %v6613 = vmax.f32 %v6581, 0.0
      %v6614 = vmax.f32 %v6582, 0.0
      %v6615 = vmax.f32 %v6583, 0.0
      %v6616 = vmax.f32 %v6584, 0.0
      %v6617 = vmax.f32 %v6585, 0.0
      %v6618 = vmax.f32 %v6586, 0.0
      %v6619 = vmax.f32 %v6587, 0.0
      %v6620 = vpack.c.bf16 %v6589, %v6588
      %v6621 = vpack.c.bf16 %v6591, %v6590
      %v6622 = vpack.c.bf16 %v6593, %v6592
      %v6623 = vpack.c.bf16 %v6595, %v6594
      %v6624 = vpack.c.bf16 %v6597, %v6596
      %v6625 = vpack.c.bf16 %v6599, %v6598
      %v6626 = vpack.c.bf16 %v6601, %v6600
      %v6627 = vpack.c.bf16 %v6603, %v6602
      %v6628 = vpack.c.bf16 %v6605, %v6604
      %v6629 = vpack.c.bf16 %v6607, %v6606
      %v6630 = vpack.c.bf16 %v6609, %v6608
      %v6631 = vpack.c.bf16 %v6611, %v6610
      %v6632 = vpack.c.bf16 %v6613, %v6612
      %v6633 = vpack.c.bf16 %v6615, %v6614
      %v6634 = vpack.c.bf16 %v6617, %v6616
      %v6635 = vpack.c.bf16 %v6619, %v6618
      %v6636 = vld [vmem:[%s23] sm:$0xf]
      %v6637 = vld [vmem:[%s23 + $0x4] sm:$0xf]
      %v6638 = vld [vmem:[%s23 + $0x8] sm:$0xf]
      %v6639 = vld [vmem:[%s23 + $0xc] sm:$0xf]
      %v6640 = vld [vmem:[%s23 + $0x10] sm:$0xf]
      %v6641 = vld [vmem:[%s23 + $0x14] sm:$0xf]
      %v6642 = vld [vmem:[%s23 + $0x18] sm:$0xf]
      %v6643 = vld [vmem:[%s23 + $0x1c] sm:$0xf]
      %v6644 = vld [vmem:[%s23 + $0x20] sm:$0xf]
      %v6645 = vld [vmem:[%s23 + $0x24] sm:$0xf]
      %v6646 = vld [vmem:[%s23 + $0x28] sm:$0xf]
      %v6647 = vld [vmem:[%s23 + $0x2c] sm:$0xf]
      %v6648 = vld [vmem:[%s23 + $0x30] sm:$0xf]
      %v6649 = vld [vmem:[%s23 + $0x34] sm:$0xf]
      %v6650 = vld [vmem:[%s23 + $0x38] sm:$0xf]
      %v6651 = vld [vmem:[%s23 + $0x3c] sm:$0xf]
      %v6652 = vld [vmem:[%s24] sm:$0x1]
      %v6654 = vlaneseq
      %v6655 = vshrl.u32 %v6654, 7
      %v6656 = vsub.s32 0, %v6655
      %v6657 = vrot.slane %v6652, %v6656
      %v6675 = vunpack.c.l.b16 %v6636
      %v6676 = vunpack.c.l.b16 %v6637
      %v6677 = vunpack.c.l.b16 %v6638
      %v6678 = vunpack.c.l.b16 %v6639
      %v6679 = vunpack.c.l.b16 %v6640
      %v6680 = vunpack.c.l.b16 %v6641
      %v6681 = vunpack.c.l.b16 %v6642
      %v6682 = vunpack.c.l.b16 %v6643
      %v6683 = vunpack.c.l.b16 %v6644
      %v6684 = vunpack.c.l.b16 %v6645
      %v6685 = vunpack.c.l.b16 %v6646
      %v6686 = vunpack.c.l.b16 %v6647
      %v6687 = vunpack.c.l.b16 %v6648
      %v6688 = vunpack.c.l.b16 %v6649
      %v6689 = vunpack.c.l.b16 %v6650
      %v6690 = vunpack.c.l.b16 %v6651
      %v6691 = vpack.c.b16 %v6676, %v6675
      %v6692 = vpack.c.b16 %v6678, %v6677
      %v6693 = vpack.c.b16 %v6680, %v6679
      %v6694 = vpack.c.b16 %v6682, %v6681
      %v6695 = vpack.c.b16 %v6684, %v6683
      %v6696 = vpack.c.b16 %v6686, %v6685
      %v6697 = vpack.c.b16 %v6688, %v6687
      %v6698 = vpack.c.b16 %v6690, %v6689
      %6707 = vmatprep.subr.bf16.mxu0 0
      %6708 = vmatpush1.bf16.msra.mxu0 %v6691
      %6709 = vmatprep.subr.bf16.mxu0 0
      %6710 = vmatpush1.bf16.msra.mxu0 %v6692
      %6711 = vmatprep.subr.bf16.mxu0 0
      %6712 = vmatpush1.bf16.msra.mxu0 %v6693
      %6713 = vmatprep.subr.bf16.mxu0 0
      %6714 = vmatpush1.bf16.msra.mxu0 %v6694
      %6715 = vmatprep.subr.bf16.mxu0 0
      %6716 = vmatpush1.bf16.msra.mxu0 %v6695
      %6717 = vmatprep.subr.bf16.mxu0 0
      %6718 = vmatpush1.bf16.msra.mxu0 %v6696
      %6719 = vmatprep.subr.bf16.mxu0 0
      %6720 = vmatpush1.bf16.msra.mxu0 %v6697
      %6721 = vmatprep.subr.bf16.mxu0 0
      %6722 = vmatpush1.bf16.msra.mxu0 %v6698
      %6723 = vmatprep.subr.bf16.mxu0 0
      %6724 = vmatpush1.bf16.msra.mxu0 0
      %6725 = vmatprep.subr.bf16.mxu0 0
      %6726 = vmatpush1.bf16.msra.mxu0 0
      %6727 = vmatprep.subr.bf16.mxu0 0
      %6728 = vmatpush1.bf16.msra.mxu0 0
      %6729 = vmatprep.subr.bf16.mxu0 0
      %6730 = vmatpush1.bf16.msra.mxu0 0
      %6731 = vmatprep.subr.bf16.mxu0 0
      %6732 = vmatpush1.bf16.msra.mxu0 0
      %6733 = vmatprep.subr.bf16.mxu0 0
      %6734 = vmatpush1.bf16.msra.mxu0 0
      %6735 = vmatprep.subr.bf16.mxu0 0
      %6736 = vmatpush1.bf16.msra.mxu0 0
      %6737 = vmatprep.subr.bf16.mxu0 0
      %6738 = vmatpush1.bf16.msra.mxu0 0
      %6739 = vmatprep.mubr.bf16.mxu0 0
      %6740 = vmatmul.mubr.bf16.gmra.mrb[0].mxu0 %v6620
      %v6741 = vpop.f32.mrb[0].mxu0
      %v6742 = vadd.f32 %v6657, %v6741
      %v6743 = vpop.f32.mrb[0].mxu0
      %v6744 = vpop.f32.mrb[0].mxu0
      %v6745 = vadd.f32 %v6657, %v6744
      %v6746 = vpop.f32.mrb[0].mxu0
      %6747 = vmatprep.mubr.bf16.mxu0 0
      %6748 = vmatmul.mubr.bf16.gmra.mrb[0].mxu0 %v6621
      %v6749 = vpop.f32.mrb[0].mxu0
      %v6750 = vadd.f32 %v6657, %v6749
      %v6751 = vpop.f32.mrb[0].mxu0
      %v6752 = vpop.f32.mrb[0].mxu0
      %v6753 = vadd.f32 %v6657, %v6752
      %v6754 = vpop.f32.mrb[0].mxu0
      %6755 = vmatprep.mubr.bf16.mxu0 0
      %6756 = vmatmul.mubr.bf16.gmra.mrb[0].mxu0 %v6622
      %v6757 = vpop.f32.mrb[0].mxu0
      %v6758 = vadd.f32 %v6657, %v6757
      %v6759 = vpop.f32.mrb[0].mxu0
      %v6760 = vpop.f32.mrb[0].mxu0
      %v6761 = vadd.f32 %v6657, %v6760
      %v6762 = vpop.f32.mrb[0].mxu0
      %6763 = vmatprep.mubr.bf16.mxu0 0
      %6764 = vmatmul.mubr.bf16.gmra.mrb[0].mxu0 %v6623
      %v6765 = vpop.f32.mrb[0].mxu0
      %v6766 = vadd.f32 %v6657, %v6765
      %v6767 = vpop.f32.mrb[0].mxu0
      %v6768 = vpop.f32.mrb[0].mxu0
      %v6769 = vadd.f32 %v6657, %v6768
      %v6770 = vpop.f32.mrb[0].mxu0
      %6771 = vmatprep.mubr.bf16.mxu0 0
      %6772 = vmatmul.mubr.bf16.gmra.mrb[0].mxu0 %v6624
      %v6773 = vpop.f32.mrb[0].mxu0
      %v6774 = vadd.f32 %v6657, %v6773
      %v6775 = vpop.f32.mrb[0].mxu0
      %v6776 = vpop.f32.mrb[0].mxu0
      %v6777 = vadd.f32 %v6657, %v6776
      %v6778 = vpop.f32.mrb[0].mxu0
      %6779 = vmatprep.mubr.bf16.mxu0 0
      %6780 = vmatmul.mubr.bf16.gmra.mrb[0].mxu0 %v6625
      %v6781 = vpop.f32.mrb[0].mxu0
      %v6782 = vadd.f32 %v6657, %v6781
      %v6783 = vpop.f32.mrb[0].mxu0
      %v6784 = vpop.f32.mrb[0].mxu0
      %v6785 = vadd.f32 %v6657, %v6784
      %v6786 = vpop.f32.mrb[0].mxu0
      %6787 = vmatprep.mubr.bf16.mxu0 0
      %6788 = vmatmul.mubr.bf16.gmra.mrb[0].mxu0 %v6626
      %v6789 = vpop.f32.mrb[0].mxu0
      %v6790 = vadd.f32 %v6657, %v6789
      %v6791 = vpop.f32.mrb[0].mxu0
      %v6792 = vpop.f32.mrb[0].mxu0
      %v6793 = vadd.f32 %v6657, %v6792
      %v6794 = vpop.f32.mrb[0].mxu0
      %6795 = vmatprep.mubr.bf16.mxu0 0
      %6796 = vmatmul.mubr.bf16.gmra.mrb[0].mxu0 %v6627
      %v6797 = vpop.f32.mrb[0].mxu0
      %v6798 = vadd.f32 %v6657, %v6797
      %v6799 = vpop.f32.mrb[0].mxu0
      %v6800 = vpop.f32.mrb[0].mxu0
      %v6801 = vadd.f32 %v6657, %v6800
      %v6802 = vpop.f32.mrb[0].mxu0
      %6803 = vmatprep.mubr.bf16.mxu0 0
      %6804 = vmatmul.mubr.bf16.gmra.mrb[0].mxu0 %v6628
      %v6805 = vpop.f32.mrb[0].mxu0
      %v6806 = vadd.f32 %v6657, %v6805
      %v6807 = vpop.f32.mrb[0].mxu0
      %v6808 = vpop.f32.mrb[0].mxu0
      %v6809 = vadd.f32 %v6657, %v6808
      %v6810 = vpop.f32.mrb[0].mxu0
      %6811 = vmatprep.mubr.bf16.mxu0 0
      %6812 = vmatmul.mubr.bf16.gmra.mrb[0].mxu0 %v6629
      %v6813 = vpop.f32.mrb[0].mxu0
      %v6814 = vadd.f32 %v6657, %v6813
      %v6815 = vpop.f32.mrb[0].mxu0
      %v6816 = vpop.f32.mrb[0].mxu0
      %v6817 = vadd.f32 %v6657, %v6816
      %v6818 = vpop.f32.mrb[0].mxu0
      %6819 = vmatprep.mubr.bf16.mxu0 0
      %6820 = vmatmul.mubr.bf16.gmra.mrb[0].mxu0 %v6630
      %v6821 = vpop.f32.mrb[0].mxu0
      %v6822 = vadd.f32 %v6657, %v6821
      %v6823 = vpop.f32.mrb[0].mxu0
      %v6824 = vpop.f32.mrb[0].mxu0
      %v6825 = vadd.f32 %v6657, %v6824
      %v6826 = vpop.f32.mrb[0].mxu0
      %6827 = vmatprep.mubr.bf16.mxu0 0
      %6828 = vmatmul.mubr.bf16.gmra.mrb[0].mxu0 %v6631
      %v6829 = vpop.f32.mrb[0].mxu0
      %v6830 = vadd.f32 %v6657, %v6829
      %v6831 = vpop.f32.mrb[0].mxu0
      %v6832 = vpop.f32.mrb[0].mxu0
      %v6833 = vadd.f32 %v6657, %v6832
      %v6834 = vpop.f32.mrb[0].mxu0
      %6835 = vmatprep.mubr.bf16.mxu0 0
      %6836 = vmatmul.mubr.bf16.gmra.mrb[0].mxu0 %v6632
      %v6837 = vpop.f32.mrb[0].mxu0
      %v6838 = vadd.f32 %v6657, %v6837
      %v6839 = vpop.f32.mrb[0].mxu0
      %v6840 = vpop.f32.mrb[0].mxu0
      %v6841 = vadd.f32 %v6657, %v6840
      %v6842 = vpop.f32.mrb[0].mxu0
      %6843 = vmatprep.mubr.bf16.mxu0 0
      %6844 = vmatmul.mubr.bf16.gmra.mrb[0].mxu0 %v6633
      %v6845 = vpop.f32.mrb[0].mxu0
      %v6846 = vadd.f32 %v6657, %v6845
      %v6847 = vpop.f32.mrb[0].mxu0
      %v6848 = vpop.f32.mrb[0].mxu0
      %v6849 = vadd.f32 %v6657, %v6848
      %v6850 = vpop.f32.mrb[0].mxu0
      %6851 = vmatprep.mubr.bf16.mxu0 0
      %6852 = vmatmul.mubr.bf16.gmra.mrb[0].mxu0 %v6634
      %v6853 = vpop.f32.mrb[0].mxu0
      %v6854 = vadd.f32 %v6657, %v6853
      %v6855 = vpop.f32.mrb[0].mxu0
      %v6856 = vpop.f32.mrb[0].mxu0
      %v6857 = vadd.f32 %v6657, %v6856
      %v6858 = vpop.f32.mrb[0].mxu0
      %6859 = vmatprep.mubr.bf16.mxu0 0
      %6860 = vmatmul.mubr.bf16.gmra.mrb[0].mxu0 %v6635
      %v6861 = vpop.f32.mrb[0].mxu0
      %v6862 = vadd.f32 %v6657, %v6861
      %v6863 = vpop.f32.mrb[0].mxu0
      %v6864 = vpop.f32.mrb[0].mxu0
      %v6865 = vadd.f32 %v6657, %v6864
      %v6866 = vpop.f32.mrb[0].mxu0
      %6867 = vdwg.mxu0
      %v6868 = vxor.u32 %v6742, 2147483648
      %v6869 = vxor.u32 %v6745, 2147483648
      %v6870 = vxor.u32 %v6750, 2147483648
      %v6871 = vxor.u32 %v6753, 2147483648
      %v6872 = vxor.u32 %v6758, 2147483648
      %v6873 = vxor.u32 %v6761, 2147483648
      %v6874 = vxor.u32 %v6766, 2147483648
      %v6875 = vxor.u32 %v6769, 2147483648
      %v6876 = vxor.u32 %v6774, 2147483648
      %v6877 = vxor.u32 %v6777, 2147483648
      %v6878 = vxor.u32 %v6782, 2147483648
      %v6879 = vxor.u32 %v6785, 2147483648
      %v6880 = vxor.u32 %v6790, 2147483648
      %v6881 = vxor.u32 %v6793, 2147483648
      %v6882 = vxor.u32 %v6798, 2147483648
      %v6883 = vxor.u32 %v6801, 2147483648
      %v6884 = vxor.u32 %v6806, 2147483648
      %v6885 = vxor.u32 %v6809, 2147483648
      %v6886 = vxor.u32 %v6814, 2147483648
      %v6887 = vxor.u32 %v6817, 2147483648
      %v6888 = vxor.u32 %v6822, 2147483648
      %v6889 = vxor.u32 %v6825, 2147483648
      %v6890 = vxor.u32 %v6830, 2147483648
      %v6891 = vxor.u32 %v6833, 2147483648
      %v6892 = vxor.u32 %v6838, 2147483648
      %v6893 = vxor.u32 %v6841, 2147483648
      %v6894 = vxor.u32 %v6846, 2147483648
      %v6895 = vxor.u32 %v6849, 2147483648
      %v6896 = vxor.u32 %v6854, 2147483648
      %v6897 = vxor.u32 %v6857, 2147483648
      %v6898 = vxor.u32 %v6862, 2147483648
      %v6899 = vxor.u32 %v6865, 2147483648
      %v6900 = vmul.f32 %v6868, 1.442695
      %v6901 = vpow.pop %v6900
      %v6902 = vmul.f32 %v6869, 1.442695
      %v6903 = vpow.pop %v6902
      %v6904 = vmul.f32 %v6870, 1.442695
      %v6905 = vpow.pop %v6904
      %v6906 = vmul.f32 %v6871, 1.442695
      %v6907 = vpow.pop %v6906
      %v6908 = vmul.f32 %v6872, 1.442695
      %v6909 = vpow.pop %v6908
      %v6910 = vmul.f32 %v6873, 1.442695
      %v6911 = vpow.pop %v6910
      %v6912 = vmul.f32 %v6874, 1.442695
      %v6913 = vpow.pop %v6912
      %v6914 = vmul.f32 %v6875, 1.442695
      %v6915 = vpow.pop %v6914
      %v6916 = vmul.f32 %v6876, 1.442695
      %v6917 = vpow.pop %v6916
      %v6918 = vmul.f32 %v6877, 1.442695
      %v6919 = vpow.pop %v6918
      %v6920 = vmul.f32 %v6878, 1.442695
      %v6921 = vpow.pop %v6920
      %v6922 = vmul.f32 %v6879, 1.442695
      %v6923 = vpow.pop %v6922
      %v6924 = vmul.f32 %v6880, 1.442695
      %v6925 = vpow.pop %v6924
      %v6926 = vmul.f32 %v6881, 1.442695
      %v6927 = vpow.pop %v6926
      %v6928 = vmul.f32 %v6882, 1.442695
      %v6929 = vpow.pop %v6928
      %v6930 = vmul.f32 %v6883, 1.442695
      %v6931 = vpow.pop %v6930
      %v6932 = vmul.f32 %v6884, 1.442695
      %v6933 = vpow.pop %v6932
      %v6934 = vmul.f32 %v6885, 1.442695
      %v6935 = vpow.pop %v6934
      %v6936 = vmul.f32 %v6886, 1.442695
      %v6937 = vpow.pop %v6936
      %v6938 = vmul.f32 %v6887, 1.442695
      %v6939 = vpow.pop %v6938
      %v6940 = vmul.f32 %v6888, 1.442695
      %v6941 = vpow.pop %v6940
      %v6942 = vmul.f32 %v6889, 1.442695
      %v6943 = vpow.pop %v6942
      %v6944 = vmul.f32 %v6890, 1.442695
      %v6945 = vpow.pop %v6944
      %v6946 = vmul.f32 %v6891, 1.442695
      %v6947 = vpow.pop %v6946
      %v6948 = vmul.f32 %v6892, 1.442695
      %v6949 = vpow.pop %v6948
      %v6950 = vmul.f32 %v6893, 1.442695
      %v6951 = vpow.pop %v6950
      %v6952 = vmul.f32 %v6894, 1.442695
      %v6953 = vpow.pop %v6952
      %v6954 = vmul.f32 %v6895, 1.442695
      %v6955 = vpow.pop %v6954
      %v6956 = vmul.f32 %v6896, 1.442695
      %v6957 = vpow.pop %v6956
      %v6958 = vmul.f32 %v6897, 1.442695
      %v6959 = vpow.pop %v6958
      %v6960 = vmul.f32 %v6898, 1.442695
      %v6961 = vpow.pop %v6960
      %v6962 = vmul.f32 %v6899, 1.442695
      %v6963 = vpow.pop %v6962
      %v6964 = vadd.f32 %v6901, 1.0
      %v6965 = vadd.f32 %v6903, 1.0
      %v6966 = vadd.f32 %v6905, 1.0
      %v6967 = vadd.f32 %v6907, 1.0
      %v6968 = vadd.f32 %v6909, 1.0
      %v6969 = vadd.f32 %v6911, 1.0
      %v6970 = vadd.f32 %v6913, 1.0
      %v6971 = vadd.f32 %v6915, 1.0
      %v6972 = vadd.f32 %v6917, 1.0
      %v6973 = vadd.f32 %v6919, 1.0
      %v6974 = vadd.f32 %v6921, 1.0
      %v6975 = vadd.f32 %v6923, 1.0
      %v6976 = vadd.f32 %v6925, 1.0
      %v6977 = vadd.f32 %v6927, 1.0
      %v6978 = vadd.f32 %v6929, 1.0
      %v6979 = vadd.f32 %v6931, 1.0
      %v6980 = vadd.f32 %v6933, 1.0
      %v6981 = vadd.f32 %v6935, 1.0
      %v6982 = vadd.f32 %v6937, 1.0
      %v6983 = vadd.f32 %v6939, 1.0
      %v6984 = vadd.f32 %v6941, 1.0
      %v6985 = vadd.f32 %v6943, 1.0
      %v6986 = vadd.f32 %v6945, 1.0
      %v6987 = vadd.f32 %v6947, 1.0
      %v6988 = vadd.f32 %v6949, 1.0
      %v6989 = vadd.f32 %v6951, 1.0
      %v6990 = vadd.f32 %v6953, 1.0
      %v6991 = vadd.f32 %v6955, 1.0
      %v6992 = vadd.f32 %v6957, 1.0
      %v6993 = vadd.f32 %v6959, 1.0
      %v6994 = vadd.f32 %v6961, 1.0
      %v6995 = vadd.f32 %v6963, 1.0
      %v6996 = vrcp.pop %v6964
      %v6997 = vmul.f32 1.0, %v6996
      %v6998 = vrcp.pop %v6965
      %v6999 = vmul.f32 1.0, %v6998
      %v7000 = vrcp.pop %v6966
      %v7001 = vmul.f32 1.0, %v7000
      %v7002 = vrcp.pop %v6967
      %v7003 = vmul.f32 1.0, %v7002
      %v7004 = vrcp.pop %v6968
      %v7005 = vmul.f32 1.0, %v7004
      %v7006 = vrcp.pop %v6969
      %v7007 = vmul.f32 1.0, %v7006
      %v7008 = vrcp.pop %v6970
      %v7009 = vmul.f32 1.0, %v7008
      %v7010 = vrcp.pop %v6971
      %v7011 = vmul.f32 1.0, %v7010
      %v7012 = vrcp.pop %v6972
      %v7013 = vmul.f32 1.0, %v7012
      %v7014 = vrcp.pop %v6973
      %v7015 = vmul.f32 1.0, %v7014
      %v7016 = vrcp.pop %v6974
      %v7017 = vmul.f32 1.0, %v7016
      %v7018 = vrcp.pop %v6975
      %v7019 = vmul.f32 1.0, %v7018
      %v7020 = vrcp.pop %v6976
      %v7021 = vmul.f32 1.0, %v7020
      %v7022 = vrcp.pop %v6977
      %v7023 = vmul.f32 1.0, %v7022
      %v7024 = vrcp.pop %v6978
      %v7025 = vmul.f32 1.0, %v7024
      %v7026 = vrcp.pop %v6979
      %v7027 = vmul.f32 1.0, %v7026
      %v7028 = vrcp.pop %v6980
      %v7029 = vmul.f32 1.0, %v7028
      %v7030 = vrcp.pop %v6981
      %v7031 = vmul.f32 1.0, %v7030
      %v7032 = vrcp.pop %v6982
      %v7033 = vmul.f32 1.0, %v7032
      %v7034 = vrcp.pop %v6983
      %v7035 = vmul.f32 1.0, %v7034
      %v7036 = vrcp.pop %v6984
      %v7037 = vmul.f32 1.0, %v7036
      %v7038 = vrcp.pop %v6985
      %v7039 = vmul.f32 1.0, %v7038
      %v7040 = vrcp.pop %v6986
      %v7041 = vmul.f32 1.0, %v7040
      %v7042 = vrcp.pop %v6987
      %v7043 = vmul.f32 1.0, %v7042
      %v7044 = vrcp.pop %v6988
      %v7045 = vmul.f32 1.0, %v7044
      %v7046 = vrcp.pop %v6989
      %v7047 = vmul.f32 1.0, %v7046
      %v7048 = vrcp.pop %v6990
      %v7049 = vmul.f32 1.0, %v7048
      %v7050 = vrcp.pop %v6991
      %v7051 = vmul.f32 1.0, %v7050
      %v7052 = vrcp.pop %v6992
      %v7053 = vmul.f32 1.0, %v7052
      %v7054 = vrcp.pop %v6993
      %v7055 = vmul.f32 1.0, %v7054
      %v7056 = vrcp.pop %v6994
      %v7057 = vmul.f32 1.0, %v7056
      %v7058 = vrcp.pop %v6995
      %v7059 = vmul.f32 1.0, %v7058
      %v7060 = vlaneseq
      %v7061 = vand.u32 %v7060, 127
      %vm7062 = vcmp.eq.s32.totalorder %v7061, 3
      %v7063 = vsel %vm7062, %v5781, %v6997
      %v7064 = vsel %vm7062, %v5784, %v6999
      %v7065 = vsel %vm7062, %v5789, %v7001
      %v7066 = vsel %vm7062, %v5792, %v7003
      %v7067 = vsel %vm7062, %v5797, %v7005
      %v7068 = vsel %vm7062, %v5800, %v7007
      %v7069 = vsel %vm7062, %v5805, %v7009
      %v7070 = vsel %vm7062, %v5808, %v7011
      %v7071 = vsel %vm7062, %v5813, %v7013
      %v7072 = vsel %vm7062, %v5816, %v7015
      %v7073 = vsel %vm7062, %v5821, %v7017
      %v7074 = vsel %vm7062, %v5824, %v7019
      %v7075 = vsel %vm7062, %v5829, %v7021
      %v7076 = vsel %vm7062, %v5832, %v7023
      %v7077 = vsel %vm7062, %v5837, %v7025
      %v7078 = vsel %vm7062, %v5840, %v7027
      %v7079 = vsel %vm7062, %v5845, %v7029
      %v7080 = vsel %vm7062, %v5848, %v7031
      %v7081 = vsel %vm7062, %v5853, %v7033
      %v7082 = vsel %vm7062, %v5856, %v7035
      %v7083 = vsel %vm7062, %v5861, %v7037
      %v7084 = vsel %vm7062, %v5864, %v7039
      %v7085 = vsel %vm7062, %v5869, %v7041
      %v7086 = vsel %vm7062, %v5872, %v7043
      %v7087 = vsel %vm7062, %v5877, %v7045
      %v7088 = vsel %vm7062, %v5880, %v7047
      %v7089 = vsel %vm7062, %v5885, %v7049
      %v7090 = vsel %vm7062, %v5888, %v7051
      %v7091 = vsel %vm7062, %v5893, %v7053
      %v7092 = vsel %vm7062, %v5896, %v7055
      %v7093 = vsel %vm7062, %v5901, %v7057
      %v7094 = vsel %vm7062, %v5904, %v7059
      %7095 = vst [vmem:[%s788] sm:$0xff] %v7063
      %7096 = vst [vmem:[%s788 + $0x8] sm:$0xff] %v7064
      %7097 = vst [vmem:[%s788 + $0x10] sm:$0xff] %v7065
      %7098 = vst [vmem:[%s788 + $0x18] sm:$0xff] %v7066
      %7099 = vst [vmem:[%s788 + $0x20] sm:$0xff] %v7067
      %7100 = vst [vmem:[%s788 + $0x28] sm:$0xff] %v7068
      %7101 = vst [vmem:[%s788 + $0x30] sm:$0xff] %v7069
      %7102 = vst [vmem:[%s788 + $0x38] sm:$0xff] %v7070
      %7103 = vst [vmem:[%s788 + $0x40] sm:$0xff] %v7071
      %7104 = vst [vmem:[%s788 + $0x48] sm:$0xff] %v7072
      %7105 = vst [vmem:[%s788 + $0x50] sm:$0xff] %v7073
      %7106 = vst [vmem:[%s788 + $0x58] sm:$0xff] %v7074
      %7107 = vst [vmem:[%s788 + $0x60] sm:$0xff] %v7075
      %7108 = vst [vmem:[%s788 + $0x68] sm:$0xff] %v7076
      %7109 = vst [vmem:[%s788 + $0x70] sm:$0xff] %v7077
      %7110 = vst [vmem:[%s788 + $0x78] sm:$0xff] %v7078
      %7111 = vst [vmem:[%s788 + $0x80] sm:$0xff] %v7079
      %7112 = vst [vmem:[%s788 + $0x88] sm:$0xff] %v7080
      %7113 = vst [vmem:[%s788 + $0x90] sm:$0xff] %v7081
      %7114 = vst [vmem:[%s788 + $0x98] sm:$0xff] %v7082
      %7115 = vst [vmem:[%s788 + $0xa0] sm:$0xff] %v7083
      %7116 = vst [vmem:[%s788 + $0xa8] sm:$0xff] %v7084
      %7117 = vst [vmem:[%s788 + $0xb0] sm:$0xff] %v7085
      %7118 = vst [vmem:[%s788 + $0xb8] sm:$0xff] %v7086
      %7119 = vst [vmem:[%s788 + $0xc0] sm:$0xff] %v7087
      %7120 = vst [vmem:[%s788 + $0xc8] sm:$0xff] %v7088
      %7121 = vst [vmem:[%s788 + $0xd0] sm:$0xff] %v7089
      %7122 = vst [vmem:[%s788 + $0xd8] sm:$0xff] %v7090
      %7123 = vst [vmem:[%s788 + $0xe0] sm:$0xff] %v7091
      %7124 = vst [vmem:[%s788 + $0xe8] sm:$0xff] %v7092
      %7125 = vst [vmem:[%s788 + $0xf0] sm:$0xff] %v7093
      %7126 = vst [vmem:[%s788 + $0xf8] sm:$0xff] %v7094
      %s7127 = smul.u32 32, %s36
      %p7128 = scmp.lt.s32.totalorder %s7127, 255
      %s7129 = scalar_select %p7128, %s7127, 255
      %s7130 = smul.addr %s7129, 8
      %s7131 = scalar_lea.vmem %s25, %s7130
      // Predicated region
      $region121: #{nerf_forward_pallas.1} parent=119 // pred_check
        %p7132 = pneg %p589
      $region122: #{nerf_forward_pallas.1} parent=119 // pred_check_branch
        %7134 = sbr.rel (%p7132) target = $region124
      $region123: #{nerf_forward_pallas.1} parent=119 // pred_region
        %s7135 = smul.u32 32, %s36
      $region124: #{nerf_forward_pallas.1} parent=119 // pred_fallthru
        _
    $region120: #{nerf_forward_pallas.1} parent=5 // pred_fallthru
      _
    %p7136 = scmp.le.s32.totalorder 2, %s31
    // Predicated region
    $region125: #{nerf_forward_pallas.1} parent=5 // pred_check
      %p7137 = pneg %p7136
    $region126: #{nerf_forward_pallas.1} parent=5 // pred_check_branch
      %7139 = sbr.rel (%p7137) target = $region128
    $region127: #{nerf_forward_pallas.1} parent=5 // pred_region
      %s7140 = ssub.s32 %s31, 2
      // Predicated region
      $region129: #{nerf_forward_pallas.1} parent=127 // pred_check
        %p7141 = pneg %p595
      $region130: #{nerf_forward_pallas.1} parent=127 // pred_check_branch
        %7143 = sbr.rel (%p7141) target = $region132
      $region131: #{nerf_forward_pallas.1} parent=127 // pred_region
        %s7144 = smul.u32 32, %s37
        %p7145 = scmp.lt.s32.totalorder %s7144, 255
        %s7146 = scalar_select %p7145, %s7144, 255
        %s7147 = smul.addr %s7146, 8
        %s7148 = scalar_lea.vmem %s25, %s7147
      $region132: #{nerf_forward_pallas.1} parent=127 // pred_fallthru
        _
    $region128: #{nerf_forward_pallas.1} parent=5 // pred_fallthru
      _
  $region6: #{nerf_forward_pallas.1} parent=0 // loop_footer
    %s35 = sadd.s32 1, %s31
  $region7: #{nerf_forward_pallas.1} parent=0 // loop_footer_branch
    %30 = sbr.rel target = $region3
  $region8: #{nerf_forward_pallas.1} parent=0 // loop_exit
    _

</llo_original>
